<compile_context>
chip_gen: v6e
topology: v6e:2x2x1
jax: 0.10.0
libtpu: 0.0.40
codegen_flags: <defaults>
</compile_context>

<pallas_src>
import jax
import jax.numpy as jnp
import numpy as np
from jax import lax
from jax.experimental import pallas as pl
from jax.experimental.pallas import tpu as pltpu


def _round_up(x, m):
    return ((x + m - 1) // m) * m


def _pick_bt(B):
    # Single grid step by default: v5e/v6e have one TensorCore, so splitting
    # only adds per-step overhead, and one big M is more MXU-friendly.
    # On v7x (2 TCs) prefer an even 2-way split, but only when the resulting
    # batch tile keeps the 8-sublane rule on the 2-D outputs (Bt % 8 == 0).
    try:
        kind = jax.devices()[0].device_kind.lower()
    except Exception:  # pragma: no cover - defensive
        kind = ""
    if "v7" in kind and B % 16 == 0:
        return B // 2
    return B


# ----------------------------------------------------------------------------
# Fused backbone + classifiers kernel (one batch tile per grid step).
# ----------------------------------------------------------------------------
def _cbn_kernel(x_ref, wb_ref, brow_ref, wc_ref, bc_ref,   # inputs
                feat_ref, logits_ref):                      # outputs
    # x_ref     : (Bt, H, K3)   K3 = 3*(W+2)*Cin -- each output row's three
    #                           padded input rows laid side by side on lanes
    #                           (compute dtype: bf16 or f32).
    # wb_ref    : (K3, W*F)     block-banded conv weight (compute dtype).
    # brow_ref  : (1, W*F)      conv bias tiled along w (f32).
    # wc_ref    : (F, NCp)      fused [head | cls2 | cls3] weights (f32).
    # bc_ref    : (1, NCp)      fused classifier bias (f32).
    # feat_ref  : (Bt, F)       f32 GAP features.
    # logits_ref: (Bt, NCp)     f32 fused logits (lane-padded to 128).
    Bt, H, K3 = x_ref.shape
    WF = wb_ref.shape[1]
    F = feat_ref.shape[1]
    W = WF // F

    # Hoist the broadcast bias out of the row loop (JAX does not CSE
    # broadcast_in_dim); wb is read inside the dot so its live range stays
    # per-iteration (it is far too big for vregs).
    bias = jnp.broadcast_to(brow_ref[...], (Bt, WF))

    # One banded matmul per output row; progressive GAP so only a (Bt, W*F)
    # f32 accumulator (a dozen vregs) is ever live.  Static unroll (H=16)
    # gives the scheduler full visibility.
    acc = jnp.zeros((Bt, WF), jnp.float32)
    for h in range(H):
        lhs = x_ref[:, h, :]                               # (Bt, K3) lane-dense
        act = jnp.dot(lhs, wb_ref[...],
                      preferred_element_type=jnp.float32)  # (Bt, W*F) f32
        acc = acc + jnp.maximum(act + bias, 0.0)           # bias + ReLU + sum_h

    # Fold the W groups of F lanes (static lane slices; done once per step).
    feat = jnp.zeros((Bt, F), jnp.float32)
    for w in range(W):
        feat = feat + acc[:, w * F:(w + 1) * F]
    feat = feat * (1.0 / (H * W))                          # GAP mean
    feat_ref[...] = feat                                   # F=32 -> masked
    # store; acceptable at this size (pad F to 128 only if it grows).

    # Fused classifiers [backbone head | classifier2 | classifier3], all f32
    # (tiny matmul; keeps feat precision). Lane-dense 128-wide store.
    logits = jnp.dot(feat, wc_ref[...],
                     preferred_element_type=jnp.float32) + bc_ref[...]
    logits_ref[...] = logits


# ----------------------------------------------------------------------------
# One-time parameter preparation (hoisted out of the per-forward path):
# block-banded conv weight, tiled conv bias, fused + lane-padded classifiers.
# ----------------------------------------------------------------------------
def prepare_params(params, width, compute_dtype=jnp.bfloat16):
    """width: spatial W of the images this prep will be used with."""
    W = int(width)
    conv_w = np.asarray(jax.device_get(params["conv_w"]))   # (3, 3, Cin, F)
    conv_b = np.asarray(jax.device_get(params["conv_b"]))   # (1, F)
    _, _, cin, f = conv_w.shape
    nc = params["w_cls"].shape[1]
    ncp = _round_up(3 * nc, 128)                            # lane-dense logits

    # Block-banded conv weight:
    #   out[b,h, w*F+f] = sum_{kh,w',c} xrows[b,h, kh*(W+2)*Cin + w'*Cin + c]
    #                                   * wb[kh*(W+2)*Cin + w'*Cin + c, w*F+f]
    # with wb[kh, w+kw, c, w, f] = conv_w[kh, kw, c, f].
    wb = np.zeros((3, W + 2, cin, W, f), np.float32)
    for kw in range(3):
        for w in range(W):
            wb[:, w + kw, :, w, :] = conv_w[:, kw, :, :]
    wb = wb.reshape(3 * (W + 2) * cin, W * f)
    brow = np.tile(conv_b, (1, W))                          # (1, W*F)

    w_cat = jnp.concatenate(
        [params["w_cls"], params["w2"], params["w3"]], axis=1)   # (F, 3*NC)
    b_cat = jnp.concatenate(
        [params["b_cls"], params["b2"], params["b3"]], axis=1)   # (1, 3*NC)
    w_cat = jnp.pad(w_cat, ((0, 0), (0, ncp - 3 * nc)))
    b_cat = jnp.pad(b_cat, ((0, 0), (0, ncp - 3 * nc)))

    return {
        "conv_wb": jnp.asarray(wb, compute_dtype),          # (3*(W+2)*Cin, W*F)
        "conv_brow": jnp.asarray(brow, jnp.float32),        # (1, W*F)
        "w_cat": w_cat.astype(jnp.float32),                 # (F, NCp) -- f32
        "b_cat": b_cat.astype(jnp.float32),                 # (1, NCp)
    }


# ----------------------------------------------------------------------------
# Forward wrapper.
# ----------------------------------------------------------------------------
def cbn_net_forward(x_nchw, prep, *, num_classes):
    """CBNNet.forward with the synthetic conv backbone.

    x_nchw: (B, Cin, H, W) float32, B divisible by 3 (CPE batch = 3*c).
    prep  : output of prepare_params(params, W).
    """
    B, Cin, H, W = x_nchw.shape
    assert B % 3 == 0, "CPE expects batch = 3 * c"
    NC = num_classes
    K3, WF = prep["conv_wb"].shape
    F = prep["w_cat"].shape[0]
    NCp = prep["w_cat"].shape[1]
    assert WF == W * F and K3 == 3 * (W + 2) * Cin, "prep/W mismatch"
    compute_dtype = prep["conv_wb"].dtype

    Bt = _pick_bt(B)
    grid = (B // Bt,)

    # Layout prep in XLA (a few hundred KB of HBM, hidden by the pipeline):
    # NCHW -> NHWC, zero-pad ('same'), fuse (W+2, Cin) onto the lane axis,
    # then overlap each output row's 3 input rows side by side so the kernel's
    # per-row matmul LHS is one contiguous lane-dense load — no halo buffer,
    # no re-zeroing, no im2col stores inside the kernel.
    x = jnp.transpose(x_nchw, (0, 2, 3, 1)).astype(jnp.float32)
    xpad = jnp.pad(x, ((0, 0), (1, 1), (1, 1), (0, 0)))
    xrow = xpad.reshape(B, H + 2, (W + 2) * Cin)
    x_rows = jnp.concatenate(
        [xrow[:, 0:H], xrow[:, 1:H + 1], xrow[:, 2:H + 2]], axis=-1
    ).astype(compute_dtype)                                  # (B, H, K3)

    cost = pl.CostEstimate(
        flops=2 * B * H * K3 * WF + 2 * B * F * NCp,
        transcendentals=0,
        bytes_accessed=x_rows.size * x_rows.dtype.itemsize
        + prep["conv_wb"].size * prep["conv_wb"].dtype.itemsize
        + (prep["w_cat"].size + B * F + B * NCp) * 4,
    )

    feat, logits_pad = pl.pallas_call(
        _cbn_kernel,
        out_shape=(jax.ShapeDtypeStruct((B, F), jnp.float32),
                   jax.ShapeDtypeStruct((B, NCp), jnp.float32)),
        grid_spec=pltpu.PrefetchScalarGridSpec(
            num_scalar_prefetch=0,
            grid=grid,
            in_specs=[
                pl.BlockSpec((Bt, H, K3), lambda i: (i, 0, 0)),
                pl.BlockSpec((K3, WF), lambda i: (0, 0)),     # resident
                pl.BlockSpec((1, WF), lambda i: (0, 0)),      # resident
                pl.BlockSpec((F, NCp), lambda i: (0, 0)),     # resident
                pl.BlockSpec((1, NCp), lambda i: (0, 0)),     # resident
            ],
            out_specs=(
                pl.BlockSpec((Bt, F), lambda i: (i, 0)),
                pl.BlockSpec((Bt, NCp), lambda i: (i, 0)),
            ),
        ),
        # Batch tiles are independent; total VMEM footprint is <1 MiB so the
        # default scoped VMEM limit is fine on all generations.
        compiler_params=pltpu.CompilerParams(
            dimension_semantics=("parallel",)),
        cost_estimate=cost,
    )(x_rows, prep["conv_wb"], prep["conv_brow"], prep["w_cat"], prep["b_cat"])

    # CBNNet head glue: batch-third split + averaging (tiny; left to XLA).
    c = B // 3
    logits_all = logits_pad[:, :3 * NC]          # drop the lane padding
    logits = logits_all[:, :NC]
    l2 = logits_all[:, NC:2 * NC].reshape(3, c, NC)
    l3 = logits_all[:, 2 * NC:3 * NC].reshape(3, c, NC)

    return {
        "feat": feat,
        "logits": logits,
        "logitsH2": l2[0], "logitsM2": l2[1], "logitsT2": l2[2],
        "logits_2": jnp.mean(l2, axis=0),
        "logitsH3": l3[0], "logitsM3": l3[1], "logitsT3": l3[2],
        "logits_3": jnp.mean(l3, axis=0),
    }


# ----------------------------------------------------------------------------
# Plain-JAX reference (same math, f32-accurate matmuls) for correctness.
# ----------------------------------------------------------------------------
def reference_forward(x_nchw, params):
    B, Cin, H, W = x_nchw.shape
    F = params["conv_w"].shape[-1]
    hp = lax.Precision.HIGHEST
    x = jnp.transpose(x_nchw, (0, 2, 3, 1))
    xp = jnp.pad(x, ((0, 0), (1, 1), (1, 1), (0, 0)))
    acc = jnp.zeros((B, H, W, F), jnp.float32)
    for kh in range(3):
        for kw in range(3):
            acc = acc + jnp.einsum("bhwc,cf->bhwf",
                                   xp[:, kh:kh + H, kw:kw + W, :],
                                   params["conv_w"][kh, kw], precision=hp)
    acc = jnp.maximum(acc + params["conv_b"][0], 0.0)
    feat = jnp.mean(acc.reshape(B, H * W, F), axis=1)

    def lin(w, b):
        return jnp.dot(feat, w, precision=hp) + b[0]

    out = {"feat": feat, "logits": lin(params["w_cls"], params["b_cls"])}
    c = B // 3
    for name, (w, b) in (("2", (params["w2"], params["b2"])),
                         ("3", (params["w3"], params["b3"]))):
        la = lin(w, b)
        out["logitsH" + name] = la[:c]
        out["logitsM" + name] = la[c:2 * c]
        out["logitsT" + name] = la[2 * c:]
        out["logits_" + name] = (la[:c] + la[c:2 * c] + la[2 * c:]) / 3.0
    return out


if __name__ == "__main__":
    # Small shapes consistent with the module: CPE batch = 3*c (c=8), Cin=4,
    # 16x16 spatial, num_features=32, num_classes=10.
    B, Cin, H, W = 24, 4, 16, 16
    F, NC = 32, 10

    key = jax.random.PRNGKey(0)
    ks = jax.random.split(key, 9)
    params = {
        "conv_w": jax.random.normal(ks[0], (3, 3, Cin, F), jnp.float32) * 0.1,
        "conv_b": jax.random.normal(ks[1], (1, F), jnp.float32) * 0.01,
        "w_cls": jax.random.normal(ks[2], (F, NC), jnp.float32) * 0.1,
        "b_cls": jax.random.normal(ks[3], (1, NC), jnp.float32) * 0.01,
        "w2": jax.random.normal(ks[4], (F, NC), jnp.float32) * 0.1,
        "b2": jax.random.normal(ks[5], (1, NC), jnp.float32) * 0.01,
        "w3": jax.random.normal(ks[6], (F, NC), jnp.float32) * 0.1,
        "b3": jax.random.normal(ks[7], (1, NC), jnp.float32) * 0.01,
    }
    x = jax.random.normal(ks[8], (B, Cin, H, W), jnp.float32)

    fwd = jax.jit(cbn_net_forward, static_argnames=("num_classes",))
    ref = reference_forward(x, params)

    # f32 MXU path (strict check).
    prep32 = prepare_params(params, W, jnp.float32)
    out32 = fwd(x, prep32, num_classes=NC)
    jax.block_until_ready(out32)
    for k in ref:
        assert out32[k].shape == ref[k].shape, (k, out32[k].shape, ref[k].shape)
        assert jnp.allclose(out32[k], ref[k], atol=1e-4, rtol=1e-4), k

    # Default bf16 MXU operands (f32 accumulation, f32 classifier).
    prep16 = prepare_params(params, W)
    out16 = fwd(x, prep16, num_classes=NC)
    jax.block_until_ready(out16)
    for k in ref:
        assert jnp.allclose(out16[k], ref[k], atol=5e-2, rtol=5e-2), k

    print("KERNEL_OK")
</pallas_src>

<mosaic_0001>
module attributes {stable_mosaic.version = 11 : i64} {
  func.func @_cbn_kernel(%arg0: i32, %arg1: memref<24x16x216xf32, #tpu.memory_space<vmem>>, %arg2: memref<216x512xf32, #tpu.memory_space<vmem>>, %arg3: memref<1x512xf32, #tpu.memory_space<vmem>>, %arg4: memref<32x128xf32, #tpu.memory_space<vmem>>, %arg5: memref<1x128xf32, #tpu.memory_space<vmem>>, %arg6: memref<24x32xf32, #tpu.memory_space<vmem>>, %arg7: memref<24x128xf32, #tpu.memory_space<vmem>>) attributes {dimension_semantics = [#tpu.dimension_semantics<parallel>], iteration_bounds = array<i64: 1>, scalar_prefetch = 0 : i64, scratch_operands = 0 : i64, tpu.core_type = #tpu.core_type<tc>, window_params = [{transform_indices = @transform_0, window_bounds = array<i64: 24, 16, 216>}, {pipeline_mode = #tpu.pipeline_mode<synchronous>, transform_indices = @transform_1, window_bounds = array<i64: 216, 512>}, {pipeline_mode = #tpu.pipeline_mode<synchronous>, transform_indices = @transform_2, window_bounds = array<i64: 1, 512>}, {pipeline_mode = #tpu.pipeline_mode<synchronous>, transform_indices = @transform_3, window_bounds = array<i64: 32, 128>}, {pipeline_mode = #tpu.pipeline_mode<synchronous>, transform_indices = @transform_4, window_bounds = array<i64: 1, 128>}, {transform_indices = @transform_5, window_bounds = array<i64: 24, 32>}, {transform_indices = @transform_6, window_bounds = array<i64: 24, 128>}]} {
    %c0 = arith.constant 0 : index
    %c0_0 = arith.constant 0 : index
    %0 = vector.load %arg3[%c0, %c0_0] : memref<1x512xf32, #tpu.memory_space<vmem>>, vector<1x512xf32>
    %1 = vector.shape_cast %0 : vector<1x512xf32> to vector<1x512xf32>
    %2 = vector.broadcast %1 : vector<1x512xf32> to vector<24x512xf32>
    %cst = arith.constant 0.000000e+00 : f32
    %3 = vector.broadcast %cst : f32 to vector<24x512xf32>
    %c0_1 = arith.constant 0 : index
    %c0_2 = arith.constant 0 : index
    %c0_3 = arith.constant 0 : index
    %4 = vector.load %arg1[%c0_1, %c0_2, %c0_3] : memref<24x16x216xf32, #tpu.memory_space<vmem>>, vector<24x1x216xf32>
    %5 = vector.shape_cast %4 : vector<24x1x216xf32> to vector<24x216xf32>
    %c0_4 = arith.constant 0 : index
    %c0_5 = arith.constant 0 : index
    %6 = vector.load %arg2[%c0_4, %c0_5] : memref<216x512xf32, #tpu.memory_space<vmem>>, vector<216x512xf32>
    %cst_6 = arith.constant dense<0.000000e+00> : vector<24x512xf32>
    %7 = tpu.matmul %5, %6, %cst_6 {dimension_numbers = #tpu.dot_dimension_numbers<[1], [0], [0], [1], [0, 0, 1, 1], [], []>} : vector<24x216xf32>, vector<216x512xf32>, vector<24x512xf32> -> vector<24x512xf32>
    %8 = arith.addf %7, %2 : vector<24x512xf32>
    %cst_7 = arith.constant 0.000000e+00 : f32
    %9 = vector.broadcast %cst_7 : f32 to vector<24x512xf32>
    %10 = arith.maximumf %8, %9 : vector<24x512xf32>
    %11 = arith.addf %3, %10 : vector<24x512xf32>
    %c0_8 = arith.constant 0 : index
    %c1 = arith.constant 1 : index
    %c0_9 = arith.constant 0 : index
    %12 = vector.load %arg1[%c0_8, %c1, %c0_9] : memref<24x16x216xf32, #tpu.memory_space<vmem>>, vector<24x1x216xf32>
    %13 = vector.shape_cast %12 : vector<24x1x216xf32> to vector<24x216xf32>
    %c0_10 = arith.constant 0 : index
    %c0_11 = arith.constant 0 : index
    %14 = vector.load %arg2[%c0_10, %c0_11] : memref<216x512xf32, #tpu.memory_space<vmem>>, vector<216x512xf32>
    %cst_12 = arith.constant dense<0.000000e+00> : vector<24x512xf32>
    %15 = tpu.matmul %13, %14, %cst_12 {dimension_numbers = #tpu.dot_dimension_numbers<[1], [0], [0], [1], [0, 0, 1, 1], [], []>} : vector<24x216xf32>, vector<216x512xf32>, vector<24x512xf32> -> vector<24x512xf32>
    %16 = arith.addf %15, %2 : vector<24x512xf32>
    %cst_13 = arith.constant 0.000000e+00 : f32
    %17 = vector.broadcast %cst_13 : f32 to vector<24x512xf32>
    %18 = arith.maximumf %16, %17 : vector<24x512xf32>
    %19 = arith.addf %11, %18 : vector<24x512xf32>
    %c0_14 = arith.constant 0 : index
    %c2 = arith.constant 2 : index
    %c0_15 = arith.constant 0 : index
    %20 = vector.load %arg1[%c0_14, %c2, %c0_15] : memref<24x16x216xf32, #tpu.memory_space<vmem>>, vector<24x1x216xf32>
    %21 = vector.shape_cast %20 : vector<24x1x216xf32> to vector<24x216xf32>
    %c0_16 = arith.constant 0 : index
    %c0_17 = arith.constant 0 : index
    %22 = vector.load %arg2[%c0_16, %c0_17] : memref<216x512xf32, #tpu.memory_space<vmem>>, vector<216x512xf32>
    %cst_18 = arith.constant dense<0.000000e+00> : vector<24x512xf32>
    %23 = tpu.matmul %21, %22, %cst_18 {dimension_numbers = #tpu.dot_dimension_numbers<[1], [0], [0], [1], [0, 0, 1, 1], [], []>} : vector<24x216xf32>, vector<216x512xf32>, vector<24x512xf32> -> vector<24x512xf32>
    %24 = arith.addf %23, %2 : vector<24x512xf32>
    %cst_19 = arith.constant 0.000000e+00 : f32
    %25 = vector.broadcast %cst_19 : f32 to vector<24x512xf32>
    %26 = arith.maximumf %24, %25 : vector<24x512xf32>
    %27 = arith.addf %19, %26 : vector<24x512xf32>
    %c0_20 = arith.constant 0 : index
    %c3 = arith.constant 3 : index
    %c0_21 = arith.constant 0 : index
    %28 = vector.load %arg1[%c0_20, %c3, %c0_21] : memref<24x16x216xf32, #tpu.memory_space<vmem>>, vector<24x1x216xf32>
    %29 = vector.shape_cast %28 : vector<24x1x216xf32> to vector<24x216xf32>
    %c0_22 = arith.constant 0 : index
    %c0_23 = arith.constant 0 : index
    %30 = vector.load %arg2[%c0_22, %c0_23] : memref<216x512xf32, #tpu.memory_space<vmem>>, vector<216x512xf32>
    %cst_24 = arith.constant dense<0.000000e+00> : vector<24x512xf32>
    %31 = tpu.matmul %29, %30, %cst_24 {dimension_numbers = #tpu.dot_dimension_numbers<[1], [0], [0], [1], [0, 0, 1, 1], [], []>} : vector<24x216xf32>, vector<216x512xf32>, vector<24x512xf32> -> vector<24x512xf32>
    %32 = arith.addf %31, %2 : vector<24x512xf32>
    %cst_25 = arith.constant 0.000000e+00 : f32
    %33 = vector.broadcast %cst_25 : f32 to vector<24x512xf32>
    %34 = arith.maximumf %32, %33 : vector<24x512xf32>
    %35 = arith.addf %27, %34 : vector<24x512xf32>
    %c0_26 = arith.constant 0 : index
    %c4 = arith.constant 4 : index
    %c0_27 = arith.constant 0 : index
    %36 = vector.load %arg1[%c0_26, %c4, %c0_27] : memref<24x16x216xf32, #tpu.memory_space<vmem>>, vector<24x1x216xf32>
    %37 = vector.shape_cast %36 : vector<24x1x216xf32> to vector<24x216xf32>
    %c0_28 = arith.constant 0 : index
    %c0_29 = arith.constant 0 : index
    %38 = vector.load %arg2[%c0_28, %c0_29] : memref<216x512xf32, #tpu.memory_space<vmem>>, vector<216x512xf32>
    %cst_30 = arith.constant dense<0.000000e+00> : vector<24x512xf32>
    %39 = tpu.matmul %37, %38, %cst_30 {dimension_numbers = #tpu.dot_dimension_numbers<[1], [0], [0], [1], [0, 0, 1, 1], [], []>} : vector<24x216xf32>, vector<216x512xf32>, vector<24x512xf32> -> vector<24x512xf32>
    %40 = arith.addf %39, %2 : vector<24x512xf32>
    %cst_31 = arith.constant 0.000000e+00 : f32
    %41 = vector.broadcast %cst_31 : f32 to vector<24x512xf32>
    %42 = arith.maximumf %40, %41 : vector<24x512xf32>
    %43 = arith.addf %35, %42 : vector<24x512xf32>
    %c0_32 = arith.constant 0 : index
    %c5 = arith.constant 5 : index
    %c0_33 = arith.constant 0 : index
    %44 = vector.load %arg1[%c0_32, %c5, %c0_33] : memref<24x16x216xf32, #tpu.memory_space<vmem>>, vector<24x1x216xf32>
    %45 = vector.shape_cast %44 : vector<24x1x216xf32> to vector<24x216xf32>
    %c0_34 = arith.constant 0 : index
    %c0_35 = arith.constant 0 : index
    %46 = vector.load %arg2[%c0_34, %c0_35] : memref<216x512xf32, #tpu.memory_space<vmem>>, vector<216x512xf32>
    %cst_36 = arith.constant dense<0.000000e+00> : vector<24x512xf32>
    %47 = tpu.matmul %45, %46, %cst_36 {dimension_numbers = #tpu.dot_dimension_numbers<[1], [0], [0], [1], [0, 0, 1, 1], [], []>} : vector<24x216xf32>, vector<216x512xf32>, vector<24x512xf32> -> vector<24x512xf32>
    %48 = arith.addf %47, %2 : vector<24x512xf32>
    %cst_37 = arith.constant 0.000000e+00 : f32
    %49 = vector.broadcast %cst_37 : f32 to vector<24x512xf32>
    %50 = arith.maximumf %48, %49 : vector<24x512xf32>
    %51 = arith.addf %43, %50 : vector<24x512xf32>
    %c0_38 = arith.constant 0 : index
    %c6 = arith.constant 6 : index
    %c0_39 = arith.constant 0 : index
    %52 = vector.load %arg1[%c0_38, %c6, %c0_39] : memref<24x16x216xf32, #tpu.memory_space<vmem>>, vector<24x1x216xf32>
    %53 = vector.shape_cast %52 : vector<24x1x216xf32> to vector<24x216xf32>
    %c0_40 = arith.constant 0 : index
    %c0_41 = arith.constant 0 : index
    %54 = vector.load %arg2[%c0_40, %c0_41] : memref<216x512xf32, #tpu.memory_space<vmem>>, vector<216x512xf32>
    %cst_42 = arith.constant dense<0.000000e+00> : vector<24x512xf32>
    %55 = tpu.matmul %53, %54, %cst_42 {dimension_numbers = #tpu.dot_dimension_numbers<[1], [0], [0], [1], [0, 0, 1, 1], [], []>} : vector<24x216xf32>, vector<216x512xf32>, vector<24x512xf32> -> vector<24x512xf32>
    %56 = arith.addf %55, %2 : vector<24x512xf32>
    %cst_43 = arith.constant 0.000000e+00 : f32
    %57 = vector.broadcast %cst_43 : f32 to vector<24x512xf32>
    %58 = arith.maximumf %56, %57 : vector<24x512xf32>
    %59 = arith.addf %51, %58 : vector<24x512xf32>
    %c0_44 = arith.constant 0 : index
    %c7 = arith.constant 7 : index
    %c0_45 = arith.constant 0 : index
    %60 = vector.load %arg1[%c0_44, %c7, %c0_45] : memref<24x16x216xf32, #tpu.memory_space<vmem>>, vector<24x1x216xf32>
    %61 = vector.shape_cast %60 : vector<24x1x216xf32> to vector<24x216xf32>
    %c0_46 = arith.constant 0 : index
    %c0_47 = arith.constant 0 : index
    %62 = vector.load %arg2[%c0_46, %c0_47] : memref<216x512xf32, #tpu.memory_space<vmem>>, vector<216x512xf32>
    %cst_48 = arith.constant dense<0.000000e+00> : vector<24x512xf32>
    %63 = tpu.matmul %61, %62, %cst_48 {dimension_numbers = #tpu.dot_dimension_numbers<[1], [0], [0], [1], [0, 0, 1, 1], [], []>} : vector<24x216xf32>, vector<216x512xf32>, vector<24x512xf32> -> vector<24x512xf32>
    %64 = arith.addf %63, %2 : vector<24x512xf32>
    %cst_49 = arith.constant 0.000000e+00 : f32
    %65 = vector.broadcast %cst_49 : f32 to vector<24x512xf32>
    %66 = arith.maximumf %64, %65 : vector<24x512xf32>
    %67 = arith.addf %59, %66 : vector<24x512xf32>
    %c0_50 = arith.constant 0 : index
    %c8 = arith.constant 8 : index
    %c0_51 = arith.constant 0 : index
    %68 = vector.load %arg1[%c0_50, %c8, %c0_51] : memref<24x16x216xf32, #tpu.memory_space<vmem>>, vector<24x1x216xf32>
    %69 = vector.shape_cast %68 : vector<24x1x216xf32> to vector<24x216xf32>
    %c0_52 = arith.constant 0 : index
    %c0_53 = arith.constant 0 : index
    %70 = vector.load %arg2[%c0_52, %c0_53] : memref<216x512xf32, #tpu.memory_space<vmem>>, vector<216x512xf32>
    %cst_54 = arith.constant dense<0.000000e+00> : vector<24x512xf32>
    %71 = tpu.matmul %69, %70, %cst_54 {dimension_numbers = #tpu.dot_dimension_numbers<[1], [0], [0], [1], [0, 0, 1, 1], [], []>} : vector<24x216xf32>, vector<216x512xf32>, vector<24x512xf32> -> vector<24x512xf32>
    %72 = arith.addf %71, %2 : vector<24x512xf32>
    %cst_55 = arith.constant 0.000000e+00 : f32
    %73 = vector.broadcast %cst_55 : f32 to vector<24x512xf32>
    %74 = arith.maximumf %72, %73 : vector<24x512xf32>
    %75 = arith.addf %67, %74 : vector<24x512xf32>
    %c0_56 = arith.constant 0 : index
    %c9 = arith.constant 9 : index
    %c0_57 = arith.constant 0 : index
    %76 = vector.load %arg1[%c0_56, %c9, %c0_57] : memref<24x16x216xf32, #tpu.memory_space<vmem>>, vector<24x1x216xf32>
    %77 = vector.shape_cast %76 : vector<24x1x216xf32> to vector<24x216xf32>
    %c0_58 = arith.constant 0 : index
    %c0_59 = arith.constant 0 : index
    %78 = vector.load %arg2[%c0_58, %c0_59] : memref<216x512xf32, #tpu.memory_space<vmem>>, vector<216x512xf32>
    %cst_60 = arith.constant dense<0.000000e+00> : vector<24x512xf32>
    %79 = tpu.matmul %77, %78, %cst_60 {dimension_numbers = #tpu.dot_dimension_numbers<[1], [0], [0], [1], [0, 0, 1, 1], [], []>} : vector<24x216xf32>, vector<216x512xf32>, vector<24x512xf32> -> vector<24x512xf32>
    %80 = arith.addf %79, %2 : vector<24x512xf32>
    %cst_61 = arith.constant 0.000000e+00 : f32
    %81 = vector.broadcast %cst_61 : f32 to vector<24x512xf32>
    %82 = arith.maximumf %80, %81 : vector<24x512xf32>
    %83 = arith.addf %75, %82 : vector<24x512xf32>
    %c0_62 = arith.constant 0 : index
    %c10 = arith.constant 10 : index
    %c0_63 = arith.constant 0 : index
    %84 = vector.load %arg1[%c0_62, %c10, %c0_63] : memref<24x16x216xf32, #tpu.memory_space<vmem>>, vector<24x1x216xf32>
    %85 = vector.shape_cast %84 : vector<24x1x216xf32> to vector<24x216xf32>
    %c0_64 = arith.constant 0 : index
    %c0_65 = arith.constant 0 : index
    %86 = vector.load %arg2[%c0_64, %c0_65] : memref<216x512xf32, #tpu.memory_space<vmem>>, vector<216x512xf32>
    %cst_66 = arith.constant dense<0.000000e+00> : vector<24x512xf32>
    %87 = tpu.matmul %85, %86, %cst_66 {dimension_numbers = #tpu.dot_dimension_numbers<[1], [0], [0], [1], [0, 0, 1, 1], [], []>} : vector<24x216xf32>, vector<216x512xf32>, vector<24x512xf32> -> vector<24x512xf32>
    %88 = arith.addf %87, %2 : vector<24x512xf32>
    %cst_67 = arith.constant 0.000000e+00 : f32
    %89 = vector.broadcast %cst_67 : f32 to vector<24x512xf32>
    %90 = arith.maximumf %88, %89 : vector<24x512xf32>
    %91 = arith.addf %83, %90 : vector<24x512xf32>
    %c0_68 = arith.constant 0 : index
    %c11 = arith.constant 11 : index
    %c0_69 = arith.constant 0 : index
    %92 = vector.load %arg1[%c0_68, %c11, %c0_69] : memref<24x16x216xf32, #tpu.memory_space<vmem>>, vector<24x1x216xf32>
    %93 = vector.shape_cast %92 : vector<24x1x216xf32> to vector<24x216xf32>
    %c0_70 = arith.constant 0 : index
    %c0_71 = arith.constant 0 : index
    %94 = vector.load %arg2[%c0_70, %c0_71] : memref<216x512xf32, #tpu.memory_space<vmem>>, vector<216x512xf32>
    %cst_72 = arith.constant dense<0.000000e+00> : vector<24x512xf32>
    %95 = tpu.matmul %93, %94, %cst_72 {dimension_numbers = #tpu.dot_dimension_numbers<[1], [0], [0], [1], [0, 0, 1, 1], [], []>} : vector<24x216xf32>, vector<216x512xf32>, vector<24x512xf32> -> vector<24x512xf32>
    %96 = arith.addf %95, %2 : vector<24x512xf32>
    %cst_73 = arith.constant 0.000000e+00 : f32
    %97 = vector.broadcast %cst_73 : f32 to vector<24x512xf32>
    %98 = arith.maximumf %96, %97 : vector<24x512xf32>
    %99 = arith.addf %91, %98 : vector<24x512xf32>
    %c0_74 = arith.constant 0 : index
    %c12 = arith.constant 12 : index
    %c0_75 = arith.constant 0 : index
    %100 = vector.load %arg1[%c0_74, %c12, %c0_75] : memref<24x16x216xf32, #tpu.memory_space<vmem>>, vector<24x1x216xf32>
    %101 = vector.shape_cast %100 : vector<24x1x216xf32> to vector<24x216xf32>
    %c0_76 = arith.constant 0 : index
    %c0_77 = arith.constant 0 : index
    %102 = vector.load %arg2[%c0_76, %c0_77] : memref<216x512xf32, #tpu.memory_space<vmem>>, vector<216x512xf32>
    %cst_78 = arith.constant dense<0.000000e+00> : vector<24x512xf32>
    %103 = tpu.matmul %101, %102, %cst_78 {dimension_numbers = #tpu.dot_dimension_numbers<[1], [0], [0], [1], [0, 0, 1, 1], [], []>} : vector<24x216xf32>, vector<216x512xf32>, vector<24x512xf32> -> vector<24x512xf32>
    %104 = arith.addf %103, %2 : vector<24x512xf32>
    %cst_79 = arith.constant 0.000000e+00 : f32
    %105 = vector.broadcast %cst_79 : f32 to vector<24x512xf32>
    %106 = arith.maximumf %104, %105 : vector<24x512xf32>
    %107 = arith.addf %99, %106 : vector<24x512xf32>
    %c0_80 = arith.constant 0 : index
    %c13 = arith.constant 13 : index
    %c0_81 = arith.constant 0 : index
    %108 = vector.load %arg1[%c0_80, %c13, %c0_81] : memref<24x16x216xf32, #tpu.memory_space<vmem>>, vector<24x1x216xf32>
    %109 = vector.shape_cast %108 : vector<24x1x216xf32> to vector<24x216xf32>
    %c0_82 = arith.constant 0 : index
    %c0_83 = arith.constant 0 : index
    %110 = vector.load %arg2[%c0_82, %c0_83] : memref<216x512xf32, #tpu.memory_space<vmem>>, vector<216x512xf32>
    %cst_84 = arith.constant dense<0.000000e+00> : vector<24x512xf32>
    %111 = tpu.matmul %109, %110, %cst_84 {dimension_numbers = #tpu.dot_dimension_numbers<[1], [0], [0], [1], [0, 0, 1, 1], [], []>} : vector<24x216xf32>, vector<216x512xf32>, vector<24x512xf32> -> vector<24x512xf32>
    %112 = arith.addf %111, %2 : vector<24x512xf32>
    %cst_85 = arith.constant 0.000000e+00 : f32
    %113 = vector.broadcast %cst_85 : f32 to vector<24x512xf32>
    %114 = arith.maximumf %112, %113 : vector<24x512xf32>
    %115 = arith.addf %107, %114 : vector<24x512xf32>
    %c0_86 = arith.constant 0 : index
    %c14 = arith.constant 14 : index
    %c0_87 = arith.constant 0 : index
    %116 = vector.load %arg1[%c0_86, %c14, %c0_87] : memref<24x16x216xf32, #tpu.memory_space<vmem>>, vector<24x1x216xf32>
    %117 = vector.shape_cast %116 : vector<24x1x216xf32> to vector<24x216xf32>
    %c0_88 = arith.constant 0 : index
    %c0_89 = arith.constant 0 : index
    %118 = vector.load %arg2[%c0_88, %c0_89] : memref<216x512xf32, #tpu.memory_space<vmem>>, vector<216x512xf32>
    %cst_90 = arith.constant dense<0.000000e+00> : vector<24x512xf32>
    %119 = tpu.matmul %117, %118, %cst_90 {dimension_numbers = #tpu.dot_dimension_numbers<[1], [0], [0], [1], [0, 0, 1, 1], [], []>} : vector<24x216xf32>, vector<216x512xf32>, vector<24x512xf32> -> vector<24x512xf32>
    %120 = arith.addf %119, %2 : vector<24x512xf32>
    %cst_91 = arith.constant 0.000000e+00 : f32
    %121 = vector.broadcast %cst_91 : f32 to vector<24x512xf32>
    %122 = arith.maximumf %120, %121 : vector<24x512xf32>
    %123 = arith.addf %115, %122 : vector<24x512xf32>
    %c0_92 = arith.constant 0 : index
    %c15 = arith.constant 15 : index
    %c0_93 = arith.constant 0 : index
    %124 = vector.load %arg1[%c0_92, %c15, %c0_93] : memref<24x16x216xf32, #tpu.memory_space<vmem>>, vector<24x1x216xf32>
    %125 = vector.shape_cast %124 : vector<24x1x216xf32> to vector<24x216xf32>
    %c0_94 = arith.constant 0 : index
    %c0_95 = arith.constant 0 : index
    %126 = vector.load %arg2[%c0_94, %c0_95] : memref<216x512xf32, #tpu.memory_space<vmem>>, vector<216x512xf32>
    %cst_96 = arith.constant dense<0.000000e+00> : vector<24x512xf32>
    %127 = tpu.matmul %125, %126, %cst_96 {dimension_numbers = #tpu.dot_dimension_numbers<[1], [0], [0], [1], [0, 0, 1, 1], [], []>} : vector<24x216xf32>, vector<216x512xf32>, vector<24x512xf32> -> vector<24x512xf32>
    %128 = arith.addf %127, %2 : vector<24x512xf32>
    %cst_97 = arith.constant 0.000000e+00 : f32
    %129 = vector.broadcast %cst_97 : f32 to vector<24x512xf32>
    %130 = arith.maximumf %128, %129 : vector<24x512xf32>
    %131 = arith.addf %123, %130 : vector<24x512xf32>
    %cst_98 = arith.constant 0.000000e+00 : f32
    %132 = vector.broadcast %cst_98 : f32 to vector<24x32xf32>
    %133 = vector.extract_strided_slice %131 {offsets = [0, 0], sizes = [24, 32], strides = [1, 1]} : vector<24x512xf32> to vector<24x32xf32>
    %134 = arith.addf %132, %133 : vector<24x32xf32>
    %135 = vector.extract_strided_slice %131 {offsets = [0, 32], sizes = [24, 32], strides = [1, 1]} : vector<24x512xf32> to vector<24x32xf32>
    %136 = arith.addf %134, %135 : vector<24x32xf32>
    %137 = vector.extract_strided_slice %131 {offsets = [0, 64], sizes = [24, 32], strides = [1, 1]} : vector<24x512xf32> to vector<24x32xf32>
    %138 = arith.addf %136, %137 : vector<24x32xf32>
    %139 = vector.extract_strided_slice %131 {offsets = [0, 96], sizes = [24, 32], strides = [1, 1]} : vector<24x512xf32> to vector<24x32xf32>
    %140 = arith.addf %138, %139 : vector<24x32xf32>
    %141 = vector.extract_strided_slice %131 {offsets = [0, 128], sizes = [24, 32], strides = [1, 1]} : vector<24x512xf32> to vector<24x32xf32>
    %142 = arith.addf %140, %141 : vector<24x32xf32>
    %143 = vector.extract_strided_slice %131 {offsets = [0, 160], sizes = [24, 32], strides = [1, 1]} : vector<24x512xf32> to vector<24x32xf32>
    %144 = arith.addf %142, %143 : vector<24x32xf32>
    %145 = vector.extract_strided_slice %131 {offsets = [0, 192], sizes = [24, 32], strides = [1, 1]} : vector<24x512xf32> to vector<24x32xf32>
    %146 = arith.addf %144, %145 : vector<24x32xf32>
    %147 = vector.extract_strided_slice %131 {offsets = [0, 224], sizes = [24, 32], strides = [1, 1]} : vector<24x512xf32> to vector<24x32xf32>
    %148 = arith.addf %146, %147 : vector<24x32xf32>
    %149 = vector.extract_strided_slice %131 {offsets = [0, 256], sizes = [24, 32], strides = [1, 1]} : vector<24x512xf32> to vector<24x32xf32>
    %150 = arith.addf %148, %149 : vector<24x32xf32>
    %151 = vector.extract_strided_slice %131 {offsets = [0, 288], sizes = [24, 32], strides = [1, 1]} : vector<24x512xf32> to vector<24x32xf32>
    %152 = arith.addf %150, %151 : vector<24x32xf32>
    %153 = vector.extract_strided_slice %131 {offsets = [0, 320], sizes = [24, 32], strides = [1, 1]} : vector<24x512xf32> to vector<24x32xf32>
    %154 = arith.addf %152, %153 : vector<24x32xf32>
    %155 = vector.extract_strided_slice %131 {offsets = [0, 352], sizes = [24, 32], strides = [1, 1]} : vector<24x512xf32> to vector<24x32xf32>
    %156 = arith.addf %154, %155 : vector<24x32xf32>
    %157 = vector.extract_strided_slice %131 {offsets = [0, 384], sizes = [24, 32], strides = [1, 1]} : vector<24x512xf32> to vector<24x32xf32>
    %158 = arith.addf %156, %157 : vector<24x32xf32>
    %159 = vector.extract_strided_slice %131 {offsets = [0, 416], sizes = [24, 32], strides = [1, 1]} : vector<24x512xf32> to vector<24x32xf32>
    %160 = arith.addf %158, %159 : vector<24x32xf32>
    %161 = vector.extract_strided_slice %131 {offsets = [0, 448], sizes = [24, 32], strides = [1, 1]} : vector<24x512xf32> to vector<24x32xf32>
    %162 = arith.addf %160, %161 : vector<24x32xf32>
    %163 = vector.extract_strided_slice %131 {offsets = [0, 480], sizes = [24, 32], strides = [1, 1]} : vector<24x512xf32> to vector<24x32xf32>
    %164 = arith.addf %162, %163 : vector<24x32xf32>
    %cst_99 = arith.constant 3.906250e-03 : f32
    %165 = vector.broadcast %cst_99 : f32 to vector<24x32xf32>
    %166 = arith.mulf %164, %165 : vector<24x32xf32>
    %c0_100 = arith.constant 0 : index
    %c0_101 = arith.constant 0 : index
    %167 = vector.load %arg6[%c0_100, %c0_101] : memref<24x32xf32, #tpu.memory_space<vmem>>, vector<24x32xf32>
    tpu.vector_store %arg6[%c0_100, %c0_101], %166 {strides = array<i32>} : memref<24x32xf32, #tpu.memory_space<vmem>>, vector<24x32xf32>,
    %c0_102 = arith.constant 0 : index
    %c0_103 = arith.constant 0 : index
    %168 = vector.load %arg4[%c0_102, %c0_103] : memref<32x128xf32, #tpu.memory_space<vmem>>, vector<32x128xf32>
    %cst_104 = arith.constant dense<0.000000e+00> : vector<24x128xf32>
    %169 = tpu.matmul %166, %168, %cst_104 {dimension_numbers = #tpu.dot_dimension_numbers<[1], [0], [0], [1], [0, 0, 1, 1], [], []>} : vector<24x32xf32>, vector<32x128xf32>, vector<24x128xf32> -> vector<24x128xf32>
    %c0_105 = arith.constant 0 : index
    %c0_106 = arith.constant 0 : index
    %170 = vector.load %arg5[%c0_105, %c0_106] : memref<1x128xf32, #tpu.memory_space<vmem>>, vector<1x128xf32>
    %171 = vector.broadcast %170 : vector<1x128xf32> to vector<24x128xf32>
    %172 = arith.addf %169, %171 : vector<24x128xf32>
    %c0_107 = arith.constant 0 : index
    %c0_108 = arith.constant 0 : index
    %173 = vector.load %arg7[%c0_107, %c0_108] : memref<24x128xf32, #tpu.memory_space<vmem>>, vector<24x128xf32>
    tpu.vector_store %arg7[%c0_107, %c0_108], %172 {strides = array<i32>} : memref<24x128xf32, #tpu.memory_space<vmem>>, vector<24x128xf32>,
    return
  }
  func.func @transform_0(%arg0: i32) -> (i32, i32, i32) {
    %c0_i32 = arith.constant 0 : i32
    %c0_i32_0 = arith.constant 0 : i32
    %c0_i32_1 = arith.constant 0 : i32
    return %arg0, %c0_i32, %c0_i32_0 : i32, i32, i32
  }
  func.func @transform_1(%arg0: i32) -> (i32, i32) {
    %c0_i32 = arith.constant 0 : i32
    %c0_i32_0 = arith.constant 0 : i32
    %c0_i32_1 = arith.constant 0 : i32
    return %c0_i32, %c0_i32_0 : i32, i32
  }
  func.func @transform_2(%arg0: i32) -> (i32, i32) {
    %c0_i32 = arith.constant 0 : i32
    %c0_i32_0 = arith.constant 0 : i32
    %c0_i32_1 = arith.constant 0 : i32
    return %c0_i32, %c0_i32_0 : i32, i32
  }
  func.func @transform_3(%arg0: i32) -> (i32, i32) {
    %c0_i32 = arith.constant 0 : i32
    %c0_i32_0 = arith.constant 0 : i32
    %c0_i32_1 = arith.constant 0 : i32
    return %c0_i32, %c0_i32_0 : i32, i32
  }
  func.func @transform_4(%arg0: i32) -> (i32, i32) {
    %c0_i32 = arith.constant 0 : i32
    %c0_i32_0 = arith.constant 0 : i32
    %c0_i32_1 = arith.constant 0 : i32
    return %c0_i32, %c0_i32_0 : i32, i32
  }
  func.func @transform_5(%arg0: i32) -> (i32, i32) {
    %c0_i32 = arith.constant 0 : i32
    %c0_i32_0 = arith.constant 0 : i32
    return %arg0, %c0_i32 : i32, i32
  }
  func.func @transform_6(%arg0: i32) -> (i32, i32) {
    %c0_i32 = arith.constant 0 : i32
    %c0_i32_0 = arith.constant 0 : i32
    return %arg0, %c0_i32 : i32, i32
  }
}

</mosaic_0001>

<llo_original>
// kernel: cbn_net_forward.1
$region0: #{cbn_net_forward.1}
  #allocation0 [shape = 'u32[]', space=smem, size = 0x4, offset = 0x4, fixed_abs, tag = 'smem constant byte address 0x4 - core index']
  #allocation1 [shape = 'u32[144,128]{1,0:T(1,128)}', space=vmem, size = 0x12000, scoped, tag = 'internal scratch']
  %s0 = inlined_call_operand.vmem [shape: f32[24,16,216], index: 0, kind: input, shape index: {}]
  %s1 = inlined_call_operand.vmem [shape: f32[216,512], index: 1, kind: input, shape index: {}]
  %s2 = inlined_call_operand.vmem [shape: f32[1,512], index: 2, kind: input, shape index: {}]
  %s3 = inlined_call_operand.vmem [shape: f32[32,128], index: 3, kind: input, shape index: {}]
  %s4 = inlined_call_operand.vmem [shape: f32[1,128], index: 4, kind: input, shape index: {}]
  %s5 = inlined_call_operand.hbm [shape: f32[24,32], index: 5, kind: output, shape index: {0}]
  %s6 = inlined_call_operand.vmem [shape: f32[24,128], index: 6, kind: output, shape index: {1}]
  %7 = xla_tuple %s5, %s6
  %s8 = sld [smem:[#allocation0]]
  $region38: #{cbn_net_forward.1} parent=0
    _
  %s10 = ssub.s32 1, %s8
  %s11 = scalar_select 0, %s10, %s8
  $region1: #{cbn_net_forward.1} parent=0
    #allocation2 [shape = 'u8[12288]{0}', space=vmem, size = 0x3000, scoped, tag = 'output window, operand 0, single buffered']
    #allocation3 [shape = 's32[1]{0}', space=sflag, size = 0x4, scoped, tag = 'scoped memory for cbn_net_forward.1']
    %12 = vsyncpa [#allocation3], 0
    // Predicated region
    $region2: #{cbn_net_forward.1} parent=1 // pred_check
      _
    $region3: #{cbn_net_forward.1} parent=1 // pred_check_branch
      %14 = sbr.rel (0) target = $region5
    $region4: #{cbn_net_forward.1} parent=1 // pred_region
      _
    $region5: #{cbn_net_forward.1} parent=1 // pred_fallthru
      _
    // Predicated region
    $region6: #{cbn_net_forward.1} parent=1 // pred_check
      _
    $region7: #{cbn_net_forward.1} parent=1 // pred_check_branch
      %16 = sbr.rel (0) target = $region9
    $region8: #{cbn_net_forward.1} parent=1 // pred_region
      _
    $region9: #{cbn_net_forward.1} parent=1 // pred_fallthru
      _
    // Predicated region
    $region10: #{cbn_net_forward.1} parent=1 // pred_check
      _
    $region11: #{cbn_net_forward.1} parent=1 // pred_check_branch
      %18 = sbr.rel (0) target = $region13
    $region12: #{cbn_net_forward.1} parent=1 // pred_region
      _
    $region13: #{cbn_net_forward.1} parent=1 // pred_fallthru
      _
    // Predicated region
    $region14: #{cbn_net_forward.1} parent=1 // pred_check
      _
    $region15: #{cbn_net_forward.1} parent=1 // pred_check_branch
      %20 = sbr.rel (0) target = $region17
    $region16: #{cbn_net_forward.1} parent=1 // pred_region
      _
    $region17: #{cbn_net_forward.1} parent=1 // pred_fallthru
      _
    // Predicated region
    $region18: #{cbn_net_forward.1} parent=1 // pred_check
      _
    $region19: #{cbn_net_forward.1} parent=1 // pred_check_branch
      %22 = sbr.rel (0) target = $region21
    $region20: #{cbn_net_forward.1} parent=1 // pred_region
      _
    $region21: #{cbn_net_forward.1} parent=1 // pred_fallthru
      _
    %v23 = vld [vmem:[%s2] sm:$0xf]
    %v25 = vlaneseq
    %v26 = vshrl.u32 %v25, 7
    %v27 = vsub.s32 0, %v26
    %v28 = vrot.slane %v23, %v27
    %v29 = vlaneseq
    %v30 = vshrl.u32 %v29, 7
    %v31 = vsub.s32 1, %v30
    %v32 = vrot.slane %v23, %v31
    %v33 = vlaneseq
    %v34 = vshrl.u32 %v33, 7
    %v35 = vsub.s32 2, %v34
    %v36 = vrot.slane %v23, %v35
    %v37 = vlaneseq
    %v38 = vshrl.u32 %v37, 7
    %v39 = vsub.s32 3, %v38
    %v40 = vrot.slane %v23, %v39
    %v45 = vld [vmem:[%s0] ss:$8 sm:$0x3]
    %s46 = scalar_lea.vmem %s0, 32
    %v47 = vld [vmem:[%s46] ss:$8 sm:$0x3]
    %s48 = scalar_lea.vmem %s0, 64
    %v49 = vld [vmem:[%s48] ss:$8 sm:$0x3]
    %s50 = scalar_lea.vmem %s0, 96
    %v51 = vld [vmem:[%s50] ss:$8 sm:$0x3]
    %s52 = scalar_lea.vmem %s0, 128
    %v53 = vld [vmem:[%s52] ss:$8 sm:$0x3]
    %s54 = scalar_lea.vmem %s0, 160
    %v55 = vld [vmem:[%s54] ss:$8 sm:$0x3]
    %s56 = scalar_lea.vmem %s0, 192
    %v57 = vld [vmem:[%s56] ss:$8 sm:$0x3]
    %s58 = scalar_lea.vmem %s0, 224
    %v59 = vld [vmem:[%s58] ss:$8 sm:$0x3]
    %s60 = scalar_lea.vmem %s0, 256
    %v61 = vld [vmem:[%s60] ss:$8 sm:$0x3]
    %s62 = scalar_lea.vmem %s0, 288
    %v63 = vld [vmem:[%s62] ss:$8 sm:$0x3]
    %s64 = scalar_lea.vmem %s0, 320
    %v65 = vld [vmem:[%s64] ss:$8 sm:$0x3]
    %s66 = scalar_lea.vmem %s0, 352
    %v67 = vld [vmem:[%s66] ss:$8 sm:$0x3]
    %s68 = scalar_lea.vmem %s0, 384
    %v69 = vld [vmem:[%s68] ss:$8 sm:$0x3]
    %s70 = scalar_lea.vmem %s0, 416
    %v71 = vld [vmem:[%s70] ss:$8 sm:$0x3]
    %s72 = scalar_lea.vmem %s0, 448
    %v73 = vld [vmem:[%s72] ss:$8 sm:$0x3]
    %s74 = scalar_lea.vmem %s0, 480
    %v75 = vld [vmem:[%s74] ss:$8 sm:$0x3]
    %s76 = scalar_lea.vmem %s0, 512
    %v77 = vld [vmem:[%s76] ss:$8 sm:$0x3]
    %s78 = scalar_lea.vmem %s0, 544
    %v79 = vld [vmem:[%s78] ss:$8 sm:$0x3]
    %s80 = scalar_lea.vmem %s0, 576
    %v81 = vld [vmem:[%s80] ss:$8 sm:$0x3]
    %s82 = scalar_lea.vmem %s0, 608
    %v83 = vld [vmem:[%s82] ss:$8 sm:$0x3]
    %s84 = scalar_lea.vmem %s0, 640
    %v85 = vld [vmem:[%s84] ss:$8 sm:$0x3]
    %s86 = scalar_lea.vmem %s0, 672
    %v87 = vld [vmem:[%s86] ss:$8 sm:$0x3]
    %s88 = scalar_lea.vmem %s0, 704
    %v89 = vld [vmem:[%s88] ss:$8 sm:$0x3]
    %s90 = scalar_lea.vmem %s0, 736
    %v91 = vld [vmem:[%s90] ss:$8 sm:$0x3]
    %v92 = vld [vmem:[%s1] sm:$0xff]
    %v93 = vld [vmem:[%s1 + $0x8] sm:$0xff]
    %v94 = vld [vmem:[%s1 + $0x10] sm:$0xff]
    %v95 = vld [vmem:[%s1 + $0x18] sm:$0xff]
    %v96 = vld [vmem:[%s1 + $0x20] sm:$0xff]
    %v97 = vld [vmem:[%s1 + $0x28] sm:$0xff]
    %v98 = vld [vmem:[%s1 + $0x30] sm:$0xff]
    %v99 = vld [vmem:[%s1 + $0x38] sm:$0xff]
    %v100 = vld [vmem:[%s1 + $0x40] sm:$0xff]
    %v101 = vld [vmem:[%s1 + $0x48] sm:$0xff]
    %v102 = vld [vmem:[%s1 + $0x50] sm:$0xff]
    %v103 = vld [vmem:[%s1 + $0x58] sm:$0xff]
    %v104 = vld [vmem:[%s1 + $0x60] sm:$0xff]
    %v105 = vld [vmem:[%s1 + $0x68] sm:$0xff]
    %v106 = vld [vmem:[%s1 + $0x70] sm:$0xff]
    %v107 = vld [vmem:[%s1 + $0x78] sm:$0xff]
    %v108 = vld [vmem:[%s1 + $0x80] sm:$0xff]
    %v109 = vld [vmem:[%s1 + $0x88] sm:$0xff]
    %v110 = vld [vmem:[%s1 + $0x90] sm:$0xff]
    %v111 = vld [vmem:[%s1 + $0x98] sm:$0xff]
    %v112 = vld [vmem:[%s1 + $0xa0] sm:$0xff]
    %v113 = vld [vmem:[%s1 + $0xa8] sm:$0xff]
    %v114 = vld [vmem:[%s1 + $0xb0] sm:$0xff]
    %v115 = vld [vmem:[%s1 + $0xb8] sm:$0xff]
    %v116 = vld [vmem:[%s1 + $0xc0] sm:$0xff]
    %v117 = vld [vmem:[%s1 + $0xc8] sm:$0xff]
    %v118 = vld [vmem:[%s1 + $0xd0] sm:$0xff]
    %v119 = vld [vmem:[%s1 + $0xd8] sm:$0xff]
    %v120 = vld [vmem:[%s1 + $0xe0] sm:$0xff]
    %v121 = vld [vmem:[%s1 + $0xe8] sm:$0xff]
    %v122 = vld [vmem:[%s1 + $0xf0] sm:$0xff]
    %v123 = vld [vmem:[%s1 + $0xf8] sm:$0xff]
    %v124 = vld [vmem:[%s1 + $0x100] sm:$0xff]
    %v125 = vld [vmem:[%s1 + $0x108] sm:$0xff]
    %v126 = vld [vmem:[%s1 + $0x110] sm:$0xff]
    %v127 = vld [vmem:[%s1 + $0x118] sm:$0xff]
    %v128 = vld [vmem:[%s1 + $0x120] sm:$0xff]
    %v129 = vld [vmem:[%s1 + $0x128] sm:$0xff]
    %v130 = vld [vmem:[%s1 + $0x130] sm:$0xff]
    %v131 = vld [vmem:[%s1 + $0x138] sm:$0xff]
    %v132 = vld [vmem:[%s1 + $0x140] sm:$0xff]
    %v133 = vld [vmem:[%s1 + $0x148] sm:$0xff]
    %v134 = vld [vmem:[%s1 + $0x150] sm:$0xff]
    %v135 = vld [vmem:[%s1 + $0x158] sm:$0xff]
    %v136 = vld [vmem:[%s1 + $0x160] sm:$0xff]
    %v137 = vld [vmem:[%s1 + $0x168] sm:$0xff]
    %v138 = vld [vmem:[%s1 + $0x170] sm:$0xff]
    %v139 = vld [vmem:[%s1 + $0x178] sm:$0xff]
    %v140 = vld [vmem:[%s1 + $0x180] sm:$0xff]
    %v141 = vld [vmem:[%s1 + $0x188] sm:$0xff]
    %v142 = vld [vmem:[%s1 + $0x190] sm:$0xff]
    %v143 = vld [vmem:[%s1 + $0x198] sm:$0xff]
    %v144 = vld [vmem:[%s1 + $0x1a0] sm:$0xff]
    %v145 = vld [vmem:[%s1 + $0x1a8] sm:$0xff]
    %v146 = vld [vmem:[%s1 + $0x1b0] sm:$0xff]
    %v147 = vld [vmem:[%s1 + $0x1b8] sm:$0xff]
    %v148 = vld [vmem:[%s1 + $0x1c0] sm:$0xff]
    %v149 = vld [vmem:[%s1 + $0x1c8] sm:$0xff]
    %v150 = vld [vmem:[%s1 + $0x1d0] sm:$0xff]
    %v151 = vld [vmem:[%s1 + $0x1d8] sm:$0xff]
    %v152 = vld [vmem:[%s1 + $0x1e0] sm:$0xff]
    %v153 = vld [vmem:[%s1 + $0x1e8] sm:$0xff]
    %v154 = vld [vmem:[%s1 + $0x1f0] sm:$0xff]
    %v155 = vld [vmem:[%s1 + $0x1f8] sm:$0xff]
    %v156 = vld [vmem:[%s1 + $0x200] sm:$0xff]
    %v157 = vld [vmem:[%s1 + $0x208] sm:$0xff]
    %v158 = vld [vmem:[%s1 + $0x210] sm:$0xff]
    %v159 = vld [vmem:[%s1 + $0x218] sm:$0xff]
    %v160 = vld [vmem:[%s1 + $0x220] sm:$0xff]
    %v161 = vld [vmem:[%s1 + $0x228] sm:$0xff]
    %v162 = vld [vmem:[%s1 + $0x230] sm:$0xff]
    %v163 = vld [vmem:[%s1 + $0x238] sm:$0xff]
    %v164 = vld [vmem:[%s1 + $0x240] sm:$0xff]
    %v165 = vld [vmem:[%s1 + $0x248] sm:$0xff]
    %v166 = vld [vmem:[%s1 + $0x250] sm:$0xff]
    %v167 = vld [vmem:[%s1 + $0x258] sm:$0xff]
    %v168 = vld [vmem:[%s1 + $0x260] sm:$0xff]
    %v169 = vld [vmem:[%s1 + $0x268] sm:$0xff]
    %v170 = vld [vmem:[%s1 + $0x270] sm:$0xff]
    %v171 = vld [vmem:[%s1 + $0x278] sm:$0xff]
    %v172 = vld [vmem:[%s1 + $0x280] sm:$0xff]
    %v173 = vld [vmem:[%s1 + $0x288] sm:$0xff]
    %v174 = vld [vmem:[%s1 + $0x290] sm:$0xff]
    %v175 = vld [vmem:[%s1 + $0x298] sm:$0xff]
    %v176 = vld [vmem:[%s1 + $0x2a0] sm:$0xff]
    %v177 = vld [vmem:[%s1 + $0x2a8] sm:$0xff]
    %v178 = vld [vmem:[%s1 + $0x2b0] sm:$0xff]
    %v179 = vld [vmem:[%s1 + $0x2b8] sm:$0xff]
    %v180 = vld [vmem:[%s1 + $0x2c0] sm:$0xff]
    %v181 = vld [vmem:[%s1 + $0x2c8] sm:$0xff]
    %v182 = vld [vmem:[%s1 + $0x2d0] sm:$0xff]
    %v183 = vld [vmem:[%s1 + $0x2d8] sm:$0xff]
    %v184 = vld [vmem:[%s1 + $0x2e0] sm:$0xff]
    %v185 = vld [vmem:[%s1 + $0x2e8] sm:$0xff]
    %v186 = vld [vmem:[%s1 + $0x2f0] sm:$0xff]
    %v187 = vld [vmem:[%s1 + $0x2f8] sm:$0xff]
    %v188 = vld [vmem:[%s1 + $0x300] sm:$0xff]
    %v189 = vld [vmem:[%s1 + $0x308] sm:$0xff]
    %v190 = vld [vmem:[%s1 + $0x310] sm:$0xff]
    %v191 = vld [vmem:[%s1 + $0x318] sm:$0xff]
    %v192 = vld [vmem:[%s1 + $0x320] sm:$0xff]
    %v193 = vld [vmem:[%s1 + $0x328] sm:$0xff]
    %v194 = vld [vmem:[%s1 + $0x330] sm:$0xff]
    %v195 = vld [vmem:[%s1 + $0x338] sm:$0xff]
    %v196 = vld [vmem:[%s1 + $0x340] sm:$0xff]
    %v197 = vld [vmem:[%s1 + $0x348] sm:$0xff]
    %v198 = vld [vmem:[%s1 + $0x350] sm:$0xff]
    %v199 = vld [vmem:[%s1 + $0x358] sm:$0xff]
    %v224 = vcombine.low %v45, %v47
    %v225 = vcombine.low %v49, %v51
    %v226 = vcombine.low %v53, %v55
    %v227 = vcombine.low %v57, %v59
    %v229 = vunpack.c.l.s4 1966171168
    %v230 = vunpack.c.0.s8 %v229
    %v231 = vlaneseq
    %v232 = vshrl.u32 %v231, 7
    %v233 = vsub.s32 %v230, %v232
    %v234 = vrot.slane %v224, %v233
    %v236 = vunpack.c.l.s4 1966171168
    %v237 = vunpack.c.0.s8 %v236
    %v238 = vlaneseq
    %v239 = vshrl.u32 %v238, 7
    %v240 = vsub.s32 %v237, %v239
    %v241 = vrot.slane %v225, %v240
    %v243 = vunpack.c.l.s4 1966171168
    %v244 = vunpack.c.0.s8 %v243
    %v245 = vlaneseq
    %v246 = vshrl.u32 %v245, 7
    %v247 = vsub.s32 %v244, %v246
    %v248 = vrot.slane %v226, %v247
    %v250 = vunpack.c.l.s4 1966171168
    %v251 = vunpack.c.0.s8 %v250
    %v252 = vlaneseq
    %v253 = vshrl.u32 %v252, 7
    %v254 = vsub.s32 %v251, %v253
    %v255 = vrot.slane %v227, %v254
    %v256 = vcombine.low %v234, %v241
    %v257 = vcombine.high %v234, %v241
    %v258 = vcombine.low %v248, %v255
    %v259 = vcombine.high %v248, %v255
    %v261 = vunpack.c.l.s4 1966171168
    %v262 = vunpack.c.0.s8 %v261
    %v263 = vlaneseq
    %v264 = vshrl.u32 %v263, 7
    %v265 = vsub.s32 %v262, %v264
    %v266 = vrot.slane %v256, %v265
    %v268 = vunpack.c.l.s4 1966171168
    %v269 = vunpack.c.0.s8 %v268
    %v270 = vlaneseq
    %v271 = vshrl.u32 %v270, 7
    %v272 = vsub.s32 %v269, %v271
    %v273 = vrot.slane %v257, %v272
    %v275 = vunpack.c.l.s4 1966171168
    %v276 = vunpack.c.0.s8 %v275
    %v277 = vlaneseq
    %v278 = vshrl.u32 %v277, 7
    %v279 = vsub.s32 %v276, %v278
    %v280 = vrot.slane %v258, %v279
    %v282 = vunpack.c.l.s4 1966171168
    %v283 = vunpack.c.0.s8 %v282
    %v284 = vlaneseq
    %v285 = vshrl.u32 %v284, 7
    %v286 = vsub.s32 %v283, %v285
    %v287 = vrot.slane %v259, %v286
    %v288 = vcombine.low %v266, %v280
    %v289 = vcombine.low %v273, %v287
    %v290 = vcombine.low %v61, %v63
    %v291 = vcombine.low %v65, %v67
    %v292 = vcombine.low %v69, %v71
    %v293 = vcombine.low %v73, %v75
    %v295 = vunpack.c.l.s4 1966171168
    %v296 = vunpack.c.0.s8 %v295
    %v297 = vlaneseq
    %v298 = vshrl.u32 %v297, 7
    %v299 = vsub.s32 %v296, %v298
    %v300 = vrot.slane %v290, %v299
    %v302 = vunpack.c.l.s4 1966171168
    %v303 = vunpack.c.0.s8 %v302
    %v304 = vlaneseq
    %v305 = vshrl.u32 %v304, 7
    %v306 = vsub.s32 %v303, %v305
    %v307 = vrot.slane %v291, %v306
    %v309 = vunpack.c.l.s4 1966171168
    %v310 = vunpack.c.0.s8 %v309
    %v311 = vlaneseq
    %v312 = vshrl.u32 %v311, 7
    %v313 = vsub.s32 %v310, %v312
    %v314 = vrot.slane %v292, %v313
    %v316 = vunpack.c.l.s4 1966171168
    %v317 = vunpack.c.0.s8 %v316
    %v318 = vlaneseq
    %v319 = vshrl.u32 %v318, 7
    %v320 = vsub.s32 %v317, %v319
    %v321 = vrot.slane %v293, %v320
    %v322 = vcombine.low %v300, %v307
    %v323 = vcombine.high %v300, %v307
    %v324 = vcombine.low %v314, %v321
    %v325 = vcombine.high %v314, %v321
    %v327 = vunpack.c.l.s4 1966171168
    %v328 = vunpack.c.0.s8 %v327
    %v329 = vlaneseq
    %v330 = vshrl.u32 %v329, 7
    %v331 = vsub.s32 %v328, %v330
    %v332 = vrot.slane %v322, %v331
    %v334 = vunpack.c.l.s4 1966171168
    %v335 = vunpack.c.0.s8 %v334
    %v336 = vlaneseq
    %v337 = vshrl.u32 %v336, 7
    %v338 = vsub.s32 %v335, %v337
    %v339 = vrot.slane %v323, %v338
    %v341 = vunpack.c.l.s4 1966171168
    %v342 = vunpack.c.0.s8 %v341
    %v343 = vlaneseq
    %v344 = vshrl.u32 %v343, 7
    %v345 = vsub.s32 %v342, %v344
    %v346 = vrot.slane %v324, %v345
    %v348 = vunpack.c.l.s4 1966171168
    %v349 = vunpack.c.0.s8 %v348
    %v350 = vlaneseq
    %v351 = vshrl.u32 %v350, 7
    %v352 = vsub.s32 %v349, %v351
    %v353 = vrot.slane %v325, %v352
    %v354 = vcombine.low %v332, %v346
    %v355 = vcombine.low %v339, %v353
    %v356 = vcombine.low %v77, %v79
    %v357 = vcombine.low %v81, %v83
    %v358 = vcombine.low %v85, %v87
    %v359 = vcombine.low %v89, %v91
    %v361 = vunpack.c.l.s4 1966171168
    %v362 = vunpack.c.0.s8 %v361
    %v363 = vlaneseq
    %v364 = vshrl.u32 %v363, 7
    %v365 = vsub.s32 %v362, %v364
    %v366 = vrot.slane %v356, %v365
    %v368 = vunpack.c.l.s4 1966171168
    %v369 = vunpack.c.0.s8 %v368
    %v370 = vlaneseq
    %v371 = vshrl.u32 %v370, 7
    %v372 = vsub.s32 %v369, %v371
    %v373 = vrot.slane %v357, %v372
    %v375 = vunpack.c.l.s4 1966171168
    %v376 = vunpack.c.0.s8 %v375
    %v377 = vlaneseq
    %v378 = vshrl.u32 %v377, 7
    %v379 = vsub.s32 %v376, %v378
    %v380 = vrot.slane %v358, %v379
    %v382 = vunpack.c.l.s4 1966171168
    %v383 = vunpack.c.0.s8 %v382
    %v384 = vlaneseq
    %v385 = vshrl.u32 %v384, 7
    %v386 = vsub.s32 %v383, %v385
    %v387 = vrot.slane %v359, %v386
    %v388 = vcombine.low %v366, %v373
    %v389 = vcombine.high %v366, %v373
    %v390 = vcombine.low %v380, %v387
    %v391 = vcombine.high %v380, %v387
    %v393 = vunpack.c.l.s4 1966171168
    %v394 = vunpack.c.0.s8 %v393
    %v395 = vlaneseq
    %v396 = vshrl.u32 %v395, 7
    %v397 = vsub.s32 %v394, %v396
    %v398 = vrot.slane %v388, %v397
    %v400 = vunpack.c.l.s4 1966171168
    %v401 = vunpack.c.0.s8 %v400
    %v402 = vlaneseq
    %v403 = vshrl.u32 %v402, 7
    %v404 = vsub.s32 %v401, %v403
    %v405 = vrot.slane %v389, %v404
    %v407 = vunpack.c.l.s4 1966171168
    %v408 = vunpack.c.0.s8 %v407
    %v409 = vlaneseq
    %v410 = vshrl.u32 %v409, 7
    %v411 = vsub.s32 %v408, %v410
    %v412 = vrot.slane %v390, %v411
    %v414 = vunpack.c.l.s4 1966171168
    %v415 = vunpack.c.0.s8 %v414
    %v416 = vlaneseq
    %v417 = vshrl.u32 %v416, 7
    %v418 = vsub.s32 %v415, %v417
    %v419 = vrot.slane %v391, %v418
    %v420 = vcombine.low %v398, %v412
    %v421 = vcombine.low %v405, %v419
    %vm425 = vcmask 719872
    %v426 = vsel %vm425, %v289, 0
    %v428 = vsel %vm425, %v355, 0
    %v430 = vsel %vm425, %v421, 0
    %432 = vmatprep.subr.mxu0 %v153
    %433 = vmatpush1.msra.mxu0 %v152
    %434 = vmatprep.subr.mxu0 %v149
    %435 = vmatpush1.msra.mxu0 %v148
    %436 = vmatprep.subr.mxu0 %v145
    %437 = vmatpush1.msra.mxu0 %v144
    %438 = vmatprep.subr.mxu0 %v141
    %439 = vmatpush1.msra.mxu0 %v140
    %440 = vmatprep.subr.mxu0 %v137
    %441 = vmatpush1.msra.mxu0 %v136
    %442 = vmatprep.subr.mxu0 %v133
    %443 = vmatpush1.msra.mxu0 %v132
    %444 = vmatprep.subr.mxu0 %v129
    %445 = vmatpush1.msra.mxu0 %v128
    %446 = vmatprep.subr.mxu0 %v125
    %447 = vmatpush1.msra.mxu0 %v124
    %448 = vmatprep.subr.mxu0 %v121
    %449 = vmatpush1.msra.mxu0 %v120
    %450 = vmatprep.subr.mxu0 %v117
    %451 = vmatpush1.msra.mxu0 %v116
    %452 = vmatprep.subr.mxu0 %v113
    %453 = vmatpush1.msra.mxu0 %v112
    %454 = vmatprep.subr.mxu0 %v109
    %455 = vmatpush1.msra.mxu0 %v108
    %456 = vmatprep.subr.mxu0 %v105
    %457 = vmatpush1.msra.mxu0 %v104
    %458 = vmatprep.subr.mxu0 %v101
    %459 = vmatpush1.msra.mxu0 %v100
    %460 = vmatprep.subr.mxu0 %v97
    %461 = vmatpush1.msra.mxu0 %v96
    %462 = vmatprep.subr.mxu0 %v93
    %463 = vmatpush1.msra.mxu0 %v92
    %464 = vmatprep.subr.mxu0 0.0
    %465 = vmatpush2.msra.mxu0 0.0
    %466 = vmatprep.subr.mxu0 0.0
    %467 = vmatpush2.msra.mxu0 0.0
    %468 = vmatprep.subr.mxu0 0.0
    %469 = vmatpush2.msra.mxu0 0.0
    %470 = vmatprep.subr.mxu0 0.0
    %471 = vmatpush2.msra.mxu0 0.0
    %472 = vmatprep.subr.mxu0 0.0
    %473 = vmatpush2.msra.mxu0 0.0
    %474 = vmatprep.subr.mxu0 %v197
    %475 = vmatpush2.msra.mxu0 %v196
    %476 = vmatprep.subr.mxu0 %v193
    %477 = vmatpush2.msra.mxu0 %v192
    %478 = vmatprep.subr.mxu0 %v189
    %479 = vmatpush2.msra.mxu0 %v188
    %480 = vmatprep.subr.mxu0 %v185
    %481 = vmatpush2.msra.mxu0 %v184
    %482 = vmatprep.subr.mxu0 %v181
    %483 = vmatpush2.msra.mxu0 %v180
    %484 = vmatprep.subr.mxu0 %v177
    %485 = vmatpush2.msra.mxu0 %v176
    %486 = vmatprep.subr.mxu0 %v173
    %487 = vmatpush2.msra.mxu0 %v172
    %488 = vmatprep.subr.mxu0 %v169
    %489 = vmatpush2.msra.mxu0 %v168
    %490 = vmatprep.subr.mxu0 %v165
    %491 = vmatpush2.msra.mxu0 %v164
    %492 = vmatprep.subr.mxu0 %v161
    %493 = vmatpush2.msra.mxu0 %v160
    %494 = vmatprep.subr.mxu0 %v157
    %495 = vmatpush2.msra.mxu0 %v156
    %496 = vmatprep.mubr.f32.mxu0 %v426
    %497 = vmatmul.mubr.f32.gmra.mxu0 %v288
    %v498 = vpop.f32.mrf.mxu0
    %v499 = vadd.f32 %v28, %v498
    %v500 = vpop.f32.mrf.mxu0
    %v501 = vadd.f32 %v32, %v500
    %502 = vmatprep.mubr.f32.mxu0 %v428
    %503 = vmatmul.mubr.f32.gmra.mxu0 %v354
    %v504 = vpop.f32.mrf.mxu0
    %v505 = vadd.f32 %v28, %v504
    %v506 = vpop.f32.mrf.mxu0
    %v507 = vadd.f32 %v32, %v506
    %508 = vmatprep.mubr.f32.mxu0 %v430
    %509 = vmatmul.mubr.f32.gmra.mxu0 %v420
    %v510 = vpop.f32.mrf.mxu0
    %v511 = vadd.f32 %v28, %v510
    %v512 = vpop.f32.mrf.mxu0
    %v513 = vadd.f32 %v32, %v512
    %514 = vdwg.mxu0
    %515 = vmatprep.subr.mxu0 %v155
    %516 = vmatpush1.msra.mxu0 %v154
    %517 = vmatprep.subr.mxu0 %v151
    %518 = vmatpush1.msra.mxu0 %v150
    %519 = vmatprep.subr.mxu0 %v147
    %520 = vmatpush1.msra.mxu0 %v146
    %521 = vmatprep.subr.mxu0 %v143
    %522 = vmatpush1.msra.mxu0 %v142
    %523 = vmatprep.subr.mxu0 %v139
    %524 = vmatpush1.msra.mxu0 %v138
    %525 = vmatprep.subr.mxu0 %v135
    %526 = vmatpush1.msra.mxu0 %v134
    %527 = vmatprep.subr.mxu0 %v131
    %528 = vmatpush1.msra.mxu0 %v130
    %529 = vmatprep.subr.mxu0 %v127
    %530 = vmatpush1.msra.mxu0 %v126
    %531 = vmatprep.subr.mxu0 %v123
    %532 = vmatpush1.msra.mxu0 %v122
    %533 = vmatprep.subr.mxu0 %v119
    %534 = vmatpush1.msra.mxu0 %v118
    %535 = vmatprep.subr.mxu0 %v115
    %536 = vmatpush1.msra.mxu0 %v114
    %537 = vmatprep.subr.mxu0 %v111
    %538 = vmatpush1.msra.mxu0 %v110
    %539 = vmatprep.subr.mxu0 %v107
    %540 = vmatpush1.msra.mxu0 %v106
    %541 = vmatprep.subr.mxu0 %v103
    %542 = vmatpush1.msra.mxu0 %v102
    %543 = vmatprep.subr.mxu0 %v99
    %544 = vmatpush1.msra.mxu0 %v98
    %545 = vmatprep.subr.mxu0 %v95
    %546 = vmatpush1.msra.mxu0 %v94
    %547 = vmatprep.subr.mxu0 0.0
    %548 = vmatpush2.msra.mxu0 0.0
    %549 = vmatprep.subr.mxu0 0.0
    %550 = vmatpush2.msra.mxu0 0.0
    %551 = vmatprep.subr.mxu0 0.0
    %552 = vmatpush2.msra.mxu0 0.0
    %553 = vmatprep.subr.mxu0 0.0
    %554 = vmatpush2.msra.mxu0 0.0
    %555 = vmatprep.subr.mxu0 0.0
    %556 = vmatpush2.msra.mxu0 0.0
    %557 = vmatprep.subr.mxu0 %v199
    %558 = vmatpush2.msra.mxu0 %v198
    %559 = vmatprep.subr.mxu0 %v195
    %560 = vmatpush2.msra.mxu0 %v194
    %561 = vmatprep.subr.mxu0 %v191
    %562 = vmatpush2.msra.mxu0 %v190
    %563 = vmatprep.subr.mxu0 %v187
    %564 = vmatpush2.msra.mxu0 %v186
    %565 = vmatprep.subr.mxu0 %v183
    %566 = vmatpush2.msra.mxu0 %v182
    %567 = vmatprep.subr.mxu0 %v179
    %568 = vmatpush2.msra.mxu0 %v178
    %569 = vmatprep.subr.mxu0 %v175
    %570 = vmatpush2.msra.mxu0 %v174
    %571 = vmatprep.subr.mxu0 %v171
    %572 = vmatpush2.msra.mxu0 %v170
    %573 = vmatprep.subr.mxu0 %v167
    %574 = vmatpush2.msra.mxu0 %v166
    %575 = vmatprep.subr.mxu0 %v163
    %576 = vmatpush2.msra.mxu0 %v162
    %577 = vmatprep.subr.mxu0 %v159
    %578 = vmatpush2.msra.mxu0 %v158
    %579 = vmatprep.mubr.f32.mxu0 %v426
    %580 = vmatmul.mubr.f32.gmra.mxu0 %v288
    %v581 = vpop.f32.mrf.mxu0
    %v582 = vadd.f32 %v36, %v581
    %v583 = vpop.f32.mrf.mxu0
    %v584 = vadd.f32 %v40, %v583
    %585 = vmatprep.mubr.f32.mxu0 %v428
    %586 = vmatmul.mubr.f32.gmra.mxu0 %v354
    %v587 = vpop.f32.mrf.mxu0
    %v588 = vadd.f32 %v36, %v587
    %v589 = vpop.f32.mrf.mxu0
    %v590 = vadd.f32 %v40, %v589
    %591 = vmatprep.mubr.f32.mxu0 %v430
    %592 = vmatmul.mubr.f32.gmra.mxu0 %v420
    %v593 = vpop.f32.mrf.mxu0
    %v594 = vadd.f32 %v36, %v593
    %v595 = vpop.f32.mrf.mxu0
    %v596 = vadd.f32 %v40, %v595
    %597 = vdwg.mxu0
    %v598 = vmax.f32 %v499, 0.0
    %v599 = vmax.f32 %v501, 0.0
    %v600 = vmax.f32 %v582, 0.0
    %v601 = vmax.f32 %v584, 0.0
    %v602 = vmax.f32 %v505, 0.0
    %v603 = vmax.f32 %v507, 0.0
    %v604 = vmax.f32 %v588, 0.0
    %v605 = vmax.f32 %v590, 0.0
    %v606 = vmax.f32 %v511, 0.0
    %v607 = vmax.f32 %v513, 0.0
    %v608 = vmax.f32 %v594, 0.0
    %v609 = vmax.f32 %v596, 0.0
    %v610 = vadd.f32 %v598, 0.0
    %v611 = vadd.f32 %v599, 0.0
    %v612 = vadd.f32 %v600, 0.0
    %v613 = vadd.f32 %v601, 0.0
    %v614 = vadd.f32 %v602, 0.0
    %v615 = vadd.f32 %v603, 0.0
    %v616 = vadd.f32 %v604, 0.0
    %v617 = vadd.f32 %v605, 0.0
    %v618 = vadd.f32 %v606, 0.0
    %v619 = vadd.f32 %v607, 0.0
    %v620 = vadd.f32 %v608, 0.0
    %v621 = vadd.f32 %v609, 0.0
    %s622 = scalar_lea.vmem %s0, 1
    %v623 = vld [vmem:[%s622] ss:$8 sm:$0x3]
    %s624 = scalar_lea.vmem %s0, 33
    %v625 = vld [vmem:[%s624] ss:$8 sm:$0x3]
    %s626 = scalar_lea.vmem %s0, 65
    %v627 = vld [vmem:[%s626] ss:$8 sm:$0x3]
    %s628 = scalar_lea.vmem %s0, 97
    %v629 = vld [vmem:[%s628] ss:$8 sm:$0x3]
    %s630 = scalar_lea.vmem %s0, 129
    %v631 = vld [vmem:[%s630] ss:$8 sm:$0x3]
    %s632 = scalar_lea.vmem %s0, 161
    %v633 = vld [vmem:[%s632] ss:$8 sm:$0x3]
    %s634 = scalar_lea.vmem %s0, 193
    %v635 = vld [vmem:[%s634] ss:$8 sm:$0x3]
    %s636 = scalar_lea.vmem %s0, 225
    %v637 = vld [vmem:[%s636] ss:$8 sm:$0x3]
    %s638 = scalar_lea.vmem %s0, 257
    %v639 = vld [vmem:[%s638] ss:$8 sm:$0x3]
    %s640 = scalar_lea.vmem %s0, 289
    %v641 = vld [vmem:[%s640] ss:$8 sm:$0x3]
    %s642 = scalar_lea.vmem %s0, 321
    %v643 = vld [vmem:[%s642] ss:$8 sm:$0x3]
    %s644 = scalar_lea.vmem %s0, 353
    %v645 = vld [vmem:[%s644] ss:$8 sm:$0x3]
    %s646 = scalar_lea.vmem %s0, 385
    %v647 = vld [vmem:[%s646] ss:$8 sm:$0x3]
    %s648 = scalar_lea.vmem %s0, 417
    %v649 = vld [vmem:[%s648] ss:$8 sm:$0x3]
    %s650 = scalar_lea.vmem %s0, 449
    %v651 = vld [vmem:[%s650] ss:$8 sm:$0x3]
    %s652 = scalar_lea.vmem %s0, 481
    %v653 = vld [vmem:[%s652] ss:$8 sm:$0x3]
    %s654 = scalar_lea.vmem %s0, 513
    %v655 = vld [vmem:[%s654] ss:$8 sm:$0x3]
    %s656 = scalar_lea.vmem %s0, 545
    %v657 = vld [vmem:[%s656] ss:$8 sm:$0x3]
    %s658 = scalar_lea.vmem %s0, 577
    %v659 = vld [vmem:[%s658] ss:$8 sm:$0x3]
    %s660 = scalar_lea.vmem %s0, 609
    %v661 = vld [vmem:[%s660] ss:$8 sm:$0x3]
    %s662 = scalar_lea.vmem %s0, 641
    %v663 = vld [vmem:[%s662] ss:$8 sm:$0x3]
    %s664 = scalar_lea.vmem %s0, 673
    %v665 = vld [vmem:[%s664] ss:$8 sm:$0x3]
    %s666 = scalar_lea.vmem %s0, 705
    %v667 = vld [vmem:[%s666] ss:$8 sm:$0x3]
    %s668 = scalar_lea.vmem %s0, 737
    %v669 = vld [vmem:[%s668] ss:$8 sm:$0x3]
    %v694 = vcombine.low %v623, %v625
    %v695 = vcombine.low %v627, %v629
    %v696 = vcombine.low %v631, %v633
    %v697 = vcombine.low %v635, %v637
    %v699 = vunpack.c.l.s4 1966171168
    %v700 = vunpack.c.0.s8 %v699
    %v701 = vlaneseq
    %v702 = vshrl.u32 %v701, 7
    %v703 = vsub.s32 %v700, %v702
    %v704 = vrot.slane %v694, %v703
    %v706 = vunpack.c.l.s4 1966171168
    %v707 = vunpack.c.0.s8 %v706
    %v708 = vlaneseq
    %v709 = vshrl.u32 %v708, 7
    %v710 = vsub.s32 %v707, %v709
    %v711 = vrot.slane %v695, %v710
    %v713 = vunpack.c.l.s4 1966171168
    %v714 = vunpack.c.0.s8 %v713
    %v715 = vlaneseq
    %v716 = vshrl.u32 %v715, 7
    %v717 = vsub.s32 %v714, %v716
    %v718 = vrot.slane %v696, %v717
    %v720 = vunpack.c.l.s4 1966171168
    %v721 = vunpack.c.0.s8 %v720
    %v722 = vlaneseq
    %v723 = vshrl.u32 %v722, 7
    %v724 = vsub.s32 %v721, %v723
    %v725 = vrot.slane %v697, %v724
    %v726 = vcombine.low %v704, %v711
    %v727 = vcombine.high %v704, %v711
    %v728 = vcombine.low %v718, %v725
    %v729 = vcombine.high %v718, %v725
    %v731 = vunpack.c.l.s4 1966171168
    %v732 = vunpack.c.0.s8 %v731
    %v733 = vlaneseq
    %v734 = vshrl.u32 %v733, 7
    %v735 = vsub.s32 %v732, %v734
    %v736 = vrot.slane %v726, %v735
    %v738 = vunpack.c.l.s4 1966171168
    %v739 = vunpack.c.0.s8 %v738
    %v740 = vlaneseq
    %v741 = vshrl.u32 %v740, 7
    %v742 = vsub.s32 %v739, %v741
    %v743 = vrot.slane %v727, %v742
    %v745 = vunpack.c.l.s4 1966171168
    %v746 = vunpack.c.0.s8 %v745
    %v747 = vlaneseq
    %v748 = vshrl.u32 %v747, 7
    %v749 = vsub.s32 %v746, %v748
    %v750 = vrot.slane %v728, %v749
    %v752 = vunpack.c.l.s4 1966171168
    %v753 = vunpack.c.0.s8 %v752
    %v754 = vlaneseq
    %v755 = vshrl.u32 %v754, 7
    %v756 = vsub.s32 %v753, %v755
    %v757 = vrot.slane %v729, %v756
    %v758 = vcombine.low %v736, %v750
    %v759 = vcombine.low %v743, %v757
    %v760 = vcombine.low %v639, %v641
    %v761 = vcombine.low %v643, %v645
    %v762 = vcombine.low %v647, %v649
    %v763 = vcombine.low %v651, %v653
    %v765 = vunpack.c.l.s4 1966171168
    %v766 = vunpack.c.0.s8 %v765
    %v767 = vlaneseq
    %v768 = vshrl.u32 %v767, 7
    %v769 = vsub.s32 %v766, %v768
    %v770 = vrot.slane %v760, %v769
    %v772 = vunpack.c.l.s4 1966171168
    %v773 = vunpack.c.0.s8 %v772
    %v774 = vlaneseq
    %v775 = vshrl.u32 %v774, 7
    %v776 = vsub.s32 %v773, %v775
    %v777 = vrot.slane %v761, %v776
    %v779 = vunpack.c.l.s4 1966171168
    %v780 = vunpack.c.0.s8 %v779
    %v781 = vlaneseq
    %v782 = vshrl.u32 %v781, 7
    %v783 = vsub.s32 %v780, %v782
    %v784 = vrot.slane %v762, %v783
    %v786 = vunpack.c.l.s4 1966171168
    %v787 = vunpack.c.0.s8 %v786
    %v788 = vlaneseq
    %v789 = vshrl.u32 %v788, 7
    %v790 = vsub.s32 %v787, %v789
    %v791 = vrot.slane %v763, %v790
    %v792 = vcombine.low %v770, %v777
    %v793 = vcombine.high %v770, %v777
    %v794 = vcombine.low %v784, %v791
    %v795 = vcombine.high %v784, %v791
    %v797 = vunpack.c.l.s4 1966171168
    %v798 = vunpack.c.0.s8 %v797
    %v799 = vlaneseq
    %v800 = vshrl.u32 %v799, 7
    %v801 = vsub.s32 %v798, %v800
    %v802 = vrot.slane %v792, %v801
    %v804 = vunpack.c.l.s4 1966171168
    %v805 = vunpack.c.0.s8 %v804
    %v806 = vlaneseq
    %v807 = vshrl.u32 %v806, 7
    %v808 = vsub.s32 %v805, %v807
    %v809 = vrot.slane %v793, %v808
    %v811 = vunpack.c.l.s4 1966171168
    %v812 = vunpack.c.0.s8 %v811
    %v813 = vlaneseq
    %v814 = vshrl.u32 %v813, 7
    %v815 = vsub.s32 %v812, %v814
    %v816 = vrot.slane %v794, %v815
    %v818 = vunpack.c.l.s4 1966171168
    %v819 = vunpack.c.0.s8 %v818
    %v820 = vlaneseq
    %v821 = vshrl.u32 %v820, 7
    %v822 = vsub.s32 %v819, %v821
    %v823 = vrot.slane %v795, %v822
    %v824 = vcombine.low %v802, %v816
    %v825 = vcombine.low %v809, %v823
    %v826 = vcombine.low %v655, %v657
    %v827 = vcombine.low %v659, %v661
    %v828 = vcombine.low %v663, %v665
    %v829 = vcombine.low %v667, %v669
    %v831 = vunpack.c.l.s4 1966171168
    %v832 = vunpack.c.0.s8 %v831
    %v833 = vlaneseq
    %v834 = vshrl.u32 %v833, 7
    %v835 = vsub.s32 %v832, %v834
    %v836 = vrot.slane %v826, %v835
    %v838 = vunpack.c.l.s4 1966171168
    %v839 = vunpack.c.0.s8 %v838
    %v840 = vlaneseq
    %v841 = vshrl.u32 %v840, 7
    %v842 = vsub.s32 %v839, %v841
    %v843 = vrot.slane %v827, %v842
    %v845 = vunpack.c.l.s4 1966171168
    %v846 = vunpack.c.0.s8 %v845
    %v847 = vlaneseq
    %v848 = vshrl.u32 %v847, 7
    %v849 = vsub.s32 %v846, %v848
    %v850 = vrot.slane %v828, %v849
    %v852 = vunpack.c.l.s4 1966171168
    %v853 = vunpack.c.0.s8 %v852
    %v854 = vlaneseq
    %v855 = vshrl.u32 %v854, 7
    %v856 = vsub.s32 %v853, %v855
    %v857 = vrot.slane %v829, %v856
    %v858 = vcombine.low %v836, %v843
    %v859 = vcombine.high %v836, %v843
    %v860 = vcombine.low %v850, %v857
    %v861 = vcombine.high %v850, %v857
    %v863 = vunpack.c.l.s4 1966171168
    %v864 = vunpack.c.0.s8 %v863
    %v865 = vlaneseq
    %v866 = vshrl.u32 %v865, 7
    %v867 = vsub.s32 %v864, %v866
    %v868 = vrot.slane %v858, %v867
    %v870 = vunpack.c.l.s4 1966171168
    %v871 = vunpack.c.0.s8 %v870
    %v872 = vlaneseq
    %v873 = vshrl.u32 %v872, 7
    %v874 = vsub.s32 %v871, %v873
    %v875 = vrot.slane %v859, %v874
    %v877 = vunpack.c.l.s4 1966171168
    %v878 = vunpack.c.0.s8 %v877
    %v879 = vlaneseq
    %v880 = vshrl.u32 %v879, 7
    %v881 = vsub.s32 %v878, %v880
    %v882 = vrot.slane %v860, %v881
    %v884 = vunpack.c.l.s4 1966171168
    %v885 = vunpack.c.0.s8 %v884
    %v886 = vlaneseq
    %v887 = vshrl.u32 %v886, 7
    %v888 = vsub.s32 %v885, %v887
    %v889 = vrot.slane %v861, %v888
    %v890 = vcombine.low %v868, %v882
    %v891 = vcombine.low %v875, %v889
    %v895 = vsel %vm425, %v759, 0
    %v897 = vsel %vm425, %v825, 0
    %v899 = vsel %vm425, %v891, 0
    %901 = vmatprep.subr.mxu0 %v153
    %902 = vmatpush1.msra.mxu0 %v152
    %903 = vmatprep.subr.mxu0 %v149
    %904 = vmatpush1.msra.mxu0 %v148
    %905 = vmatprep.subr.mxu0 %v145
    %906 = vmatpush1.msra.mxu0 %v144
    %907 = vmatprep.subr.mxu0 %v141
    %908 = vmatpush1.msra.mxu0 %v140
    %909 = vmatprep.subr.mxu0 %v137
    %910 = vmatpush1.msra.mxu0 %v136
    %911 = vmatprep.subr.mxu0 %v133
    %912 = vmatpush1.msra.mxu0 %v132
    %913 = vmatprep.subr.mxu0 %v129
    %914 = vmatpush1.msra.mxu0 %v128
    %915 = vmatprep.subr.mxu0 %v125
    %916 = vmatpush1.msra.mxu0 %v124
    %917 = vmatprep.subr.mxu0 %v121
    %918 = vmatpush1.msra.mxu0 %v120
    %919 = vmatprep.subr.mxu0 %v117
    %920 = vmatpush1.msra.mxu0 %v116
    %921 = vmatprep.subr.mxu0 %v113
    %922 = vmatpush1.msra.mxu0 %v112
    %923 = vmatprep.subr.mxu0 %v109
    %924 = vmatpush1.msra.mxu0 %v108
    %925 = vmatprep.subr.mxu0 %v105
    %926 = vmatpush1.msra.mxu0 %v104
    %927 = vmatprep.subr.mxu0 %v101
    %928 = vmatpush1.msra.mxu0 %v100
    %929 = vmatprep.subr.mxu0 %v97
    %930 = vmatpush1.msra.mxu0 %v96
    %931 = vmatprep.subr.mxu0 %v93
    %932 = vmatpush1.msra.mxu0 %v92
    %933 = vmatprep.subr.mxu0 0.0
    %934 = vmatpush2.msra.mxu0 0.0
    %935 = vmatprep.subr.mxu0 0.0
    %936 = vmatpush2.msra.mxu0 0.0
    %937 = vmatprep.subr.mxu0 0.0
    %938 = vmatpush2.msra.mxu0 0.0
    %939 = vmatprep.subr.mxu0 0.0
    %940 = vmatpush2.msra.mxu0 0.0
    %941 = vmatprep.subr.mxu0 0.0
    %942 = vmatpush2.msra.mxu0 0.0
    %943 = vmatprep.subr.mxu0 %v197
    %944 = vmatpush2.msra.mxu0 %v196
    %945 = vmatprep.subr.mxu0 %v193
    %946 = vmatpush2.msra.mxu0 %v192
    %947 = vmatprep.subr.mxu0 %v189
    %948 = vmatpush2.msra.mxu0 %v188
    %949 = vmatprep.subr.mxu0 %v185
    %950 = vmatpush2.msra.mxu0 %v184
    %951 = vmatprep.subr.mxu0 %v181
    %952 = vmatpush2.msra.mxu0 %v180
    %953 = vmatprep.subr.mxu0 %v177
    %954 = vmatpush2.msra.mxu0 %v176
    %955 = vmatprep.subr.mxu0 %v173
    %956 = vmatpush2.msra.mxu0 %v172
    %957 = vmatprep.subr.mxu0 %v169
    %958 = vmatpush2.msra.mxu0 %v168
    %959 = vmatprep.subr.mxu0 %v165
    %960 = vmatpush2.msra.mxu0 %v164
    %961 = vmatprep.subr.mxu0 %v161
    %962 = vmatpush2.msra.mxu0 %v160
    %963 = vmatprep.subr.mxu0 %v157
    %964 = vmatpush2.msra.mxu0 %v156
    %965 = vmatprep.mubr.f32.mxu0 %v895
    %966 = vmatmul.mubr.f32.gmra.mxu0 %v758
    %v967 = vpop.f32.mrf.mxu0
    %v968 = vadd.f32 %v28, %v967
    %v969 = vpop.f32.mrf.mxu0
    %v970 = vadd.f32 %v32, %v969
    %971 = vmatprep.mubr.f32.mxu0 %v897
    %972 = vmatmul.mubr.f32.gmra.mxu0 %v824
    %v973 = vpop.f32.mrf.mxu0
    %v974 = vadd.f32 %v28, %v973
    %v975 = vpop.f32.mrf.mxu0
    %v976 = vadd.f32 %v32, %v975
    %977 = vmatprep.mubr.f32.mxu0 %v899
    %978 = vmatmul.mubr.f32.gmra.mxu0 %v890
    %v979 = vpop.f32.mrf.mxu0
    %v980 = vadd.f32 %v28, %v979
    %v981 = vpop.f32.mrf.mxu0
    %v982 = vadd.f32 %v32, %v981
    %983 = vdwg.mxu0
    %984 = vmatprep.subr.mxu0 %v155
    %985 = vmatpush1.msra.mxu0 %v154
    %986 = vmatprep.subr.mxu0 %v151
    %987 = vmatpush1.msra.mxu0 %v150
    %988 = vmatprep.subr.mxu0 %v147
    %989 = vmatpush1.msra.mxu0 %v146
    %990 = vmatprep.subr.mxu0 %v143
    %991 = vmatpush1.msra.mxu0 %v142
    %992 = vmatprep.subr.mxu0 %v139
    %993 = vmatpush1.msra.mxu0 %v138
    %994 = vmatprep.subr.mxu0 %v135
    %995 = vmatpush1.msra.mxu0 %v134
    %996 = vmatprep.subr.mxu0 %v131
    %997 = vmatpush1.msra.mxu0 %v130
    %998 = vmatprep.subr.mxu0 %v127
    %999 = vmatpush1.msra.mxu0 %v126
    %1000 = vmatprep.subr.mxu0 %v123
    %1001 = vmatpush1.msra.mxu0 %v122
    %1002 = vmatprep.subr.mxu0 %v119
    %1003 = vmatpush1.msra.mxu0 %v118
    %1004 = vmatprep.subr.mxu0 %v115
    %1005 = vmatpush1.msra.mxu0 %v114
    %1006 = vmatprep.subr.mxu0 %v111
    %1007 = vmatpush1.msra.mxu0 %v110
    %1008 = vmatprep.subr.mxu0 %v107
    %1009 = vmatpush1.msra.mxu0 %v106
    %1010 = vmatprep.subr.mxu0 %v103
    %1011 = vmatpush1.msra.mxu0 %v102
    %1012 = vmatprep.subr.mxu0 %v99
    %1013 = vmatpush1.msra.mxu0 %v98
    %1014 = vmatprep.subr.mxu0 %v95
    %1015 = vmatpush1.msra.mxu0 %v94
    %1016 = vmatprep.subr.mxu0 0.0
    %1017 = vmatpush2.msra.mxu0 0.0
    %1018 = vmatprep.subr.mxu0 0.0
    %1019 = vmatpush2.msra.mxu0 0.0
    %1020 = vmatprep.subr.mxu0 0.0
    %1021 = vmatpush2.msra.mxu0 0.0
    %1022 = vmatprep.subr.mxu0 0.0
    %1023 = vmatpush2.msra.mxu0 0.0
    %1024 = vmatprep.subr.mxu0 0.0
    %1025 = vmatpush2.msra.mxu0 0.0
    %1026 = vmatprep.subr.mxu0 %v199
    %1027 = vmatpush2.msra.mxu0 %v198
    %1028 = vmatprep.subr.mxu0 %v195
    %1029 = vmatpush2.msra.mxu0 %v194
    %1030 = vmatprep.subr.mxu0 %v191
    %1031 = vmatpush2.msra.mxu0 %v190
    %1032 = vmatprep.subr.mxu0 %v187
    %1033 = vmatpush2.msra.mxu0 %v186
    %1034 = vmatprep.subr.mxu0 %v183
    %1035 = vmatpush2.msra.mxu0 %v182
    %1036 = vmatprep.subr.mxu0 %v179
    %1037 = vmatpush2.msra.mxu0 %v178
    %1038 = vmatprep.subr.mxu0 %v175
    %1039 = vmatpush2.msra.mxu0 %v174
    %1040 = vmatprep.subr.mxu0 %v171
    %1041 = vmatpush2.msra.mxu0 %v170
    %1042 = vmatprep.subr.mxu0 %v167
    %1043 = vmatpush2.msra.mxu0 %v166
    %1044 = vmatprep.subr.mxu0 %v163
    %1045 = vmatpush2.msra.mxu0 %v162
    %1046 = vmatprep.subr.mxu0 %v159
    %1047 = vmatpush2.msra.mxu0 %v158
    %1048 = vmatprep.mubr.f32.mxu0 %v895
    %1049 = vmatmul.mubr.f32.gmra.mxu0 %v758
    %v1050 = vpop.f32.mrf.mxu0
    %v1051 = vadd.f32 %v36, %v1050
    %v1052 = vpop.f32.mrf.mxu0
    %v1053 = vadd.f32 %v40, %v1052
    %1054 = vmatprep.mubr.f32.mxu0 %v897
    %1055 = vmatmul.mubr.f32.gmra.mxu0 %v824
    %v1056 = vpop.f32.mrf.mxu0
    %v1057 = vadd.f32 %v36, %v1056
    %v1058 = vpop.f32.mrf.mxu0
    %v1059 = vadd.f32 %v40, %v1058
    %1060 = vmatprep.mubr.f32.mxu0 %v899
    %1061 = vmatmul.mubr.f32.gmra.mxu0 %v890
    %v1062 = vpop.f32.mrf.mxu0
    %v1063 = vadd.f32 %v36, %v1062
    %v1064 = vpop.f32.mrf.mxu0
    %v1065 = vadd.f32 %v40, %v1064
    %1066 = vdwg.mxu0
    %v1067 = vmax.f32 %v968, 0.0
    %v1068 = vmax.f32 %v970, 0.0
    %v1069 = vmax.f32 %v1051, 0.0
    %v1070 = vmax.f32 %v1053, 0.0
    %v1071 = vmax.f32 %v974, 0.0
    %v1072 = vmax.f32 %v976, 0.0
    %v1073 = vmax.f32 %v1057, 0.0
    %v1074 = vmax.f32 %v1059, 0.0
    %v1075 = vmax.f32 %v980, 0.0
    %v1076 = vmax.f32 %v982, 0.0
    %v1077 = vmax.f32 %v1063, 0.0
    %v1078 = vmax.f32 %v1065, 0.0
    %v1079 = vadd.f32 %v610, %v1067
    %v1080 = vadd.f32 %v611, %v1068
    %v1081 = vadd.f32 %v612, %v1069
    %v1082 = vadd.f32 %v613, %v1070
    %v1083 = vadd.f32 %v614, %v1071
    %v1084 = vadd.f32 %v615, %v1072
    %v1085 = vadd.f32 %v616, %v1073
    %v1086 = vadd.f32 %v617, %v1074
    %v1087 = vadd.f32 %v618, %v1075
    %v1088 = vadd.f32 %v619, %v1076
    %v1089 = vadd.f32 %v620, %v1077
    %v1090 = vadd.f32 %v621, %v1078
    %s1091 = scalar_lea.vmem %s0, 2
    %v1092 = vld [vmem:[%s1091] ss:$8 sm:$0x3]
    %s1093 = scalar_lea.vmem %s0, 34
    %v1094 = vld [vmem:[%s1093] ss:$8 sm:$0x3]
    %s1095 = scalar_lea.vmem %s0, 66
    %v1096 = vld [vmem:[%s1095] ss:$8 sm:$0x3]
    %s1097 = scalar_lea.vmem %s0, 98
    %v1098 = vld [vmem:[%s1097] ss:$8 sm:$0x3]
    %s1099 = scalar_lea.vmem %s0, 130
    %v1100 = vld [vmem:[%s1099] ss:$8 sm:$0x3]
    %s1101 = scalar_lea.vmem %s0, 162
    %v1102 = vld [vmem:[%s1101] ss:$8 sm:$0x3]
    %s1103 = scalar_lea.vmem %s0, 194
    %v1104 = vld [vmem:[%s1103] ss:$8 sm:$0x3]
    %s1105 = scalar_lea.vmem %s0, 226
    %v1106 = vld [vmem:[%s1105] ss:$8 sm:$0x3]
    %s1107 = scalar_lea.vmem %s0, 258
    %v1108 = vld [vmem:[%s1107] ss:$8 sm:$0x3]
    %s1109 = scalar_lea.vmem %s0, 290
    %v1110 = vld [vmem:[%s1109] ss:$8 sm:$0x3]
    %s1111 = scalar_lea.vmem %s0, 322
    %v1112 = vld [vmem:[%s1111] ss:$8 sm:$0x3]
    %s1113 = scalar_lea.vmem %s0, 354
    %v1114 = vld [vmem:[%s1113] ss:$8 sm:$0x3]
    %s1115 = scalar_lea.vmem %s0, 386
    %v1116 = vld [vmem:[%s1115] ss:$8 sm:$0x3]
    %s1117 = scalar_lea.vmem %s0, 418
    %v1118 = vld [vmem:[%s1117] ss:$8 sm:$0x3]
    %s1119 = scalar_lea.vmem %s0, 450
    %v1120 = vld [vmem:[%s1119] ss:$8 sm:$0x3]
    %s1121 = scalar_lea.vmem %s0, 482
    %v1122 = vld [vmem:[%s1121] ss:$8 sm:$0x3]
    %s1123 = scalar_lea.vmem %s0, 514
    %v1124 = vld [vmem:[%s1123] ss:$8 sm:$0x3]
    %s1125 = scalar_lea.vmem %s0, 546
    %v1126 = vld [vmem:[%s1125] ss:$8 sm:$0x3]
    %s1127 = scalar_lea.vmem %s0, 578
    %v1128 = vld [vmem:[%s1127] ss:$8 sm:$0x3]
    %s1129 = scalar_lea.vmem %s0, 610
    %v1130 = vld [vmem:[%s1129] ss:$8 sm:$0x3]
    %s1131 = scalar_lea.vmem %s0, 642
    %v1132 = vld [vmem:[%s1131] ss:$8 sm:$0x3]
    %s1133 = scalar_lea.vmem %s0, 674
    %v1134 = vld [vmem:[%s1133] ss:$8 sm:$0x3]
    %s1135 = scalar_lea.vmem %s0, 706
    %v1136 = vld [vmem:[%s1135] ss:$8 sm:$0x3]
    %s1137 = scalar_lea.vmem %s0, 738
    %v1138 = vld [vmem:[%s1137] ss:$8 sm:$0x3]
    %v1163 = vcombine.low %v1092, %v1094
    %v1164 = vcombine.low %v1096, %v1098
    %v1165 = vcombine.low %v1100, %v1102
    %v1166 = vcombine.low %v1104, %v1106
    %v1168 = vunpack.c.l.s4 1966171168
    %v1169 = vunpack.c.0.s8 %v1168
    %v1170 = vlaneseq
    %v1171 = vshrl.u32 %v1170, 7
    %v1172 = vsub.s32 %v1169, %v1171
    %v1173 = vrot.slane %v1163, %v1172
    %v1175 = vunpack.c.l.s4 1966171168
    %v1176 = vunpack.c.0.s8 %v1175
    %v1177 = vlaneseq
    %v1178 = vshrl.u32 %v1177, 7
    %v1179 = vsub.s32 %v1176, %v1178
    %v1180 = vrot.slane %v1164, %v1179
    %v1182 = vunpack.c.l.s4 1966171168
    %v1183 = vunpack.c.0.s8 %v1182
    %v1184 = vlaneseq
    %v1185 = vshrl.u32 %v1184, 7
    %v1186 = vsub.s32 %v1183, %v1185
    %v1187 = vrot.slane %v1165, %v1186
    %v1189 = vunpack.c.l.s4 1966171168
    %v1190 = vunpack.c.0.s8 %v1189
    %v1191 = vlaneseq
    %v1192 = vshrl.u32 %v1191, 7
    %v1193 = vsub.s32 %v1190, %v1192
    %v1194 = vrot.slane %v1166, %v1193
    %v1195 = vcombine.low %v1173, %v1180
    %v1196 = vcombine.high %v1173, %v1180
    %v1197 = vcombine.low %v1187, %v1194
    %v1198 = vcombine.high %v1187, %v1194
    %v1200 = vunpack.c.l.s4 1966171168
    %v1201 = vunpack.c.0.s8 %v1200
    %v1202 = vlaneseq
    %v1203 = vshrl.u32 %v1202, 7
    %v1204 = vsub.s32 %v1201, %v1203
    %v1205 = vrot.slane %v1195, %v1204
    %v1207 = vunpack.c.l.s4 1966171168
    %v1208 = vunpack.c.0.s8 %v1207
    %v1209 = vlaneseq
    %v1210 = vshrl.u32 %v1209, 7
    %v1211 = vsub.s32 %v1208, %v1210
    %v1212 = vrot.slane %v1196, %v1211
    %v1214 = vunpack.c.l.s4 1966171168
    %v1215 = vunpack.c.0.s8 %v1214
    %v1216 = vlaneseq
    %v1217 = vshrl.u32 %v1216, 7
    %v1218 = vsub.s32 %v1215, %v1217
    %v1219 = vrot.slane %v1197, %v1218
    %v1221 = vunpack.c.l.s4 1966171168
    %v1222 = vunpack.c.0.s8 %v1221
    %v1223 = vlaneseq
    %v1224 = vshrl.u32 %v1223, 7
    %v1225 = vsub.s32 %v1222, %v1224
    %v1226 = vrot.slane %v1198, %v1225
    %v1227 = vcombine.low %v1205, %v1219
    %v1228 = vcombine.low %v1212, %v1226
    %v1229 = vcombine.low %v1108, %v1110
    %v1230 = vcombine.low %v1112, %v1114
    %v1231 = vcombine.low %v1116, %v1118
    %v1232 = vcombine.low %v1120, %v1122
    %v1234 = vunpack.c.l.s4 1966171168
    %v1235 = vunpack.c.0.s8 %v1234
    %v1236 = vlaneseq
    %v1237 = vshrl.u32 %v1236, 7
    %v1238 = vsub.s32 %v1235, %v1237
    %v1239 = vrot.slane %v1229, %v1238
    %v1241 = vunpack.c.l.s4 1966171168
    %v1242 = vunpack.c.0.s8 %v1241
    %v1243 = vlaneseq
    %v1244 = vshrl.u32 %v1243, 7
    %v1245 = vsub.s32 %v1242, %v1244
    %v1246 = vrot.slane %v1230, %v1245
    %v1248 = vunpack.c.l.s4 1966171168
    %v1249 = vunpack.c.0.s8 %v1248
    %v1250 = vlaneseq
    %v1251 = vshrl.u32 %v1250, 7
    %v1252 = vsub.s32 %v1249, %v1251
    %v1253 = vrot.slane %v1231, %v1252
    %v1255 = vunpack.c.l.s4 1966171168
    %v1256 = vunpack.c.0.s8 %v1255
    %v1257 = vlaneseq
    %v1258 = vshrl.u32 %v1257, 7
    %v1259 = vsub.s32 %v1256, %v1258
    %v1260 = vrot.slane %v1232, %v1259
    %v1261 = vcombine.low %v1239, %v1246
    %v1262 = vcombine.high %v1239, %v1246
    %v1263 = vcombine.low %v1253, %v1260
    %v1264 = vcombine.high %v1253, %v1260
    %v1266 = vunpack.c.l.s4 1966171168
    %v1267 = vunpack.c.0.s8 %v1266
    %v1268 = vlaneseq
    %v1269 = vshrl.u32 %v1268, 7
    %v1270 = vsub.s32 %v1267, %v1269
    %v1271 = vrot.slane %v1261, %v1270
    %v1273 = vunpack.c.l.s4 1966171168
    %v1274 = vunpack.c.0.s8 %v1273
    %v1275 = vlaneseq
    %v1276 = vshrl.u32 %v1275, 7
    %v1277 = vsub.s32 %v1274, %v1276
    %v1278 = vrot.slane %v1262, %v1277
    %v1280 = vunpack.c.l.s4 1966171168
    %v1281 = vunpack.c.0.s8 %v1280
    %v1282 = vlaneseq
    %v1283 = vshrl.u32 %v1282, 7
    %v1284 = vsub.s32 %v1281, %v1283
    %v1285 = vrot.slane %v1263, %v1284
    %v1287 = vunpack.c.l.s4 1966171168
    %v1288 = vunpack.c.0.s8 %v1287
    %v1289 = vlaneseq
    %v1290 = vshrl.u32 %v1289, 7
    %v1291 = vsub.s32 %v1288, %v1290
    %v1292 = vrot.slane %v1264, %v1291
    %v1293 = vcombine.low %v1271, %v1285
    %v1294 = vcombine.low %v1278, %v1292
    %v1295 = vcombine.low %v1124, %v1126
    %v1296 = vcombine.low %v1128, %v1130
    %v1297 = vcombine.low %v1132, %v1134
    %v1298 = vcombine.low %v1136, %v1138
    %v1300 = vunpack.c.l.s4 1966171168
    %v1301 = vunpack.c.0.s8 %v1300
    %v1302 = vlaneseq
    %v1303 = vshrl.u32 %v1302, 7
    %v1304 = vsub.s32 %v1301, %v1303
    %v1305 = vrot.slane %v1295, %v1304
    %v1307 = vunpack.c.l.s4 1966171168
    %v1308 = vunpack.c.0.s8 %v1307
    %v1309 = vlaneseq
    %v1310 = vshrl.u32 %v1309, 7
    %v1311 = vsub.s32 %v1308, %v1310
    %v1312 = vrot.slane %v1296, %v1311
    %v1314 = vunpack.c.l.s4 1966171168
    %v1315 = vunpack.c.0.s8 %v1314
    %v1316 = vlaneseq
    %v1317 = vshrl.u32 %v1316, 7
    %v1318 = vsub.s32 %v1315, %v1317
    %v1319 = vrot.slane %v1297, %v1318
    %v1321 = vunpack.c.l.s4 1966171168
    %v1322 = vunpack.c.0.s8 %v1321
    %v1323 = vlaneseq
    %v1324 = vshrl.u32 %v1323, 7
    %v1325 = vsub.s32 %v1322, %v1324
    %v1326 = vrot.slane %v1298, %v1325
    %v1327 = vcombine.low %v1305, %v1312
    %v1328 = vcombine.high %v1305, %v1312
    %v1329 = vcombine.low %v1319, %v1326
    %v1330 = vcombine.high %v1319, %v1326
    %v1332 = vunpack.c.l.s4 1966171168
    %v1333 = vunpack.c.0.s8 %v1332
    %v1334 = vlaneseq
    %v1335 = vshrl.u32 %v1334, 7
    %v1336 = vsub.s32 %v1333, %v1335
    %v1337 = vrot.slane %v1327, %v1336
    %v1339 = vunpack.c.l.s4 1966171168
    %v1340 = vunpack.c.0.s8 %v1339
    %v1341 = vlaneseq
    %v1342 = vshrl.u32 %v1341, 7
    %v1343 = vsub.s32 %v1340, %v1342
    %v1344 = vrot.slane %v1328, %v1343
    %v1346 = vunpack.c.l.s4 1966171168
    %v1347 = vunpack.c.0.s8 %v1346
    %v1348 = vlaneseq
    %v1349 = vshrl.u32 %v1348, 7
    %v1350 = vsub.s32 %v1347, %v1349
    %v1351 = vrot.slane %v1329, %v1350
    %v1353 = vunpack.c.l.s4 1966171168
    %v1354 = vunpack.c.0.s8 %v1353
    %v1355 = vlaneseq
    %v1356 = vshrl.u32 %v1355, 7
    %v1357 = vsub.s32 %v1354, %v1356
    %v1358 = vrot.slane %v1330, %v1357
    %v1359 = vcombine.low %v1337, %v1351
    %v1360 = vcombine.low %v1344, %v1358
    %v1364 = vsel %vm425, %v1228, 0
    %v1366 = vsel %vm425, %v1294, 0
    %v1368 = vsel %vm425, %v1360, 0
    %1370 = vmatprep.subr.mxu0 %v153
    %1371 = vmatpush1.msra.mxu0 %v152
    %1372 = vmatprep.subr.mxu0 %v149
    %1373 = vmatpush1.msra.mxu0 %v148
    %1374 = vmatprep.subr.mxu0 %v145
    %1375 = vmatpush1.msra.mxu0 %v144
    %1376 = vmatprep.subr.mxu0 %v141
    %1377 = vmatpush1.msra.mxu0 %v140
    %1378 = vmatprep.subr.mxu0 %v137
    %1379 = vmatpush1.msra.mxu0 %v136
    %1380 = vmatprep.subr.mxu0 %v133
    %1381 = vmatpush1.msra.mxu0 %v132
    %1382 = vmatprep.subr.mxu0 %v129
    %1383 = vmatpush1.msra.mxu0 %v128
    %1384 = vmatprep.subr.mxu0 %v125
    %1385 = vmatpush1.msra.mxu0 %v124
    %1386 = vmatprep.subr.mxu0 %v121
    %1387 = vmatpush1.msra.mxu0 %v120
    %1388 = vmatprep.subr.mxu0 %v117
    %1389 = vmatpush1.msra.mxu0 %v116
    %1390 = vmatprep.subr.mxu0 %v113
    %1391 = vmatpush1.msra.mxu0 %v112
    %1392 = vmatprep.subr.mxu0 %v109
    %1393 = vmatpush1.msra.mxu0 %v108
    %1394 = vmatprep.subr.mxu0 %v105
    %1395 = vmatpush1.msra.mxu0 %v104
    %1396 = vmatprep.subr.mxu0 %v101
    %1397 = vmatpush1.msra.mxu0 %v100
    %1398 = vmatprep.subr.mxu0 %v97
    %1399 = vmatpush1.msra.mxu0 %v96
    %1400 = vmatprep.subr.mxu0 %v93
    %1401 = vmatpush1.msra.mxu0 %v92
    %1402 = vmatprep.subr.mxu0 0.0
    %1403 = vmatpush2.msra.mxu0 0.0
    %1404 = vmatprep.subr.mxu0 0.0
    %1405 = vmatpush2.msra.mxu0 0.0
    %1406 = vmatprep.subr.mxu0 0.0
    %1407 = vmatpush2.msra.mxu0 0.0
    %1408 = vmatprep.subr.mxu0 0.0
    %1409 = vmatpush2.msra.mxu0 0.0
    %1410 = vmatprep.subr.mxu0 0.0
    %1411 = vmatpush2.msra.mxu0 0.0
    %1412 = vmatprep.subr.mxu0 %v197
    %1413 = vmatpush2.msra.mxu0 %v196
    %1414 = vmatprep.subr.mxu0 %v193
    %1415 = vmatpush2.msra.mxu0 %v192
    %1416 = vmatprep.subr.mxu0 %v189
    %1417 = vmatpush2.msra.mxu0 %v188
    %1418 = vmatprep.subr.mxu0 %v185
    %1419 = vmatpush2.msra.mxu0 %v184
    %1420 = vmatprep.subr.mxu0 %v181
    %1421 = vmatpush2.msra.mxu0 %v180
    %1422 = vmatprep.subr.mxu0 %v177
    %1423 = vmatpush2.msra.mxu0 %v176
    %1424 = vmatprep.subr.mxu0 %v173
    %1425 = vmatpush2.msra.mxu0 %v172
    %1426 = vmatprep.subr.mxu0 %v169
    %1427 = vmatpush2.msra.mxu0 %v168
    %1428 = vmatprep.subr.mxu0 %v165
    %1429 = vmatpush2.msra.mxu0 %v164
    %1430 = vmatprep.subr.mxu0 %v161
    %1431 = vmatpush2.msra.mxu0 %v160
    %1432 = vmatprep.subr.mxu0 %v157
    %1433 = vmatpush2.msra.mxu0 %v156
    %1434 = vmatprep.mubr.f32.mxu0 %v1364
    %1435 = vmatmul.mubr.f32.gmra.mxu0 %v1227
    %v1436 = vpop.f32.mrf.mxu0
    %v1437 = vadd.f32 %v28, %v1436
    %v1438 = vpop.f32.mrf.mxu0
    %v1439 = vadd.f32 %v32, %v1438
    %1440 = vmatprep.mubr.f32.mxu0 %v1366
    %1441 = vmatmul.mubr.f32.gmra.mxu0 %v1293
    %v1442 = vpop.f32.mrf.mxu0
    %v1443 = vadd.f32 %v28, %v1442
    %v1444 = vpop.f32.mrf.mxu0
    %v1445 = vadd.f32 %v32, %v1444
    %1446 = vmatprep.mubr.f32.mxu0 %v1368
    %1447 = vmatmul.mubr.f32.gmra.mxu0 %v1359
    %v1448 = vpop.f32.mrf.mxu0
    %v1449 = vadd.f32 %v28, %v1448
    %v1450 = vpop.f32.mrf.mxu0
    %v1451 = vadd.f32 %v32, %v1450
    %1452 = vdwg.mxu0
    %1453 = vmatprep.subr.mxu0 %v155
    %1454 = vmatpush1.msra.mxu0 %v154
    %1455 = vmatprep.subr.mxu0 %v151
    %1456 = vmatpush1.msra.mxu0 %v150
    %1457 = vmatprep.subr.mxu0 %v147
    %1458 = vmatpush1.msra.mxu0 %v146
    %1459 = vmatprep.subr.mxu0 %v143
    %1460 = vmatpush1.msra.mxu0 %v142
    %1461 = vmatprep.subr.mxu0 %v139
    %1462 = vmatpush1.msra.mxu0 %v138
    %1463 = vmatprep.subr.mxu0 %v135
    %1464 = vmatpush1.msra.mxu0 %v134
    %1465 = vmatprep.subr.mxu0 %v131
    %1466 = vmatpush1.msra.mxu0 %v130
    %1467 = vmatprep.subr.mxu0 %v127
    %1468 = vmatpush1.msra.mxu0 %v126
    %1469 = vmatprep.subr.mxu0 %v123
    %1470 = vmatpush1.msra.mxu0 %v122
    %1471 = vmatprep.subr.mxu0 %v119
    %1472 = vmatpush1.msra.mxu0 %v118
    %1473 = vmatprep.subr.mxu0 %v115
    %1474 = vmatpush1.msra.mxu0 %v114
    %1475 = vmatprep.subr.mxu0 %v111
    %1476 = vmatpush1.msra.mxu0 %v110
    %1477 = vmatprep.subr.mxu0 %v107
    %1478 = vmatpush1.msra.mxu0 %v106
    %1479 = vmatprep.subr.mxu0 %v103
    %1480 = vmatpush1.msra.mxu0 %v102
    %1481 = vmatprep.subr.mxu0 %v99
    %1482 = vmatpush1.msra.mxu0 %v98
    %1483 = vmatprep.subr.mxu0 %v95
    %1484 = vmatpush1.msra.mxu0 %v94
    %1485 = vmatprep.subr.mxu0 0.0
    %1486 = vmatpush2.msra.mxu0 0.0
    %1487 = vmatprep.subr.mxu0 0.0
    %1488 = vmatpush2.msra.mxu0 0.0
    %1489 = vmatprep.subr.mxu0 0.0
    %1490 = vmatpush2.msra.mxu0 0.0
    %1491 = vmatprep.subr.mxu0 0.0
    %1492 = vmatpush2.msra.mxu0 0.0
    %1493 = vmatprep.subr.mxu0 0.0
    %1494 = vmatpush2.msra.mxu0 0.0
    %1495 = vmatprep.subr.mxu0 %v199
    %1496 = vmatpush2.msra.mxu0 %v198
    %1497 = vmatprep.subr.mxu0 %v195
    %1498 = vmatpush2.msra.mxu0 %v194
    %1499 = vmatprep.subr.mxu0 %v191
    %1500 = vmatpush2.msra.mxu0 %v190
    %1501 = vmatprep.subr.mxu0 %v187
    %1502 = vmatpush2.msra.mxu0 %v186
    %1503 = vmatprep.subr.mxu0 %v183
    %1504 = vmatpush2.msra.mxu0 %v182
    %1505 = vmatprep.subr.mxu0 %v179
    %1506 = vmatpush2.msra.mxu0 %v178
    %1507 = vmatprep.subr.mxu0 %v175
    %1508 = vmatpush2.msra.mxu0 %v174
    %1509 = vmatprep.subr.mxu0 %v171
    %1510 = vmatpush2.msra.mxu0 %v170
    %1511 = vmatprep.subr.mxu0 %v167
    %1512 = vmatpush2.msra.mxu0 %v166
    %1513 = vmatprep.subr.mxu0 %v163
    %1514 = vmatpush2.msra.mxu0 %v162
    %1515 = vmatprep.subr.mxu0 %v159
    %1516 = vmatpush2.msra.mxu0 %v158
    %1517 = vmatprep.mubr.f32.mxu0 %v1364
    %1518 = vmatmul.mubr.f32.gmra.mxu0 %v1227
    %v1519 = vpop.f32.mrf.mxu0
    %v1520 = vadd.f32 %v36, %v1519
    %v1521 = vpop.f32.mrf.mxu0
    %v1522 = vadd.f32 %v40, %v1521
    %1523 = vmatprep.mubr.f32.mxu0 %v1366
    %1524 = vmatmul.mubr.f32.gmra.mxu0 %v1293
    %v1525 = vpop.f32.mrf.mxu0
    %v1526 = vadd.f32 %v36, %v1525
    %v1527 = vpop.f32.mrf.mxu0
    %v1528 = vadd.f32 %v40, %v1527
    %1529 = vmatprep.mubr.f32.mxu0 %v1368
    %1530 = vmatmul.mubr.f32.gmra.mxu0 %v1359
    %v1531 = vpop.f32.mrf.mxu0
    %v1532 = vadd.f32 %v36, %v1531
    %v1533 = vpop.f32.mrf.mxu0
    %v1534 = vadd.f32 %v40, %v1533
    %1535 = vdwg.mxu0
    %v1536 = vmax.f32 %v1437, 0.0
    %v1537 = vmax.f32 %v1439, 0.0
    %v1538 = vmax.f32 %v1520, 0.0
    %v1539 = vmax.f32 %v1522, 0.0
    %v1540 = vmax.f32 %v1443, 0.0
    %v1541 = vmax.f32 %v1445, 0.0
    %v1542 = vmax.f32 %v1526, 0.0
    %v1543 = vmax.f32 %v1528, 0.0
    %v1544 = vmax.f32 %v1449, 0.0
    %v1545 = vmax.f32 %v1451, 0.0
    %v1546 = vmax.f32 %v1532, 0.0
    %v1547 = vmax.f32 %v1534, 0.0
    %v1548 = vadd.f32 %v1079, %v1536
    %v1549 = vadd.f32 %v1080, %v1537
    %v1550 = vadd.f32 %v1081, %v1538
    %v1551 = vadd.f32 %v1082, %v1539
    %v1552 = vadd.f32 %v1083, %v1540
    %v1553 = vadd.f32 %v1084, %v1541
    %v1554 = vadd.f32 %v1085, %v1542
    %v1555 = vadd.f32 %v1086, %v1543
    %v1556 = vadd.f32 %v1087, %v1544
    %v1557 = vadd.f32 %v1088, %v1545
    %v1558 = vadd.f32 %v1089, %v1546
    %v1559 = vadd.f32 %v1090, %v1547
    %s1560 = scalar_lea.vmem %s0, 3
    %v1561 = vld [vmem:[%s1560] ss:$8 sm:$0x3]
    %s1562 = scalar_lea.vmem %s0, 35
    %v1563 = vld [vmem:[%s1562] ss:$8 sm:$0x3]
    %s1564 = scalar_lea.vmem %s0, 67
    %v1565 = vld [vmem:[%s1564] ss:$8 sm:$0x3]
    %s1566 = scalar_lea.vmem %s0, 99
    %v1567 = vld [vmem:[%s1566] ss:$8 sm:$0x3]
    %s1568 = scalar_lea.vmem %s0, 131
    %v1569 = vld [vmem:[%s1568] ss:$8 sm:$0x3]
    %s1570 = scalar_lea.vmem %s0, 163
    %v1571 = vld [vmem:[%s1570] ss:$8 sm:$0x3]
    %s1572 = scalar_lea.vmem %s0, 195
    %v1573 = vld [vmem:[%s1572] ss:$8 sm:$0x3]
    %s1574 = scalar_lea.vmem %s0, 227
    %v1575 = vld [vmem:[%s1574] ss:$8 sm:$0x3]
    %s1576 = scalar_lea.vmem %s0, 259
    %v1577 = vld [vmem:[%s1576] ss:$8 sm:$0x3]
    %s1578 = scalar_lea.vmem %s0, 291
    %v1579 = vld [vmem:[%s1578] ss:$8 sm:$0x3]
    %s1580 = scalar_lea.vmem %s0, 323
    %v1581 = vld [vmem:[%s1580] ss:$8 sm:$0x3]
    %s1582 = scalar_lea.vmem %s0, 355
    %v1583 = vld [vmem:[%s1582] ss:$8 sm:$0x3]
    %s1584 = scalar_lea.vmem %s0, 387
    %v1585 = vld [vmem:[%s1584] ss:$8 sm:$0x3]
    %s1586 = scalar_lea.vmem %s0, 419
    %v1587 = vld [vmem:[%s1586] ss:$8 sm:$0x3]
    %s1588 = scalar_lea.vmem %s0, 451
    %v1589 = vld [vmem:[%s1588] ss:$8 sm:$0x3]
    %s1590 = scalar_lea.vmem %s0, 483
    %v1591 = vld [vmem:[%s1590] ss:$8 sm:$0x3]
    %s1592 = scalar_lea.vmem %s0, 515
    %v1593 = vld [vmem:[%s1592] ss:$8 sm:$0x3]
    %s1594 = scalar_lea.vmem %s0, 547
    %v1595 = vld [vmem:[%s1594] ss:$8 sm:$0x3]
    %s1596 = scalar_lea.vmem %s0, 579
    %v1597 = vld [vmem:[%s1596] ss:$8 sm:$0x3]
    %s1598 = scalar_lea.vmem %s0, 611
    %v1599 = vld [vmem:[%s1598] ss:$8 sm:$0x3]
    %s1600 = scalar_lea.vmem %s0, 643
    %v1601 = vld [vmem:[%s1600] ss:$8 sm:$0x3]
    %s1602 = scalar_lea.vmem %s0, 675
    %v1603 = vld [vmem:[%s1602] ss:$8 sm:$0x3]
    %s1604 = scalar_lea.vmem %s0, 707
    %v1605 = vld [vmem:[%s1604] ss:$8 sm:$0x3]
    %s1606 = scalar_lea.vmem %s0, 739
    %v1607 = vld [vmem:[%s1606] ss:$8 sm:$0x3]
    %v1632 = vcombine.low %v1561, %v1563
    %v1633 = vcombine.low %v1565, %v1567
    %v1634 = vcombine.low %v1569, %v1571
    %v1635 = vcombine.low %v1573, %v1575
    %v1637 = vunpack.c.l.s4 1966171168
    %v1638 = vunpack.c.0.s8 %v1637
    %v1639 = vlaneseq
    %v1640 = vshrl.u32 %v1639, 7
    %v1641 = vsub.s32 %v1638, %v1640
    %v1642 = vrot.slane %v1632, %v1641
    %v1644 = vunpack.c.l.s4 1966171168
    %v1645 = vunpack.c.0.s8 %v1644
    %v1646 = vlaneseq
    %v1647 = vshrl.u32 %v1646, 7
    %v1648 = vsub.s32 %v1645, %v1647
    %v1649 = vrot.slane %v1633, %v1648
    %v1651 = vunpack.c.l.s4 1966171168
    %v1652 = vunpack.c.0.s8 %v1651
    %v1653 = vlaneseq
    %v1654 = vshrl.u32 %v1653, 7
    %v1655 = vsub.s32 %v1652, %v1654
    %v1656 = vrot.slane %v1634, %v1655
    %v1658 = vunpack.c.l.s4 1966171168
    %v1659 = vunpack.c.0.s8 %v1658
    %v1660 = vlaneseq
    %v1661 = vshrl.u32 %v1660, 7
    %v1662 = vsub.s32 %v1659, %v1661
    %v1663 = vrot.slane %v1635, %v1662
    %v1664 = vcombine.low %v1642, %v1649
    %v1665 = vcombine.high %v1642, %v1649
    %v1666 = vcombine.low %v1656, %v1663
    %v1667 = vcombine.high %v1656, %v1663
    %v1669 = vunpack.c.l.s4 1966171168
    %v1670 = vunpack.c.0.s8 %v1669
    %v1671 = vlaneseq
    %v1672 = vshrl.u32 %v1671, 7
    %v1673 = vsub.s32 %v1670, %v1672
    %v1674 = vrot.slane %v1664, %v1673
    %v1676 = vunpack.c.l.s4 1966171168
    %v1677 = vunpack.c.0.s8 %v1676
    %v1678 = vlaneseq
    %v1679 = vshrl.u32 %v1678, 7
    %v1680 = vsub.s32 %v1677, %v1679
    %v1681 = vrot.slane %v1665, %v1680
    %v1683 = vunpack.c.l.s4 1966171168
    %v1684 = vunpack.c.0.s8 %v1683
    %v1685 = vlaneseq
    %v1686 = vshrl.u32 %v1685, 7
    %v1687 = vsub.s32 %v1684, %v1686
    %v1688 = vrot.slane %v1666, %v1687
    %v1690 = vunpack.c.l.s4 1966171168
    %v1691 = vunpack.c.0.s8 %v1690
    %v1692 = vlaneseq
    %v1693 = vshrl.u32 %v1692, 7
    %v1694 = vsub.s32 %v1691, %v1693
    %v1695 = vrot.slane %v1667, %v1694
    %v1696 = vcombine.low %v1674, %v1688
    %v1697 = vcombine.low %v1681, %v1695
    %v1698 = vcombine.low %v1577, %v1579
    %v1699 = vcombine.low %v1581, %v1583
    %v1700 = vcombine.low %v1585, %v1587
    %v1701 = vcombine.low %v1589, %v1591
    %v1703 = vunpack.c.l.s4 1966171168
    %v1704 = vunpack.c.0.s8 %v1703
    %v1705 = vlaneseq
    %v1706 = vshrl.u32 %v1705, 7
    %v1707 = vsub.s32 %v1704, %v1706
    %v1708 = vrot.slane %v1698, %v1707
    %v1710 = vunpack.c.l.s4 1966171168
    %v1711 = vunpack.c.0.s8 %v1710
    %v1712 = vlaneseq
    %v1713 = vshrl.u32 %v1712, 7
    %v1714 = vsub.s32 %v1711, %v1713
    %v1715 = vrot.slane %v1699, %v1714
    %v1717 = vunpack.c.l.s4 1966171168
    %v1718 = vunpack.c.0.s8 %v1717
    %v1719 = vlaneseq
    %v1720 = vshrl.u32 %v1719, 7
    %v1721 = vsub.s32 %v1718, %v1720
    %v1722 = vrot.slane %v1700, %v1721
    %v1724 = vunpack.c.l.s4 1966171168
    %v1725 = vunpack.c.0.s8 %v1724
    %v1726 = vlaneseq
    %v1727 = vshrl.u32 %v1726, 7
    %v1728 = vsub.s32 %v1725, %v1727
    %v1729 = vrot.slane %v1701, %v1728
    %v1730 = vcombine.low %v1708, %v1715
    %v1731 = vcombine.high %v1708, %v1715
    %v1732 = vcombine.low %v1722, %v1729
    %v1733 = vcombine.high %v1722, %v1729
    %v1735 = vunpack.c.l.s4 1966171168
    %v1736 = vunpack.c.0.s8 %v1735
    %v1737 = vlaneseq
    %v1738 = vshrl.u32 %v1737, 7
    %v1739 = vsub.s32 %v1736, %v1738
    %v1740 = vrot.slane %v1730, %v1739
    %v1742 = vunpack.c.l.s4 1966171168
    %v1743 = vunpack.c.0.s8 %v1742
    %v1744 = vlaneseq
    %v1745 = vshrl.u32 %v1744, 7
    %v1746 = vsub.s32 %v1743, %v1745
    %v1747 = vrot.slane %v1731, %v1746
    %v1749 = vunpack.c.l.s4 1966171168
    %v1750 = vunpack.c.0.s8 %v1749
    %v1751 = vlaneseq
    %v1752 = vshrl.u32 %v1751, 7
    %v1753 = vsub.s32 %v1750, %v1752
    %v1754 = vrot.slane %v1732, %v1753
    %v1756 = vunpack.c.l.s4 1966171168
    %v1757 = vunpack.c.0.s8 %v1756
    %v1758 = vlaneseq
    %v1759 = vshrl.u32 %v1758, 7
    %v1760 = vsub.s32 %v1757, %v1759
    %v1761 = vrot.slane %v1733, %v1760
    %v1762 = vcombine.low %v1740, %v1754
    %v1763 = vcombine.low %v1747, %v1761
    %v1764 = vcombine.low %v1593, %v1595
    %v1765 = vcombine.low %v1597, %v1599
    %v1766 = vcombine.low %v1601, %v1603
    %v1767 = vcombine.low %v1605, %v1607
    %v1769 = vunpack.c.l.s4 1966171168
    %v1770 = vunpack.c.0.s8 %v1769
    %v1771 = vlaneseq
    %v1772 = vshrl.u32 %v1771, 7
    %v1773 = vsub.s32 %v1770, %v1772
    %v1774 = vrot.slane %v1764, %v1773
    %v1776 = vunpack.c.l.s4 1966171168
    %v1777 = vunpack.c.0.s8 %v1776
    %v1778 = vlaneseq
    %v1779 = vshrl.u32 %v1778, 7
    %v1780 = vsub.s32 %v1777, %v1779
    %v1781 = vrot.slane %v1765, %v1780
    %v1783 = vunpack.c.l.s4 1966171168
    %v1784 = vunpack.c.0.s8 %v1783
    %v1785 = vlaneseq
    %v1786 = vshrl.u32 %v1785, 7
    %v1787 = vsub.s32 %v1784, %v1786
    %v1788 = vrot.slane %v1766, %v1787
    %v1790 = vunpack.c.l.s4 1966171168
    %v1791 = vunpack.c.0.s8 %v1790
    %v1792 = vlaneseq
    %v1793 = vshrl.u32 %v1792, 7
    %v1794 = vsub.s32 %v1791, %v1793
    %v1795 = vrot.slane %v1767, %v1794
    %v1796 = vcombine.low %v1774, %v1781
    %v1797 = vcombine.high %v1774, %v1781
    %v1798 = vcombine.low %v1788, %v1795
    %v1799 = vcombine.high %v1788, %v1795
    %v1801 = vunpack.c.l.s4 1966171168
    %v1802 = vunpack.c.0.s8 %v1801
    %v1803 = vlaneseq
    %v1804 = vshrl.u32 %v1803, 7
    %v1805 = vsub.s32 %v1802, %v1804
    %v1806 = vrot.slane %v1796, %v1805
    %v1808 = vunpack.c.l.s4 1966171168
    %v1809 = vunpack.c.0.s8 %v1808
    %v1810 = vlaneseq
    %v1811 = vshrl.u32 %v1810, 7
    %v1812 = vsub.s32 %v1809, %v1811
    %v1813 = vrot.slane %v1797, %v1812
    %v1815 = vunpack.c.l.s4 1966171168
    %v1816 = vunpack.c.0.s8 %v1815
    %v1817 = vlaneseq
    %v1818 = vshrl.u32 %v1817, 7
    %v1819 = vsub.s32 %v1816, %v1818
    %v1820 = vrot.slane %v1798, %v1819
    %v1822 = vunpack.c.l.s4 1966171168
    %v1823 = vunpack.c.0.s8 %v1822
    %v1824 = vlaneseq
    %v1825 = vshrl.u32 %v1824, 7
    %v1826 = vsub.s32 %v1823, %v1825
    %v1827 = vrot.slane %v1799, %v1826
    %v1828 = vcombine.low %v1806, %v1820
    %v1829 = vcombine.low %v1813, %v1827
    %v1833 = vsel %vm425, %v1697, 0
    %v1835 = vsel %vm425, %v1763, 0
    %v1837 = vsel %vm425, %v1829, 0
    %1839 = vmatprep.subr.mxu0 %v153
    %1840 = vmatpush1.msra.mxu0 %v152
    %1841 = vmatprep.subr.mxu0 %v149
    %1842 = vmatpush1.msra.mxu0 %v148
    %1843 = vmatprep.subr.mxu0 %v145
    %1844 = vmatpush1.msra.mxu0 %v144
    %1845 = vmatprep.subr.mxu0 %v141
    %1846 = vmatpush1.msra.mxu0 %v140
    %1847 = vmatprep.subr.mxu0 %v137
    %1848 = vmatpush1.msra.mxu0 %v136
    %1849 = vmatprep.subr.mxu0 %v133
    %1850 = vmatpush1.msra.mxu0 %v132
    %1851 = vmatprep.subr.mxu0 %v129
    %1852 = vmatpush1.msra.mxu0 %v128
    %1853 = vmatprep.subr.mxu0 %v125
    %1854 = vmatpush1.msra.mxu0 %v124
    %1855 = vmatprep.subr.mxu0 %v121
    %1856 = vmatpush1.msra.mxu0 %v120
    %1857 = vmatprep.subr.mxu0 %v117
    %1858 = vmatpush1.msra.mxu0 %v116
    %1859 = vmatprep.subr.mxu0 %v113
    %1860 = vmatpush1.msra.mxu0 %v112
    %1861 = vmatprep.subr.mxu0 %v109
    %1862 = vmatpush1.msra.mxu0 %v108
    %1863 = vmatprep.subr.mxu0 %v105
    %1864 = vmatpush1.msra.mxu0 %v104
    %1865 = vmatprep.subr.mxu0 %v101
    %1866 = vmatpush1.msra.mxu0 %v100
    %1867 = vmatprep.subr.mxu0 %v97
    %1868 = vmatpush1.msra.mxu0 %v96
    %1869 = vmatprep.subr.mxu0 %v93
    %1870 = vmatpush1.msra.mxu0 %v92
    %1871 = vmatprep.subr.mxu0 0.0
    %1872 = vmatpush2.msra.mxu0 0.0
    %1873 = vmatprep.subr.mxu0 0.0
    %1874 = vmatpush2.msra.mxu0 0.0
    %1875 = vmatprep.subr.mxu0 0.0
    %1876 = vmatpush2.msra.mxu0 0.0
    %1877 = vmatprep.subr.mxu0 0.0
    %1878 = vmatpush2.msra.mxu0 0.0
    %1879 = vmatprep.subr.mxu0 0.0
    %1880 = vmatpush2.msra.mxu0 0.0
    %1881 = vmatprep.subr.mxu0 %v197
    %1882 = vmatpush2.msra.mxu0 %v196
    %1883 = vmatprep.subr.mxu0 %v193
    %1884 = vmatpush2.msra.mxu0 %v192
    %1885 = vmatprep.subr.mxu0 %v189
    %1886 = vmatpush2.msra.mxu0 %v188
    %1887 = vmatprep.subr.mxu0 %v185
    %1888 = vmatpush2.msra.mxu0 %v184
    %1889 = vmatprep.subr.mxu0 %v181
    %1890 = vmatpush2.msra.mxu0 %v180
    %1891 = vmatprep.subr.mxu0 %v177
    %1892 = vmatpush2.msra.mxu0 %v176
    %1893 = vmatprep.subr.mxu0 %v173
    %1894 = vmatpush2.msra.mxu0 %v172
    %1895 = vmatprep.subr.mxu0 %v169
    %1896 = vmatpush2.msra.mxu0 %v168
    %1897 = vmatprep.subr.mxu0 %v165
    %1898 = vmatpush2.msra.mxu0 %v164
    %1899 = vmatprep.subr.mxu0 %v161
    %1900 = vmatpush2.msra.mxu0 %v160
    %1901 = vmatprep.subr.mxu0 %v157
    %1902 = vmatpush2.msra.mxu0 %v156
    %1903 = vmatprep.mubr.f32.mxu0 %v1833
    %1904 = vmatmul.mubr.f32.gmra.mxu0 %v1696
    %v1905 = vpop.f32.mrf.mxu0
    %v1906 = vadd.f32 %v28, %v1905
    %v1907 = vpop.f32.mrf.mxu0
    %v1908 = vadd.f32 %v32, %v1907
    %1909 = vmatprep.mubr.f32.mxu0 %v1835
    %1910 = vmatmul.mubr.f32.gmra.mxu0 %v1762
    %v1911 = vpop.f32.mrf.mxu0
    %v1912 = vadd.f32 %v28, %v1911
    %v1913 = vpop.f32.mrf.mxu0
    %v1914 = vadd.f32 %v32, %v1913
    %1915 = vmatprep.mubr.f32.mxu0 %v1837
    %1916 = vmatmul.mubr.f32.gmra.mxu0 %v1828
    %v1917 = vpop.f32.mrf.mxu0
    %v1918 = vadd.f32 %v28, %v1917
    %v1919 = vpop.f32.mrf.mxu0
    %v1920 = vadd.f32 %v32, %v1919
    %1921 = vdwg.mxu0
    %1922 = vmatprep.subr.mxu0 %v155
    %1923 = vmatpush1.msra.mxu0 %v154
    %1924 = vmatprep.subr.mxu0 %v151
    %1925 = vmatpush1.msra.mxu0 %v150
    %1926 = vmatprep.subr.mxu0 %v147
    %1927 = vmatpush1.msra.mxu0 %v146
    %1928 = vmatprep.subr.mxu0 %v143
    %1929 = vmatpush1.msra.mxu0 %v142
    %1930 = vmatprep.subr.mxu0 %v139
    %1931 = vmatpush1.msra.mxu0 %v138
    %1932 = vmatprep.subr.mxu0 %v135
    %1933 = vmatpush1.msra.mxu0 %v134
    %1934 = vmatprep.subr.mxu0 %v131
    %1935 = vmatpush1.msra.mxu0 %v130
    %1936 = vmatprep.subr.mxu0 %v127
    %1937 = vmatpush1.msra.mxu0 %v126
    %1938 = vmatprep.subr.mxu0 %v123
    %1939 = vmatpush1.msra.mxu0 %v122
    %1940 = vmatprep.subr.mxu0 %v119
    %1941 = vmatpush1.msra.mxu0 %v118
    %1942 = vmatprep.subr.mxu0 %v115
    %1943 = vmatpush1.msra.mxu0 %v114
    %1944 = vmatprep.subr.mxu0 %v111
    %1945 = vmatpush1.msra.mxu0 %v110
    %1946 = vmatprep.subr.mxu0 %v107
    %1947 = vmatpush1.msra.mxu0 %v106
    %1948 = vmatprep.subr.mxu0 %v103
    %1949 = vmatpush1.msra.mxu0 %v102
    %1950 = vmatprep.subr.mxu0 %v99
    %1951 = vmatpush1.msra.mxu0 %v98
    %1952 = vmatprep.subr.mxu0 %v95
    %1953 = vmatpush1.msra.mxu0 %v94
    %1954 = vmatprep.subr.mxu0 0.0
    %1955 = vmatpush2.msra.mxu0 0.0
    %1956 = vmatprep.subr.mxu0 0.0
    %1957 = vmatpush2.msra.mxu0 0.0
    %1958 = vmatprep.subr.mxu0 0.0
    %1959 = vmatpush2.msra.mxu0 0.0
    %1960 = vmatprep.subr.mxu0 0.0
    %1961 = vmatpush2.msra.mxu0 0.0
    %1962 = vmatprep.subr.mxu0 0.0
    %1963 = vmatpush2.msra.mxu0 0.0
    %1964 = vmatprep.subr.mxu0 %v199
    %1965 = vmatpush2.msra.mxu0 %v198
    %1966 = vmatprep.subr.mxu0 %v195
    %1967 = vmatpush2.msra.mxu0 %v194
    %1968 = vmatprep.subr.mxu0 %v191
    %1969 = vmatpush2.msra.mxu0 %v190
    %1970 = vmatprep.subr.mxu0 %v187
    %1971 = vmatpush2.msra.mxu0 %v186
    %1972 = vmatprep.subr.mxu0 %v183
    %1973 = vmatpush2.msra.mxu0 %v182
    %1974 = vmatprep.subr.mxu0 %v179
    %1975 = vmatpush2.msra.mxu0 %v178
    %1976 = vmatprep.subr.mxu0 %v175
    %1977 = vmatpush2.msra.mxu0 %v174
    %1978 = vmatprep.subr.mxu0 %v171
    %1979 = vmatpush2.msra.mxu0 %v170
    %1980 = vmatprep.subr.mxu0 %v167
    %1981 = vmatpush2.msra.mxu0 %v166
    %1982 = vmatprep.subr.mxu0 %v163
    %1983 = vmatpush2.msra.mxu0 %v162
    %1984 = vmatprep.subr.mxu0 %v159
    %1985 = vmatpush2.msra.mxu0 %v158
    %1986 = vmatprep.mubr.f32.mxu0 %v1833
    %1987 = vmatmul.mubr.f32.gmra.mxu0 %v1696
    %v1988 = vpop.f32.mrf.mxu0
    %v1989 = vadd.f32 %v36, %v1988
    %v1990 = vpop.f32.mrf.mxu0
    %v1991 = vadd.f32 %v40, %v1990
    %1992 = vmatprep.mubr.f32.mxu0 %v1835
    %1993 = vmatmul.mubr.f32.gmra.mxu0 %v1762
    %v1994 = vpop.f32.mrf.mxu0
    %v1995 = vadd.f32 %v36, %v1994
    %v1996 = vpop.f32.mrf.mxu0
    %v1997 = vadd.f32 %v40, %v1996
    %1998 = vmatprep.mubr.f32.mxu0 %v1837
    %1999 = vmatmul.mubr.f32.gmra.mxu0 %v1828
    %v2000 = vpop.f32.mrf.mxu0
    %v2001 = vadd.f32 %v36, %v2000
    %v2002 = vpop.f32.mrf.mxu0
    %v2003 = vadd.f32 %v40, %v2002
    %2004 = vdwg.mxu0
    %v2005 = vmax.f32 %v1906, 0.0
    %v2006 = vmax.f32 %v1908, 0.0
    %v2007 = vmax.f32 %v1989, 0.0
    %v2008 = vmax.f32 %v1991, 0.0
    %v2009 = vmax.f32 %v1912, 0.0
    %v2010 = vmax.f32 %v1914, 0.0
    %v2011 = vmax.f32 %v1995, 0.0
    %v2012 = vmax.f32 %v1997, 0.0
    %v2013 = vmax.f32 %v1918, 0.0
    %v2014 = vmax.f32 %v1920, 0.0
    %v2015 = vmax.f32 %v2001, 0.0
    %v2016 = vmax.f32 %v2003, 0.0
    %v2017 = vadd.f32 %v1548, %v2005
    %v2018 = vadd.f32 %v1549, %v2006
    %v2019 = vadd.f32 %v1550, %v2007
    %v2020 = vadd.f32 %v1551, %v2008
    %v2021 = vadd.f32 %v1552, %v2009
    %v2022 = vadd.f32 %v1553, %v2010
    %v2023 = vadd.f32 %v1554, %v2011
    %v2024 = vadd.f32 %v1555, %v2012
    %v2025 = vadd.f32 %v1556, %v2013
    %v2026 = vadd.f32 %v1557, %v2014
    %v2027 = vadd.f32 %v1558, %v2015
    %v2028 = vadd.f32 %v1559, %v2016
    %s2029 = scalar_lea.vmem %s0, 4
    %v2030 = vld [vmem:[%s2029] ss:$8 sm:$0x3]
    %s2031 = scalar_lea.vmem %s0, 36
    %v2032 = vld [vmem:[%s2031] ss:$8 sm:$0x3]
    %s2033 = scalar_lea.vmem %s0, 68
    %v2034 = vld [vmem:[%s2033] ss:$8 sm:$0x3]
    %s2035 = scalar_lea.vmem %s0, 100
    %v2036 = vld [vmem:[%s2035] ss:$8 sm:$0x3]
    %s2037 = scalar_lea.vmem %s0, 132
    %v2038 = vld [vmem:[%s2037] ss:$8 sm:$0x3]
    %s2039 = scalar_lea.vmem %s0, 164
    %v2040 = vld [vmem:[%s2039] ss:$8 sm:$0x3]
    %s2041 = scalar_lea.vmem %s0, 196
    %v2042 = vld [vmem:[%s2041] ss:$8 sm:$0x3]
    %s2043 = scalar_lea.vmem %s0, 228
    %v2044 = vld [vmem:[%s2043] ss:$8 sm:$0x3]
    %s2045 = scalar_lea.vmem %s0, 260
    %v2046 = vld [vmem:[%s2045] ss:$8 sm:$0x3]
    %s2047 = scalar_lea.vmem %s0, 292
    %v2048 = vld [vmem:[%s2047] ss:$8 sm:$0x3]
    %s2049 = scalar_lea.vmem %s0, 324
    %v2050 = vld [vmem:[%s2049] ss:$8 sm:$0x3]
    %s2051 = scalar_lea.vmem %s0, 356
    %v2052 = vld [vmem:[%s2051] ss:$8 sm:$0x3]
    %s2053 = scalar_lea.vmem %s0, 388
    %v2054 = vld [vmem:[%s2053] ss:$8 sm:$0x3]
    %s2055 = scalar_lea.vmem %s0, 420
    %v2056 = vld [vmem:[%s2055] ss:$8 sm:$0x3]
    %s2057 = scalar_lea.vmem %s0, 452
    %v2058 = vld [vmem:[%s2057] ss:$8 sm:$0x3]
    %s2059 = scalar_lea.vmem %s0, 484
    %v2060 = vld [vmem:[%s2059] ss:$8 sm:$0x3]
    %s2061 = scalar_lea.vmem %s0, 516
    %v2062 = vld [vmem:[%s2061] ss:$8 sm:$0x3]
    %s2063 = scalar_lea.vmem %s0, 548
    %v2064 = vld [vmem:[%s2063] ss:$8 sm:$0x3]
    %s2065 = scalar_lea.vmem %s0, 580
    %v2066 = vld [vmem:[%s2065] ss:$8 sm:$0x3]
    %s2067 = scalar_lea.vmem %s0, 612
    %v2068 = vld [vmem:[%s2067] ss:$8 sm:$0x3]
    %s2069 = scalar_lea.vmem %s0, 644
    %v2070 = vld [vmem:[%s2069] ss:$8 sm:$0x3]
    %s2071 = scalar_lea.vmem %s0, 676
    %v2072 = vld [vmem:[%s2071] ss:$8 sm:$0x3]
    %s2073 = scalar_lea.vmem %s0, 708
    %v2074 = vld [vmem:[%s2073] ss:$8 sm:$0x3]
    %s2075 = scalar_lea.vmem %s0, 740
    %v2076 = vld [vmem:[%s2075] ss:$8 sm:$0x3]
    %v2101 = vcombine.low %v2030, %v2032
    %v2102 = vcombine.low %v2034, %v2036
    %v2103 = vcombine.low %v2038, %v2040
    %v2104 = vcombine.low %v2042, %v2044
    %v2106 = vunpack.c.l.s4 1966171168
    %v2107 = vunpack.c.0.s8 %v2106
    %v2108 = vlaneseq
    %v2109 = vshrl.u32 %v2108, 7
    %v2110 = vsub.s32 %v2107, %v2109
    %v2111 = vrot.slane %v2101, %v2110
    %v2113 = vunpack.c.l.s4 1966171168
    %v2114 = vunpack.c.0.s8 %v2113
    %v2115 = vlaneseq
    %v2116 = vshrl.u32 %v2115, 7
    %v2117 = vsub.s32 %v2114, %v2116
    %v2118 = vrot.slane %v2102, %v2117
    %v2120 = vunpack.c.l.s4 1966171168
    %v2121 = vunpack.c.0.s8 %v2120
    %v2122 = vlaneseq
    %v2123 = vshrl.u32 %v2122, 7
    %v2124 = vsub.s32 %v2121, %v2123
    %v2125 = vrot.slane %v2103, %v2124
    %v2127 = vunpack.c.l.s4 1966171168
    %v2128 = vunpack.c.0.s8 %v2127
    %v2129 = vlaneseq
    %v2130 = vshrl.u32 %v2129, 7
    %v2131 = vsub.s32 %v2128, %v2130
    %v2132 = vrot.slane %v2104, %v2131
    %v2133 = vcombine.low %v2111, %v2118
    %v2134 = vcombine.high %v2111, %v2118
    %v2135 = vcombine.low %v2125, %v2132
    %v2136 = vcombine.high %v2125, %v2132
    %v2138 = vunpack.c.l.s4 1966171168
    %v2139 = vunpack.c.0.s8 %v2138
    %v2140 = vlaneseq
    %v2141 = vshrl.u32 %v2140, 7
    %v2142 = vsub.s32 %v2139, %v2141
    %v2143 = vrot.slane %v2133, %v2142
    %v2145 = vunpack.c.l.s4 1966171168
    %v2146 = vunpack.c.0.s8 %v2145
    %v2147 = vlaneseq
    %v2148 = vshrl.u32 %v2147, 7
    %v2149 = vsub.s32 %v2146, %v2148
    %v2150 = vrot.slane %v2134, %v2149
    %v2152 = vunpack.c.l.s4 1966171168
    %v2153 = vunpack.c.0.s8 %v2152
    %v2154 = vlaneseq
    %v2155 = vshrl.u32 %v2154, 7
    %v2156 = vsub.s32 %v2153, %v2155
    %v2157 = vrot.slane %v2135, %v2156
    %v2159 = vunpack.c.l.s4 1966171168
    %v2160 = vunpack.c.0.s8 %v2159
    %v2161 = vlaneseq
    %v2162 = vshrl.u32 %v2161, 7
    %v2163 = vsub.s32 %v2160, %v2162
    %v2164 = vrot.slane %v2136, %v2163
    %v2165 = vcombine.low %v2143, %v2157
    %v2166 = vcombine.low %v2150, %v2164
    %v2167 = vcombine.low %v2046, %v2048
    %v2168 = vcombine.low %v2050, %v2052
    %v2169 = vcombine.low %v2054, %v2056
    %v2170 = vcombine.low %v2058, %v2060
    %v2172 = vunpack.c.l.s4 1966171168
    %v2173 = vunpack.c.0.s8 %v2172
    %v2174 = vlaneseq
    %v2175 = vshrl.u32 %v2174, 7
    %v2176 = vsub.s32 %v2173, %v2175
    %v2177 = vrot.slane %v2167, %v2176
    %v2179 = vunpack.c.l.s4 1966171168
    %v2180 = vunpack.c.0.s8 %v2179
    %v2181 = vlaneseq
    %v2182 = vshrl.u32 %v2181, 7
    %v2183 = vsub.s32 %v2180, %v2182
    %v2184 = vrot.slane %v2168, %v2183
    %v2186 = vunpack.c.l.s4 1966171168
    %v2187 = vunpack.c.0.s8 %v2186
    %v2188 = vlaneseq
    %v2189 = vshrl.u32 %v2188, 7
    %v2190 = vsub.s32 %v2187, %v2189
    %v2191 = vrot.slane %v2169, %v2190
    %v2193 = vunpack.c.l.s4 1966171168
    %v2194 = vunpack.c.0.s8 %v2193
    %v2195 = vlaneseq
    %v2196 = vshrl.u32 %v2195, 7
    %v2197 = vsub.s32 %v2194, %v2196
    %v2198 = vrot.slane %v2170, %v2197
    %v2199 = vcombine.low %v2177, %v2184
    %v2200 = vcombine.high %v2177, %v2184
    %v2201 = vcombine.low %v2191, %v2198
    %v2202 = vcombine.high %v2191, %v2198
    %v2204 = vunpack.c.l.s4 1966171168
    %v2205 = vunpack.c.0.s8 %v2204
    %v2206 = vlaneseq
    %v2207 = vshrl.u32 %v2206, 7
    %v2208 = vsub.s32 %v2205, %v2207
    %v2209 = vrot.slane %v2199, %v2208
    %v2211 = vunpack.c.l.s4 1966171168
    %v2212 = vunpack.c.0.s8 %v2211
    %v2213 = vlaneseq
    %v2214 = vshrl.u32 %v2213, 7
    %v2215 = vsub.s32 %v2212, %v2214
    %v2216 = vrot.slane %v2200, %v2215
    %v2218 = vunpack.c.l.s4 1966171168
    %v2219 = vunpack.c.0.s8 %v2218
    %v2220 = vlaneseq
    %v2221 = vshrl.u32 %v2220, 7
    %v2222 = vsub.s32 %v2219, %v2221
    %v2223 = vrot.slane %v2201, %v2222
    %v2225 = vunpack.c.l.s4 1966171168
    %v2226 = vunpack.c.0.s8 %v2225
    %v2227 = vlaneseq
    %v2228 = vshrl.u32 %v2227, 7
    %v2229 = vsub.s32 %v2226, %v2228
    %v2230 = vrot.slane %v2202, %v2229
    %v2231 = vcombine.low %v2209, %v2223
    %v2232 = vcombine.low %v2216, %v2230
    %v2233 = vcombine.low %v2062, %v2064
    %v2234 = vcombine.low %v2066, %v2068
    %v2235 = vcombine.low %v2070, %v2072
    %v2236 = vcombine.low %v2074, %v2076
    %v2238 = vunpack.c.l.s4 1966171168
    %v2239 = vunpack.c.0.s8 %v2238
    %v2240 = vlaneseq
    %v2241 = vshrl.u32 %v2240, 7
    %v2242 = vsub.s32 %v2239, %v2241
    %v2243 = vrot.slane %v2233, %v2242
    %v2245 = vunpack.c.l.s4 1966171168
    %v2246 = vunpack.c.0.s8 %v2245
    %v2247 = vlaneseq
    %v2248 = vshrl.u32 %v2247, 7
    %v2249 = vsub.s32 %v2246, %v2248
    %v2250 = vrot.slane %v2234, %v2249
    %v2252 = vunpack.c.l.s4 1966171168
    %v2253 = vunpack.c.0.s8 %v2252
    %v2254 = vlaneseq
    %v2255 = vshrl.u32 %v2254, 7
    %v2256 = vsub.s32 %v2253, %v2255
    %v2257 = vrot.slane %v2235, %v2256
    %v2259 = vunpack.c.l.s4 1966171168
    %v2260 = vunpack.c.0.s8 %v2259
    %v2261 = vlaneseq
    %v2262 = vshrl.u32 %v2261, 7
    %v2263 = vsub.s32 %v2260, %v2262
    %v2264 = vrot.slane %v2236, %v2263
    %v2265 = vcombine.low %v2243, %v2250
    %v2266 = vcombine.high %v2243, %v2250
    %v2267 = vcombine.low %v2257, %v2264
    %v2268 = vcombine.high %v2257, %v2264
    %v2270 = vunpack.c.l.s4 1966171168
    %v2271 = vunpack.c.0.s8 %v2270
    %v2272 = vlaneseq
    %v2273 = vshrl.u32 %v2272, 7
    %v2274 = vsub.s32 %v2271, %v2273
    %v2275 = vrot.slane %v2265, %v2274
    %v2277 = vunpack.c.l.s4 1966171168
    %v2278 = vunpack.c.0.s8 %v2277
    %v2279 = vlaneseq
    %v2280 = vshrl.u32 %v2279, 7
    %v2281 = vsub.s32 %v2278, %v2280
    %v2282 = vrot.slane %v2266, %v2281
    %v2284 = vunpack.c.l.s4 1966171168
    %v2285 = vunpack.c.0.s8 %v2284
    %v2286 = vlaneseq
    %v2287 = vshrl.u32 %v2286, 7
    %v2288 = vsub.s32 %v2285, %v2287
    %v2289 = vrot.slane %v2267, %v2288
    %v2291 = vunpack.c.l.s4 1966171168
    %v2292 = vunpack.c.0.s8 %v2291
    %v2293 = vlaneseq
    %v2294 = vshrl.u32 %v2293, 7
    %v2295 = vsub.s32 %v2292, %v2294
    %v2296 = vrot.slane %v2268, %v2295
    %v2297 = vcombine.low %v2275, %v2289
    %v2298 = vcombine.low %v2282, %v2296
    %v2302 = vsel %vm425, %v2166, 0
    %v2304 = vsel %vm425, %v2232, 0
    %v2306 = vsel %vm425, %v2298, 0
    %2308 = vmatprep.subr.mxu0 %v153
    %2309 = vmatpush1.msra.mxu0 %v152
    %2310 = vmatprep.subr.mxu0 %v149
    %2311 = vmatpush1.msra.mxu0 %v148
    %2312 = vmatprep.subr.mxu0 %v145
    %2313 = vmatpush1.msra.mxu0 %v144
    %2314 = vmatprep.subr.mxu0 %v141
    %2315 = vmatpush1.msra.mxu0 %v140
    %2316 = vmatprep.subr.mxu0 %v137
    %2317 = vmatpush1.msra.mxu0 %v136
    %2318 = vmatprep.subr.mxu0 %v133
    %2319 = vmatpush1.msra.mxu0 %v132
    %2320 = vmatprep.subr.mxu0 %v129
    %2321 = vmatpush1.msra.mxu0 %v128
    %2322 = vmatprep.subr.mxu0 %v125
    %2323 = vmatpush1.msra.mxu0 %v124
    %2324 = vmatprep.subr.mxu0 %v121
    %2325 = vmatpush1.msra.mxu0 %v120
    %2326 = vmatprep.subr.mxu0 %v117
    %2327 = vmatpush1.msra.mxu0 %v116
    %2328 = vmatprep.subr.mxu0 %v113
    %2329 = vmatpush1.msra.mxu0 %v112
    %2330 = vmatprep.subr.mxu0 %v109
    %2331 = vmatpush1.msra.mxu0 %v108
    %2332 = vmatprep.subr.mxu0 %v105
    %2333 = vmatpush1.msra.mxu0 %v104
    %2334 = vmatprep.subr.mxu0 %v101
    %2335 = vmatpush1.msra.mxu0 %v100
    %2336 = vmatprep.subr.mxu0 %v97
    %2337 = vmatpush1.msra.mxu0 %v96
    %2338 = vmatprep.subr.mxu0 %v93
    %2339 = vmatpush1.msra.mxu0 %v92
    %2340 = vmatprep.subr.mxu0 0.0
    %2341 = vmatpush2.msra.mxu0 0.0
    %2342 = vmatprep.subr.mxu0 0.0
    %2343 = vmatpush2.msra.mxu0 0.0
    %2344 = vmatprep.subr.mxu0 0.0
    %2345 = vmatpush2.msra.mxu0 0.0
    %2346 = vmatprep.subr.mxu0 0.0
    %2347 = vmatpush2.msra.mxu0 0.0
    %2348 = vmatprep.subr.mxu0 0.0
    %2349 = vmatpush2.msra.mxu0 0.0
    %2350 = vmatprep.subr.mxu0 %v197
    %2351 = vmatpush2.msra.mxu0 %v196
    %2352 = vmatprep.subr.mxu0 %v193
    %2353 = vmatpush2.msra.mxu0 %v192
    %2354 = vmatprep.subr.mxu0 %v189
    %2355 = vmatpush2.msra.mxu0 %v188
    %2356 = vmatprep.subr.mxu0 %v185
    %2357 = vmatpush2.msra.mxu0 %v184
    %2358 = vmatprep.subr.mxu0 %v181
    %2359 = vmatpush2.msra.mxu0 %v180
    %2360 = vmatprep.subr.mxu0 %v177
    %2361 = vmatpush2.msra.mxu0 %v176
    %2362 = vmatprep.subr.mxu0 %v173
    %2363 = vmatpush2.msra.mxu0 %v172
    %2364 = vmatprep.subr.mxu0 %v169
    %2365 = vmatpush2.msra.mxu0 %v168
    %2366 = vmatprep.subr.mxu0 %v165
    %2367 = vmatpush2.msra.mxu0 %v164
    %2368 = vmatprep.subr.mxu0 %v161
    %2369 = vmatpush2.msra.mxu0 %v160
    %2370 = vmatprep.subr.mxu0 %v157
    %2371 = vmatpush2.msra.mxu0 %v156
    %2372 = vmatprep.mubr.f32.mxu0 %v2302
    %2373 = vmatmul.mubr.f32.gmra.mxu0 %v2165
    %v2374 = vpop.f32.mrf.mxu0
    %v2375 = vadd.f32 %v28, %v2374
    %v2376 = vpop.f32.mrf.mxu0
    %v2377 = vadd.f32 %v32, %v2376
    %2378 = vmatprep.mubr.f32.mxu0 %v2304
    %2379 = vmatmul.mubr.f32.gmra.mxu0 %v2231
    %v2380 = vpop.f32.mrf.mxu0
    %v2381 = vadd.f32 %v28, %v2380
    %v2382 = vpop.f32.mrf.mxu0
    %v2383 = vadd.f32 %v32, %v2382
    %2384 = vmatprep.mubr.f32.mxu0 %v2306
    %2385 = vmatmul.mubr.f32.gmra.mxu0 %v2297
    %v2386 = vpop.f32.mrf.mxu0
    %v2387 = vadd.f32 %v28, %v2386
    %v2388 = vpop.f32.mrf.mxu0
    %v2389 = vadd.f32 %v32, %v2388
    %2390 = vdwg.mxu0
    %2391 = vmatprep.subr.mxu0 %v155
    %2392 = vmatpush1.msra.mxu0 %v154
    %2393 = vmatprep.subr.mxu0 %v151
    %2394 = vmatpush1.msra.mxu0 %v150
    %2395 = vmatprep.subr.mxu0 %v147
    %2396 = vmatpush1.msra.mxu0 %v146
    %2397 = vmatprep.subr.mxu0 %v143
    %2398 = vmatpush1.msra.mxu0 %v142
    %2399 = vmatprep.subr.mxu0 %v139
    %2400 = vmatpush1.msra.mxu0 %v138
    %2401 = vmatprep.subr.mxu0 %v135
    %2402 = vmatpush1.msra.mxu0 %v134
    %2403 = vmatprep.subr.mxu0 %v131
    %2404 = vmatpush1.msra.mxu0 %v130
    %2405 = vmatprep.subr.mxu0 %v127
    %2406 = vmatpush1.msra.mxu0 %v126
    %2407 = vmatprep.subr.mxu0 %v123
    %2408 = vmatpush1.msra.mxu0 %v122
    %2409 = vmatprep.subr.mxu0 %v119
    %2410 = vmatpush1.msra.mxu0 %v118
    %2411 = vmatprep.subr.mxu0 %v115
    %2412 = vmatpush1.msra.mxu0 %v114
    %2413 = vmatprep.subr.mxu0 %v111
    %2414 = vmatpush1.msra.mxu0 %v110
    %2415 = vmatprep.subr.mxu0 %v107
    %2416 = vmatpush1.msra.mxu0 %v106
    %2417 = vmatprep.subr.mxu0 %v103
    %2418 = vmatpush1.msra.mxu0 %v102
    %2419 = vmatprep.subr.mxu0 %v99
    %2420 = vmatpush1.msra.mxu0 %v98
    %2421 = vmatprep.subr.mxu0 %v95
    %2422 = vmatpush1.msra.mxu0 %v94
    %2423 = vmatprep.subr.mxu0 0.0
    %2424 = vmatpush2.msra.mxu0 0.0
    %2425 = vmatprep.subr.mxu0 0.0
    %2426 = vmatpush2.msra.mxu0 0.0
    %2427 = vmatprep.subr.mxu0 0.0
    %2428 = vmatpush2.msra.mxu0 0.0
    %2429 = vmatprep.subr.mxu0 0.0
    %2430 = vmatpush2.msra.mxu0 0.0
    %2431 = vmatprep.subr.mxu0 0.0
    %2432 = vmatpush2.msra.mxu0 0.0
    %2433 = vmatprep.subr.mxu0 %v199
    %2434 = vmatpush2.msra.mxu0 %v198
    %2435 = vmatprep.subr.mxu0 %v195
    %2436 = vmatpush2.msra.mxu0 %v194
    %2437 = vmatprep.subr.mxu0 %v191
    %2438 = vmatpush2.msra.mxu0 %v190
    %2439 = vmatprep.subr.mxu0 %v187
    %2440 = vmatpush2.msra.mxu0 %v186
    %2441 = vmatprep.subr.mxu0 %v183
    %2442 = vmatpush2.msra.mxu0 %v182
    %2443 = vmatprep.subr.mxu0 %v179
    %2444 = vmatpush2.msra.mxu0 %v178
    %2445 = vmatprep.subr.mxu0 %v175
    %2446 = vmatpush2.msra.mxu0 %v174
    %2447 = vmatprep.subr.mxu0 %v171
    %2448 = vmatpush2.msra.mxu0 %v170
    %2449 = vmatprep.subr.mxu0 %v167
    %2450 = vmatpush2.msra.mxu0 %v166
    %2451 = vmatprep.subr.mxu0 %v163
    %2452 = vmatpush2.msra.mxu0 %v162
    %2453 = vmatprep.subr.mxu0 %v159
    %2454 = vmatpush2.msra.mxu0 %v158
    %2455 = vmatprep.mubr.f32.mxu0 %v2302
    %2456 = vmatmul.mubr.f32.gmra.mxu0 %v2165
    %v2457 = vpop.f32.mrf.mxu0
    %v2458 = vadd.f32 %v36, %v2457
    %v2459 = vpop.f32.mrf.mxu0
    %v2460 = vadd.f32 %v40, %v2459
    %2461 = vmatprep.mubr.f32.mxu0 %v2304
    %2462 = vmatmul.mubr.f32.gmra.mxu0 %v2231
    %v2463 = vpop.f32.mrf.mxu0
    %v2464 = vadd.f32 %v36, %v2463
    %v2465 = vpop.f32.mrf.mxu0
    %v2466 = vadd.f32 %v40, %v2465
    %2467 = vmatprep.mubr.f32.mxu0 %v2306
    %2468 = vmatmul.mubr.f32.gmra.mxu0 %v2297
    %v2469 = vpop.f32.mrf.mxu0
    %v2470 = vadd.f32 %v36, %v2469
    %v2471 = vpop.f32.mrf.mxu0
    %v2472 = vadd.f32 %v40, %v2471
    %2473 = vdwg.mxu0
    %v2474 = vmax.f32 %v2375, 0.0
    %v2475 = vmax.f32 %v2377, 0.0
    %v2476 = vmax.f32 %v2458, 0.0
    %v2477 = vmax.f32 %v2460, 0.0
    %v2478 = vmax.f32 %v2381, 0.0
    %v2479 = vmax.f32 %v2383, 0.0
    %v2480 = vmax.f32 %v2464, 0.0
    %v2481 = vmax.f32 %v2466, 0.0
    %v2482 = vmax.f32 %v2387, 0.0
    %v2483 = vmax.f32 %v2389, 0.0
    %v2484 = vmax.f32 %v2470, 0.0
    %v2485 = vmax.f32 %v2472, 0.0
    %v2486 = vadd.f32 %v2017, %v2474
    %v2487 = vadd.f32 %v2018, %v2475
    %v2488 = vadd.f32 %v2019, %v2476
    %v2489 = vadd.f32 %v2020, %v2477
    %v2490 = vadd.f32 %v2021, %v2478
    %v2491 = vadd.f32 %v2022, %v2479
    %v2492 = vadd.f32 %v2023, %v2480
    %v2493 = vadd.f32 %v2024, %v2481
    %v2494 = vadd.f32 %v2025, %v2482
    %v2495 = vadd.f32 %v2026, %v2483
    %v2496 = vadd.f32 %v2027, %v2484
    %v2497 = vadd.f32 %v2028, %v2485
    %s2498 = scalar_lea.vmem %s0, 5
    %v2499 = vld [vmem:[%s2498] ss:$8 sm:$0x3]
    %s2500 = scalar_lea.vmem %s0, 37
    %v2501 = vld [vmem:[%s2500] ss:$8 sm:$0x3]
    %s2502 = scalar_lea.vmem %s0, 69
    %v2503 = vld [vmem:[%s2502] ss:$8 sm:$0x3]
    %s2504 = scalar_lea.vmem %s0, 101
    %v2505 = vld [vmem:[%s2504] ss:$8 sm:$0x3]
    %s2506 = scalar_lea.vmem %s0, 133
    %v2507 = vld [vmem:[%s2506] ss:$8 sm:$0x3]
    %s2508 = scalar_lea.vmem %s0, 165
    %v2509 = vld [vmem:[%s2508] ss:$8 sm:$0x3]
    %s2510 = scalar_lea.vmem %s0, 197
    %v2511 = vld [vmem:[%s2510] ss:$8 sm:$0x3]
    %s2512 = scalar_lea.vmem %s0, 229
    %v2513 = vld [vmem:[%s2512] ss:$8 sm:$0x3]
    %s2514 = scalar_lea.vmem %s0, 261
    %v2515 = vld [vmem:[%s2514] ss:$8 sm:$0x3]
    %s2516 = scalar_lea.vmem %s0, 293
    %v2517 = vld [vmem:[%s2516] ss:$8 sm:$0x3]
    %s2518 = scalar_lea.vmem %s0, 325
    %v2519 = vld [vmem:[%s2518] ss:$8 sm:$0x3]
    %s2520 = scalar_lea.vmem %s0, 357
    %v2521 = vld [vmem:[%s2520] ss:$8 sm:$0x3]
    %s2522 = scalar_lea.vmem %s0, 389
    %v2523 = vld [vmem:[%s2522] ss:$8 sm:$0x3]
    %s2524 = scalar_lea.vmem %s0, 421
    %v2525 = vld [vmem:[%s2524] ss:$8 sm:$0x3]
    %s2526 = scalar_lea.vmem %s0, 453
    %v2527 = vld [vmem:[%s2526] ss:$8 sm:$0x3]
    %s2528 = scalar_lea.vmem %s0, 485
    %v2529 = vld [vmem:[%s2528] ss:$8 sm:$0x3]
    %s2530 = scalar_lea.vmem %s0, 517
    %v2531 = vld [vmem:[%s2530] ss:$8 sm:$0x3]
    %s2532 = scalar_lea.vmem %s0, 549
    %v2533 = vld [vmem:[%s2532] ss:$8 sm:$0x3]
    %s2534 = scalar_lea.vmem %s0, 581
    %v2535 = vld [vmem:[%s2534] ss:$8 sm:$0x3]
    %s2536 = scalar_lea.vmem %s0, 613
    %v2537 = vld [vmem:[%s2536] ss:$8 sm:$0x3]
    %s2538 = scalar_lea.vmem %s0, 645
    %v2539 = vld [vmem:[%s2538] ss:$8 sm:$0x3]
    %s2540 = scalar_lea.vmem %s0, 677
    %v2541 = vld [vmem:[%s2540] ss:$8 sm:$0x3]
    %s2542 = scalar_lea.vmem %s0, 709
    %v2543 = vld [vmem:[%s2542] ss:$8 sm:$0x3]
    %s2544 = scalar_lea.vmem %s0, 741
    %v2545 = vld [vmem:[%s2544] ss:$8 sm:$0x3]
    %v2570 = vcombine.low %v2499, %v2501
    %v2571 = vcombine.low %v2503, %v2505
    %v2572 = vcombine.low %v2507, %v2509
    %v2573 = vcombine.low %v2511, %v2513
    %v2575 = vunpack.c.l.s4 1966171168
    %v2576 = vunpack.c.0.s8 %v2575
    %v2577 = vlaneseq
    %v2578 = vshrl.u32 %v2577, 7
    %v2579 = vsub.s32 %v2576, %v2578
    %v2580 = vrot.slane %v2570, %v2579
    %v2582 = vunpack.c.l.s4 1966171168
    %v2583 = vunpack.c.0.s8 %v2582
    %v2584 = vlaneseq
    %v2585 = vshrl.u32 %v2584, 7
    %v2586 = vsub.s32 %v2583, %v2585
    %v2587 = vrot.slane %v2571, %v2586
    %v2589 = vunpack.c.l.s4 1966171168
    %v2590 = vunpack.c.0.s8 %v2589
    %v2591 = vlaneseq
    %v2592 = vshrl.u32 %v2591, 7
    %v2593 = vsub.s32 %v2590, %v2592
    %v2594 = vrot.slane %v2572, %v2593
    %v2596 = vunpack.c.l.s4 1966171168
    %v2597 = vunpack.c.0.s8 %v2596
    %v2598 = vlaneseq
    %v2599 = vshrl.u32 %v2598, 7
    %v2600 = vsub.s32 %v2597, %v2599
    %v2601 = vrot.slane %v2573, %v2600
    %v2602 = vcombine.low %v2580, %v2587
    %v2603 = vcombine.high %v2580, %v2587
    %v2604 = vcombine.low %v2594, %v2601
    %v2605 = vcombine.high %v2594, %v2601
    %v2607 = vunpack.c.l.s4 1966171168
    %v2608 = vunpack.c.0.s8 %v2607
    %v2609 = vlaneseq
    %v2610 = vshrl.u32 %v2609, 7
    %v2611 = vsub.s32 %v2608, %v2610
    %v2612 = vrot.slane %v2602, %v2611
    %v2614 = vunpack.c.l.s4 1966171168
    %v2615 = vunpack.c.0.s8 %v2614
    %v2616 = vlaneseq
    %v2617 = vshrl.u32 %v2616, 7
    %v2618 = vsub.s32 %v2615, %v2617
    %v2619 = vrot.slane %v2603, %v2618
    %v2621 = vunpack.c.l.s4 1966171168
    %v2622 = vunpack.c.0.s8 %v2621
    %v2623 = vlaneseq
    %v2624 = vshrl.u32 %v2623, 7
    %v2625 = vsub.s32 %v2622, %v2624
    %v2626 = vrot.slane %v2604, %v2625
    %v2628 = vunpack.c.l.s4 1966171168
    %v2629 = vunpack.c.0.s8 %v2628
    %v2630 = vlaneseq
    %v2631 = vshrl.u32 %v2630, 7
    %v2632 = vsub.s32 %v2629, %v2631
    %v2633 = vrot.slane %v2605, %v2632
    %v2634 = vcombine.low %v2612, %v2626
    %v2635 = vcombine.low %v2619, %v2633
    %v2636 = vcombine.low %v2515, %v2517
    %v2637 = vcombine.low %v2519, %v2521
    %v2638 = vcombine.low %v2523, %v2525
    %v2639 = vcombine.low %v2527, %v2529
    %v2641 = vunpack.c.l.s4 1966171168
    %v2642 = vunpack.c.0.s8 %v2641
    %v2643 = vlaneseq
    %v2644 = vshrl.u32 %v2643, 7
    %v2645 = vsub.s32 %v2642, %v2644
    %v2646 = vrot.slane %v2636, %v2645
    %v2648 = vunpack.c.l.s4 1966171168
    %v2649 = vunpack.c.0.s8 %v2648
    %v2650 = vlaneseq
    %v2651 = vshrl.u32 %v2650, 7
    %v2652 = vsub.s32 %v2649, %v2651
    %v2653 = vrot.slane %v2637, %v2652
    %v2655 = vunpack.c.l.s4 1966171168
    %v2656 = vunpack.c.0.s8 %v2655
    %v2657 = vlaneseq
    %v2658 = vshrl.u32 %v2657, 7
    %v2659 = vsub.s32 %v2656, %v2658
    %v2660 = vrot.slane %v2638, %v2659
    %v2662 = vunpack.c.l.s4 1966171168
    %v2663 = vunpack.c.0.s8 %v2662
    %v2664 = vlaneseq
    %v2665 = vshrl.u32 %v2664, 7
    %v2666 = vsub.s32 %v2663, %v2665
    %v2667 = vrot.slane %v2639, %v2666
    %v2668 = vcombine.low %v2646, %v2653
    %v2669 = vcombine.high %v2646, %v2653
    %v2670 = vcombine.low %v2660, %v2667
    %v2671 = vcombine.high %v2660, %v2667
    %v2673 = vunpack.c.l.s4 1966171168
    %v2674 = vunpack.c.0.s8 %v2673
    %v2675 = vlaneseq
    %v2676 = vshrl.u32 %v2675, 7
    %v2677 = vsub.s32 %v2674, %v2676
    %v2678 = vrot.slane %v2668, %v2677
    %v2680 = vunpack.c.l.s4 1966171168
    %v2681 = vunpack.c.0.s8 %v2680
    %v2682 = vlaneseq
    %v2683 = vshrl.u32 %v2682, 7
    %v2684 = vsub.s32 %v2681, %v2683
    %v2685 = vrot.slane %v2669, %v2684
    %v2687 = vunpack.c.l.s4 1966171168
    %v2688 = vunpack.c.0.s8 %v2687
    %v2689 = vlaneseq
    %v2690 = vshrl.u32 %v2689, 7
    %v2691 = vsub.s32 %v2688, %v2690
    %v2692 = vrot.slane %v2670, %v2691
    %v2694 = vunpack.c.l.s4 1966171168
    %v2695 = vunpack.c.0.s8 %v2694
    %v2696 = vlaneseq
    %v2697 = vshrl.u32 %v2696, 7
    %v2698 = vsub.s32 %v2695, %v2697
    %v2699 = vrot.slane %v2671, %v2698
    %v2700 = vcombine.low %v2678, %v2692
    %v2701 = vcombine.low %v2685, %v2699
    %v2702 = vcombine.low %v2531, %v2533
    %v2703 = vcombine.low %v2535, %v2537
    %v2704 = vcombine.low %v2539, %v2541
    %v2705 = vcombine.low %v2543, %v2545
    %v2707 = vunpack.c.l.s4 1966171168
    %v2708 = vunpack.c.0.s8 %v2707
    %v2709 = vlaneseq
    %v2710 = vshrl.u32 %v2709, 7
    %v2711 = vsub.s32 %v2708, %v2710
    %v2712 = vrot.slane %v2702, %v2711
    %v2714 = vunpack.c.l.s4 1966171168
    %v2715 = vunpack.c.0.s8 %v2714
    %v2716 = vlaneseq
    %v2717 = vshrl.u32 %v2716, 7
    %v2718 = vsub.s32 %v2715, %v2717
    %v2719 = vrot.slane %v2703, %v2718
    %v2721 = vunpack.c.l.s4 1966171168
    %v2722 = vunpack.c.0.s8 %v2721
    %v2723 = vlaneseq
    %v2724 = vshrl.u32 %v2723, 7
    %v2725 = vsub.s32 %v2722, %v2724
    %v2726 = vrot.slane %v2704, %v2725
    %v2728 = vunpack.c.l.s4 1966171168
    %v2729 = vunpack.c.0.s8 %v2728
    %v2730 = vlaneseq
    %v2731 = vshrl.u32 %v2730, 7
    %v2732 = vsub.s32 %v2729, %v2731
    %v2733 = vrot.slane %v2705, %v2732
    %v2734 = vcombine.low %v2712, %v2719
    %v2735 = vcombine.high %v2712, %v2719
    %v2736 = vcombine.low %v2726, %v2733
    %v2737 = vcombine.high %v2726, %v2733
    %v2739 = vunpack.c.l.s4 1966171168
    %v2740 = vunpack.c.0.s8 %v2739
    %v2741 = vlaneseq
    %v2742 = vshrl.u32 %v2741, 7
    %v2743 = vsub.s32 %v2740, %v2742
    %v2744 = vrot.slane %v2734, %v2743
    %v2746 = vunpack.c.l.s4 1966171168
    %v2747 = vunpack.c.0.s8 %v2746
    %v2748 = vlaneseq
    %v2749 = vshrl.u32 %v2748, 7
    %v2750 = vsub.s32 %v2747, %v2749
    %v2751 = vrot.slane %v2735, %v2750
    %v2753 = vunpack.c.l.s4 1966171168
    %v2754 = vunpack.c.0.s8 %v2753
    %v2755 = vlaneseq
    %v2756 = vshrl.u32 %v2755, 7
    %v2757 = vsub.s32 %v2754, %v2756
    %v2758 = vrot.slane %v2736, %v2757
    %v2760 = vunpack.c.l.s4 1966171168
    %v2761 = vunpack.c.0.s8 %v2760
    %v2762 = vlaneseq
    %v2763 = vshrl.u32 %v2762, 7
    %v2764 = vsub.s32 %v2761, %v2763
    %v2765 = vrot.slane %v2737, %v2764
    %v2766 = vcombine.low %v2744, %v2758
    %v2767 = vcombine.low %v2751, %v2765
    %v2771 = vsel %vm425, %v2635, 0
    %v2773 = vsel %vm425, %v2701, 0
    %v2775 = vsel %vm425, %v2767, 0
    %2777 = vmatprep.subr.mxu0 %v153
    %2778 = vmatpush1.msra.mxu0 %v152
    %2779 = vmatprep.subr.mxu0 %v149
    %2780 = vmatpush1.msra.mxu0 %v148
    %2781 = vmatprep.subr.mxu0 %v145
    %2782 = vmatpush1.msra.mxu0 %v144
    %2783 = vmatprep.subr.mxu0 %v141
    %2784 = vmatpush1.msra.mxu0 %v140
    %2785 = vmatprep.subr.mxu0 %v137
    %2786 = vmatpush1.msra.mxu0 %v136
    %2787 = vmatprep.subr.mxu0 %v133
    %2788 = vmatpush1.msra.mxu0 %v132
    %2789 = vmatprep.subr.mxu0 %v129
    %2790 = vmatpush1.msra.mxu0 %v128
    %2791 = vmatprep.subr.mxu0 %v125
    %2792 = vmatpush1.msra.mxu0 %v124
    %2793 = vmatprep.subr.mxu0 %v121
    %2794 = vmatpush1.msra.mxu0 %v120
    %2795 = vmatprep.subr.mxu0 %v117
    %2796 = vmatpush1.msra.mxu0 %v116
    %2797 = vmatprep.subr.mxu0 %v113
    %2798 = vmatpush1.msra.mxu0 %v112
    %2799 = vmatprep.subr.mxu0 %v109
    %2800 = vmatpush1.msra.mxu0 %v108
    %2801 = vmatprep.subr.mxu0 %v105
    %2802 = vmatpush1.msra.mxu0 %v104
    %2803 = vmatprep.subr.mxu0 %v101
    %2804 = vmatpush1.msra.mxu0 %v100
    %2805 = vmatprep.subr.mxu0 %v97
    %2806 = vmatpush1.msra.mxu0 %v96
    %2807 = vmatprep.subr.mxu0 %v93
    %2808 = vmatpush1.msra.mxu0 %v92
    %2809 = vmatprep.subr.mxu0 0.0
    %2810 = vmatpush2.msra.mxu0 0.0
    %2811 = vmatprep.subr.mxu0 0.0
    %2812 = vmatpush2.msra.mxu0 0.0
    %2813 = vmatprep.subr.mxu0 0.0
    %2814 = vmatpush2.msra.mxu0 0.0
    %2815 = vmatprep.subr.mxu0 0.0
    %2816 = vmatpush2.msra.mxu0 0.0
    %2817 = vmatprep.subr.mxu0 0.0
    %2818 = vmatpush2.msra.mxu0 0.0
    %2819 = vmatprep.subr.mxu0 %v197
    %2820 = vmatpush2.msra.mxu0 %v196
    %2821 = vmatprep.subr.mxu0 %v193
    %2822 = vmatpush2.msra.mxu0 %v192
    %2823 = vmatprep.subr.mxu0 %v189
    %2824 = vmatpush2.msra.mxu0 %v188
    %2825 = vmatprep.subr.mxu0 %v185
    %2826 = vmatpush2.msra.mxu0 %v184
    %2827 = vmatprep.subr.mxu0 %v181
    %2828 = vmatpush2.msra.mxu0 %v180
    %2829 = vmatprep.subr.mxu0 %v177
    %2830 = vmatpush2.msra.mxu0 %v176
    %2831 = vmatprep.subr.mxu0 %v173
    %2832 = vmatpush2.msra.mxu0 %v172
    %2833 = vmatprep.subr.mxu0 %v169
    %2834 = vmatpush2.msra.mxu0 %v168
    %2835 = vmatprep.subr.mxu0 %v165
    %2836 = vmatpush2.msra.mxu0 %v164
    %2837 = vmatprep.subr.mxu0 %v161
    %2838 = vmatpush2.msra.mxu0 %v160
    %2839 = vmatprep.subr.mxu0 %v157
    %2840 = vmatpush2.msra.mxu0 %v156
    %2841 = vmatprep.mubr.f32.mxu0 %v2771
    %2842 = vmatmul.mubr.f32.gmra.mxu0 %v2634
    %v2843 = vpop.f32.mrf.mxu0
    %v2844 = vadd.f32 %v28, %v2843
    %v2845 = vpop.f32.mrf.mxu0
    %v2846 = vadd.f32 %v32, %v2845
    %2847 = vmatprep.mubr.f32.mxu0 %v2773
    %2848 = vmatmul.mubr.f32.gmra.mxu0 %v2700
    %v2849 = vpop.f32.mrf.mxu0
    %v2850 = vadd.f32 %v28, %v2849
    %v2851 = vpop.f32.mrf.mxu0
    %v2852 = vadd.f32 %v32, %v2851
    %2853 = vmatprep.mubr.f32.mxu0 %v2775
    %2854 = vmatmul.mubr.f32.gmra.mxu0 %v2766
    %v2855 = vpop.f32.mrf.mxu0
    %v2856 = vadd.f32 %v28, %v2855
    %v2857 = vpop.f32.mrf.mxu0
    %v2858 = vadd.f32 %v32, %v2857
    %2859 = vdwg.mxu0
    %2860 = vmatprep.subr.mxu0 %v155
    %2861 = vmatpush1.msra.mxu0 %v154
    %2862 = vmatprep.subr.mxu0 %v151
    %2863 = vmatpush1.msra.mxu0 %v150
    %2864 = vmatprep.subr.mxu0 %v147
    %2865 = vmatpush1.msra.mxu0 %v146
    %2866 = vmatprep.subr.mxu0 %v143
    %2867 = vmatpush1.msra.mxu0 %v142
    %2868 = vmatprep.subr.mxu0 %v139
    %2869 = vmatpush1.msra.mxu0 %v138
    %2870 = vmatprep.subr.mxu0 %v135
    %2871 = vmatpush1.msra.mxu0 %v134
    %2872 = vmatprep.subr.mxu0 %v131
    %2873 = vmatpush1.msra.mxu0 %v130
    %2874 = vmatprep.subr.mxu0 %v127
    %2875 = vmatpush1.msra.mxu0 %v126
    %2876 = vmatprep.subr.mxu0 %v123
    %2877 = vmatpush1.msra.mxu0 %v122
    %2878 = vmatprep.subr.mxu0 %v119
    %2879 = vmatpush1.msra.mxu0 %v118
    %2880 = vmatprep.subr.mxu0 %v115
    %2881 = vmatpush1.msra.mxu0 %v114
    %2882 = vmatprep.subr.mxu0 %v111
    %2883 = vmatpush1.msra.mxu0 %v110
    %2884 = vmatprep.subr.mxu0 %v107
    %2885 = vmatpush1.msra.mxu0 %v106
    %2886 = vmatprep.subr.mxu0 %v103
    %2887 = vmatpush1.msra.mxu0 %v102
    %2888 = vmatprep.subr.mxu0 %v99
    %2889 = vmatpush1.msra.mxu0 %v98
    %2890 = vmatprep.subr.mxu0 %v95
    %2891 = vmatpush1.msra.mxu0 %v94
    %2892 = vmatprep.subr.mxu0 0.0
    %2893 = vmatpush2.msra.mxu0 0.0
    %2894 = vmatprep.subr.mxu0 0.0
    %2895 = vmatpush2.msra.mxu0 0.0
    %2896 = vmatprep.subr.mxu0 0.0
    %2897 = vmatpush2.msra.mxu0 0.0
    %2898 = vmatprep.subr.mxu0 0.0
    %2899 = vmatpush2.msra.mxu0 0.0
    %2900 = vmatprep.subr.mxu0 0.0
    %2901 = vmatpush2.msra.mxu0 0.0
    %2902 = vmatprep.subr.mxu0 %v199
    %2903 = vmatpush2.msra.mxu0 %v198
    %2904 = vmatprep.subr.mxu0 %v195
    %2905 = vmatpush2.msra.mxu0 %v194
    %2906 = vmatprep.subr.mxu0 %v191
    %2907 = vmatpush2.msra.mxu0 %v190
    %2908 = vmatprep.subr.mxu0 %v187
    %2909 = vmatpush2.msra.mxu0 %v186
    %2910 = vmatprep.subr.mxu0 %v183
    %2911 = vmatpush2.msra.mxu0 %v182
    %2912 = vmatprep.subr.mxu0 %v179
    %2913 = vmatpush2.msra.mxu0 %v178
    %2914 = vmatprep.subr.mxu0 %v175
    %2915 = vmatpush2.msra.mxu0 %v174
    %2916 = vmatprep.subr.mxu0 %v171
    %2917 = vmatpush2.msra.mxu0 %v170
    %2918 = vmatprep.subr.mxu0 %v167
    %2919 = vmatpush2.msra.mxu0 %v166
    %2920 = vmatprep.subr.mxu0 %v163
    %2921 = vmatpush2.msra.mxu0 %v162
    %2922 = vmatprep.subr.mxu0 %v159
    %2923 = vmatpush2.msra.mxu0 %v158
    %2924 = vmatprep.mubr.f32.mxu0 %v2771
    %2925 = vmatmul.mubr.f32.gmra.mxu0 %v2634
    %v2926 = vpop.f32.mrf.mxu0
    %v2927 = vadd.f32 %v36, %v2926
    %v2928 = vpop.f32.mrf.mxu0
    %v2929 = vadd.f32 %v40, %v2928
    %2930 = vmatprep.mubr.f32.mxu0 %v2773
    %2931 = vmatmul.mubr.f32.gmra.mxu0 %v2700
    %v2932 = vpop.f32.mrf.mxu0
    %v2933 = vadd.f32 %v36, %v2932
    %v2934 = vpop.f32.mrf.mxu0
    %v2935 = vadd.f32 %v40, %v2934
    %2936 = vmatprep.mubr.f32.mxu0 %v2775
    %2937 = vmatmul.mubr.f32.gmra.mxu0 %v2766
    %v2938 = vpop.f32.mrf.mxu0
    %v2939 = vadd.f32 %v36, %v2938
    %v2940 = vpop.f32.mrf.mxu0
    %v2941 = vadd.f32 %v40, %v2940
    %2942 = vdwg.mxu0
    %v2943 = vmax.f32 %v2844, 0.0
    %v2944 = vmax.f32 %v2846, 0.0
    %v2945 = vmax.f32 %v2927, 0.0
    %v2946 = vmax.f32 %v2929, 0.0
    %v2947 = vmax.f32 %v2850, 0.0
    %v2948 = vmax.f32 %v2852, 0.0
    %v2949 = vmax.f32 %v2933, 0.0
    %v2950 = vmax.f32 %v2935, 0.0
    %v2951 = vmax.f32 %v2856, 0.0
    %v2952 = vmax.f32 %v2858, 0.0
    %v2953 = vmax.f32 %v2939, 0.0
    %v2954 = vmax.f32 %v2941, 0.0
    %v2955 = vadd.f32 %v2486, %v2943
    %v2956 = vadd.f32 %v2487, %v2944
    %v2957 = vadd.f32 %v2488, %v2945
    %v2958 = vadd.f32 %v2489, %v2946
    %v2959 = vadd.f32 %v2490, %v2947
    %v2960 = vadd.f32 %v2491, %v2948
    %v2961 = vadd.f32 %v2492, %v2949
    %v2962 = vadd.f32 %v2493, %v2950
    %v2963 = vadd.f32 %v2494, %v2951
    %v2964 = vadd.f32 %v2495, %v2952
    %v2965 = vadd.f32 %v2496, %v2953
    %v2966 = vadd.f32 %v2497, %v2954
    %s2967 = scalar_lea.vmem %s0, 6
    %v2968 = vld [vmem:[%s2967] ss:$8 sm:$0x3]
    %s2969 = scalar_lea.vmem %s0, 38
    %v2970 = vld [vmem:[%s2969] ss:$8 sm:$0x3]
    %s2971 = scalar_lea.vmem %s0, 70
    %v2972 = vld [vmem:[%s2971] ss:$8 sm:$0x3]
    %s2973 = scalar_lea.vmem %s0, 102
    %v2974 = vld [vmem:[%s2973] ss:$8 sm:$0x3]
    %s2975 = scalar_lea.vmem %s0, 134
    %v2976 = vld [vmem:[%s2975] ss:$8 sm:$0x3]
    %s2977 = scalar_lea.vmem %s0, 166
    %v2978 = vld [vmem:[%s2977] ss:$8 sm:$0x3]
    %s2979 = scalar_lea.vmem %s0, 198
    %v2980 = vld [vmem:[%s2979] ss:$8 sm:$0x3]
    %s2981 = scalar_lea.vmem %s0, 230
    %v2982 = vld [vmem:[%s2981] ss:$8 sm:$0x3]
    %s2983 = scalar_lea.vmem %s0, 262
    %v2984 = vld [vmem:[%s2983] ss:$8 sm:$0x3]
    %s2985 = scalar_lea.vmem %s0, 294
    %v2986 = vld [vmem:[%s2985] ss:$8 sm:$0x3]
    %s2987 = scalar_lea.vmem %s0, 326
    %v2988 = vld [vmem:[%s2987] ss:$8 sm:$0x3]
    %s2989 = scalar_lea.vmem %s0, 358
    %v2990 = vld [vmem:[%s2989] ss:$8 sm:$0x3]
    %s2991 = scalar_lea.vmem %s0, 390
    %v2992 = vld [vmem:[%s2991] ss:$8 sm:$0x3]
    %s2993 = scalar_lea.vmem %s0, 422
    %v2994 = vld [vmem:[%s2993] ss:$8 sm:$0x3]
    %s2995 = scalar_lea.vmem %s0, 454
    %v2996 = vld [vmem:[%s2995] ss:$8 sm:$0x3]
    %s2997 = scalar_lea.vmem %s0, 486
    %v2998 = vld [vmem:[%s2997] ss:$8 sm:$0x3]
    %s2999 = scalar_lea.vmem %s0, 518
    %v3000 = vld [vmem:[%s2999] ss:$8 sm:$0x3]
    %s3001 = scalar_lea.vmem %s0, 550
    %v3002 = vld [vmem:[%s3001] ss:$8 sm:$0x3]
    %s3003 = scalar_lea.vmem %s0, 582
    %v3004 = vld [vmem:[%s3003] ss:$8 sm:$0x3]
    %s3005 = scalar_lea.vmem %s0, 614
    %v3006 = vld [vmem:[%s3005] ss:$8 sm:$0x3]
    %s3007 = scalar_lea.vmem %s0, 646
    %v3008 = vld [vmem:[%s3007] ss:$8 sm:$0x3]
    %s3009 = scalar_lea.vmem %s0, 678
    %v3010 = vld [vmem:[%s3009] ss:$8 sm:$0x3]
    %s3011 = scalar_lea.vmem %s0, 710
    %v3012 = vld [vmem:[%s3011] ss:$8 sm:$0x3]
    %s3013 = scalar_lea.vmem %s0, 742
    %v3014 = vld [vmem:[%s3013] ss:$8 sm:$0x3]
    %v3039 = vcombine.low %v2968, %v2970
    %v3040 = vcombine.low %v2972, %v2974
    %v3041 = vcombine.low %v2976, %v2978
    %v3042 = vcombine.low %v2980, %v2982
    %v3044 = vunpack.c.l.s4 1966171168
    %v3045 = vunpack.c.0.s8 %v3044
    %v3046 = vlaneseq
    %v3047 = vshrl.u32 %v3046, 7
    %v3048 = vsub.s32 %v3045, %v3047
    %v3049 = vrot.slane %v3039, %v3048
    %v3051 = vunpack.c.l.s4 1966171168
    %v3052 = vunpack.c.0.s8 %v3051
    %v3053 = vlaneseq
    %v3054 = vshrl.u32 %v3053, 7
    %v3055 = vsub.s32 %v3052, %v3054
    %v3056 = vrot.slane %v3040, %v3055
    %v3058 = vunpack.c.l.s4 1966171168
    %v3059 = vunpack.c.0.s8 %v3058
    %v3060 = vlaneseq
    %v3061 = vshrl.u32 %v3060, 7
    %v3062 = vsub.s32 %v3059, %v3061
    %v3063 = vrot.slane %v3041, %v3062
    %v3065 = vunpack.c.l.s4 1966171168
    %v3066 = vunpack.c.0.s8 %v3065
    %v3067 = vlaneseq
    %v3068 = vshrl.u32 %v3067, 7
    %v3069 = vsub.s32 %v3066, %v3068
    %v3070 = vrot.slane %v3042, %v3069
    %v3071 = vcombine.low %v3049, %v3056
    %v3072 = vcombine.high %v3049, %v3056
    %v3073 = vcombine.low %v3063, %v3070
    %v3074 = vcombine.high %v3063, %v3070
    %v3076 = vunpack.c.l.s4 1966171168
    %v3077 = vunpack.c.0.s8 %v3076
    %v3078 = vlaneseq
    %v3079 = vshrl.u32 %v3078, 7
    %v3080 = vsub.s32 %v3077, %v3079
    %v3081 = vrot.slane %v3071, %v3080
    %v3083 = vunpack.c.l.s4 1966171168
    %v3084 = vunpack.c.0.s8 %v3083
    %v3085 = vlaneseq
    %v3086 = vshrl.u32 %v3085, 7
    %v3087 = vsub.s32 %v3084, %v3086
    %v3088 = vrot.slane %v3072, %v3087
    %v3090 = vunpack.c.l.s4 1966171168
    %v3091 = vunpack.c.0.s8 %v3090
    %v3092 = vlaneseq
    %v3093 = vshrl.u32 %v3092, 7
    %v3094 = vsub.s32 %v3091, %v3093
    %v3095 = vrot.slane %v3073, %v3094
    %v3097 = vunpack.c.l.s4 1966171168
    %v3098 = vunpack.c.0.s8 %v3097
    %v3099 = vlaneseq
    %v3100 = vshrl.u32 %v3099, 7
    %v3101 = vsub.s32 %v3098, %v3100
    %v3102 = vrot.slane %v3074, %v3101
    %v3103 = vcombine.low %v3081, %v3095
    %v3104 = vcombine.low %v3088, %v3102
    %v3105 = vcombine.low %v2984, %v2986
    %v3106 = vcombine.low %v2988, %v2990
    %v3107 = vcombine.low %v2992, %v2994
    %v3108 = vcombine.low %v2996, %v2998
    %v3110 = vunpack.c.l.s4 1966171168
    %v3111 = vunpack.c.0.s8 %v3110
    %v3112 = vlaneseq
    %v3113 = vshrl.u32 %v3112, 7
    %v3114 = vsub.s32 %v3111, %v3113
    %v3115 = vrot.slane %v3105, %v3114
    %v3117 = vunpack.c.l.s4 1966171168
    %v3118 = vunpack.c.0.s8 %v3117
    %v3119 = vlaneseq
    %v3120 = vshrl.u32 %v3119, 7
    %v3121 = vsub.s32 %v3118, %v3120
    %v3122 = vrot.slane %v3106, %v3121
    %v3124 = vunpack.c.l.s4 1966171168
    %v3125 = vunpack.c.0.s8 %v3124
    %v3126 = vlaneseq
    %v3127 = vshrl.u32 %v3126, 7
    %v3128 = vsub.s32 %v3125, %v3127
    %v3129 = vrot.slane %v3107, %v3128
    %v3131 = vunpack.c.l.s4 1966171168
    %v3132 = vunpack.c.0.s8 %v3131
    %v3133 = vlaneseq
    %v3134 = vshrl.u32 %v3133, 7
    %v3135 = vsub.s32 %v3132, %v3134
    %v3136 = vrot.slane %v3108, %v3135
    %v3137 = vcombine.low %v3115, %v3122
    %v3138 = vcombine.high %v3115, %v3122
    %v3139 = vcombine.low %v3129, %v3136
    %v3140 = vcombine.high %v3129, %v3136
    %v3142 = vunpack.c.l.s4 1966171168
    %v3143 = vunpack.c.0.s8 %v3142
    %v3144 = vlaneseq
    %v3145 = vshrl.u32 %v3144, 7
    %v3146 = vsub.s32 %v3143, %v3145
    %v3147 = vrot.slane %v3137, %v3146
    %v3149 = vunpack.c.l.s4 1966171168
    %v3150 = vunpack.c.0.s8 %v3149
    %v3151 = vlaneseq
    %v3152 = vshrl.u32 %v3151, 7
    %v3153 = vsub.s32 %v3150, %v3152
    %v3154 = vrot.slane %v3138, %v3153
    %v3156 = vunpack.c.l.s4 1966171168
    %v3157 = vunpack.c.0.s8 %v3156
    %v3158 = vlaneseq
    %v3159 = vshrl.u32 %v3158, 7
    %v3160 = vsub.s32 %v3157, %v3159
    %v3161 = vrot.slane %v3139, %v3160
    %v3163 = vunpack.c.l.s4 1966171168
    %v3164 = vunpack.c.0.s8 %v3163
    %v3165 = vlaneseq
    %v3166 = vshrl.u32 %v3165, 7
    %v3167 = vsub.s32 %v3164, %v3166
    %v3168 = vrot.slane %v3140, %v3167
    %v3169 = vcombine.low %v3147, %v3161
    %v3170 = vcombine.low %v3154, %v3168
    %v3171 = vcombine.low %v3000, %v3002
    %v3172 = vcombine.low %v3004, %v3006
    %v3173 = vcombine.low %v3008, %v3010
    %v3174 = vcombine.low %v3012, %v3014
    %v3176 = vunpack.c.l.s4 1966171168
    %v3177 = vunpack.c.0.s8 %v3176
    %v3178 = vlaneseq
    %v3179 = vshrl.u32 %v3178, 7
    %v3180 = vsub.s32 %v3177, %v3179
    %v3181 = vrot.slane %v3171, %v3180
    %v3183 = vunpack.c.l.s4 1966171168
    %v3184 = vunpack.c.0.s8 %v3183
    %v3185 = vlaneseq
    %v3186 = vshrl.u32 %v3185, 7
    %v3187 = vsub.s32 %v3184, %v3186
    %v3188 = vrot.slane %v3172, %v3187
    %v3190 = vunpack.c.l.s4 1966171168
    %v3191 = vunpack.c.0.s8 %v3190
    %v3192 = vlaneseq
    %v3193 = vshrl.u32 %v3192, 7
    %v3194 = vsub.s32 %v3191, %v3193
    %v3195 = vrot.slane %v3173, %v3194
    %v3197 = vunpack.c.l.s4 1966171168
    %v3198 = vunpack.c.0.s8 %v3197
    %v3199 = vlaneseq
    %v3200 = vshrl.u32 %v3199, 7
    %v3201 = vsub.s32 %v3198, %v3200
    %v3202 = vrot.slane %v3174, %v3201
    %v3203 = vcombine.low %v3181, %v3188
    %v3204 = vcombine.high %v3181, %v3188
    %v3205 = vcombine.low %v3195, %v3202
    %v3206 = vcombine.high %v3195, %v3202
    %v3208 = vunpack.c.l.s4 1966171168
    %v3209 = vunpack.c.0.s8 %v3208
    %v3210 = vlaneseq
    %v3211 = vshrl.u32 %v3210, 7
    %v3212 = vsub.s32 %v3209, %v3211
    %v3213 = vrot.slane %v3203, %v3212
    %v3215 = vunpack.c.l.s4 1966171168
    %v3216 = vunpack.c.0.s8 %v3215
    %v3217 = vlaneseq
    %v3218 = vshrl.u32 %v3217, 7
    %v3219 = vsub.s32 %v3216, %v3218
    %v3220 = vrot.slane %v3204, %v3219
    %v3222 = vunpack.c.l.s4 1966171168
    %v3223 = vunpack.c.0.s8 %v3222
    %v3224 = vlaneseq
    %v3225 = vshrl.u32 %v3224, 7
    %v3226 = vsub.s32 %v3223, %v3225
    %v3227 = vrot.slane %v3205, %v3226
    %v3229 = vunpack.c.l.s4 1966171168
    %v3230 = vunpack.c.0.s8 %v3229
    %v3231 = vlaneseq
    %v3232 = vshrl.u32 %v3231, 7
    %v3233 = vsub.s32 %v3230, %v3232
    %v3234 = vrot.slane %v3206, %v3233
    %v3235 = vcombine.low %v3213, %v3227
    %v3236 = vcombine.low %v3220, %v3234
    %v3240 = vsel %vm425, %v3104, 0
    %v3242 = vsel %vm425, %v3170, 0
    %v3244 = vsel %vm425, %v3236, 0
    %3246 = vmatprep.subr.mxu0 %v153
    %3247 = vmatpush1.msra.mxu0 %v152
    %3248 = vmatprep.subr.mxu0 %v149
    %3249 = vmatpush1.msra.mxu0 %v148
    %3250 = vmatprep.subr.mxu0 %v145
    %3251 = vmatpush1.msra.mxu0 %v144
    %3252 = vmatprep.subr.mxu0 %v141
    %3253 = vmatpush1.msra.mxu0 %v140
    %3254 = vmatprep.subr.mxu0 %v137
    %3255 = vmatpush1.msra.mxu0 %v136
    %3256 = vmatprep.subr.mxu0 %v133
    %3257 = vmatpush1.msra.mxu0 %v132
    %3258 = vmatprep.subr.mxu0 %v129
    %3259 = vmatpush1.msra.mxu0 %v128
    %3260 = vmatprep.subr.mxu0 %v125
    %3261 = vmatpush1.msra.mxu0 %v124
    %3262 = vmatprep.subr.mxu0 %v121
    %3263 = vmatpush1.msra.mxu0 %v120
    %3264 = vmatprep.subr.mxu0 %v117
    %3265 = vmatpush1.msra.mxu0 %v116
    %3266 = vmatprep.subr.mxu0 %v113
    %3267 = vmatpush1.msra.mxu0 %v112
    %3268 = vmatprep.subr.mxu0 %v109
    %3269 = vmatpush1.msra.mxu0 %v108
    %3270 = vmatprep.subr.mxu0 %v105
    %3271 = vmatpush1.msra.mxu0 %v104
    %3272 = vmatprep.subr.mxu0 %v101
    %3273 = vmatpush1.msra.mxu0 %v100
    %3274 = vmatprep.subr.mxu0 %v97
    %3275 = vmatpush1.msra.mxu0 %v96
    %3276 = vmatprep.subr.mxu0 %v93
    %3277 = vmatpush1.msra.mxu0 %v92
    %3278 = vmatprep.subr.mxu0 0.0
    %3279 = vmatpush2.msra.mxu0 0.0
    %3280 = vmatprep.subr.mxu0 0.0
    %3281 = vmatpush2.msra.mxu0 0.0
    %3282 = vmatprep.subr.mxu0 0.0
    %3283 = vmatpush2.msra.mxu0 0.0
    %3284 = vmatprep.subr.mxu0 0.0
    %3285 = vmatpush2.msra.mxu0 0.0
    %3286 = vmatprep.subr.mxu0 0.0
    %3287 = vmatpush2.msra.mxu0 0.0
    %3288 = vmatprep.subr.mxu0 %v197
    %3289 = vmatpush2.msra.mxu0 %v196
    %3290 = vmatprep.subr.mxu0 %v193
    %3291 = vmatpush2.msra.mxu0 %v192
    %3292 = vmatprep.subr.mxu0 %v189
    %3293 = vmatpush2.msra.mxu0 %v188
    %3294 = vmatprep.subr.mxu0 %v185
    %3295 = vmatpush2.msra.mxu0 %v184
    %3296 = vmatprep.subr.mxu0 %v181
    %3297 = vmatpush2.msra.mxu0 %v180
    %3298 = vmatprep.subr.mxu0 %v177
    %3299 = vmatpush2.msra.mxu0 %v176
    %3300 = vmatprep.subr.mxu0 %v173
    %3301 = vmatpush2.msra.mxu0 %v172
    %3302 = vmatprep.subr.mxu0 %v169
    %3303 = vmatpush2.msra.mxu0 %v168
    %3304 = vmatprep.subr.mxu0 %v165
    %3305 = vmatpush2.msra.mxu0 %v164
    %3306 = vmatprep.subr.mxu0 %v161
    %3307 = vmatpush2.msra.mxu0 %v160
    %3308 = vmatprep.subr.mxu0 %v157
    %3309 = vmatpush2.msra.mxu0 %v156
    %3310 = vmatprep.mubr.f32.mxu0 %v3240
    %3311 = vmatmul.mubr.f32.gmra.mxu0 %v3103
    %v3312 = vpop.f32.mrf.mxu0
    %v3313 = vadd.f32 %v28, %v3312
    %v3314 = vpop.f32.mrf.mxu0
    %v3315 = vadd.f32 %v32, %v3314
    %3316 = vmatprep.mubr.f32.mxu0 %v3242
    %3317 = vmatmul.mubr.f32.gmra.mxu0 %v3169
    %v3318 = vpop.f32.mrf.mxu0
    %v3319 = vadd.f32 %v28, %v3318
    %v3320 = vpop.f32.mrf.mxu0
    %v3321 = vadd.f32 %v32, %v3320
    %3322 = vmatprep.mubr.f32.mxu0 %v3244
    %3323 = vmatmul.mubr.f32.gmra.mxu0 %v3235
    %v3324 = vpop.f32.mrf.mxu0
    %v3325 = vadd.f32 %v28, %v3324
    %v3326 = vpop.f32.mrf.mxu0
    %v3327 = vadd.f32 %v32, %v3326
    %3328 = vdwg.mxu0
    %3329 = vmatprep.subr.mxu0 %v155
    %3330 = vmatpush1.msra.mxu0 %v154
    %3331 = vmatprep.subr.mxu0 %v151
    %3332 = vmatpush1.msra.mxu0 %v150
    %3333 = vmatprep.subr.mxu0 %v147
    %3334 = vmatpush1.msra.mxu0 %v146
    %3335 = vmatprep.subr.mxu0 %v143
    %3336 = vmatpush1.msra.mxu0 %v142
    %3337 = vmatprep.subr.mxu0 %v139
    %3338 = vmatpush1.msra.mxu0 %v138
    %3339 = vmatprep.subr.mxu0 %v135
    %3340 = vmatpush1.msra.mxu0 %v134
    %3341 = vmatprep.subr.mxu0 %v131
    %3342 = vmatpush1.msra.mxu0 %v130
    %3343 = vmatprep.subr.mxu0 %v127
    %3344 = vmatpush1.msra.mxu0 %v126
    %3345 = vmatprep.subr.mxu0 %v123
    %3346 = vmatpush1.msra.mxu0 %v122
    %3347 = vmatprep.subr.mxu0 %v119
    %3348 = vmatpush1.msra.mxu0 %v118
    %3349 = vmatprep.subr.mxu0 %v115
    %3350 = vmatpush1.msra.mxu0 %v114
    %3351 = vmatprep.subr.mxu0 %v111
    %3352 = vmatpush1.msra.mxu0 %v110
    %3353 = vmatprep.subr.mxu0 %v107
    %3354 = vmatpush1.msra.mxu0 %v106
    %3355 = vmatprep.subr.mxu0 %v103
    %3356 = vmatpush1.msra.mxu0 %v102
    %3357 = vmatprep.subr.mxu0 %v99
    %3358 = vmatpush1.msra.mxu0 %v98
    %3359 = vmatprep.subr.mxu0 %v95
    %3360 = vmatpush1.msra.mxu0 %v94
    %3361 = vmatprep.subr.mxu0 0.0
    %3362 = vmatpush2.msra.mxu0 0.0
    %3363 = vmatprep.subr.mxu0 0.0
    %3364 = vmatpush2.msra.mxu0 0.0
    %3365 = vmatprep.subr.mxu0 0.0
    %3366 = vmatpush2.msra.mxu0 0.0
    %3367 = vmatprep.subr.mxu0 0.0
    %3368 = vmatpush2.msra.mxu0 0.0
    %3369 = vmatprep.subr.mxu0 0.0
    %3370 = vmatpush2.msra.mxu0 0.0
    %3371 = vmatprep.subr.mxu0 %v199
    %3372 = vmatpush2.msra.mxu0 %v198
    %3373 = vmatprep.subr.mxu0 %v195
    %3374 = vmatpush2.msra.mxu0 %v194
    %3375 = vmatprep.subr.mxu0 %v191
    %3376 = vmatpush2.msra.mxu0 %v190
    %3377 = vmatprep.subr.mxu0 %v187
    %3378 = vmatpush2.msra.mxu0 %v186
    %3379 = vmatprep.subr.mxu0 %v183
    %3380 = vmatpush2.msra.mxu0 %v182
    %3381 = vmatprep.subr.mxu0 %v179
    %3382 = vmatpush2.msra.mxu0 %v178
    %3383 = vmatprep.subr.mxu0 %v175
    %3384 = vmatpush2.msra.mxu0 %v174
    %3385 = vmatprep.subr.mxu0 %v171
    %3386 = vmatpush2.msra.mxu0 %v170
    %3387 = vmatprep.subr.mxu0 %v167
    %3388 = vmatpush2.msra.mxu0 %v166
    %3389 = vmatprep.subr.mxu0 %v163
    %3390 = vmatpush2.msra.mxu0 %v162
    %3391 = vmatprep.subr.mxu0 %v159
    %3392 = vmatpush2.msra.mxu0 %v158
    %3393 = vmatprep.mubr.f32.mxu0 %v3240
    %3394 = vmatmul.mubr.f32.gmra.mxu0 %v3103
    %v3395 = vpop.f32.mrf.mxu0
    %v3396 = vadd.f32 %v36, %v3395
    %v3397 = vpop.f32.mrf.mxu0
    %v3398 = vadd.f32 %v40, %v3397
    %3399 = vmatprep.mubr.f32.mxu0 %v3242
    %3400 = vmatmul.mubr.f32.gmra.mxu0 %v3169
    %v3401 = vpop.f32.mrf.mxu0
    %v3402 = vadd.f32 %v36, %v3401
    %v3403 = vpop.f32.mrf.mxu0
    %v3404 = vadd.f32 %v40, %v3403
    %3405 = vmatprep.mubr.f32.mxu0 %v3244
    %3406 = vmatmul.mubr.f32.gmra.mxu0 %v3235
    %v3407 = vpop.f32.mrf.mxu0
    %v3408 = vadd.f32 %v36, %v3407
    %v3409 = vpop.f32.mrf.mxu0
    %v3410 = vadd.f32 %v40, %v3409
    %3411 = vdwg.mxu0
    %v3412 = vmax.f32 %v3313, 0.0
    %v3413 = vmax.f32 %v3315, 0.0
    %v3414 = vmax.f32 %v3396, 0.0
    %v3415 = vmax.f32 %v3398, 0.0
    %v3416 = vmax.f32 %v3319, 0.0
    %v3417 = vmax.f32 %v3321, 0.0
    %v3418 = vmax.f32 %v3402, 0.0
    %v3419 = vmax.f32 %v3404, 0.0
    %v3420 = vmax.f32 %v3325, 0.0
    %v3421 = vmax.f32 %v3327, 0.0
    %v3422 = vmax.f32 %v3408, 0.0
    %v3423 = vmax.f32 %v3410, 0.0
    %v3424 = vadd.f32 %v2955, %v3412
    %v3425 = vadd.f32 %v2956, %v3413
    %v3426 = vadd.f32 %v2957, %v3414
    %v3427 = vadd.f32 %v2958, %v3415
    %v3428 = vadd.f32 %v2959, %v3416
    %v3429 = vadd.f32 %v2960, %v3417
    %v3430 = vadd.f32 %v2961, %v3418
    %v3431 = vadd.f32 %v2962, %v3419
    %v3432 = vadd.f32 %v2963, %v3420
    %v3433 = vadd.f32 %v2964, %v3421
    %v3434 = vadd.f32 %v2965, %v3422
    %v3435 = vadd.f32 %v2966, %v3423
    %s3436 = scalar_lea.vmem %s0, 7
    %v3437 = vld [vmem:[%s3436] ss:$8 sm:$0x3]
    %s3438 = scalar_lea.vmem %s0, 39
    %v3439 = vld [vmem:[%s3438] ss:$8 sm:$0x3]
    %s3440 = scalar_lea.vmem %s0, 71
    %v3441 = vld [vmem:[%s3440] ss:$8 sm:$0x3]
    %s3442 = scalar_lea.vmem %s0, 103
    %v3443 = vld [vmem:[%s3442] ss:$8 sm:$0x3]
    %s3444 = scalar_lea.vmem %s0, 135
    %v3445 = vld [vmem:[%s3444] ss:$8 sm:$0x3]
    %s3446 = scalar_lea.vmem %s0, 167
    %v3447 = vld [vmem:[%s3446] ss:$8 sm:$0x3]
    %s3448 = scalar_lea.vmem %s0, 199
    %v3449 = vld [vmem:[%s3448] ss:$8 sm:$0x3]
    %s3450 = scalar_lea.vmem %s0, 231
    %v3451 = vld [vmem:[%s3450] ss:$8 sm:$0x3]
    %s3452 = scalar_lea.vmem %s0, 263
    %v3453 = vld [vmem:[%s3452] ss:$8 sm:$0x3]
    %s3454 = scalar_lea.vmem %s0, 295
    %v3455 = vld [vmem:[%s3454] ss:$8 sm:$0x3]
    %s3456 = scalar_lea.vmem %s0, 327
    %v3457 = vld [vmem:[%s3456] ss:$8 sm:$0x3]
    %s3458 = scalar_lea.vmem %s0, 359
    %v3459 = vld [vmem:[%s3458] ss:$8 sm:$0x3]
    %s3460 = scalar_lea.vmem %s0, 391
    %v3461 = vld [vmem:[%s3460] ss:$8 sm:$0x3]
    %s3462 = scalar_lea.vmem %s0, 423
    %v3463 = vld [vmem:[%s3462] ss:$8 sm:$0x3]
    %s3464 = scalar_lea.vmem %s0, 455
    %v3465 = vld [vmem:[%s3464] ss:$8 sm:$0x3]
    %s3466 = scalar_lea.vmem %s0, 487
    %v3467 = vld [vmem:[%s3466] ss:$8 sm:$0x3]
    %s3468 = scalar_lea.vmem %s0, 519
    %v3469 = vld [vmem:[%s3468] ss:$8 sm:$0x3]
    %s3470 = scalar_lea.vmem %s0, 551
    %v3471 = vld [vmem:[%s3470] ss:$8 sm:$0x3]
    %s3472 = scalar_lea.vmem %s0, 583
    %v3473 = vld [vmem:[%s3472] ss:$8 sm:$0x3]
    %s3474 = scalar_lea.vmem %s0, 615
    %v3475 = vld [vmem:[%s3474] ss:$8 sm:$0x3]
    %s3476 = scalar_lea.vmem %s0, 647
    %v3477 = vld [vmem:[%s3476] ss:$8 sm:$0x3]
    %s3478 = scalar_lea.vmem %s0, 679
    %v3479 = vld [vmem:[%s3478] ss:$8 sm:$0x3]
    %s3480 = scalar_lea.vmem %s0, 711
    %v3481 = vld [vmem:[%s3480] ss:$8 sm:$0x3]
    %s3482 = scalar_lea.vmem %s0, 743
    %v3483 = vld [vmem:[%s3482] ss:$8 sm:$0x3]
    %v3508 = vcombine.low %v3437, %v3439
    %v3509 = vcombine.low %v3441, %v3443
    %v3510 = vcombine.low %v3445, %v3447
    %v3511 = vcombine.low %v3449, %v3451
    %v3513 = vunpack.c.l.s4 1966171168
    %v3514 = vunpack.c.0.s8 %v3513
    %v3515 = vlaneseq
    %v3516 = vshrl.u32 %v3515, 7
    %v3517 = vsub.s32 %v3514, %v3516
    %v3518 = vrot.slane %v3508, %v3517
    %v3520 = vunpack.c.l.s4 1966171168
    %v3521 = vunpack.c.0.s8 %v3520
    %v3522 = vlaneseq
    %v3523 = vshrl.u32 %v3522, 7
    %v3524 = vsub.s32 %v3521, %v3523
    %v3525 = vrot.slane %v3509, %v3524
    %v3527 = vunpack.c.l.s4 1966171168
    %v3528 = vunpack.c.0.s8 %v3527
    %v3529 = vlaneseq
    %v3530 = vshrl.u32 %v3529, 7
    %v3531 = vsub.s32 %v3528, %v3530
    %v3532 = vrot.slane %v3510, %v3531
    %v3534 = vunpack.c.l.s4 1966171168
    %v3535 = vunpack.c.0.s8 %v3534
    %v3536 = vlaneseq
    %v3537 = vshrl.u32 %v3536, 7
    %v3538 = vsub.s32 %v3535, %v3537
    %v3539 = vrot.slane %v3511, %v3538
    %v3540 = vcombine.low %v3518, %v3525
    %v3541 = vcombine.high %v3518, %v3525
    %v3542 = vcombine.low %v3532, %v3539
    %v3543 = vcombine.high %v3532, %v3539
    %v3545 = vunpack.c.l.s4 1966171168
    %v3546 = vunpack.c.0.s8 %v3545
    %v3547 = vlaneseq
    %v3548 = vshrl.u32 %v3547, 7
    %v3549 = vsub.s32 %v3546, %v3548
    %v3550 = vrot.slane %v3540, %v3549
    %v3552 = vunpack.c.l.s4 1966171168
    %v3553 = vunpack.c.0.s8 %v3552
    %v3554 = vlaneseq
    %v3555 = vshrl.u32 %v3554, 7
    %v3556 = vsub.s32 %v3553, %v3555
    %v3557 = vrot.slane %v3541, %v3556
    %v3559 = vunpack.c.l.s4 1966171168
    %v3560 = vunpack.c.0.s8 %v3559
    %v3561 = vlaneseq
    %v3562 = vshrl.u32 %v3561, 7
    %v3563 = vsub.s32 %v3560, %v3562
    %v3564 = vrot.slane %v3542, %v3563
    %v3566 = vunpack.c.l.s4 1966171168
    %v3567 = vunpack.c.0.s8 %v3566
    %v3568 = vlaneseq
    %v3569 = vshrl.u32 %v3568, 7
    %v3570 = vsub.s32 %v3567, %v3569
    %v3571 = vrot.slane %v3543, %v3570
    %v3572 = vcombine.low %v3550, %v3564
    %v3573 = vcombine.low %v3557, %v3571
    %v3574 = vcombine.low %v3453, %v3455
    %v3575 = vcombine.low %v3457, %v3459
    %v3576 = vcombine.low %v3461, %v3463
    %v3577 = vcombine.low %v3465, %v3467
    %v3579 = vunpack.c.l.s4 1966171168
    %v3580 = vunpack.c.0.s8 %v3579
    %v3581 = vlaneseq
    %v3582 = vshrl.u32 %v3581, 7
    %v3583 = vsub.s32 %v3580, %v3582
    %v3584 = vrot.slane %v3574, %v3583
    %v3586 = vunpack.c.l.s4 1966171168
    %v3587 = vunpack.c.0.s8 %v3586
    %v3588 = vlaneseq
    %v3589 = vshrl.u32 %v3588, 7
    %v3590 = vsub.s32 %v3587, %v3589
    %v3591 = vrot.slane %v3575, %v3590
    %v3593 = vunpack.c.l.s4 1966171168
    %v3594 = vunpack.c.0.s8 %v3593
    %v3595 = vlaneseq
    %v3596 = vshrl.u32 %v3595, 7
    %v3597 = vsub.s32 %v3594, %v3596
    %v3598 = vrot.slane %v3576, %v3597
    %v3600 = vunpack.c.l.s4 1966171168
    %v3601 = vunpack.c.0.s8 %v3600
    %v3602 = vlaneseq
    %v3603 = vshrl.u32 %v3602, 7
    %v3604 = vsub.s32 %v3601, %v3603
    %v3605 = vrot.slane %v3577, %v3604
    %v3606 = vcombine.low %v3584, %v3591
    %v3607 = vcombine.high %v3584, %v3591
    %v3608 = vcombine.low %v3598, %v3605
    %v3609 = vcombine.high %v3598, %v3605
    %v3611 = vunpack.c.l.s4 1966171168
    %v3612 = vunpack.c.0.s8 %v3611
    %v3613 = vlaneseq
    %v3614 = vshrl.u32 %v3613, 7
    %v3615 = vsub.s32 %v3612, %v3614
    %v3616 = vrot.slane %v3606, %v3615
    %v3618 = vunpack.c.l.s4 1966171168
    %v3619 = vunpack.c.0.s8 %v3618
    %v3620 = vlaneseq
    %v3621 = vshrl.u32 %v3620, 7
    %v3622 = vsub.s32 %v3619, %v3621
    %v3623 = vrot.slane %v3607, %v3622
    %v3625 = vunpack.c.l.s4 1966171168
    %v3626 = vunpack.c.0.s8 %v3625
    %v3627 = vlaneseq
    %v3628 = vshrl.u32 %v3627, 7
    %v3629 = vsub.s32 %v3626, %v3628
    %v3630 = vrot.slane %v3608, %v3629
    %v3632 = vunpack.c.l.s4 1966171168
    %v3633 = vunpack.c.0.s8 %v3632
    %v3634 = vlaneseq
    %v3635 = vshrl.u32 %v3634, 7
    %v3636 = vsub.s32 %v3633, %v3635
    %v3637 = vrot.slane %v3609, %v3636
    %v3638 = vcombine.low %v3616, %v3630
    %v3639 = vcombine.low %v3623, %v3637
    %v3640 = vcombine.low %v3469, %v3471
    %v3641 = vcombine.low %v3473, %v3475
    %v3642 = vcombine.low %v3477, %v3479
    %v3643 = vcombine.low %v3481, %v3483
    %v3645 = vunpack.c.l.s4 1966171168
    %v3646 = vunpack.c.0.s8 %v3645
    %v3647 = vlaneseq
    %v3648 = vshrl.u32 %v3647, 7
    %v3649 = vsub.s32 %v3646, %v3648
    %v3650 = vrot.slane %v3640, %v3649
    %v3652 = vunpack.c.l.s4 1966171168
    %v3653 = vunpack.c.0.s8 %v3652
    %v3654 = vlaneseq
    %v3655 = vshrl.u32 %v3654, 7
    %v3656 = vsub.s32 %v3653, %v3655
    %v3657 = vrot.slane %v3641, %v3656
    %v3659 = vunpack.c.l.s4 1966171168
    %v3660 = vunpack.c.0.s8 %v3659
    %v3661 = vlaneseq
    %v3662 = vshrl.u32 %v3661, 7
    %v3663 = vsub.s32 %v3660, %v3662
    %v3664 = vrot.slane %v3642, %v3663
    %v3666 = vunpack.c.l.s4 1966171168
    %v3667 = vunpack.c.0.s8 %v3666
    %v3668 = vlaneseq
    %v3669 = vshrl.u32 %v3668, 7
    %v3670 = vsub.s32 %v3667, %v3669
    %v3671 = vrot.slane %v3643, %v3670
    %v3672 = vcombine.low %v3650, %v3657
    %v3673 = vcombine.high %v3650, %v3657
    %v3674 = vcombine.low %v3664, %v3671
    %v3675 = vcombine.high %v3664, %v3671
    %v3677 = vunpack.c.l.s4 1966171168
    %v3678 = vunpack.c.0.s8 %v3677
    %v3679 = vlaneseq
    %v3680 = vshrl.u32 %v3679, 7
    %v3681 = vsub.s32 %v3678, %v3680
    %v3682 = vrot.slane %v3672, %v3681
    %v3684 = vunpack.c.l.s4 1966171168
    %v3685 = vunpack.c.0.s8 %v3684
    %v3686 = vlaneseq
    %v3687 = vshrl.u32 %v3686, 7
    %v3688 = vsub.s32 %v3685, %v3687
    %v3689 = vrot.slane %v3673, %v3688
    %v3691 = vunpack.c.l.s4 1966171168
    %v3692 = vunpack.c.0.s8 %v3691
    %v3693 = vlaneseq
    %v3694 = vshrl.u32 %v3693, 7
    %v3695 = vsub.s32 %v3692, %v3694
    %v3696 = vrot.slane %v3674, %v3695
    %v3698 = vunpack.c.l.s4 1966171168
    %v3699 = vunpack.c.0.s8 %v3698
    %v3700 = vlaneseq
    %v3701 = vshrl.u32 %v3700, 7
    %v3702 = vsub.s32 %v3699, %v3701
    %v3703 = vrot.slane %v3675, %v3702
    %v3704 = vcombine.low %v3682, %v3696
    %v3705 = vcombine.low %v3689, %v3703
    %v3709 = vsel %vm425, %v3573, 0
    %v3711 = vsel %vm425, %v3639, 0
    %v3713 = vsel %vm425, %v3705, 0
    %3715 = vmatprep.subr.mxu0 %v153
    %3716 = vmatpush1.msra.mxu0 %v152
    %3717 = vmatprep.subr.mxu0 %v149
    %3718 = vmatpush1.msra.mxu0 %v148
    %3719 = vmatprep.subr.mxu0 %v145
    %3720 = vmatpush1.msra.mxu0 %v144
    %3721 = vmatprep.subr.mxu0 %v141
    %3722 = vmatpush1.msra.mxu0 %v140
    %3723 = vmatprep.subr.mxu0 %v137
    %3724 = vmatpush1.msra.mxu0 %v136
    %3725 = vmatprep.subr.mxu0 %v133
    %3726 = vmatpush1.msra.mxu0 %v132
    %3727 = vmatprep.subr.mxu0 %v129
    %3728 = vmatpush1.msra.mxu0 %v128
    %3729 = vmatprep.subr.mxu0 %v125
    %3730 = vmatpush1.msra.mxu0 %v124
    %3731 = vmatprep.subr.mxu0 %v121
    %3732 = vmatpush1.msra.mxu0 %v120
    %3733 = vmatprep.subr.mxu0 %v117
    %3734 = vmatpush1.msra.mxu0 %v116
    %3735 = vmatprep.subr.mxu0 %v113
    %3736 = vmatpush1.msra.mxu0 %v112
    %3737 = vmatprep.subr.mxu0 %v109
    %3738 = vmatpush1.msra.mxu0 %v108
    %3739 = vmatprep.subr.mxu0 %v105
    %3740 = vmatpush1.msra.mxu0 %v104
    %3741 = vmatprep.subr.mxu0 %v101
    %3742 = vmatpush1.msra.mxu0 %v100
    %3743 = vmatprep.subr.mxu0 %v97
    %3744 = vmatpush1.msra.mxu0 %v96
    %3745 = vmatprep.subr.mxu0 %v93
    %3746 = vmatpush1.msra.mxu0 %v92
    %3747 = vmatprep.subr.mxu0 0.0
    %3748 = vmatpush2.msra.mxu0 0.0
    %3749 = vmatprep.subr.mxu0 0.0
    %3750 = vmatpush2.msra.mxu0 0.0
    %3751 = vmatprep.subr.mxu0 0.0
    %3752 = vmatpush2.msra.mxu0 0.0
    %3753 = vmatprep.subr.mxu0 0.0
    %3754 = vmatpush2.msra.mxu0 0.0
    %3755 = vmatprep.subr.mxu0 0.0
    %3756 = vmatpush2.msra.mxu0 0.0
    %3757 = vmatprep.subr.mxu0 %v197
    %3758 = vmatpush2.msra.mxu0 %v196
    %3759 = vmatprep.subr.mxu0 %v193
    %3760 = vmatpush2.msra.mxu0 %v192
    %3761 = vmatprep.subr.mxu0 %v189
    %3762 = vmatpush2.msra.mxu0 %v188
    %3763 = vmatprep.subr.mxu0 %v185
    %3764 = vmatpush2.msra.mxu0 %v184
    %3765 = vmatprep.subr.mxu0 %v181
    %3766 = vmatpush2.msra.mxu0 %v180
    %3767 = vmatprep.subr.mxu0 %v177
    %3768 = vmatpush2.msra.mxu0 %v176
    %3769 = vmatprep.subr.mxu0 %v173
    %3770 = vmatpush2.msra.mxu0 %v172
    %3771 = vmatprep.subr.mxu0 %v169
    %3772 = vmatpush2.msra.mxu0 %v168
    %3773 = vmatprep.subr.mxu0 %v165
    %3774 = vmatpush2.msra.mxu0 %v164
    %3775 = vmatprep.subr.mxu0 %v161
    %3776 = vmatpush2.msra.mxu0 %v160
    %3777 = vmatprep.subr.mxu0 %v157
    %3778 = vmatpush2.msra.mxu0 %v156
    %3779 = vmatprep.mubr.f32.mxu0 %v3709
    %3780 = vmatmul.mubr.f32.gmra.mxu0 %v3572
    %v3781 = vpop.f32.mrf.mxu0
    %v3782 = vadd.f32 %v28, %v3781
    %v3783 = vpop.f32.mrf.mxu0
    %v3784 = vadd.f32 %v32, %v3783
    %3785 = vmatprep.mubr.f32.mxu0 %v3711
    %3786 = vmatmul.mubr.f32.gmra.mxu0 %v3638
    %v3787 = vpop.f32.mrf.mxu0
    %v3788 = vadd.f32 %v28, %v3787
    %v3789 = vpop.f32.mrf.mxu0
    %v3790 = vadd.f32 %v32, %v3789
    %3791 = vmatprep.mubr.f32.mxu0 %v3713
    %3792 = vmatmul.mubr.f32.gmra.mxu0 %v3704
    %v3793 = vpop.f32.mrf.mxu0
    %v3794 = vadd.f32 %v28, %v3793
    %v3795 = vpop.f32.mrf.mxu0
    %v3796 = vadd.f32 %v32, %v3795
    %3797 = vdwg.mxu0
    %3798 = vmatprep.subr.mxu0 %v155
    %3799 = vmatpush1.msra.mxu0 %v154
    %3800 = vmatprep.subr.mxu0 %v151
    %3801 = vmatpush1.msra.mxu0 %v150
    %3802 = vmatprep.subr.mxu0 %v147
    %3803 = vmatpush1.msra.mxu0 %v146
    %3804 = vmatprep.subr.mxu0 %v143
    %3805 = vmatpush1.msra.mxu0 %v142
    %3806 = vmatprep.subr.mxu0 %v139
    %3807 = vmatpush1.msra.mxu0 %v138
    %3808 = vmatprep.subr.mxu0 %v135
    %3809 = vmatpush1.msra.mxu0 %v134
    %3810 = vmatprep.subr.mxu0 %v131
    %3811 = vmatpush1.msra.mxu0 %v130
    %3812 = vmatprep.subr.mxu0 %v127
    %3813 = vmatpush1.msra.mxu0 %v126
    %3814 = vmatprep.subr.mxu0 %v123
    %3815 = vmatpush1.msra.mxu0 %v122
    %3816 = vmatprep.subr.mxu0 %v119
    %3817 = vmatpush1.msra.mxu0 %v118
    %3818 = vmatprep.subr.mxu0 %v115
    %3819 = vmatpush1.msra.mxu0 %v114
    %3820 = vmatprep.subr.mxu0 %v111
    %3821 = vmatpush1.msra.mxu0 %v110
    %3822 = vmatprep.subr.mxu0 %v107
    %3823 = vmatpush1.msra.mxu0 %v106
    %3824 = vmatprep.subr.mxu0 %v103
    %3825 = vmatpush1.msra.mxu0 %v102
    %3826 = vmatprep.subr.mxu0 %v99
    %3827 = vmatpush1.msra.mxu0 %v98
    %3828 = vmatprep.subr.mxu0 %v95
    %3829 = vmatpush1.msra.mxu0 %v94
    %3830 = vmatprep.subr.mxu0 0.0
    %3831 = vmatpush2.msra.mxu0 0.0
    %3832 = vmatprep.subr.mxu0 0.0
    %3833 = vmatpush2.msra.mxu0 0.0
    %3834 = vmatprep.subr.mxu0 0.0
    %3835 = vmatpush2.msra.mxu0 0.0
    %3836 = vmatprep.subr.mxu0 0.0
    %3837 = vmatpush2.msra.mxu0 0.0
    %3838 = vmatprep.subr.mxu0 0.0
    %3839 = vmatpush2.msra.mxu0 0.0
    %3840 = vmatprep.subr.mxu0 %v199
    %3841 = vmatpush2.msra.mxu0 %v198
    %3842 = vmatprep.subr.mxu0 %v195
    %3843 = vmatpush2.msra.mxu0 %v194
    %3844 = vmatprep.subr.mxu0 %v191
    %3845 = vmatpush2.msra.mxu0 %v190
    %3846 = vmatprep.subr.mxu0 %v187
    %3847 = vmatpush2.msra.mxu0 %v186
    %3848 = vmatprep.subr.mxu0 %v183
    %3849 = vmatpush2.msra.mxu0 %v182
    %3850 = vmatprep.subr.mxu0 %v179
    %3851 = vmatpush2.msra.mxu0 %v178
    %3852 = vmatprep.subr.mxu0 %v175
    %3853 = vmatpush2.msra.mxu0 %v174
    %3854 = vmatprep.subr.mxu0 %v171
    %3855 = vmatpush2.msra.mxu0 %v170
    %3856 = vmatprep.subr.mxu0 %v167
    %3857 = vmatpush2.msra.mxu0 %v166
    %3858 = vmatprep.subr.mxu0 %v163
    %3859 = vmatpush2.msra.mxu0 %v162
    %3860 = vmatprep.subr.mxu0 %v159
    %3861 = vmatpush2.msra.mxu0 %v158
    %3862 = vmatprep.mubr.f32.mxu0 %v3709
    %3863 = vmatmul.mubr.f32.gmra.mxu0 %v3572
    %v3864 = vpop.f32.mrf.mxu0
    %v3865 = vadd.f32 %v36, %v3864
    %v3866 = vpop.f32.mrf.mxu0
    %v3867 = vadd.f32 %v40, %v3866
    %3868 = vmatprep.mubr.f32.mxu0 %v3711
    %3869 = vmatmul.mubr.f32.gmra.mxu0 %v3638
    %v3870 = vpop.f32.mrf.mxu0
    %v3871 = vadd.f32 %v36, %v3870
    %v3872 = vpop.f32.mrf.mxu0
    %v3873 = vadd.f32 %v40, %v3872
    %3874 = vmatprep.mubr.f32.mxu0 %v3713
    %3875 = vmatmul.mubr.f32.gmra.mxu0 %v3704
    %v3876 = vpop.f32.mrf.mxu0
    %v3877 = vadd.f32 %v36, %v3876
    %v3878 = vpop.f32.mrf.mxu0
    %v3879 = vadd.f32 %v40, %v3878
    %3880 = vdwg.mxu0
    %v3881 = vmax.f32 %v3782, 0.0
    %v3882 = vmax.f32 %v3784, 0.0
    %v3883 = vmax.f32 %v3865, 0.0
    %v3884 = vmax.f32 %v3867, 0.0
    %v3885 = vmax.f32 %v3788, 0.0
    %v3886 = vmax.f32 %v3790, 0.0
    %v3887 = vmax.f32 %v3871, 0.0
    %v3888 = vmax.f32 %v3873, 0.0
    %v3889 = vmax.f32 %v3794, 0.0
    %v3890 = vmax.f32 %v3796, 0.0
    %v3891 = vmax.f32 %v3877, 0.0
    %v3892 = vmax.f32 %v3879, 0.0
    %v3893 = vadd.f32 %v3424, %v3881
    %v3894 = vadd.f32 %v3425, %v3882
    %v3895 = vadd.f32 %v3426, %v3883
    %v3896 = vadd.f32 %v3427, %v3884
    %v3897 = vadd.f32 %v3428, %v3885
    %v3898 = vadd.f32 %v3429, %v3886
    %v3899 = vadd.f32 %v3430, %v3887
    %v3900 = vadd.f32 %v3431, %v3888
    %v3901 = vadd.f32 %v3432, %v3889
    %v3902 = vadd.f32 %v3433, %v3890
    %v3903 = vadd.f32 %v3434, %v3891
    %v3904 = vadd.f32 %v3435, %v3892
    %s3905 = scalar_lea.vmem %s0, 16
    %v3906 = vld [vmem:[%s3905] ss:$8 sm:$0x3]
    %s3907 = scalar_lea.vmem %s0, 48
    %v3908 = vld [vmem:[%s3907] ss:$8 sm:$0x3]
    %s3909 = scalar_lea.vmem %s0, 80
    %v3910 = vld [vmem:[%s3909] ss:$8 sm:$0x3]
    %s3911 = scalar_lea.vmem %s0, 112
    %v3912 = vld [vmem:[%s3911] ss:$8 sm:$0x3]
    %s3913 = scalar_lea.vmem %s0, 144
    %v3914 = vld [vmem:[%s3913] ss:$8 sm:$0x3]
    %s3915 = scalar_lea.vmem %s0, 176
    %v3916 = vld [vmem:[%s3915] ss:$8 sm:$0x3]
    %s3917 = scalar_lea.vmem %s0, 208
    %v3918 = vld [vmem:[%s3917] ss:$8 sm:$0x3]
    %s3919 = scalar_lea.vmem %s0, 240
    %v3920 = vld [vmem:[%s3919] ss:$8 sm:$0x3]
    %s3921 = scalar_lea.vmem %s0, 272
    %v3922 = vld [vmem:[%s3921] ss:$8 sm:$0x3]
    %s3923 = scalar_lea.vmem %s0, 304
    %v3924 = vld [vmem:[%s3923] ss:$8 sm:$0x3]
    %s3925 = scalar_lea.vmem %s0, 336
    %v3926 = vld [vmem:[%s3925] ss:$8 sm:$0x3]
    %s3927 = scalar_lea.vmem %s0, 368
    %v3928 = vld [vmem:[%s3927] ss:$8 sm:$0x3]
    %s3929 = scalar_lea.vmem %s0, 400
    %v3930 = vld [vmem:[%s3929] ss:$8 sm:$0x3]
    %s3931 = scalar_lea.vmem %s0, 432
    %v3932 = vld [vmem:[%s3931] ss:$8 sm:$0x3]
    %s3933 = scalar_lea.vmem %s0, 464
    %v3934 = vld [vmem:[%s3933] ss:$8 sm:$0x3]
    %s3935 = scalar_lea.vmem %s0, 496
    %v3936 = vld [vmem:[%s3935] ss:$8 sm:$0x3]
    %s3937 = scalar_lea.vmem %s0, 528
    %v3938 = vld [vmem:[%s3937] ss:$8 sm:$0x3]
    %s3939 = scalar_lea.vmem %s0, 560
    %v3940 = vld [vmem:[%s3939] ss:$8 sm:$0x3]
    %s3941 = scalar_lea.vmem %s0, 592
    %v3942 = vld [vmem:[%s3941] ss:$8 sm:$0x3]
    %s3943 = scalar_lea.vmem %s0, 624
    %v3944 = vld [vmem:[%s3943] ss:$8 sm:$0x3]
    %s3945 = scalar_lea.vmem %s0, 656
    %v3946 = vld [vmem:[%s3945] ss:$8 sm:$0x3]
    %s3947 = scalar_lea.vmem %s0, 688
    %v3948 = vld [vmem:[%s3947] ss:$8 sm:$0x3]
    %s3949 = scalar_lea.vmem %s0, 720
    %v3950 = vld [vmem:[%s3949] ss:$8 sm:$0x3]
    %s3951 = scalar_lea.vmem %s0, 752
    %v3952 = vld [vmem:[%s3951] ss:$8 sm:$0x3]
    %v3977 = vcombine.low %v3906, %v3908
    %v3978 = vcombine.low %v3910, %v3912
    %v3979 = vcombine.low %v3914, %v3916
    %v3980 = vcombine.low %v3918, %v3920
    %v3982 = vunpack.c.l.s4 1966171168
    %v3983 = vunpack.c.0.s8 %v3982
    %v3984 = vlaneseq
    %v3985 = vshrl.u32 %v3984, 7
    %v3986 = vsub.s32 %v3983, %v3985
    %v3987 = vrot.slane %v3977, %v3986
    %v3989 = vunpack.c.l.s4 1966171168
    %v3990 = vunpack.c.0.s8 %v3989
    %v3991 = vlaneseq
    %v3992 = vshrl.u32 %v3991, 7
    %v3993 = vsub.s32 %v3990, %v3992
    %v3994 = vrot.slane %v3978, %v3993
    %v3996 = vunpack.c.l.s4 1966171168
    %v3997 = vunpack.c.0.s8 %v3996
    %v3998 = vlaneseq
    %v3999 = vshrl.u32 %v3998, 7
    %v4000 = vsub.s32 %v3997, %v3999
    %v4001 = vrot.slane %v3979, %v4000
    %v4003 = vunpack.c.l.s4 1966171168
    %v4004 = vunpack.c.0.s8 %v4003
    %v4005 = vlaneseq
    %v4006 = vshrl.u32 %v4005, 7
    %v4007 = vsub.s32 %v4004, %v4006
    %v4008 = vrot.slane %v3980, %v4007
    %v4009 = vcombine.low %v3987, %v3994
    %v4010 = vcombine.high %v3987, %v3994
    %v4011 = vcombine.low %v4001, %v4008
    %v4012 = vcombine.high %v4001, %v4008
    %v4014 = vunpack.c.l.s4 1966171168
    %v4015 = vunpack.c.0.s8 %v4014
    %v4016 = vlaneseq
    %v4017 = vshrl.u32 %v4016, 7
    %v4018 = vsub.s32 %v4015, %v4017
    %v4019 = vrot.slane %v4009, %v4018
    %v4021 = vunpack.c.l.s4 1966171168
    %v4022 = vunpack.c.0.s8 %v4021
    %v4023 = vlaneseq
    %v4024 = vshrl.u32 %v4023, 7
    %v4025 = vsub.s32 %v4022, %v4024
    %v4026 = vrot.slane %v4010, %v4025
    %v4028 = vunpack.c.l.s4 1966171168
    %v4029 = vunpack.c.0.s8 %v4028
    %v4030 = vlaneseq
    %v4031 = vshrl.u32 %v4030, 7
    %v4032 = vsub.s32 %v4029, %v4031
    %v4033 = vrot.slane %v4011, %v4032
    %v4035 = vunpack.c.l.s4 1966171168
    %v4036 = vunpack.c.0.s8 %v4035
    %v4037 = vlaneseq
    %v4038 = vshrl.u32 %v4037, 7
    %v4039 = vsub.s32 %v4036, %v4038
    %v4040 = vrot.slane %v4012, %v4039
    %v4041 = vcombine.low %v4019, %v4033
    %v4042 = vcombine.low %v4026, %v4040
    %v4043 = vcombine.low %v3922, %v3924
    %v4044 = vcombine.low %v3926, %v3928
    %v4045 = vcombine.low %v3930, %v3932
    %v4046 = vcombine.low %v3934, %v3936
    %v4048 = vunpack.c.l.s4 1966171168
    %v4049 = vunpack.c.0.s8 %v4048
    %v4050 = vlaneseq
    %v4051 = vshrl.u32 %v4050, 7
    %v4052 = vsub.s32 %v4049, %v4051
    %v4053 = vrot.slane %v4043, %v4052
    %v4055 = vunpack.c.l.s4 1966171168
    %v4056 = vunpack.c.0.s8 %v4055
    %v4057 = vlaneseq
    %v4058 = vshrl.u32 %v4057, 7
    %v4059 = vsub.s32 %v4056, %v4058
    %v4060 = vrot.slane %v4044, %v4059
    %v4062 = vunpack.c.l.s4 1966171168
    %v4063 = vunpack.c.0.s8 %v4062
    %v4064 = vlaneseq
    %v4065 = vshrl.u32 %v4064, 7
    %v4066 = vsub.s32 %v4063, %v4065
    %v4067 = vrot.slane %v4045, %v4066
    %v4069 = vunpack.c.l.s4 1966171168
    %v4070 = vunpack.c.0.s8 %v4069
    %v4071 = vlaneseq
    %v4072 = vshrl.u32 %v4071, 7
    %v4073 = vsub.s32 %v4070, %v4072
    %v4074 = vrot.slane %v4046, %v4073
    %v4075 = vcombine.low %v4053, %v4060
    %v4076 = vcombine.high %v4053, %v4060
    %v4077 = vcombine.low %v4067, %v4074
    %v4078 = vcombine.high %v4067, %v4074
    %v4080 = vunpack.c.l.s4 1966171168
    %v4081 = vunpack.c.0.s8 %v4080
    %v4082 = vlaneseq
    %v4083 = vshrl.u32 %v4082, 7
    %v4084 = vsub.s32 %v4081, %v4083
    %v4085 = vrot.slane %v4075, %v4084
    %v4087 = vunpack.c.l.s4 1966171168
    %v4088 = vunpack.c.0.s8 %v4087
    %v4089 = vlaneseq
    %v4090 = vshrl.u32 %v4089, 7
    %v4091 = vsub.s32 %v4088, %v4090
    %v4092 = vrot.slane %v4076, %v4091
    %v4094 = vunpack.c.l.s4 1966171168
    %v4095 = vunpack.c.0.s8 %v4094
    %v4096 = vlaneseq
    %v4097 = vshrl.u32 %v4096, 7
    %v4098 = vsub.s32 %v4095, %v4097
    %v4099 = vrot.slane %v4077, %v4098
    %v4101 = vunpack.c.l.s4 1966171168
    %v4102 = vunpack.c.0.s8 %v4101
    %v4103 = vlaneseq
    %v4104 = vshrl.u32 %v4103, 7
    %v4105 = vsub.s32 %v4102, %v4104
    %v4106 = vrot.slane %v4078, %v4105
    %v4107 = vcombine.low %v4085, %v4099
    %v4108 = vcombine.low %v4092, %v4106
    %v4109 = vcombine.low %v3938, %v3940
    %v4110 = vcombine.low %v3942, %v3944
    %v4111 = vcombine.low %v3946, %v3948
    %v4112 = vcombine.low %v3950, %v3952
    %v4114 = vunpack.c.l.s4 1966171168
    %v4115 = vunpack.c.0.s8 %v4114
    %v4116 = vlaneseq
    %v4117 = vshrl.u32 %v4116, 7
    %v4118 = vsub.s32 %v4115, %v4117
    %v4119 = vrot.slane %v4109, %v4118
    %v4121 = vunpack.c.l.s4 1966171168
    %v4122 = vunpack.c.0.s8 %v4121
    %v4123 = vlaneseq
    %v4124 = vshrl.u32 %v4123, 7
    %v4125 = vsub.s32 %v4122, %v4124
    %v4126 = vrot.slane %v4110, %v4125
    %v4128 = vunpack.c.l.s4 1966171168
    %v4129 = vunpack.c.0.s8 %v4128
    %v4130 = vlaneseq
    %v4131 = vshrl.u32 %v4130, 7
    %v4132 = vsub.s32 %v4129, %v4131
    %v4133 = vrot.slane %v4111, %v4132
    %v4135 = vunpack.c.l.s4 1966171168
    %v4136 = vunpack.c.0.s8 %v4135
    %v4137 = vlaneseq
    %v4138 = vshrl.u32 %v4137, 7
    %v4139 = vsub.s32 %v4136, %v4138
    %v4140 = vrot.slane %v4112, %v4139
    %v4141 = vcombine.low %v4119, %v4126
    %v4142 = vcombine.high %v4119, %v4126
    %v4143 = vcombine.low %v4133, %v4140
    %v4144 = vcombine.high %v4133, %v4140
    %v4146 = vunpack.c.l.s4 1966171168
    %v4147 = vunpack.c.0.s8 %v4146
    %v4148 = vlaneseq
    %v4149 = vshrl.u32 %v4148, 7
    %v4150 = vsub.s32 %v4147, %v4149
    %v4151 = vrot.slane %v4141, %v4150
    %v4153 = vunpack.c.l.s4 1966171168
    %v4154 = vunpack.c.0.s8 %v4153
    %v4155 = vlaneseq
    %v4156 = vshrl.u32 %v4155, 7
    %v4157 = vsub.s32 %v4154, %v4156
    %v4158 = vrot.slane %v4142, %v4157
    %v4160 = vunpack.c.l.s4 1966171168
    %v4161 = vunpack.c.0.s8 %v4160
    %v4162 = vlaneseq
    %v4163 = vshrl.u32 %v4162, 7
    %v4164 = vsub.s32 %v4161, %v4163
    %v4165 = vrot.slane %v4143, %v4164
    %v4167 = vunpack.c.l.s4 1966171168
    %v4168 = vunpack.c.0.s8 %v4167
    %v4169 = vlaneseq
    %v4170 = vshrl.u32 %v4169, 7
    %v4171 = vsub.s32 %v4168, %v4170
    %v4172 = vrot.slane %v4144, %v4171
    %v4173 = vcombine.low %v4151, %v4165
    %v4174 = vcombine.low %v4158, %v4172
    %v4178 = vsel %vm425, %v4042, 0
    %v4180 = vsel %vm425, %v4108, 0
    %v4182 = vsel %vm425, %v4174, 0
    %4184 = vmatprep.subr.mxu0 %v153
    %4185 = vmatpush1.msra.mxu0 %v152
    %4186 = vmatprep.subr.mxu0 %v149
    %4187 = vmatpush1.msra.mxu0 %v148
    %4188 = vmatprep.subr.mxu0 %v145
    %4189 = vmatpush1.msra.mxu0 %v144
    %4190 = vmatprep.subr.mxu0 %v141
    %4191 = vmatpush1.msra.mxu0 %v140
    %4192 = vmatprep.subr.mxu0 %v137
    %4193 = vmatpush1.msra.mxu0 %v136
    %4194 = vmatprep.subr.mxu0 %v133
    %4195 = vmatpush1.msra.mxu0 %v132
    %4196 = vmatprep.subr.mxu0 %v129
    %4197 = vmatpush1.msra.mxu0 %v128
    %4198 = vmatprep.subr.mxu0 %v125
    %4199 = vmatpush1.msra.mxu0 %v124
    %4200 = vmatprep.subr.mxu0 %v121
    %4201 = vmatpush1.msra.mxu0 %v120
    %4202 = vmatprep.subr.mxu0 %v117
    %4203 = vmatpush1.msra.mxu0 %v116
    %4204 = vmatprep.subr.mxu0 %v113
    %4205 = vmatpush1.msra.mxu0 %v112
    %4206 = vmatprep.subr.mxu0 %v109
    %4207 = vmatpush1.msra.mxu0 %v108
    %4208 = vmatprep.subr.mxu0 %v105
    %4209 = vmatpush1.msra.mxu0 %v104
    %4210 = vmatprep.subr.mxu0 %v101
    %4211 = vmatpush1.msra.mxu0 %v100
    %4212 = vmatprep.subr.mxu0 %v97
    %4213 = vmatpush1.msra.mxu0 %v96
    %4214 = vmatprep.subr.mxu0 %v93
    %4215 = vmatpush1.msra.mxu0 %v92
    %4216 = vmatprep.subr.mxu0 0.0
    %4217 = vmatpush2.msra.mxu0 0.0
    %4218 = vmatprep.subr.mxu0 0.0
    %4219 = vmatpush2.msra.mxu0 0.0
    %4220 = vmatprep.subr.mxu0 0.0
    %4221 = vmatpush2.msra.mxu0 0.0
    %4222 = vmatprep.subr.mxu0 0.0
    %4223 = vmatpush2.msra.mxu0 0.0
    %4224 = vmatprep.subr.mxu0 0.0
    %4225 = vmatpush2.msra.mxu0 0.0
    %4226 = vmatprep.subr.mxu0 %v197
    %4227 = vmatpush2.msra.mxu0 %v196
    %4228 = vmatprep.subr.mxu0 %v193
    %4229 = vmatpush2.msra.mxu0 %v192
    %4230 = vmatprep.subr.mxu0 %v189
    %4231 = vmatpush2.msra.mxu0 %v188
    %4232 = vmatprep.subr.mxu0 %v185
    %4233 = vmatpush2.msra.mxu0 %v184
    %4234 = vmatprep.subr.mxu0 %v181
    %4235 = vmatpush2.msra.mxu0 %v180
    %4236 = vmatprep.subr.mxu0 %v177
    %4237 = vmatpush2.msra.mxu0 %v176
    %4238 = vmatprep.subr.mxu0 %v173
    %4239 = vmatpush2.msra.mxu0 %v172
    %4240 = vmatprep.subr.mxu0 %v169
    %4241 = vmatpush2.msra.mxu0 %v168
    %4242 = vmatprep.subr.mxu0 %v165
    %4243 = vmatpush2.msra.mxu0 %v164
    %4244 = vmatprep.subr.mxu0 %v161
    %4245 = vmatpush2.msra.mxu0 %v160
    %4246 = vmatprep.subr.mxu0 %v157
    %4247 = vmatpush2.msra.mxu0 %v156
    %4248 = vmatprep.mubr.f32.mxu0 %v4178
    %4249 = vmatmul.mubr.f32.gmra.mxu0 %v4041
    %v4250 = vpop.f32.mrf.mxu0
    %v4251 = vadd.f32 %v28, %v4250
    %v4252 = vpop.f32.mrf.mxu0
    %v4253 = vadd.f32 %v32, %v4252
    %4254 = vmatprep.mubr.f32.mxu0 %v4180
    %4255 = vmatmul.mubr.f32.gmra.mxu0 %v4107
    %v4256 = vpop.f32.mrf.mxu0
    %v4257 = vadd.f32 %v28, %v4256
    %v4258 = vpop.f32.mrf.mxu0
    %v4259 = vadd.f32 %v32, %v4258
    %4260 = vmatprep.mubr.f32.mxu0 %v4182
    %4261 = vmatmul.mubr.f32.gmra.mxu0 %v4173
    %v4262 = vpop.f32.mrf.mxu0
    %v4263 = vadd.f32 %v28, %v4262
    %v4264 = vpop.f32.mrf.mxu0
    %v4265 = vadd.f32 %v32, %v4264
    %4266 = vdwg.mxu0
    %4267 = vmatprep.subr.mxu0 %v155
    %4268 = vmatpush1.msra.mxu0 %v154
    %4269 = vmatprep.subr.mxu0 %v151
    %4270 = vmatpush1.msra.mxu0 %v150
    %4271 = vmatprep.subr.mxu0 %v147
    %4272 = vmatpush1.msra.mxu0 %v146
    %4273 = vmatprep.subr.mxu0 %v143
    %4274 = vmatpush1.msra.mxu0 %v142
    %4275 = vmatprep.subr.mxu0 %v139
    %4276 = vmatpush1.msra.mxu0 %v138
    %4277 = vmatprep.subr.mxu0 %v135
    %4278 = vmatpush1.msra.mxu0 %v134
    %4279 = vmatprep.subr.mxu0 %v131
    %4280 = vmatpush1.msra.mxu0 %v130
    %4281 = vmatprep.subr.mxu0 %v127
    %4282 = vmatpush1.msra.mxu0 %v126
    %4283 = vmatprep.subr.mxu0 %v123
    %4284 = vmatpush1.msra.mxu0 %v122
    %4285 = vmatprep.subr.mxu0 %v119
    %4286 = vmatpush1.msra.mxu0 %v118
    %4287 = vmatprep.subr.mxu0 %v115
    %4288 = vmatpush1.msra.mxu0 %v114
    %4289 = vmatprep.subr.mxu0 %v111
    %4290 = vmatpush1.msra.mxu0 %v110
    %4291 = vmatprep.subr.mxu0 %v107
    %4292 = vmatpush1.msra.mxu0 %v106
    %4293 = vmatprep.subr.mxu0 %v103
    %4294 = vmatpush1.msra.mxu0 %v102
    %4295 = vmatprep.subr.mxu0 %v99
    %4296 = vmatpush1.msra.mxu0 %v98
    %4297 = vmatprep.subr.mxu0 %v95
    %4298 = vmatpush1.msra.mxu0 %v94
    %4299 = vmatprep.subr.mxu0 0.0
    %4300 = vmatpush2.msra.mxu0 0.0
    %4301 = vmatprep.subr.mxu0 0.0
    %4302 = vmatpush2.msra.mxu0 0.0
    %4303 = vmatprep.subr.mxu0 0.0
    %4304 = vmatpush2.msra.mxu0 0.0
    %4305 = vmatprep.subr.mxu0 0.0
    %4306 = vmatpush2.msra.mxu0 0.0
    %4307 = vmatprep.subr.mxu0 0.0
    %4308 = vmatpush2.msra.mxu0 0.0
    %4309 = vmatprep.subr.mxu0 %v199
    %4310 = vmatpush2.msra.mxu0 %v198
    %4311 = vmatprep.subr.mxu0 %v195
    %4312 = vmatpush2.msra.mxu0 %v194
    %4313 = vmatprep.subr.mxu0 %v191
    %4314 = vmatpush2.msra.mxu0 %v190
    %4315 = vmatprep.subr.mxu0 %v187
    %4316 = vmatpush2.msra.mxu0 %v186
    %4317 = vmatprep.subr.mxu0 %v183
    %4318 = vmatpush2.msra.mxu0 %v182
    %4319 = vmatprep.subr.mxu0 %v179
    %4320 = vmatpush2.msra.mxu0 %v178
    %4321 = vmatprep.subr.mxu0 %v175
    %4322 = vmatpush2.msra.mxu0 %v174
    %4323 = vmatprep.subr.mxu0 %v171
    %4324 = vmatpush2.msra.mxu0 %v170
    %4325 = vmatprep.subr.mxu0 %v167
    %4326 = vmatpush2.msra.mxu0 %v166
    %4327 = vmatprep.subr.mxu0 %v163
    %4328 = vmatpush2.msra.mxu0 %v162
    %4329 = vmatprep.subr.mxu0 %v159
    %4330 = vmatpush2.msra.mxu0 %v158
    %4331 = vmatprep.mubr.f32.mxu0 %v4178
    %4332 = vmatmul.mubr.f32.gmra.mxu0 %v4041
    %v4333 = vpop.f32.mrf.mxu0
    %v4334 = vadd.f32 %v36, %v4333
    %v4335 = vpop.f32.mrf.mxu0
    %v4336 = vadd.f32 %v40, %v4335
    %4337 = vmatprep.mubr.f32.mxu0 %v4180
    %4338 = vmatmul.mubr.f32.gmra.mxu0 %v4107
    %v4339 = vpop.f32.mrf.mxu0
    %v4340 = vadd.f32 %v36, %v4339
    %v4341 = vpop.f32.mrf.mxu0
    %v4342 = vadd.f32 %v40, %v4341
    %4343 = vmatprep.mubr.f32.mxu0 %v4182
    %4344 = vmatmul.mubr.f32.gmra.mxu0 %v4173
    %v4345 = vpop.f32.mrf.mxu0
    %v4346 = vadd.f32 %v36, %v4345
    %v4347 = vpop.f32.mrf.mxu0
    %v4348 = vadd.f32 %v40, %v4347
    %4349 = vdwg.mxu0
    %v4350 = vmax.f32 %v4251, 0.0
    %v4351 = vmax.f32 %v4253, 0.0
    %v4352 = vmax.f32 %v4334, 0.0
    %v4353 = vmax.f32 %v4336, 0.0
    %v4354 = vmax.f32 %v4257, 0.0
    %v4355 = vmax.f32 %v4259, 0.0
    %v4356 = vmax.f32 %v4340, 0.0
    %v4357 = vmax.f32 %v4342, 0.0
    %v4358 = vmax.f32 %v4263, 0.0
    %v4359 = vmax.f32 %v4265, 0.0
    %v4360 = vmax.f32 %v4346, 0.0
    %v4361 = vmax.f32 %v4348, 0.0
    %v4362 = vadd.f32 %v3893, %v4350
    %v4363 = vadd.f32 %v3894, %v4351
    %v4364 = vadd.f32 %v3895, %v4352
    %v4365 = vadd.f32 %v3896, %v4353
    %v4366 = vadd.f32 %v3897, %v4354
    %v4367 = vadd.f32 %v3898, %v4355
    %v4368 = vadd.f32 %v3899, %v4356
    %v4369 = vadd.f32 %v3900, %v4357
    %v4370 = vadd.f32 %v3901, %v4358
    %v4371 = vadd.f32 %v3902, %v4359
    %v4372 = vadd.f32 %v3903, %v4360
    %v4373 = vadd.f32 %v3904, %v4361
    %s4374 = scalar_lea.vmem %s0, 17
    %v4375 = vld [vmem:[%s4374] ss:$8 sm:$0x3]
    %s4376 = scalar_lea.vmem %s0, 49
    %v4377 = vld [vmem:[%s4376] ss:$8 sm:$0x3]
    %s4378 = scalar_lea.vmem %s0, 81
    %v4379 = vld [vmem:[%s4378] ss:$8 sm:$0x3]
    %s4380 = scalar_lea.vmem %s0, 113
    %v4381 = vld [vmem:[%s4380] ss:$8 sm:$0x3]
    %s4382 = scalar_lea.vmem %s0, 145
    %v4383 = vld [vmem:[%s4382] ss:$8 sm:$0x3]
    %s4384 = scalar_lea.vmem %s0, 177
    %v4385 = vld [vmem:[%s4384] ss:$8 sm:$0x3]
    %s4386 = scalar_lea.vmem %s0, 209
    %v4387 = vld [vmem:[%s4386] ss:$8 sm:$0x3]
    %s4388 = scalar_lea.vmem %s0, 241
    %v4389 = vld [vmem:[%s4388] ss:$8 sm:$0x3]
    %s4390 = scalar_lea.vmem %s0, 273
    %v4391 = vld [vmem:[%s4390] ss:$8 sm:$0x3]
    %s4392 = scalar_lea.vmem %s0, 305
    %v4393 = vld [vmem:[%s4392] ss:$8 sm:$0x3]
    %s4394 = scalar_lea.vmem %s0, 337
    %v4395 = vld [vmem:[%s4394] ss:$8 sm:$0x3]
    %s4396 = scalar_lea.vmem %s0, 369
    %v4397 = vld [vmem:[%s4396] ss:$8 sm:$0x3]
    %s4398 = scalar_lea.vmem %s0, 401
    %v4399 = vld [vmem:[%s4398] ss:$8 sm:$0x3]
    %s4400 = scalar_lea.vmem %s0, 433
    %v4401 = vld [vmem:[%s4400] ss:$8 sm:$0x3]
    %s4402 = scalar_lea.vmem %s0, 465
    %v4403 = vld [vmem:[%s4402] ss:$8 sm:$0x3]
    %s4404 = scalar_lea.vmem %s0, 497
    %v4405 = vld [vmem:[%s4404] ss:$8 sm:$0x3]
    %s4406 = scalar_lea.vmem %s0, 529
    %v4407 = vld [vmem:[%s4406] ss:$8 sm:$0x3]
    %s4408 = scalar_lea.vmem %s0, 561
    %v4409 = vld [vmem:[%s4408] ss:$8 sm:$0x3]
    %s4410 = scalar_lea.vmem %s0, 593
    %v4411 = vld [vmem:[%s4410] ss:$8 sm:$0x3]
    %s4412 = scalar_lea.vmem %s0, 625
    %v4413 = vld [vmem:[%s4412] ss:$8 sm:$0x3]
    %s4414 = scalar_lea.vmem %s0, 657
    %v4415 = vld [vmem:[%s4414] ss:$8 sm:$0x3]
    %s4416 = scalar_lea.vmem %s0, 689
    %v4417 = vld [vmem:[%s4416] ss:$8 sm:$0x3]
    %s4418 = scalar_lea.vmem %s0, 721
    %v4419 = vld [vmem:[%s4418] ss:$8 sm:$0x3]
    %s4420 = scalar_lea.vmem %s0, 753
    %v4421 = vld [vmem:[%s4420] ss:$8 sm:$0x3]
    %v4446 = vcombine.low %v4375, %v4377
    %v4447 = vcombine.low %v4379, %v4381
    %v4448 = vcombine.low %v4383, %v4385
    %v4449 = vcombine.low %v4387, %v4389
    %v4451 = vunpack.c.l.s4 1966171168
    %v4452 = vunpack.c.0.s8 %v4451
    %v4453 = vlaneseq
    %v4454 = vshrl.u32 %v4453, 7
    %v4455 = vsub.s32 %v4452, %v4454
    %v4456 = vrot.slane %v4446, %v4455
    %v4458 = vunpack.c.l.s4 1966171168
    %v4459 = vunpack.c.0.s8 %v4458
    %v4460 = vlaneseq
    %v4461 = vshrl.u32 %v4460, 7
    %v4462 = vsub.s32 %v4459, %v4461
    %v4463 = vrot.slane %v4447, %v4462
    %v4465 = vunpack.c.l.s4 1966171168
    %v4466 = vunpack.c.0.s8 %v4465
    %v4467 = vlaneseq
    %v4468 = vshrl.u32 %v4467, 7
    %v4469 = vsub.s32 %v4466, %v4468
    %v4470 = vrot.slane %v4448, %v4469
    %v4472 = vunpack.c.l.s4 1966171168
    %v4473 = vunpack.c.0.s8 %v4472
    %v4474 = vlaneseq
    %v4475 = vshrl.u32 %v4474, 7
    %v4476 = vsub.s32 %v4473, %v4475
    %v4477 = vrot.slane %v4449, %v4476
    %v4478 = vcombine.low %v4456, %v4463
    %v4479 = vcombine.high %v4456, %v4463
    %v4480 = vcombine.low %v4470, %v4477
    %v4481 = vcombine.high %v4470, %v4477
    %v4483 = vunpack.c.l.s4 1966171168
    %v4484 = vunpack.c.0.s8 %v4483
    %v4485 = vlaneseq
    %v4486 = vshrl.u32 %v4485, 7
    %v4487 = vsub.s32 %v4484, %v4486
    %v4488 = vrot.slane %v4478, %v4487
    %v4490 = vunpack.c.l.s4 1966171168
    %v4491 = vunpack.c.0.s8 %v4490
    %v4492 = vlaneseq
    %v4493 = vshrl.u32 %v4492, 7
    %v4494 = vsub.s32 %v4491, %v4493
    %v4495 = vrot.slane %v4479, %v4494
    %v4497 = vunpack.c.l.s4 1966171168
    %v4498 = vunpack.c.0.s8 %v4497
    %v4499 = vlaneseq
    %v4500 = vshrl.u32 %v4499, 7
    %v4501 = vsub.s32 %v4498, %v4500
    %v4502 = vrot.slane %v4480, %v4501
    %v4504 = vunpack.c.l.s4 1966171168
    %v4505 = vunpack.c.0.s8 %v4504
    %v4506 = vlaneseq
    %v4507 = vshrl.u32 %v4506, 7
    %v4508 = vsub.s32 %v4505, %v4507
    %v4509 = vrot.slane %v4481, %v4508
    %v4510 = vcombine.low %v4488, %v4502
    %v4511 = vcombine.low %v4495, %v4509
    %v4512 = vcombine.low %v4391, %v4393
    %v4513 = vcombine.low %v4395, %v4397
    %v4514 = vcombine.low %v4399, %v4401
    %v4515 = vcombine.low %v4403, %v4405
    %v4517 = vunpack.c.l.s4 1966171168
    %v4518 = vunpack.c.0.s8 %v4517
    %v4519 = vlaneseq
    %v4520 = vshrl.u32 %v4519, 7
    %v4521 = vsub.s32 %v4518, %v4520
    %v4522 = vrot.slane %v4512, %v4521
    %v4524 = vunpack.c.l.s4 1966171168
    %v4525 = vunpack.c.0.s8 %v4524
    %v4526 = vlaneseq
    %v4527 = vshrl.u32 %v4526, 7
    %v4528 = vsub.s32 %v4525, %v4527
    %v4529 = vrot.slane %v4513, %v4528
    %v4531 = vunpack.c.l.s4 1966171168
    %v4532 = vunpack.c.0.s8 %v4531
    %v4533 = vlaneseq
    %v4534 = vshrl.u32 %v4533, 7
    %v4535 = vsub.s32 %v4532, %v4534
    %v4536 = vrot.slane %v4514, %v4535
    %v4538 = vunpack.c.l.s4 1966171168
    %v4539 = vunpack.c.0.s8 %v4538
    %v4540 = vlaneseq
    %v4541 = vshrl.u32 %v4540, 7
    %v4542 = vsub.s32 %v4539, %v4541
    %v4543 = vrot.slane %v4515, %v4542
    %v4544 = vcombine.low %v4522, %v4529
    %v4545 = vcombine.high %v4522, %v4529
    %v4546 = vcombine.low %v4536, %v4543
    %v4547 = vcombine.high %v4536, %v4543
    %v4549 = vunpack.c.l.s4 1966171168
    %v4550 = vunpack.c.0.s8 %v4549
    %v4551 = vlaneseq
    %v4552 = vshrl.u32 %v4551, 7
    %v4553 = vsub.s32 %v4550, %v4552
    %v4554 = vrot.slane %v4544, %v4553
    %v4556 = vunpack.c.l.s4 1966171168
    %v4557 = vunpack.c.0.s8 %v4556
    %v4558 = vlaneseq
    %v4559 = vshrl.u32 %v4558, 7
    %v4560 = vsub.s32 %v4557, %v4559
    %v4561 = vrot.slane %v4545, %v4560
    %v4563 = vunpack.c.l.s4 1966171168
    %v4564 = vunpack.c.0.s8 %v4563
    %v4565 = vlaneseq
    %v4566 = vshrl.u32 %v4565, 7
    %v4567 = vsub.s32 %v4564, %v4566
    %v4568 = vrot.slane %v4546, %v4567
    %v4570 = vunpack.c.l.s4 1966171168
    %v4571 = vunpack.c.0.s8 %v4570
    %v4572 = vlaneseq
    %v4573 = vshrl.u32 %v4572, 7
    %v4574 = vsub.s32 %v4571, %v4573
    %v4575 = vrot.slane %v4547, %v4574
    %v4576 = vcombine.low %v4554, %v4568
    %v4577 = vcombine.low %v4561, %v4575
    %v4578 = vcombine.low %v4407, %v4409
    %v4579 = vcombine.low %v4411, %v4413
    %v4580 = vcombine.low %v4415, %v4417
    %v4581 = vcombine.low %v4419, %v4421
    %v4583 = vunpack.c.l.s4 1966171168
    %v4584 = vunpack.c.0.s8 %v4583
    %v4585 = vlaneseq
    %v4586 = vshrl.u32 %v4585, 7
    %v4587 = vsub.s32 %v4584, %v4586
    %v4588 = vrot.slane %v4578, %v4587
    %v4590 = vunpack.c.l.s4 1966171168
    %v4591 = vunpack.c.0.s8 %v4590
    %v4592 = vlaneseq
    %v4593 = vshrl.u32 %v4592, 7
    %v4594 = vsub.s32 %v4591, %v4593
    %v4595 = vrot.slane %v4579, %v4594
    %v4597 = vunpack.c.l.s4 1966171168
    %v4598 = vunpack.c.0.s8 %v4597
    %v4599 = vlaneseq
    %v4600 = vshrl.u32 %v4599, 7
    %v4601 = vsub.s32 %v4598, %v4600
    %v4602 = vrot.slane %v4580, %v4601
    %v4604 = vunpack.c.l.s4 1966171168
    %v4605 = vunpack.c.0.s8 %v4604
    %v4606 = vlaneseq
    %v4607 = vshrl.u32 %v4606, 7
    %v4608 = vsub.s32 %v4605, %v4607
    %v4609 = vrot.slane %v4581, %v4608
    %v4610 = vcombine.low %v4588, %v4595
    %v4611 = vcombine.high %v4588, %v4595
    %v4612 = vcombine.low %v4602, %v4609
    %v4613 = vcombine.high %v4602, %v4609
    %v4615 = vunpack.c.l.s4 1966171168
    %v4616 = vunpack.c.0.s8 %v4615
    %v4617 = vlaneseq
    %v4618 = vshrl.u32 %v4617, 7
    %v4619 = vsub.s32 %v4616, %v4618
    %v4620 = vrot.slane %v4610, %v4619
    %v4622 = vunpack.c.l.s4 1966171168
    %v4623 = vunpack.c.0.s8 %v4622
    %v4624 = vlaneseq
    %v4625 = vshrl.u32 %v4624, 7
    %v4626 = vsub.s32 %v4623, %v4625
    %v4627 = vrot.slane %v4611, %v4626
    %v4629 = vunpack.c.l.s4 1966171168
    %v4630 = vunpack.c.0.s8 %v4629
    %v4631 = vlaneseq
    %v4632 = vshrl.u32 %v4631, 7
    %v4633 = vsub.s32 %v4630, %v4632
    %v4634 = vrot.slane %v4612, %v4633
    %v4636 = vunpack.c.l.s4 1966171168
    %v4637 = vunpack.c.0.s8 %v4636
    %v4638 = vlaneseq
    %v4639 = vshrl.u32 %v4638, 7
    %v4640 = vsub.s32 %v4637, %v4639
    %v4641 = vrot.slane %v4613, %v4640
    %v4642 = vcombine.low %v4620, %v4634
    %v4643 = vcombine.low %v4627, %v4641
    %v4647 = vsel %vm425, %v4511, 0
    %v4649 = vsel %vm425, %v4577, 0
    %v4651 = vsel %vm425, %v4643, 0
    %4653 = vmatprep.subr.mxu0 %v153
    %4654 = vmatpush1.msra.mxu0 %v152
    %4655 = vmatprep.subr.mxu0 %v149
    %4656 = vmatpush1.msra.mxu0 %v148
    %4657 = vmatprep.subr.mxu0 %v145
    %4658 = vmatpush1.msra.mxu0 %v144
    %4659 = vmatprep.subr.mxu0 %v141
    %4660 = vmatpush1.msra.mxu0 %v140
    %4661 = vmatprep.subr.mxu0 %v137
    %4662 = vmatpush1.msra.mxu0 %v136
    %4663 = vmatprep.subr.mxu0 %v133
    %4664 = vmatpush1.msra.mxu0 %v132
    %4665 = vmatprep.subr.mxu0 %v129
    %4666 = vmatpush1.msra.mxu0 %v128
    %4667 = vmatprep.subr.mxu0 %v125
    %4668 = vmatpush1.msra.mxu0 %v124
    %4669 = vmatprep.subr.mxu0 %v121
    %4670 = vmatpush1.msra.mxu0 %v120
    %4671 = vmatprep.subr.mxu0 %v117
    %4672 = vmatpush1.msra.mxu0 %v116
    %4673 = vmatprep.subr.mxu0 %v113
    %4674 = vmatpush1.msra.mxu0 %v112
    %4675 = vmatprep.subr.mxu0 %v109
    %4676 = vmatpush1.msra.mxu0 %v108
    %4677 = vmatprep.subr.mxu0 %v105
    %4678 = vmatpush1.msra.mxu0 %v104
    %4679 = vmatprep.subr.mxu0 %v101
    %4680 = vmatpush1.msra.mxu0 %v100
    %4681 = vmatprep.subr.mxu0 %v97
    %4682 = vmatpush1.msra.mxu0 %v96
    %4683 = vmatprep.subr.mxu0 %v93
    %4684 = vmatpush1.msra.mxu0 %v92
    %4685 = vmatprep.subr.mxu0 0.0
    %4686 = vmatpush2.msra.mxu0 0.0
    %4687 = vmatprep.subr.mxu0 0.0
    %4688 = vmatpush2.msra.mxu0 0.0
    %4689 = vmatprep.subr.mxu0 0.0
    %4690 = vmatpush2.msra.mxu0 0.0
    %4691 = vmatprep.subr.mxu0 0.0
    %4692 = vmatpush2.msra.mxu0 0.0
    %4693 = vmatprep.subr.mxu0 0.0
    %4694 = vmatpush2.msra.mxu0 0.0
    %4695 = vmatprep.subr.mxu0 %v197
    %4696 = vmatpush2.msra.mxu0 %v196
    %4697 = vmatprep.subr.mxu0 %v193
    %4698 = vmatpush2.msra.mxu0 %v192
    %4699 = vmatprep.subr.mxu0 %v189
    %4700 = vmatpush2.msra.mxu0 %v188
    %4701 = vmatprep.subr.mxu0 %v185
    %4702 = vmatpush2.msra.mxu0 %v184
    %4703 = vmatprep.subr.mxu0 %v181
    %4704 = vmatpush2.msra.mxu0 %v180
    %4705 = vmatprep.subr.mxu0 %v177
    %4706 = vmatpush2.msra.mxu0 %v176
    %4707 = vmatprep.subr.mxu0 %v173
    %4708 = vmatpush2.msra.mxu0 %v172
    %4709 = vmatprep.subr.mxu0 %v169
    %4710 = vmatpush2.msra.mxu0 %v168
    %4711 = vmatprep.subr.mxu0 %v165
    %4712 = vmatpush2.msra.mxu0 %v164
    %4713 = vmatprep.subr.mxu0 %v161
    %4714 = vmatpush2.msra.mxu0 %v160
    %4715 = vmatprep.subr.mxu0 %v157
    %4716 = vmatpush2.msra.mxu0 %v156
    %4717 = vmatprep.mubr.f32.mxu0 %v4647
    %4718 = vmatmul.mubr.f32.gmra.mxu0 %v4510
    %v4719 = vpop.f32.mrf.mxu0
    %v4720 = vadd.f32 %v28, %v4719
    %v4721 = vpop.f32.mrf.mxu0
    %v4722 = vadd.f32 %v32, %v4721
    %4723 = vmatprep.mubr.f32.mxu0 %v4649
    %4724 = vmatmul.mubr.f32.gmra.mxu0 %v4576
    %v4725 = vpop.f32.mrf.mxu0
    %v4726 = vadd.f32 %v28, %v4725
    %v4727 = vpop.f32.mrf.mxu0
    %v4728 = vadd.f32 %v32, %v4727
    %4729 = vmatprep.mubr.f32.mxu0 %v4651
    %4730 = vmatmul.mubr.f32.gmra.mxu0 %v4642
    %v4731 = vpop.f32.mrf.mxu0
    %v4732 = vadd.f32 %v28, %v4731
    %v4733 = vpop.f32.mrf.mxu0
    %v4734 = vadd.f32 %v32, %v4733
    %4735 = vdwg.mxu0
    %4736 = vmatprep.subr.mxu0 %v155
    %4737 = vmatpush1.msra.mxu0 %v154
    %4738 = vmatprep.subr.mxu0 %v151
    %4739 = vmatpush1.msra.mxu0 %v150
    %4740 = vmatprep.subr.mxu0 %v147
    %4741 = vmatpush1.msra.mxu0 %v146
    %4742 = vmatprep.subr.mxu0 %v143
    %4743 = vmatpush1.msra.mxu0 %v142
    %4744 = vmatprep.subr.mxu0 %v139
    %4745 = vmatpush1.msra.mxu0 %v138
    %4746 = vmatprep.subr.mxu0 %v135
    %4747 = vmatpush1.msra.mxu0 %v134
    %4748 = vmatprep.subr.mxu0 %v131
    %4749 = vmatpush1.msra.mxu0 %v130
    %4750 = vmatprep.subr.mxu0 %v127
    %4751 = vmatpush1.msra.mxu0 %v126
    %4752 = vmatprep.subr.mxu0 %v123
    %4753 = vmatpush1.msra.mxu0 %v122
    %4754 = vmatprep.subr.mxu0 %v119
    %4755 = vmatpush1.msra.mxu0 %v118
    %4756 = vmatprep.subr.mxu0 %v115
    %4757 = vmatpush1.msra.mxu0 %v114
    %4758 = vmatprep.subr.mxu0 %v111
    %4759 = vmatpush1.msra.mxu0 %v110
    %4760 = vmatprep.subr.mxu0 %v107
    %4761 = vmatpush1.msra.mxu0 %v106
    %4762 = vmatprep.subr.mxu0 %v103
    %4763 = vmatpush1.msra.mxu0 %v102
    %4764 = vmatprep.subr.mxu0 %v99
    %4765 = vmatpush1.msra.mxu0 %v98
    %4766 = vmatprep.subr.mxu0 %v95
    %4767 = vmatpush1.msra.mxu0 %v94
    %4768 = vmatprep.subr.mxu0 0.0
    %4769 = vmatpush2.msra.mxu0 0.0
    %4770 = vmatprep.subr.mxu0 0.0
    %4771 = vmatpush2.msra.mxu0 0.0
    %4772 = vmatprep.subr.mxu0 0.0
    %4773 = vmatpush2.msra.mxu0 0.0
    %4774 = vmatprep.subr.mxu0 0.0
    %4775 = vmatpush2.msra.mxu0 0.0
    %4776 = vmatprep.subr.mxu0 0.0
    %4777 = vmatpush2.msra.mxu0 0.0
    %4778 = vmatprep.subr.mxu0 %v199
    %4779 = vmatpush2.msra.mxu0 %v198
    %4780 = vmatprep.subr.mxu0 %v195
    %4781 = vmatpush2.msra.mxu0 %v194
    %4782 = vmatprep.subr.mxu0 %v191
    %4783 = vmatpush2.msra.mxu0 %v190
    %4784 = vmatprep.subr.mxu0 %v187
    %4785 = vmatpush2.msra.mxu0 %v186
    %4786 = vmatprep.subr.mxu0 %v183
    %4787 = vmatpush2.msra.mxu0 %v182
    %4788 = vmatprep.subr.mxu0 %v179
    %4789 = vmatpush2.msra.mxu0 %v178
    %4790 = vmatprep.subr.mxu0 %v175
    %4791 = vmatpush2.msra.mxu0 %v174
    %4792 = vmatprep.subr.mxu0 %v171
    %4793 = vmatpush2.msra.mxu0 %v170
    %4794 = vmatprep.subr.mxu0 %v167
    %4795 = vmatpush2.msra.mxu0 %v166
    %4796 = vmatprep.subr.mxu0 %v163
    %4797 = vmatpush2.msra.mxu0 %v162
    %4798 = vmatprep.subr.mxu0 %v159
    %4799 = vmatpush2.msra.mxu0 %v158
    %4800 = vmatprep.mubr.f32.mxu0 %v4647
    %4801 = vmatmul.mubr.f32.gmra.mxu0 %v4510
    %v4802 = vpop.f32.mrf.mxu0
    %v4803 = vadd.f32 %v36, %v4802
    %v4804 = vpop.f32.mrf.mxu0
    %v4805 = vadd.f32 %v40, %v4804
    %4806 = vmatprep.mubr.f32.mxu0 %v4649
    %4807 = vmatmul.mubr.f32.gmra.mxu0 %v4576
    %v4808 = vpop.f32.mrf.mxu0
    %v4809 = vadd.f32 %v36, %v4808
    %v4810 = vpop.f32.mrf.mxu0
    %v4811 = vadd.f32 %v40, %v4810
    %4812 = vmatprep.mubr.f32.mxu0 %v4651
    %4813 = vmatmul.mubr.f32.gmra.mxu0 %v4642
    %v4814 = vpop.f32.mrf.mxu0
    %v4815 = vadd.f32 %v36, %v4814
    %v4816 = vpop.f32.mrf.mxu0
    %v4817 = vadd.f32 %v40, %v4816
    %4818 = vdwg.mxu0
    %v4819 = vmax.f32 %v4720, 0.0
    %v4820 = vmax.f32 %v4722, 0.0
    %v4821 = vmax.f32 %v4803, 0.0
    %v4822 = vmax.f32 %v4805, 0.0
    %v4823 = vmax.f32 %v4726, 0.0
    %v4824 = vmax.f32 %v4728, 0.0
    %v4825 = vmax.f32 %v4809, 0.0
    %v4826 = vmax.f32 %v4811, 0.0
    %v4827 = vmax.f32 %v4732, 0.0
    %v4828 = vmax.f32 %v4734, 0.0
    %v4829 = vmax.f32 %v4815, 0.0
    %v4830 = vmax.f32 %v4817, 0.0
    %v4831 = vadd.f32 %v4362, %v4819
    %v4832 = vadd.f32 %v4363, %v4820
    %v4833 = vadd.f32 %v4364, %v4821
    %v4834 = vadd.f32 %v4365, %v4822
    %v4835 = vadd.f32 %v4366, %v4823
    %v4836 = vadd.f32 %v4367, %v4824
    %v4837 = vadd.f32 %v4368, %v4825
    %v4838 = vadd.f32 %v4369, %v4826
    %v4839 = vadd.f32 %v4370, %v4827
    %v4840 = vadd.f32 %v4371, %v4828
    %v4841 = vadd.f32 %v4372, %v4829
    %v4842 = vadd.f32 %v4373, %v4830
    %s4843 = scalar_lea.vmem %s0, 18
    %v4844 = vld [vmem:[%s4843] ss:$8 sm:$0x3]
    %s4845 = scalar_lea.vmem %s0, 50
    %v4846 = vld [vmem:[%s4845] ss:$8 sm:$0x3]
    %s4847 = scalar_lea.vmem %s0, 82
    %v4848 = vld [vmem:[%s4847] ss:$8 sm:$0x3]
    %s4849 = scalar_lea.vmem %s0, 114
    %v4850 = vld [vmem:[%s4849] ss:$8 sm:$0x3]
    %s4851 = scalar_lea.vmem %s0, 146
    %v4852 = vld [vmem:[%s4851] ss:$8 sm:$0x3]
    %s4853 = scalar_lea.vmem %s0, 178
    %v4854 = vld [vmem:[%s4853] ss:$8 sm:$0x3]
    %s4855 = scalar_lea.vmem %s0, 210
    %v4856 = vld [vmem:[%s4855] ss:$8 sm:$0x3]
    %s4857 = scalar_lea.vmem %s0, 242
    %v4858 = vld [vmem:[%s4857] ss:$8 sm:$0x3]
    %s4859 = scalar_lea.vmem %s0, 274
    %v4860 = vld [vmem:[%s4859] ss:$8 sm:$0x3]
    %s4861 = scalar_lea.vmem %s0, 306
    %v4862 = vld [vmem:[%s4861] ss:$8 sm:$0x3]
    %s4863 = scalar_lea.vmem %s0, 338
    %v4864 = vld [vmem:[%s4863] ss:$8 sm:$0x3]
    %s4865 = scalar_lea.vmem %s0, 370
    %v4866 = vld [vmem:[%s4865] ss:$8 sm:$0x3]
    %s4867 = scalar_lea.vmem %s0, 402
    %v4868 = vld [vmem:[%s4867] ss:$8 sm:$0x3]
    %s4869 = scalar_lea.vmem %s0, 434
    %v4870 = vld [vmem:[%s4869] ss:$8 sm:$0x3]
    %s4871 = scalar_lea.vmem %s0, 466
    %v4872 = vld [vmem:[%s4871] ss:$8 sm:$0x3]
    %s4873 = scalar_lea.vmem %s0, 498
    %v4874 = vld [vmem:[%s4873] ss:$8 sm:$0x3]
    %s4875 = scalar_lea.vmem %s0, 530
    %v4876 = vld [vmem:[%s4875] ss:$8 sm:$0x3]
    %s4877 = scalar_lea.vmem %s0, 562
    %v4878 = vld [vmem:[%s4877] ss:$8 sm:$0x3]
    %s4879 = scalar_lea.vmem %s0, 594
    %v4880 = vld [vmem:[%s4879] ss:$8 sm:$0x3]
    %s4881 = scalar_lea.vmem %s0, 626
    %v4882 = vld [vmem:[%s4881] ss:$8 sm:$0x3]
    %s4883 = scalar_lea.vmem %s0, 658
    %v4884 = vld [vmem:[%s4883] ss:$8 sm:$0x3]
    %s4885 = scalar_lea.vmem %s0, 690
    %v4886 = vld [vmem:[%s4885] ss:$8 sm:$0x3]
    %s4887 = scalar_lea.vmem %s0, 722
    %v4888 = vld [vmem:[%s4887] ss:$8 sm:$0x3]
    %s4889 = scalar_lea.vmem %s0, 754
    %v4890 = vld [vmem:[%s4889] ss:$8 sm:$0x3]
    %v4915 = vcombine.low %v4844, %v4846
    %v4916 = vcombine.low %v4848, %v4850
    %v4917 = vcombine.low %v4852, %v4854
    %v4918 = vcombine.low %v4856, %v4858
    %v4920 = vunpack.c.l.s4 1966171168
    %v4921 = vunpack.c.0.s8 %v4920
    %v4922 = vlaneseq
    %v4923 = vshrl.u32 %v4922, 7
    %v4924 = vsub.s32 %v4921, %v4923
    %v4925 = vrot.slane %v4915, %v4924
    %v4927 = vunpack.c.l.s4 1966171168
    %v4928 = vunpack.c.0.s8 %v4927
    %v4929 = vlaneseq
    %v4930 = vshrl.u32 %v4929, 7
    %v4931 = vsub.s32 %v4928, %v4930
    %v4932 = vrot.slane %v4916, %v4931
    %v4934 = vunpack.c.l.s4 1966171168
    %v4935 = vunpack.c.0.s8 %v4934
    %v4936 = vlaneseq
    %v4937 = vshrl.u32 %v4936, 7
    %v4938 = vsub.s32 %v4935, %v4937
    %v4939 = vrot.slane %v4917, %v4938
    %v4941 = vunpack.c.l.s4 1966171168
    %v4942 = vunpack.c.0.s8 %v4941
    %v4943 = vlaneseq
    %v4944 = vshrl.u32 %v4943, 7
    %v4945 = vsub.s32 %v4942, %v4944
    %v4946 = vrot.slane %v4918, %v4945
    %v4947 = vcombine.low %v4925, %v4932
    %v4948 = vcombine.high %v4925, %v4932
    %v4949 = vcombine.low %v4939, %v4946
    %v4950 = vcombine.high %v4939, %v4946
    %v4952 = vunpack.c.l.s4 1966171168
    %v4953 = vunpack.c.0.s8 %v4952
    %v4954 = vlaneseq
    %v4955 = vshrl.u32 %v4954, 7
    %v4956 = vsub.s32 %v4953, %v4955
    %v4957 = vrot.slane %v4947, %v4956
    %v4959 = vunpack.c.l.s4 1966171168
    %v4960 = vunpack.c.0.s8 %v4959
    %v4961 = vlaneseq
    %v4962 = vshrl.u32 %v4961, 7
    %v4963 = vsub.s32 %v4960, %v4962
    %v4964 = vrot.slane %v4948, %v4963
    %v4966 = vunpack.c.l.s4 1966171168
    %v4967 = vunpack.c.0.s8 %v4966
    %v4968 = vlaneseq
    %v4969 = vshrl.u32 %v4968, 7
    %v4970 = vsub.s32 %v4967, %v4969
    %v4971 = vrot.slane %v4949, %v4970
    %v4973 = vunpack.c.l.s4 1966171168
    %v4974 = vunpack.c.0.s8 %v4973
    %v4975 = vlaneseq
    %v4976 = vshrl.u32 %v4975, 7
    %v4977 = vsub.s32 %v4974, %v4976
    %v4978 = vrot.slane %v4950, %v4977
    %v4979 = vcombine.low %v4957, %v4971
    %v4980 = vcombine.low %v4964, %v4978
    %v4981 = vcombine.low %v4860, %v4862
    %v4982 = vcombine.low %v4864, %v4866
    %v4983 = vcombine.low %v4868, %v4870
    %v4984 = vcombine.low %v4872, %v4874
    %v4986 = vunpack.c.l.s4 1966171168
    %v4987 = vunpack.c.0.s8 %v4986
    %v4988 = vlaneseq
    %v4989 = vshrl.u32 %v4988, 7
    %v4990 = vsub.s32 %v4987, %v4989
    %v4991 = vrot.slane %v4981, %v4990
    %v4993 = vunpack.c.l.s4 1966171168
    %v4994 = vunpack.c.0.s8 %v4993
    %v4995 = vlaneseq
    %v4996 = vshrl.u32 %v4995, 7
    %v4997 = vsub.s32 %v4994, %v4996
    %v4998 = vrot.slane %v4982, %v4997
    %v5000 = vunpack.c.l.s4 1966171168
    %v5001 = vunpack.c.0.s8 %v5000
    %v5002 = vlaneseq
    %v5003 = vshrl.u32 %v5002, 7
    %v5004 = vsub.s32 %v5001, %v5003
    %v5005 = vrot.slane %v4983, %v5004
    %v5007 = vunpack.c.l.s4 1966171168
    %v5008 = vunpack.c.0.s8 %v5007
    %v5009 = vlaneseq
    %v5010 = vshrl.u32 %v5009, 7
    %v5011 = vsub.s32 %v5008, %v5010
    %v5012 = vrot.slane %v4984, %v5011
    %v5013 = vcombine.low %v4991, %v4998
    %v5014 = vcombine.high %v4991, %v4998
    %v5015 = vcombine.low %v5005, %v5012
    %v5016 = vcombine.high %v5005, %v5012
    %v5018 = vunpack.c.l.s4 1966171168
    %v5019 = vunpack.c.0.s8 %v5018
    %v5020 = vlaneseq
    %v5021 = vshrl.u32 %v5020, 7
    %v5022 = vsub.s32 %v5019, %v5021
    %v5023 = vrot.slane %v5013, %v5022
    %v5025 = vunpack.c.l.s4 1966171168
    %v5026 = vunpack.c.0.s8 %v5025
    %v5027 = vlaneseq
    %v5028 = vshrl.u32 %v5027, 7
    %v5029 = vsub.s32 %v5026, %v5028
    %v5030 = vrot.slane %v5014, %v5029
    %v5032 = vunpack.c.l.s4 1966171168
    %v5033 = vunpack.c.0.s8 %v5032
    %v5034 = vlaneseq
    %v5035 = vshrl.u32 %v5034, 7
    %v5036 = vsub.s32 %v5033, %v5035
    %v5037 = vrot.slane %v5015, %v5036
    %v5039 = vunpack.c.l.s4 1966171168
    %v5040 = vunpack.c.0.s8 %v5039
    %v5041 = vlaneseq
    %v5042 = vshrl.u32 %v5041, 7
    %v5043 = vsub.s32 %v5040, %v5042
    %v5044 = vrot.slane %v5016, %v5043
    %v5045 = vcombine.low %v5023, %v5037
    %v5046 = vcombine.low %v5030, %v5044
    %v5047 = vcombine.low %v4876, %v4878
    %v5048 = vcombine.low %v4880, %v4882
    %v5049 = vcombine.low %v4884, %v4886
    %v5050 = vcombine.low %v4888, %v4890
    %v5052 = vunpack.c.l.s4 1966171168
    %v5053 = vunpack.c.0.s8 %v5052
    %v5054 = vlaneseq
    %v5055 = vshrl.u32 %v5054, 7
    %v5056 = vsub.s32 %v5053, %v5055
    %v5057 = vrot.slane %v5047, %v5056
    %v5059 = vunpack.c.l.s4 1966171168
    %v5060 = vunpack.c.0.s8 %v5059
    %v5061 = vlaneseq
    %v5062 = vshrl.u32 %v5061, 7
    %v5063 = vsub.s32 %v5060, %v5062
    %v5064 = vrot.slane %v5048, %v5063
    %v5066 = vunpack.c.l.s4 1966171168
    %v5067 = vunpack.c.0.s8 %v5066
    %v5068 = vlaneseq
    %v5069 = vshrl.u32 %v5068, 7
    %v5070 = vsub.s32 %v5067, %v5069
    %v5071 = vrot.slane %v5049, %v5070
    %v5073 = vunpack.c.l.s4 1966171168
    %v5074 = vunpack.c.0.s8 %v5073
    %v5075 = vlaneseq
    %v5076 = vshrl.u32 %v5075, 7
    %v5077 = vsub.s32 %v5074, %v5076
    %v5078 = vrot.slane %v5050, %v5077
    %v5079 = vcombine.low %v5057, %v5064
    %v5080 = vcombine.high %v5057, %v5064
    %v5081 = vcombine.low %v5071, %v5078
    %v5082 = vcombine.high %v5071, %v5078
    %v5084 = vunpack.c.l.s4 1966171168
    %v5085 = vunpack.c.0.s8 %v5084
    %v5086 = vlaneseq
    %v5087 = vshrl.u32 %v5086, 7
    %v5088 = vsub.s32 %v5085, %v5087
    %v5089 = vrot.slane %v5079, %v5088
    %v5091 = vunpack.c.l.s4 1966171168
    %v5092 = vunpack.c.0.s8 %v5091
    %v5093 = vlaneseq
    %v5094 = vshrl.u32 %v5093, 7
    %v5095 = vsub.s32 %v5092, %v5094
    %v5096 = vrot.slane %v5080, %v5095
    %v5098 = vunpack.c.l.s4 1966171168
    %v5099 = vunpack.c.0.s8 %v5098
    %v5100 = vlaneseq
    %v5101 = vshrl.u32 %v5100, 7
    %v5102 = vsub.s32 %v5099, %v5101
    %v5103 = vrot.slane %v5081, %v5102
    %v5105 = vunpack.c.l.s4 1966171168
    %v5106 = vunpack.c.0.s8 %v5105
    %v5107 = vlaneseq
    %v5108 = vshrl.u32 %v5107, 7
    %v5109 = vsub.s32 %v5106, %v5108
    %v5110 = vrot.slane %v5082, %v5109
    %v5111 = vcombine.low %v5089, %v5103
    %v5112 = vcombine.low %v5096, %v5110
    %v5116 = vsel %vm425, %v4980, 0
    %v5118 = vsel %vm425, %v5046, 0
    %v5120 = vsel %vm425, %v5112, 0
    %5122 = vmatprep.subr.mxu0 %v153
    %5123 = vmatpush1.msra.mxu0 %v152
    %5124 = vmatprep.subr.mxu0 %v149
    %5125 = vmatpush1.msra.mxu0 %v148
    %5126 = vmatprep.subr.mxu0 %v145
    %5127 = vmatpush1.msra.mxu0 %v144
    %5128 = vmatprep.subr.mxu0 %v141
    %5129 = vmatpush1.msra.mxu0 %v140
    %5130 = vmatprep.subr.mxu0 %v137
    %5131 = vmatpush1.msra.mxu0 %v136
    %5132 = vmatprep.subr.mxu0 %v133
    %5133 = vmatpush1.msra.mxu0 %v132
    %5134 = vmatprep.subr.mxu0 %v129
    %5135 = vmatpush1.msra.mxu0 %v128
    %5136 = vmatprep.subr.mxu0 %v125
    %5137 = vmatpush1.msra.mxu0 %v124
    %5138 = vmatprep.subr.mxu0 %v121
    %5139 = vmatpush1.msra.mxu0 %v120
    %5140 = vmatprep.subr.mxu0 %v117
    %5141 = vmatpush1.msra.mxu0 %v116
    %5142 = vmatprep.subr.mxu0 %v113
    %5143 = vmatpush1.msra.mxu0 %v112
    %5144 = vmatprep.subr.mxu0 %v109
    %5145 = vmatpush1.msra.mxu0 %v108
    %5146 = vmatprep.subr.mxu0 %v105
    %5147 = vmatpush1.msra.mxu0 %v104
    %5148 = vmatprep.subr.mxu0 %v101
    %5149 = vmatpush1.msra.mxu0 %v100
    %5150 = vmatprep.subr.mxu0 %v97
    %5151 = vmatpush1.msra.mxu0 %v96
    %5152 = vmatprep.subr.mxu0 %v93
    %5153 = vmatpush1.msra.mxu0 %v92
    %5154 = vmatprep.subr.mxu0 0.0
    %5155 = vmatpush2.msra.mxu0 0.0
    %5156 = vmatprep.subr.mxu0 0.0
    %5157 = vmatpush2.msra.mxu0 0.0
    %5158 = vmatprep.subr.mxu0 0.0
    %5159 = vmatpush2.msra.mxu0 0.0
    %5160 = vmatprep.subr.mxu0 0.0
    %5161 = vmatpush2.msra.mxu0 0.0
    %5162 = vmatprep.subr.mxu0 0.0
    %5163 = vmatpush2.msra.mxu0 0.0
    %5164 = vmatprep.subr.mxu0 %v197
    %5165 = vmatpush2.msra.mxu0 %v196
    %5166 = vmatprep.subr.mxu0 %v193
    %5167 = vmatpush2.msra.mxu0 %v192
    %5168 = vmatprep.subr.mxu0 %v189
    %5169 = vmatpush2.msra.mxu0 %v188
    %5170 = vmatprep.subr.mxu0 %v185
    %5171 = vmatpush2.msra.mxu0 %v184
    %5172 = vmatprep.subr.mxu0 %v181
    %5173 = vmatpush2.msra.mxu0 %v180
    %5174 = vmatprep.subr.mxu0 %v177
    %5175 = vmatpush2.msra.mxu0 %v176
    %5176 = vmatprep.subr.mxu0 %v173
    %5177 = vmatpush2.msra.mxu0 %v172
    %5178 = vmatprep.subr.mxu0 %v169
    %5179 = vmatpush2.msra.mxu0 %v168
    %5180 = vmatprep.subr.mxu0 %v165
    %5181 = vmatpush2.msra.mxu0 %v164
    %5182 = vmatprep.subr.mxu0 %v161
    %5183 = vmatpush2.msra.mxu0 %v160
    %5184 = vmatprep.subr.mxu0 %v157
    %5185 = vmatpush2.msra.mxu0 %v156
    %5186 = vmatprep.mubr.f32.mxu0 %v5116
    %5187 = vmatmul.mubr.f32.gmra.mxu0 %v4979
    %v5188 = vpop.f32.mrf.mxu0
    %v5189 = vadd.f32 %v28, %v5188
    %v5190 = vpop.f32.mrf.mxu0
    %v5191 = vadd.f32 %v32, %v5190
    %5192 = vmatprep.mubr.f32.mxu0 %v5118
    %5193 = vmatmul.mubr.f32.gmra.mxu0 %v5045
    %v5194 = vpop.f32.mrf.mxu0
    %v5195 = vadd.f32 %v28, %v5194
    %v5196 = vpop.f32.mrf.mxu0
    %v5197 = vadd.f32 %v32, %v5196
    %5198 = vmatprep.mubr.f32.mxu0 %v5120
    %5199 = vmatmul.mubr.f32.gmra.mxu0 %v5111
    %v5200 = vpop.f32.mrf.mxu0
    %v5201 = vadd.f32 %v28, %v5200
    %v5202 = vpop.f32.mrf.mxu0
    %v5203 = vadd.f32 %v32, %v5202
    %5204 = vdwg.mxu0
    %5205 = vmatprep.subr.mxu0 %v155
    %5206 = vmatpush1.msra.mxu0 %v154
    %5207 = vmatprep.subr.mxu0 %v151
    %5208 = vmatpush1.msra.mxu0 %v150
    %5209 = vmatprep.subr.mxu0 %v147
    %5210 = vmatpush1.msra.mxu0 %v146
    %5211 = vmatprep.subr.mxu0 %v143
    %5212 = vmatpush1.msra.mxu0 %v142
    %5213 = vmatprep.subr.mxu0 %v139
    %5214 = vmatpush1.msra.mxu0 %v138
    %5215 = vmatprep.subr.mxu0 %v135
    %5216 = vmatpush1.msra.mxu0 %v134
    %5217 = vmatprep.subr.mxu0 %v131
    %5218 = vmatpush1.msra.mxu0 %v130
    %5219 = vmatprep.subr.mxu0 %v127
    %5220 = vmatpush1.msra.mxu0 %v126
    %5221 = vmatprep.subr.mxu0 %v123
    %5222 = vmatpush1.msra.mxu0 %v122
    %5223 = vmatprep.subr.mxu0 %v119
    %5224 = vmatpush1.msra.mxu0 %v118
    %5225 = vmatprep.subr.mxu0 %v115
    %5226 = vmatpush1.msra.mxu0 %v114
    %5227 = vmatprep.subr.mxu0 %v111
    %5228 = vmatpush1.msra.mxu0 %v110
    %5229 = vmatprep.subr.mxu0 %v107
    %5230 = vmatpush1.msra.mxu0 %v106
    %5231 = vmatprep.subr.mxu0 %v103
    %5232 = vmatpush1.msra.mxu0 %v102
    %5233 = vmatprep.subr.mxu0 %v99
    %5234 = vmatpush1.msra.mxu0 %v98
    %5235 = vmatprep.subr.mxu0 %v95
    %5236 = vmatpush1.msra.mxu0 %v94
    %5237 = vmatprep.subr.mxu0 0.0
    %5238 = vmatpush2.msra.mxu0 0.0
    %5239 = vmatprep.subr.mxu0 0.0
    %5240 = vmatpush2.msra.mxu0 0.0
    %5241 = vmatprep.subr.mxu0 0.0
    %5242 = vmatpush2.msra.mxu0 0.0
    %5243 = vmatprep.subr.mxu0 0.0
    %5244 = vmatpush2.msra.mxu0 0.0
    %5245 = vmatprep.subr.mxu0 0.0
    %5246 = vmatpush2.msra.mxu0 0.0
    %5247 = vmatprep.subr.mxu0 %v199
    %5248 = vmatpush2.msra.mxu0 %v198
    %5249 = vmatprep.subr.mxu0 %v195
    %5250 = vmatpush2.msra.mxu0 %v194
    %5251 = vmatprep.subr.mxu0 %v191
    %5252 = vmatpush2.msra.mxu0 %v190
    %5253 = vmatprep.subr.mxu0 %v187
    %5254 = vmatpush2.msra.mxu0 %v186
    %5255 = vmatprep.subr.mxu0 %v183
    %5256 = vmatpush2.msra.mxu0 %v182
    %5257 = vmatprep.subr.mxu0 %v179
    %5258 = vmatpush2.msra.mxu0 %v178
    %5259 = vmatprep.subr.mxu0 %v175
    %5260 = vmatpush2.msra.mxu0 %v174
    %5261 = vmatprep.subr.mxu0 %v171
    %5262 = vmatpush2.msra.mxu0 %v170
    %5263 = vmatprep.subr.mxu0 %v167
    %5264 = vmatpush2.msra.mxu0 %v166
    %5265 = vmatprep.subr.mxu0 %v163
    %5266 = vmatpush2.msra.mxu0 %v162
    %5267 = vmatprep.subr.mxu0 %v159
    %5268 = vmatpush2.msra.mxu0 %v158
    %5269 = vmatprep.mubr.f32.mxu0 %v5116
    %5270 = vmatmul.mubr.f32.gmra.mxu0 %v4979
    %v5271 = vpop.f32.mrf.mxu0
    %v5272 = vadd.f32 %v36, %v5271
    %v5273 = vpop.f32.mrf.mxu0
    %v5274 = vadd.f32 %v40, %v5273
    %5275 = vmatprep.mubr.f32.mxu0 %v5118
    %5276 = vmatmul.mubr.f32.gmra.mxu0 %v5045
    %v5277 = vpop.f32.mrf.mxu0
    %v5278 = vadd.f32 %v36, %v5277
    %v5279 = vpop.f32.mrf.mxu0
    %v5280 = vadd.f32 %v40, %v5279
    %5281 = vmatprep.mubr.f32.mxu0 %v5120
    %5282 = vmatmul.mubr.f32.gmra.mxu0 %v5111
    %v5283 = vpop.f32.mrf.mxu0
    %v5284 = vadd.f32 %v36, %v5283
    %v5285 = vpop.f32.mrf.mxu0
    %v5286 = vadd.f32 %v40, %v5285
    %5287 = vdwg.mxu0
    %v5288 = vmax.f32 %v5189, 0.0
    %v5289 = vmax.f32 %v5191, 0.0
    %v5290 = vmax.f32 %v5272, 0.0
    %v5291 = vmax.f32 %v5274, 0.0
    %v5292 = vmax.f32 %v5195, 0.0
    %v5293 = vmax.f32 %v5197, 0.0
    %v5294 = vmax.f32 %v5278, 0.0
    %v5295 = vmax.f32 %v5280, 0.0
    %v5296 = vmax.f32 %v5201, 0.0
    %v5297 = vmax.f32 %v5203, 0.0
    %v5298 = vmax.f32 %v5284, 0.0
    %v5299 = vmax.f32 %v5286, 0.0
    %v5300 = vadd.f32 %v4831, %v5288
    %v5301 = vadd.f32 %v4832, %v5289
    %v5302 = vadd.f32 %v4833, %v5290
    %v5303 = vadd.f32 %v4834, %v5291
    %v5304 = vadd.f32 %v4835, %v5292
    %v5305 = vadd.f32 %v4836, %v5293
    %v5306 = vadd.f32 %v4837, %v5294
    %v5307 = vadd.f32 %v4838, %v5295
    %v5308 = vadd.f32 %v4839, %v5296
    %v5309 = vadd.f32 %v4840, %v5297
    %v5310 = vadd.f32 %v4841, %v5298
    %v5311 = vadd.f32 %v4842, %v5299
    %s5312 = scalar_lea.vmem %s0, 19
    %v5313 = vld [vmem:[%s5312] ss:$8 sm:$0x3]
    %s5314 = scalar_lea.vmem %s0, 51
    %v5315 = vld [vmem:[%s5314] ss:$8 sm:$0x3]
    %s5316 = scalar_lea.vmem %s0, 83
    %v5317 = vld [vmem:[%s5316] ss:$8 sm:$0x3]
    %s5318 = scalar_lea.vmem %s0, 115
    %v5319 = vld [vmem:[%s5318] ss:$8 sm:$0x3]
    %s5320 = scalar_lea.vmem %s0, 147
    %v5321 = vld [vmem:[%s5320] ss:$8 sm:$0x3]
    %s5322 = scalar_lea.vmem %s0, 179
    %v5323 = vld [vmem:[%s5322] ss:$8 sm:$0x3]
    %s5324 = scalar_lea.vmem %s0, 211
    %v5325 = vld [vmem:[%s5324] ss:$8 sm:$0x3]
    %s5326 = scalar_lea.vmem %s0, 243
    %v5327 = vld [vmem:[%s5326] ss:$8 sm:$0x3]
    %s5328 = scalar_lea.vmem %s0, 275
    %v5329 = vld [vmem:[%s5328] ss:$8 sm:$0x3]
    %s5330 = scalar_lea.vmem %s0, 307
    %v5331 = vld [vmem:[%s5330] ss:$8 sm:$0x3]
    %s5332 = scalar_lea.vmem %s0, 339
    %v5333 = vld [vmem:[%s5332] ss:$8 sm:$0x3]
    %s5334 = scalar_lea.vmem %s0, 371
    %v5335 = vld [vmem:[%s5334] ss:$8 sm:$0x3]
    %s5336 = scalar_lea.vmem %s0, 403
    %v5337 = vld [vmem:[%s5336] ss:$8 sm:$0x3]
    %s5338 = scalar_lea.vmem %s0, 435
    %v5339 = vld [vmem:[%s5338] ss:$8 sm:$0x3]
    %s5340 = scalar_lea.vmem %s0, 467
    %v5341 = vld [vmem:[%s5340] ss:$8 sm:$0x3]
    %s5342 = scalar_lea.vmem %s0, 499
    %v5343 = vld [vmem:[%s5342] ss:$8 sm:$0x3]
    %s5344 = scalar_lea.vmem %s0, 531
    %v5345 = vld [vmem:[%s5344] ss:$8 sm:$0x3]
    %s5346 = scalar_lea.vmem %s0, 563
    %v5347 = vld [vmem:[%s5346] ss:$8 sm:$0x3]
    %s5348 = scalar_lea.vmem %s0, 595
    %v5349 = vld [vmem:[%s5348] ss:$8 sm:$0x3]
    %s5350 = scalar_lea.vmem %s0, 627
    %v5351 = vld [vmem:[%s5350] ss:$8 sm:$0x3]
    %s5352 = scalar_lea.vmem %s0, 659
    %v5353 = vld [vmem:[%s5352] ss:$8 sm:$0x3]
    %s5354 = scalar_lea.vmem %s0, 691
    %v5355 = vld [vmem:[%s5354] ss:$8 sm:$0x3]
    %s5356 = scalar_lea.vmem %s0, 723
    %v5357 = vld [vmem:[%s5356] ss:$8 sm:$0x3]
    %s5358 = scalar_lea.vmem %s0, 755
    %v5359 = vld [vmem:[%s5358] ss:$8 sm:$0x3]
    %v5384 = vcombine.low %v5313, %v5315
    %v5385 = vcombine.low %v5317, %v5319
    %v5386 = vcombine.low %v5321, %v5323
    %v5387 = vcombine.low %v5325, %v5327
    %v5389 = vunpack.c.l.s4 1966171168
    %v5390 = vunpack.c.0.s8 %v5389
    %v5391 = vlaneseq
    %v5392 = vshrl.u32 %v5391, 7
    %v5393 = vsub.s32 %v5390, %v5392
    %v5394 = vrot.slane %v5384, %v5393
    %v5396 = vunpack.c.l.s4 1966171168
    %v5397 = vunpack.c.0.s8 %v5396
    %v5398 = vlaneseq
    %v5399 = vshrl.u32 %v5398, 7
    %v5400 = vsub.s32 %v5397, %v5399
    %v5401 = vrot.slane %v5385, %v5400
    %v5403 = vunpack.c.l.s4 1966171168
    %v5404 = vunpack.c.0.s8 %v5403
    %v5405 = vlaneseq
    %v5406 = vshrl.u32 %v5405, 7
    %v5407 = vsub.s32 %v5404, %v5406
    %v5408 = vrot.slane %v5386, %v5407
    %v5410 = vunpack.c.l.s4 1966171168
    %v5411 = vunpack.c.0.s8 %v5410
    %v5412 = vlaneseq
    %v5413 = vshrl.u32 %v5412, 7
    %v5414 = vsub.s32 %v5411, %v5413
    %v5415 = vrot.slane %v5387, %v5414
    %v5416 = vcombine.low %v5394, %v5401
    %v5417 = vcombine.high %v5394, %v5401
    %v5418 = vcombine.low %v5408, %v5415
    %v5419 = vcombine.high %v5408, %v5415
    %v5421 = vunpack.c.l.s4 1966171168
    %v5422 = vunpack.c.0.s8 %v5421
    %v5423 = vlaneseq
    %v5424 = vshrl.u32 %v5423, 7
    %v5425 = vsub.s32 %v5422, %v5424
    %v5426 = vrot.slane %v5416, %v5425
    %v5428 = vunpack.c.l.s4 1966171168
    %v5429 = vunpack.c.0.s8 %v5428
    %v5430 = vlaneseq
    %v5431 = vshrl.u32 %v5430, 7
    %v5432 = vsub.s32 %v5429, %v5431
    %v5433 = vrot.slane %v5417, %v5432
    %v5435 = vunpack.c.l.s4 1966171168
    %v5436 = vunpack.c.0.s8 %v5435
    %v5437 = vlaneseq
    %v5438 = vshrl.u32 %v5437, 7
    %v5439 = vsub.s32 %v5436, %v5438
    %v5440 = vrot.slane %v5418, %v5439
    %v5442 = vunpack.c.l.s4 1966171168
    %v5443 = vunpack.c.0.s8 %v5442
    %v5444 = vlaneseq
    %v5445 = vshrl.u32 %v5444, 7
    %v5446 = vsub.s32 %v5443, %v5445
    %v5447 = vrot.slane %v5419, %v5446
    %v5448 = vcombine.low %v5426, %v5440
    %v5449 = vcombine.low %v5433, %v5447
    %v5450 = vcombine.low %v5329, %v5331
    %v5451 = vcombine.low %v5333, %v5335
    %v5452 = vcombine.low %v5337, %v5339
    %v5453 = vcombine.low %v5341, %v5343
    %v5455 = vunpack.c.l.s4 1966171168
    %v5456 = vunpack.c.0.s8 %v5455
    %v5457 = vlaneseq
    %v5458 = vshrl.u32 %v5457, 7
    %v5459 = vsub.s32 %v5456, %v5458
    %v5460 = vrot.slane %v5450, %v5459
    %v5462 = vunpack.c.l.s4 1966171168
    %v5463 = vunpack.c.0.s8 %v5462
    %v5464 = vlaneseq
    %v5465 = vshrl.u32 %v5464, 7
    %v5466 = vsub.s32 %v5463, %v5465
    %v5467 = vrot.slane %v5451, %v5466
    %v5469 = vunpack.c.l.s4 1966171168
    %v5470 = vunpack.c.0.s8 %v5469
    %v5471 = vlaneseq
    %v5472 = vshrl.u32 %v5471, 7
    %v5473 = vsub.s32 %v5470, %v5472
    %v5474 = vrot.slane %v5452, %v5473
    %v5476 = vunpack.c.l.s4 1966171168
    %v5477 = vunpack.c.0.s8 %v5476
    %v5478 = vlaneseq
    %v5479 = vshrl.u32 %v5478, 7
    %v5480 = vsub.s32 %v5477, %v5479
    %v5481 = vrot.slane %v5453, %v5480
    %v5482 = vcombine.low %v5460, %v5467
    %v5483 = vcombine.high %v5460, %v5467
    %v5484 = vcombine.low %v5474, %v5481
    %v5485 = vcombine.high %v5474, %v5481
    %v5487 = vunpack.c.l.s4 1966171168
    %v5488 = vunpack.c.0.s8 %v5487
    %v5489 = vlaneseq
    %v5490 = vshrl.u32 %v5489, 7
    %v5491 = vsub.s32 %v5488, %v5490
    %v5492 = vrot.slane %v5482, %v5491
    %v5494 = vunpack.c.l.s4 1966171168
    %v5495 = vunpack.c.0.s8 %v5494
    %v5496 = vlaneseq
    %v5497 = vshrl.u32 %v5496, 7
    %v5498 = vsub.s32 %v5495, %v5497
    %v5499 = vrot.slane %v5483, %v5498
    %v5501 = vunpack.c.l.s4 1966171168
    %v5502 = vunpack.c.0.s8 %v5501
    %v5503 = vlaneseq
    %v5504 = vshrl.u32 %v5503, 7
    %v5505 = vsub.s32 %v5502, %v5504
    %v5506 = vrot.slane %v5484, %v5505
    %v5508 = vunpack.c.l.s4 1966171168
    %v5509 = vunpack.c.0.s8 %v5508
    %v5510 = vlaneseq
    %v5511 = vshrl.u32 %v5510, 7
    %v5512 = vsub.s32 %v5509, %v5511
    %v5513 = vrot.slane %v5485, %v5512
    %v5514 = vcombine.low %v5492, %v5506
    %v5515 = vcombine.low %v5499, %v5513
    %v5516 = vcombine.low %v5345, %v5347
    %v5517 = vcombine.low %v5349, %v5351
    %v5518 = vcombine.low %v5353, %v5355
    %v5519 = vcombine.low %v5357, %v5359
    %v5521 = vunpack.c.l.s4 1966171168
    %v5522 = vunpack.c.0.s8 %v5521
    %v5523 = vlaneseq
    %v5524 = vshrl.u32 %v5523, 7
    %v5525 = vsub.s32 %v5522, %v5524
    %v5526 = vrot.slane %v5516, %v5525
    %v5528 = vunpack.c.l.s4 1966171168
    %v5529 = vunpack.c.0.s8 %v5528
    %v5530 = vlaneseq
    %v5531 = vshrl.u32 %v5530, 7
    %v5532 = vsub.s32 %v5529, %v5531
    %v5533 = vrot.slane %v5517, %v5532
    %v5535 = vunpack.c.l.s4 1966171168
    %v5536 = vunpack.c.0.s8 %v5535
    %v5537 = vlaneseq
    %v5538 = vshrl.u32 %v5537, 7
    %v5539 = vsub.s32 %v5536, %v5538
    %v5540 = vrot.slane %v5518, %v5539
    %v5542 = vunpack.c.l.s4 1966171168
    %v5543 = vunpack.c.0.s8 %v5542
    %v5544 = vlaneseq
    %v5545 = vshrl.u32 %v5544, 7
    %v5546 = vsub.s32 %v5543, %v5545
    %v5547 = vrot.slane %v5519, %v5546
    %v5548 = vcombine.low %v5526, %v5533
    %v5549 = vcombine.high %v5526, %v5533
    %v5550 = vcombine.low %v5540, %v5547
    %v5551 = vcombine.high %v5540, %v5547
    %v5553 = vunpack.c.l.s4 1966171168
    %v5554 = vunpack.c.0.s8 %v5553
    %v5555 = vlaneseq
    %v5556 = vshrl.u32 %v5555, 7
    %v5557 = vsub.s32 %v5554, %v5556
    %v5558 = vrot.slane %v5548, %v5557
    %v5560 = vunpack.c.l.s4 1966171168
    %v5561 = vunpack.c.0.s8 %v5560
    %v5562 = vlaneseq
    %v5563 = vshrl.u32 %v5562, 7
    %v5564 = vsub.s32 %v5561, %v5563
    %v5565 = vrot.slane %v5549, %v5564
    %v5567 = vunpack.c.l.s4 1966171168
    %v5568 = vunpack.c.0.s8 %v5567
    %v5569 = vlaneseq
    %v5570 = vshrl.u32 %v5569, 7
    %v5571 = vsub.s32 %v5568, %v5570
    %v5572 = vrot.slane %v5550, %v5571
    %v5574 = vunpack.c.l.s4 1966171168
    %v5575 = vunpack.c.0.s8 %v5574
    %v5576 = vlaneseq
    %v5577 = vshrl.u32 %v5576, 7
    %v5578 = vsub.s32 %v5575, %v5577
    %v5579 = vrot.slane %v5551, %v5578
    %v5580 = vcombine.low %v5558, %v5572
    %v5581 = vcombine.low %v5565, %v5579
    %v5585 = vsel %vm425, %v5449, 0
    %v5587 = vsel %vm425, %v5515, 0
    %v5589 = vsel %vm425, %v5581, 0
    %5591 = vmatprep.subr.mxu0 %v153
    %5592 = vmatpush1.msra.mxu0 %v152
    %5593 = vmatprep.subr.mxu0 %v149
    %5594 = vmatpush1.msra.mxu0 %v148
    %5595 = vmatprep.subr.mxu0 %v145
    %5596 = vmatpush1.msra.mxu0 %v144
    %5597 = vmatprep.subr.mxu0 %v141
    %5598 = vmatpush1.msra.mxu0 %v140
    %5599 = vmatprep.subr.mxu0 %v137
    %5600 = vmatpush1.msra.mxu0 %v136
    %5601 = vmatprep.subr.mxu0 %v133
    %5602 = vmatpush1.msra.mxu0 %v132
    %5603 = vmatprep.subr.mxu0 %v129
    %5604 = vmatpush1.msra.mxu0 %v128
    %5605 = vmatprep.subr.mxu0 %v125
    %5606 = vmatpush1.msra.mxu0 %v124
    %5607 = vmatprep.subr.mxu0 %v121
    %5608 = vmatpush1.msra.mxu0 %v120
    %5609 = vmatprep.subr.mxu0 %v117
    %5610 = vmatpush1.msra.mxu0 %v116
    %5611 = vmatprep.subr.mxu0 %v113
    %5612 = vmatpush1.msra.mxu0 %v112
    %5613 = vmatprep.subr.mxu0 %v109
    %5614 = vmatpush1.msra.mxu0 %v108
    %5615 = vmatprep.subr.mxu0 %v105
    %5616 = vmatpush1.msra.mxu0 %v104
    %5617 = vmatprep.subr.mxu0 %v101
    %5618 = vmatpush1.msra.mxu0 %v100
    %5619 = vmatprep.subr.mxu0 %v97
    %5620 = vmatpush1.msra.mxu0 %v96
    %5621 = vmatprep.subr.mxu0 %v93
    %5622 = vmatpush1.msra.mxu0 %v92
    %5623 = vmatprep.subr.mxu0 0.0
    %5624 = vmatpush2.msra.mxu0 0.0
    %5625 = vmatprep.subr.mxu0 0.0
    %5626 = vmatpush2.msra.mxu0 0.0
    %5627 = vmatprep.subr.mxu0 0.0
    %5628 = vmatpush2.msra.mxu0 0.0
    %5629 = vmatprep.subr.mxu0 0.0
    %5630 = vmatpush2.msra.mxu0 0.0
    %5631 = vmatprep.subr.mxu0 0.0
    %5632 = vmatpush2.msra.mxu0 0.0
    %5633 = vmatprep.subr.mxu0 %v197
    %5634 = vmatpush2.msra.mxu0 %v196
    %5635 = vmatprep.subr.mxu0 %v193
    %5636 = vmatpush2.msra.mxu0 %v192
    %5637 = vmatprep.subr.mxu0 %v189
    %5638 = vmatpush2.msra.mxu0 %v188
    %5639 = vmatprep.subr.mxu0 %v185
    %5640 = vmatpush2.msra.mxu0 %v184
    %5641 = vmatprep.subr.mxu0 %v181
    %5642 = vmatpush2.msra.mxu0 %v180
    %5643 = vmatprep.subr.mxu0 %v177
    %5644 = vmatpush2.msra.mxu0 %v176
    %5645 = vmatprep.subr.mxu0 %v173
    %5646 = vmatpush2.msra.mxu0 %v172
    %5647 = vmatprep.subr.mxu0 %v169
    %5648 = vmatpush2.msra.mxu0 %v168
    %5649 = vmatprep.subr.mxu0 %v165
    %5650 = vmatpush2.msra.mxu0 %v164
    %5651 = vmatprep.subr.mxu0 %v161
    %5652 = vmatpush2.msra.mxu0 %v160
    %5653 = vmatprep.subr.mxu0 %v157
    %5654 = vmatpush2.msra.mxu0 %v156
    %5655 = vmatprep.mubr.f32.mxu0 %v5585
    %5656 = vmatmul.mubr.f32.gmra.mxu0 %v5448
    %v5657 = vpop.f32.mrf.mxu0
    %v5658 = vadd.f32 %v28, %v5657
    %v5659 = vpop.f32.mrf.mxu0
    %v5660 = vadd.f32 %v32, %v5659
    %5661 = vmatprep.mubr.f32.mxu0 %v5587
    %5662 = vmatmul.mubr.f32.gmra.mxu0 %v5514
    %v5663 = vpop.f32.mrf.mxu0
    %v5664 = vadd.f32 %v28, %v5663
    %v5665 = vpop.f32.mrf.mxu0
    %v5666 = vadd.f32 %v32, %v5665
    %5667 = vmatprep.mubr.f32.mxu0 %v5589
    %5668 = vmatmul.mubr.f32.gmra.mxu0 %v5580
    %v5669 = vpop.f32.mrf.mxu0
    %v5670 = vadd.f32 %v28, %v5669
    %v5671 = vpop.f32.mrf.mxu0
    %v5672 = vadd.f32 %v32, %v5671
    %5673 = vdwg.mxu0
    %5674 = vmatprep.subr.mxu0 %v155
    %5675 = vmatpush1.msra.mxu0 %v154
    %5676 = vmatprep.subr.mxu0 %v151
    %5677 = vmatpush1.msra.mxu0 %v150
    %5678 = vmatprep.subr.mxu0 %v147
    %5679 = vmatpush1.msra.mxu0 %v146
    %5680 = vmatprep.subr.mxu0 %v143
    %5681 = vmatpush1.msra.mxu0 %v142
    %5682 = vmatprep.subr.mxu0 %v139
    %5683 = vmatpush1.msra.mxu0 %v138
    %5684 = vmatprep.subr.mxu0 %v135
    %5685 = vmatpush1.msra.mxu0 %v134
    %5686 = vmatprep.subr.mxu0 %v131
    %5687 = vmatpush1.msra.mxu0 %v130
    %5688 = vmatprep.subr.mxu0 %v127
    %5689 = vmatpush1.msra.mxu0 %v126
    %5690 = vmatprep.subr.mxu0 %v123
    %5691 = vmatpush1.msra.mxu0 %v122
    %5692 = vmatprep.subr.mxu0 %v119
    %5693 = vmatpush1.msra.mxu0 %v118
    %5694 = vmatprep.subr.mxu0 %v115
    %5695 = vmatpush1.msra.mxu0 %v114
    %5696 = vmatprep.subr.mxu0 %v111
    %5697 = vmatpush1.msra.mxu0 %v110
    %5698 = vmatprep.subr.mxu0 %v107
    %5699 = vmatpush1.msra.mxu0 %v106
    %5700 = vmatprep.subr.mxu0 %v103
    %5701 = vmatpush1.msra.mxu0 %v102
    %5702 = vmatprep.subr.mxu0 %v99
    %5703 = vmatpush1.msra.mxu0 %v98
    %5704 = vmatprep.subr.mxu0 %v95
    %5705 = vmatpush1.msra.mxu0 %v94
    %5706 = vmatprep.subr.mxu0 0.0
    %5707 = vmatpush2.msra.mxu0 0.0
    %5708 = vmatprep.subr.mxu0 0.0
    %5709 = vmatpush2.msra.mxu0 0.0
    %5710 = vmatprep.subr.mxu0 0.0
    %5711 = vmatpush2.msra.mxu0 0.0
    %5712 = vmatprep.subr.mxu0 0.0
    %5713 = vmatpush2.msra.mxu0 0.0
    %5714 = vmatprep.subr.mxu0 0.0
    %5715 = vmatpush2.msra.mxu0 0.0
    %5716 = vmatprep.subr.mxu0 %v199
    %5717 = vmatpush2.msra.mxu0 %v198
    %5718 = vmatprep.subr.mxu0 %v195
    %5719 = vmatpush2.msra.mxu0 %v194
    %5720 = vmatprep.subr.mxu0 %v191
    %5721 = vmatpush2.msra.mxu0 %v190
    %5722 = vmatprep.subr.mxu0 %v187
    %5723 = vmatpush2.msra.mxu0 %v186
    %5724 = vmatprep.subr.mxu0 %v183
    %5725 = vmatpush2.msra.mxu0 %v182
    %5726 = vmatprep.subr.mxu0 %v179
    %5727 = vmatpush2.msra.mxu0 %v178
    %5728 = vmatprep.subr.mxu0 %v175
    %5729 = vmatpush2.msra.mxu0 %v174
    %5730 = vmatprep.subr.mxu0 %v171
    %5731 = vmatpush2.msra.mxu0 %v170
    %5732 = vmatprep.subr.mxu0 %v167
    %5733 = vmatpush2.msra.mxu0 %v166
    %5734 = vmatprep.subr.mxu0 %v163
    %5735 = vmatpush2.msra.mxu0 %v162
    %5736 = vmatprep.subr.mxu0 %v159
    %5737 = vmatpush2.msra.mxu0 %v158
    %5738 = vmatprep.mubr.f32.mxu0 %v5585
    %5739 = vmatmul.mubr.f32.gmra.mxu0 %v5448
    %v5740 = vpop.f32.mrf.mxu0
    %v5741 = vadd.f32 %v36, %v5740
    %v5742 = vpop.f32.mrf.mxu0
    %v5743 = vadd.f32 %v40, %v5742
    %5744 = vmatprep.mubr.f32.mxu0 %v5587
    %5745 = vmatmul.mubr.f32.gmra.mxu0 %v5514
    %v5746 = vpop.f32.mrf.mxu0
    %v5747 = vadd.f32 %v36, %v5746
    %v5748 = vpop.f32.mrf.mxu0
    %v5749 = vadd.f32 %v40, %v5748
    %5750 = vmatprep.mubr.f32.mxu0 %v5589
    %5751 = vmatmul.mubr.f32.gmra.mxu0 %v5580
    %v5752 = vpop.f32.mrf.mxu0
    %v5753 = vadd.f32 %v36, %v5752
    %v5754 = vpop.f32.mrf.mxu0
    %v5755 = vadd.f32 %v40, %v5754
    %5756 = vdwg.mxu0
    %v5757 = vmax.f32 %v5658, 0.0
    %v5758 = vmax.f32 %v5660, 0.0
    %v5759 = vmax.f32 %v5741, 0.0
    %v5760 = vmax.f32 %v5743, 0.0
    %v5761 = vmax.f32 %v5664, 0.0
    %v5762 = vmax.f32 %v5666, 0.0
    %v5763 = vmax.f32 %v5747, 0.0
    %v5764 = vmax.f32 %v5749, 0.0
    %v5765 = vmax.f32 %v5670, 0.0
    %v5766 = vmax.f32 %v5672, 0.0
    %v5767 = vmax.f32 %v5753, 0.0
    %v5768 = vmax.f32 %v5755, 0.0
    %v5769 = vadd.f32 %v5300, %v5757
    %v5770 = vadd.f32 %v5301, %v5758
    %v5771 = vadd.f32 %v5302, %v5759
    %v5772 = vadd.f32 %v5303, %v5760
    %v5773 = vadd.f32 %v5304, %v5761
    %v5774 = vadd.f32 %v5305, %v5762
    %v5775 = vadd.f32 %v5306, %v5763
    %v5776 = vadd.f32 %v5307, %v5764
    %v5777 = vadd.f32 %v5308, %v5765
    %v5778 = vadd.f32 %v5309, %v5766
    %v5779 = vadd.f32 %v5310, %v5767
    %v5780 = vadd.f32 %v5311, %v5768
    %s5781 = scalar_lea.vmem %s0, 20
    %v5782 = vld [vmem:[%s5781] ss:$8 sm:$0x3]
    %s5783 = scalar_lea.vmem %s0, 52
    %v5784 = vld [vmem:[%s5783] ss:$8 sm:$0x3]
    %s5785 = scalar_lea.vmem %s0, 84
    %v5786 = vld [vmem:[%s5785] ss:$8 sm:$0x3]
    %s5787 = scalar_lea.vmem %s0, 116
    %v5788 = vld [vmem:[%s5787] ss:$8 sm:$0x3]
    %s5789 = scalar_lea.vmem %s0, 148
    %v5790 = vld [vmem:[%s5789] ss:$8 sm:$0x3]
    %s5791 = scalar_lea.vmem %s0, 180
    %v5792 = vld [vmem:[%s5791] ss:$8 sm:$0x3]
    %s5793 = scalar_lea.vmem %s0, 212
    %v5794 = vld [vmem:[%s5793] ss:$8 sm:$0x3]
    %s5795 = scalar_lea.vmem %s0, 244
    %v5796 = vld [vmem:[%s5795] ss:$8 sm:$0x3]
    %s5797 = scalar_lea.vmem %s0, 276
    %v5798 = vld [vmem:[%s5797] ss:$8 sm:$0x3]
    %s5799 = scalar_lea.vmem %s0, 308
    %v5800 = vld [vmem:[%s5799] ss:$8 sm:$0x3]
    %s5801 = scalar_lea.vmem %s0, 340
    %v5802 = vld [vmem:[%s5801] ss:$8 sm:$0x3]
    %s5803 = scalar_lea.vmem %s0, 372
    %v5804 = vld [vmem:[%s5803] ss:$8 sm:$0x3]
    %s5805 = scalar_lea.vmem %s0, 404
    %v5806 = vld [vmem:[%s5805] ss:$8 sm:$0x3]
    %s5807 = scalar_lea.vmem %s0, 436
    %v5808 = vld [vmem:[%s5807] ss:$8 sm:$0x3]
    %s5809 = scalar_lea.vmem %s0, 468
    %v5810 = vld [vmem:[%s5809] ss:$8 sm:$0x3]
    %s5811 = scalar_lea.vmem %s0, 500
    %v5812 = vld [vmem:[%s5811] ss:$8 sm:$0x3]
    %s5813 = scalar_lea.vmem %s0, 532
    %v5814 = vld [vmem:[%s5813] ss:$8 sm:$0x3]
    %s5815 = scalar_lea.vmem %s0, 564
    %v5816 = vld [vmem:[%s5815] ss:$8 sm:$0x3]
    %s5817 = scalar_lea.vmem %s0, 596
    %v5818 = vld [vmem:[%s5817] ss:$8 sm:$0x3]
    %s5819 = scalar_lea.vmem %s0, 628
    %v5820 = vld [vmem:[%s5819] ss:$8 sm:$0x3]
    %s5821 = scalar_lea.vmem %s0, 660
    %v5822 = vld [vmem:[%s5821] ss:$8 sm:$0x3]
    %s5823 = scalar_lea.vmem %s0, 692
    %v5824 = vld [vmem:[%s5823] ss:$8 sm:$0x3]
    %s5825 = scalar_lea.vmem %s0, 724
    %v5826 = vld [vmem:[%s5825] ss:$8 sm:$0x3]
    %s5827 = scalar_lea.vmem %s0, 756
    %v5828 = vld [vmem:[%s5827] ss:$8 sm:$0x3]
    %v5853 = vcombine.low %v5782, %v5784
    %v5854 = vcombine.low %v5786, %v5788
    %v5855 = vcombine.low %v5790, %v5792
    %v5856 = vcombine.low %v5794, %v5796
    %v5858 = vunpack.c.l.s4 1966171168
    %v5859 = vunpack.c.0.s8 %v5858
    %v5860 = vlaneseq
    %v5861 = vshrl.u32 %v5860, 7
    %v5862 = vsub.s32 %v5859, %v5861
    %v5863 = vrot.slane %v5853, %v5862
    %v5865 = vunpack.c.l.s4 1966171168
    %v5866 = vunpack.c.0.s8 %v5865
    %v5867 = vlaneseq
    %v5868 = vshrl.u32 %v5867, 7
    %v5869 = vsub.s32 %v5866, %v5868
    %v5870 = vrot.slane %v5854, %v5869
    %v5872 = vunpack.c.l.s4 1966171168
    %v5873 = vunpack.c.0.s8 %v5872
    %v5874 = vlaneseq
    %v5875 = vshrl.u32 %v5874, 7
    %v5876 = vsub.s32 %v5873, %v5875
    %v5877 = vrot.slane %v5855, %v5876
    %v5879 = vunpack.c.l.s4 1966171168
    %v5880 = vunpack.c.0.s8 %v5879
    %v5881 = vlaneseq
    %v5882 = vshrl.u32 %v5881, 7
    %v5883 = vsub.s32 %v5880, %v5882
    %v5884 = vrot.slane %v5856, %v5883
    %v5885 = vcombine.low %v5863, %v5870
    %v5886 = vcombine.high %v5863, %v5870
    %v5887 = vcombine.low %v5877, %v5884
    %v5888 = vcombine.high %v5877, %v5884
    %v5890 = vunpack.c.l.s4 1966171168
    %v5891 = vunpack.c.0.s8 %v5890
    %v5892 = vlaneseq
    %v5893 = vshrl.u32 %v5892, 7
    %v5894 = vsub.s32 %v5891, %v5893
    %v5895 = vrot.slane %v5885, %v5894
    %v5897 = vunpack.c.l.s4 1966171168
    %v5898 = vunpack.c.0.s8 %v5897
    %v5899 = vlaneseq
    %v5900 = vshrl.u32 %v5899, 7
    %v5901 = vsub.s32 %v5898, %v5900
    %v5902 = vrot.slane %v5886, %v5901
    %v5904 = vunpack.c.l.s4 1966171168
    %v5905 = vunpack.c.0.s8 %v5904
    %v5906 = vlaneseq
    %v5907 = vshrl.u32 %v5906, 7
    %v5908 = vsub.s32 %v5905, %v5907
    %v5909 = vrot.slane %v5887, %v5908
    %v5911 = vunpack.c.l.s4 1966171168
    %v5912 = vunpack.c.0.s8 %v5911
    %v5913 = vlaneseq
    %v5914 = vshrl.u32 %v5913, 7
    %v5915 = vsub.s32 %v5912, %v5914
    %v5916 = vrot.slane %v5888, %v5915
    %v5917 = vcombine.low %v5895, %v5909
    %v5918 = vcombine.low %v5902, %v5916
    %v5919 = vcombine.low %v5798, %v5800
    %v5920 = vcombine.low %v5802, %v5804
    %v5921 = vcombine.low %v5806, %v5808
    %v5922 = vcombine.low %v5810, %v5812
    %v5924 = vunpack.c.l.s4 1966171168
    %v5925 = vunpack.c.0.s8 %v5924
    %v5926 = vlaneseq
    %v5927 = vshrl.u32 %v5926, 7
    %v5928 = vsub.s32 %v5925, %v5927
    %v5929 = vrot.slane %v5919, %v5928
    %v5931 = vunpack.c.l.s4 1966171168
    %v5932 = vunpack.c.0.s8 %v5931
    %v5933 = vlaneseq
    %v5934 = vshrl.u32 %v5933, 7
    %v5935 = vsub.s32 %v5932, %v5934
    %v5936 = vrot.slane %v5920, %v5935
    %v5938 = vunpack.c.l.s4 1966171168
    %v5939 = vunpack.c.0.s8 %v5938
    %v5940 = vlaneseq
    %v5941 = vshrl.u32 %v5940, 7
    %v5942 = vsub.s32 %v5939, %v5941
    %v5943 = vrot.slane %v5921, %v5942
    %v5945 = vunpack.c.l.s4 1966171168
    %v5946 = vunpack.c.0.s8 %v5945
    %v5947 = vlaneseq
    %v5948 = vshrl.u32 %v5947, 7
    %v5949 = vsub.s32 %v5946, %v5948
    %v5950 = vrot.slane %v5922, %v5949
    %v5951 = vcombine.low %v5929, %v5936
    %v5952 = vcombine.high %v5929, %v5936
    %v5953 = vcombine.low %v5943, %v5950
    %v5954 = vcombine.high %v5943, %v5950
    %v5956 = vunpack.c.l.s4 1966171168
    %v5957 = vunpack.c.0.s8 %v5956
    %v5958 = vlaneseq
    %v5959 = vshrl.u32 %v5958, 7
    %v5960 = vsub.s32 %v5957, %v5959
    %v5961 = vrot.slane %v5951, %v5960
    %v5963 = vunpack.c.l.s4 1966171168
    %v5964 = vunpack.c.0.s8 %v5963
    %v5965 = vlaneseq
    %v5966 = vshrl.u32 %v5965, 7
    %v5967 = vsub.s32 %v5964, %v5966
    %v5968 = vrot.slane %v5952, %v5967
    %v5970 = vunpack.c.l.s4 1966171168
    %v5971 = vunpack.c.0.s8 %v5970
    %v5972 = vlaneseq
    %v5973 = vshrl.u32 %v5972, 7
    %v5974 = vsub.s32 %v5971, %v5973
    %v5975 = vrot.slane %v5953, %v5974
    %v5977 = vunpack.c.l.s4 1966171168
    %v5978 = vunpack.c.0.s8 %v5977
    %v5979 = vlaneseq
    %v5980 = vshrl.u32 %v5979, 7
    %v5981 = vsub.s32 %v5978, %v5980
    %v5982 = vrot.slane %v5954, %v5981
    %v5983 = vcombine.low %v5961, %v5975
    %v5984 = vcombine.low %v5968, %v5982
    %v5985 = vcombine.low %v5814, %v5816
    %v5986 = vcombine.low %v5818, %v5820
    %v5987 = vcombine.low %v5822, %v5824
    %v5988 = vcombine.low %v5826, %v5828
    %v5990 = vunpack.c.l.s4 1966171168
    %v5991 = vunpack.c.0.s8 %v5990
    %v5992 = vlaneseq
    %v5993 = vshrl.u32 %v5992, 7
    %v5994 = vsub.s32 %v5991, %v5993
    %v5995 = vrot.slane %v5985, %v5994
    %v5997 = vunpack.c.l.s4 1966171168
    %v5998 = vunpack.c.0.s8 %v5997
    %v5999 = vlaneseq
    %v6000 = vshrl.u32 %v5999, 7
    %v6001 = vsub.s32 %v5998, %v6000
    %v6002 = vrot.slane %v5986, %v6001
    %v6004 = vunpack.c.l.s4 1966171168
    %v6005 = vunpack.c.0.s8 %v6004
    %v6006 = vlaneseq
    %v6007 = vshrl.u32 %v6006, 7
    %v6008 = vsub.s32 %v6005, %v6007
    %v6009 = vrot.slane %v5987, %v6008
    %v6011 = vunpack.c.l.s4 1966171168
    %v6012 = vunpack.c.0.s8 %v6011
    %v6013 = vlaneseq
    %v6014 = vshrl.u32 %v6013, 7
    %v6015 = vsub.s32 %v6012, %v6014
    %v6016 = vrot.slane %v5988, %v6015
    %v6017 = vcombine.low %v5995, %v6002
    %v6018 = vcombine.high %v5995, %v6002
    %v6019 = vcombine.low %v6009, %v6016
    %v6020 = vcombine.high %v6009, %v6016
    %v6022 = vunpack.c.l.s4 1966171168
    %v6023 = vunpack.c.0.s8 %v6022
    %v6024 = vlaneseq
    %v6025 = vshrl.u32 %v6024, 7
    %v6026 = vsub.s32 %v6023, %v6025
    %v6027 = vrot.slane %v6017, %v6026
    %v6029 = vunpack.c.l.s4 1966171168
    %v6030 = vunpack.c.0.s8 %v6029
    %v6031 = vlaneseq
    %v6032 = vshrl.u32 %v6031, 7
    %v6033 = vsub.s32 %v6030, %v6032
    %v6034 = vrot.slane %v6018, %v6033
    %v6036 = vunpack.c.l.s4 1966171168
    %v6037 = vunpack.c.0.s8 %v6036
    %v6038 = vlaneseq
    %v6039 = vshrl.u32 %v6038, 7
    %v6040 = vsub.s32 %v6037, %v6039
    %v6041 = vrot.slane %v6019, %v6040
    %v6043 = vunpack.c.l.s4 1966171168
    %v6044 = vunpack.c.0.s8 %v6043
    %v6045 = vlaneseq
    %v6046 = vshrl.u32 %v6045, 7
    %v6047 = vsub.s32 %v6044, %v6046
    %v6048 = vrot.slane %v6020, %v6047
    %v6049 = vcombine.low %v6027, %v6041
    %v6050 = vcombine.low %v6034, %v6048
    %v6054 = vsel %vm425, %v5918, 0
    %v6056 = vsel %vm425, %v5984, 0
    %v6058 = vsel %vm425, %v6050, 0
    %6060 = vmatprep.subr.mxu0 %v153
    %6061 = vmatpush1.msra.mxu0 %v152
    %6062 = vmatprep.subr.mxu0 %v149
    %6063 = vmatpush1.msra.mxu0 %v148
    %6064 = vmatprep.subr.mxu0 %v145
    %6065 = vmatpush1.msra.mxu0 %v144
    %6066 = vmatprep.subr.mxu0 %v141
    %6067 = vmatpush1.msra.mxu0 %v140
    %6068 = vmatprep.subr.mxu0 %v137
    %6069 = vmatpush1.msra.mxu0 %v136
    %6070 = vmatprep.subr.mxu0 %v133
    %6071 = vmatpush1.msra.mxu0 %v132
    %6072 = vmatprep.subr.mxu0 %v129
    %6073 = vmatpush1.msra.mxu0 %v128
    %6074 = vmatprep.subr.mxu0 %v125
    %6075 = vmatpush1.msra.mxu0 %v124
    %6076 = vmatprep.subr.mxu0 %v121
    %6077 = vmatpush1.msra.mxu0 %v120
    %6078 = vmatprep.subr.mxu0 %v117
    %6079 = vmatpush1.msra.mxu0 %v116
    %6080 = vmatprep.subr.mxu0 %v113
    %6081 = vmatpush1.msra.mxu0 %v112
    %6082 = vmatprep.subr.mxu0 %v109
    %6083 = vmatpush1.msra.mxu0 %v108
    %6084 = vmatprep.subr.mxu0 %v105
    %6085 = vmatpush1.msra.mxu0 %v104
    %6086 = vmatprep.subr.mxu0 %v101
    %6087 = vmatpush1.msra.mxu0 %v100
    %6088 = vmatprep.subr.mxu0 %v97
    %6089 = vmatpush1.msra.mxu0 %v96
    %6090 = vmatprep.subr.mxu0 %v93
    %6091 = vmatpush1.msra.mxu0 %v92
    %6092 = vmatprep.subr.mxu0 0.0
    %6093 = vmatpush2.msra.mxu0 0.0
    %6094 = vmatprep.subr.mxu0 0.0
    %6095 = vmatpush2.msra.mxu0 0.0
    %6096 = vmatprep.subr.mxu0 0.0
    %6097 = vmatpush2.msra.mxu0 0.0
    %6098 = vmatprep.subr.mxu0 0.0
    %6099 = vmatpush2.msra.mxu0 0.0
    %6100 = vmatprep.subr.mxu0 0.0
    %6101 = vmatpush2.msra.mxu0 0.0
    %6102 = vmatprep.subr.mxu0 %v197
    %6103 = vmatpush2.msra.mxu0 %v196
    %6104 = vmatprep.subr.mxu0 %v193
    %6105 = vmatpush2.msra.mxu0 %v192
    %6106 = vmatprep.subr.mxu0 %v189
    %6107 = vmatpush2.msra.mxu0 %v188
    %6108 = vmatprep.subr.mxu0 %v185
    %6109 = vmatpush2.msra.mxu0 %v184
    %6110 = vmatprep.subr.mxu0 %v181
    %6111 = vmatpush2.msra.mxu0 %v180
    %6112 = vmatprep.subr.mxu0 %v177
    %6113 = vmatpush2.msra.mxu0 %v176
    %6114 = vmatprep.subr.mxu0 %v173
    %6115 = vmatpush2.msra.mxu0 %v172
    %6116 = vmatprep.subr.mxu0 %v169
    %6117 = vmatpush2.msra.mxu0 %v168
    %6118 = vmatprep.subr.mxu0 %v165
    %6119 = vmatpush2.msra.mxu0 %v164
    %6120 = vmatprep.subr.mxu0 %v161
    %6121 = vmatpush2.msra.mxu0 %v160
    %6122 = vmatprep.subr.mxu0 %v157
    %6123 = vmatpush2.msra.mxu0 %v156
    %6124 = vmatprep.mubr.f32.mxu0 %v6054
    %6125 = vmatmul.mubr.f32.gmra.mxu0 %v5917
    %v6126 = vpop.f32.mrf.mxu0
    %v6127 = vadd.f32 %v28, %v6126
    %v6128 = vpop.f32.mrf.mxu0
    %v6129 = vadd.f32 %v32, %v6128
    %6130 = vmatprep.mubr.f32.mxu0 %v6056
    %6131 = vmatmul.mubr.f32.gmra.mxu0 %v5983
    %v6132 = vpop.f32.mrf.mxu0
    %v6133 = vadd.f32 %v28, %v6132
    %v6134 = vpop.f32.mrf.mxu0
    %v6135 = vadd.f32 %v32, %v6134
    %6136 = vmatprep.mubr.f32.mxu0 %v6058
    %6137 = vmatmul.mubr.f32.gmra.mxu0 %v6049
    %v6138 = vpop.f32.mrf.mxu0
    %v6139 = vadd.f32 %v28, %v6138
    %v6140 = vpop.f32.mrf.mxu0
    %v6141 = vadd.f32 %v32, %v6140
    %6142 = vdwg.mxu0
    %6143 = vmatprep.subr.mxu0 %v155
    %6144 = vmatpush1.msra.mxu0 %v154
    %6145 = vmatprep.subr.mxu0 %v151
    %6146 = vmatpush1.msra.mxu0 %v150
    %6147 = vmatprep.subr.mxu0 %v147
    %6148 = vmatpush1.msra.mxu0 %v146
    %6149 = vmatprep.subr.mxu0 %v143
    %6150 = vmatpush1.msra.mxu0 %v142
    %6151 = vmatprep.subr.mxu0 %v139
    %6152 = vmatpush1.msra.mxu0 %v138
    %6153 = vmatprep.subr.mxu0 %v135
    %6154 = vmatpush1.msra.mxu0 %v134
    %6155 = vmatprep.subr.mxu0 %v131
    %6156 = vmatpush1.msra.mxu0 %v130
    %6157 = vmatprep.subr.mxu0 %v127
    %6158 = vmatpush1.msra.mxu0 %v126
    %6159 = vmatprep.subr.mxu0 %v123
    %6160 = vmatpush1.msra.mxu0 %v122
    %6161 = vmatprep.subr.mxu0 %v119
    %6162 = vmatpush1.msra.mxu0 %v118
    %6163 = vmatprep.subr.mxu0 %v115
    %6164 = vmatpush1.msra.mxu0 %v114
    %6165 = vmatprep.subr.mxu0 %v111
    %6166 = vmatpush1.msra.mxu0 %v110
    %6167 = vmatprep.subr.mxu0 %v107
    %6168 = vmatpush1.msra.mxu0 %v106
    %6169 = vmatprep.subr.mxu0 %v103
    %6170 = vmatpush1.msra.mxu0 %v102
    %6171 = vmatprep.subr.mxu0 %v99
    %6172 = vmatpush1.msra.mxu0 %v98
    %6173 = vmatprep.subr.mxu0 %v95
    %6174 = vmatpush1.msra.mxu0 %v94
    %6175 = vmatprep.subr.mxu0 0.0
    %6176 = vmatpush2.msra.mxu0 0.0
    %6177 = vmatprep.subr.mxu0 0.0
    %6178 = vmatpush2.msra.mxu0 0.0
    %6179 = vmatprep.subr.mxu0 0.0
    %6180 = vmatpush2.msra.mxu0 0.0
    %6181 = vmatprep.subr.mxu0 0.0
    %6182 = vmatpush2.msra.mxu0 0.0
    %6183 = vmatprep.subr.mxu0 0.0
    %6184 = vmatpush2.msra.mxu0 0.0
    %6185 = vmatprep.subr.mxu0 %v199
    %6186 = vmatpush2.msra.mxu0 %v198
    %6187 = vmatprep.subr.mxu0 %v195
    %6188 = vmatpush2.msra.mxu0 %v194
    %6189 = vmatprep.subr.mxu0 %v191
    %6190 = vmatpush2.msra.mxu0 %v190
    %6191 = vmatprep.subr.mxu0 %v187
    %6192 = vmatpush2.msra.mxu0 %v186
    %6193 = vmatprep.subr.mxu0 %v183
    %6194 = vmatpush2.msra.mxu0 %v182
    %6195 = vmatprep.subr.mxu0 %v179
    %6196 = vmatpush2.msra.mxu0 %v178
    %6197 = vmatprep.subr.mxu0 %v175
    %6198 = vmatpush2.msra.mxu0 %v174
    %6199 = vmatprep.subr.mxu0 %v171
    %6200 = vmatpush2.msra.mxu0 %v170
    %6201 = vmatprep.subr.mxu0 %v167
    %6202 = vmatpush2.msra.mxu0 %v166
    %6203 = vmatprep.subr.mxu0 %v163
    %6204 = vmatpush2.msra.mxu0 %v162
    %6205 = vmatprep.subr.mxu0 %v159
    %6206 = vmatpush2.msra.mxu0 %v158
    %6207 = vmatprep.mubr.f32.mxu0 %v6054
    %6208 = vmatmul.mubr.f32.gmra.mxu0 %v5917
    %v6209 = vpop.f32.mrf.mxu0
    %v6210 = vadd.f32 %v36, %v6209
    %v6211 = vpop.f32.mrf.mxu0
    %v6212 = vadd.f32 %v40, %v6211
    %6213 = vmatprep.mubr.f32.mxu0 %v6056
    %6214 = vmatmul.mubr.f32.gmra.mxu0 %v5983
    %v6215 = vpop.f32.mrf.mxu0
    %v6216 = vadd.f32 %v36, %v6215
    %v6217 = vpop.f32.mrf.mxu0
    %v6218 = vadd.f32 %v40, %v6217
    %6219 = vmatprep.mubr.f32.mxu0 %v6058
    %6220 = vmatmul.mubr.f32.gmra.mxu0 %v6049
    %v6221 = vpop.f32.mrf.mxu0
    %v6222 = vadd.f32 %v36, %v6221
    %v6223 = vpop.f32.mrf.mxu0
    %v6224 = vadd.f32 %v40, %v6223
    %6225 = vdwg.mxu0
    %v6226 = vmax.f32 %v6127, 0.0
    %v6227 = vmax.f32 %v6129, 0.0
    %v6228 = vmax.f32 %v6210, 0.0
    %v6229 = vmax.f32 %v6212, 0.0
    %v6230 = vmax.f32 %v6133, 0.0
    %v6231 = vmax.f32 %v6135, 0.0
    %v6232 = vmax.f32 %v6216, 0.0
    %v6233 = vmax.f32 %v6218, 0.0
    %v6234 = vmax.f32 %v6139, 0.0
    %v6235 = vmax.f32 %v6141, 0.0
    %v6236 = vmax.f32 %v6222, 0.0
    %v6237 = vmax.f32 %v6224, 0.0
    %v6238 = vadd.f32 %v5769, %v6226
    %v6239 = vadd.f32 %v5770, %v6227
    %v6240 = vadd.f32 %v5771, %v6228
    %v6241 = vadd.f32 %v5772, %v6229
    %v6242 = vadd.f32 %v5773, %v6230
    %v6243 = vadd.f32 %v5774, %v6231
    %v6244 = vadd.f32 %v5775, %v6232
    %v6245 = vadd.f32 %v5776, %v6233
    %v6246 = vadd.f32 %v5777, %v6234
    %v6247 = vadd.f32 %v5778, %v6235
    %v6248 = vadd.f32 %v5779, %v6236
    %v6249 = vadd.f32 %v5780, %v6237
    %s6250 = scalar_lea.vmem %s0, 21
    %v6251 = vld [vmem:[%s6250] ss:$8 sm:$0x3]
    %s6252 = scalar_lea.vmem %s0, 53
    %v6253 = vld [vmem:[%s6252] ss:$8 sm:$0x3]
    %s6254 = scalar_lea.vmem %s0, 85
    %v6255 = vld [vmem:[%s6254] ss:$8 sm:$0x3]
    %s6256 = scalar_lea.vmem %s0, 117
    %v6257 = vld [vmem:[%s6256] ss:$8 sm:$0x3]
    %s6258 = scalar_lea.vmem %s0, 149
    %v6259 = vld [vmem:[%s6258] ss:$8 sm:$0x3]
    %s6260 = scalar_lea.vmem %s0, 181
    %v6261 = vld [vmem:[%s6260] ss:$8 sm:$0x3]
    %s6262 = scalar_lea.vmem %s0, 213
    %v6263 = vld [vmem:[%s6262] ss:$8 sm:$0x3]
    %s6264 = scalar_lea.vmem %s0, 245
    %v6265 = vld [vmem:[%s6264] ss:$8 sm:$0x3]
    %s6266 = scalar_lea.vmem %s0, 277
    %v6267 = vld [vmem:[%s6266] ss:$8 sm:$0x3]
    %s6268 = scalar_lea.vmem %s0, 309
    %v6269 = vld [vmem:[%s6268] ss:$8 sm:$0x3]
    %s6270 = scalar_lea.vmem %s0, 341
    %v6271 = vld [vmem:[%s6270] ss:$8 sm:$0x3]
    %s6272 = scalar_lea.vmem %s0, 373
    %v6273 = vld [vmem:[%s6272] ss:$8 sm:$0x3]
    %s6274 = scalar_lea.vmem %s0, 405
    %v6275 = vld [vmem:[%s6274] ss:$8 sm:$0x3]
    %s6276 = scalar_lea.vmem %s0, 437
    %v6277 = vld [vmem:[%s6276] ss:$8 sm:$0x3]
    %s6278 = scalar_lea.vmem %s0, 469
    %v6279 = vld [vmem:[%s6278] ss:$8 sm:$0x3]
    %s6280 = scalar_lea.vmem %s0, 501
    %v6281 = vld [vmem:[%s6280] ss:$8 sm:$0x3]
    %s6282 = scalar_lea.vmem %s0, 533
    %v6283 = vld [vmem:[%s6282] ss:$8 sm:$0x3]
    %s6284 = scalar_lea.vmem %s0, 565
    %v6285 = vld [vmem:[%s6284] ss:$8 sm:$0x3]
    %s6286 = scalar_lea.vmem %s0, 597
    %v6287 = vld [vmem:[%s6286] ss:$8 sm:$0x3]
    %s6288 = scalar_lea.vmem %s0, 629
    %v6289 = vld [vmem:[%s6288] ss:$8 sm:$0x3]
    %s6290 = scalar_lea.vmem %s0, 661
    %v6291 = vld [vmem:[%s6290] ss:$8 sm:$0x3]
    %s6292 = scalar_lea.vmem %s0, 693
    %v6293 = vld [vmem:[%s6292] ss:$8 sm:$0x3]
    %s6294 = scalar_lea.vmem %s0, 725
    %v6295 = vld [vmem:[%s6294] ss:$8 sm:$0x3]
    %s6296 = scalar_lea.vmem %s0, 757
    %v6297 = vld [vmem:[%s6296] ss:$8 sm:$0x3]
    %v6322 = vcombine.low %v6251, %v6253
    %v6323 = vcombine.low %v6255, %v6257
    %v6324 = vcombine.low %v6259, %v6261
    %v6325 = vcombine.low %v6263, %v6265
    %v6327 = vunpack.c.l.s4 1966171168
    %v6328 = vunpack.c.0.s8 %v6327
    %v6329 = vlaneseq
    %v6330 = vshrl.u32 %v6329, 7
    %v6331 = vsub.s32 %v6328, %v6330
    %v6332 = vrot.slane %v6322, %v6331
    %v6334 = vunpack.c.l.s4 1966171168
    %v6335 = vunpack.c.0.s8 %v6334
    %v6336 = vlaneseq
    %v6337 = vshrl.u32 %v6336, 7
    %v6338 = vsub.s32 %v6335, %v6337
    %v6339 = vrot.slane %v6323, %v6338
    %v6341 = vunpack.c.l.s4 1966171168
    %v6342 = vunpack.c.0.s8 %v6341
    %v6343 = vlaneseq
    %v6344 = vshrl.u32 %v6343, 7
    %v6345 = vsub.s32 %v6342, %v6344
    %v6346 = vrot.slane %v6324, %v6345
    %v6348 = vunpack.c.l.s4 1966171168
    %v6349 = vunpack.c.0.s8 %v6348
    %v6350 = vlaneseq
    %v6351 = vshrl.u32 %v6350, 7
    %v6352 = vsub.s32 %v6349, %v6351
    %v6353 = vrot.slane %v6325, %v6352
    %v6354 = vcombine.low %v6332, %v6339
    %v6355 = vcombine.high %v6332, %v6339
    %v6356 = vcombine.low %v6346, %v6353
    %v6357 = vcombine.high %v6346, %v6353
    %v6359 = vunpack.c.l.s4 1966171168
    %v6360 = vunpack.c.0.s8 %v6359
    %v6361 = vlaneseq
    %v6362 = vshrl.u32 %v6361, 7
    %v6363 = vsub.s32 %v6360, %v6362
    %v6364 = vrot.slane %v6354, %v6363
    %v6366 = vunpack.c.l.s4 1966171168
    %v6367 = vunpack.c.0.s8 %v6366
    %v6368 = vlaneseq
    %v6369 = vshrl.u32 %v6368, 7
    %v6370 = vsub.s32 %v6367, %v6369
    %v6371 = vrot.slane %v6355, %v6370
    %v6373 = vunpack.c.l.s4 1966171168
    %v6374 = vunpack.c.0.s8 %v6373
    %v6375 = vlaneseq
    %v6376 = vshrl.u32 %v6375, 7
    %v6377 = vsub.s32 %v6374, %v6376
    %v6378 = vrot.slane %v6356, %v6377
    %v6380 = vunpack.c.l.s4 1966171168
    %v6381 = vunpack.c.0.s8 %v6380
    %v6382 = vlaneseq
    %v6383 = vshrl.u32 %v6382, 7
    %v6384 = vsub.s32 %v6381, %v6383
    %v6385 = vrot.slane %v6357, %v6384
    %v6386 = vcombine.low %v6364, %v6378
    %v6387 = vcombine.low %v6371, %v6385
    %v6388 = vcombine.low %v6267, %v6269
    %v6389 = vcombine.low %v6271, %v6273
    %v6390 = vcombine.low %v6275, %v6277
    %v6391 = vcombine.low %v6279, %v6281
    %v6393 = vunpack.c.l.s4 1966171168
    %v6394 = vunpack.c.0.s8 %v6393
    %v6395 = vlaneseq
    %v6396 = vshrl.u32 %v6395, 7
    %v6397 = vsub.s32 %v6394, %v6396
    %v6398 = vrot.slane %v6388, %v6397
    %v6400 = vunpack.c.l.s4 1966171168
    %v6401 = vunpack.c.0.s8 %v6400
    %v6402 = vlaneseq
    %v6403 = vshrl.u32 %v6402, 7
    %v6404 = vsub.s32 %v6401, %v6403
    %v6405 = vrot.slane %v6389, %v6404
    %v6407 = vunpack.c.l.s4 1966171168
    %v6408 = vunpack.c.0.s8 %v6407
    %v6409 = vlaneseq
    %v6410 = vshrl.u32 %v6409, 7
    %v6411 = vsub.s32 %v6408, %v6410
    %v6412 = vrot.slane %v6390, %v6411
    %v6414 = vunpack.c.l.s4 1966171168
    %v6415 = vunpack.c.0.s8 %v6414
    %v6416 = vlaneseq
    %v6417 = vshrl.u32 %v6416, 7
    %v6418 = vsub.s32 %v6415, %v6417
    %v6419 = vrot.slane %v6391, %v6418
    %v6420 = vcombine.low %v6398, %v6405
    %v6421 = vcombine.high %v6398, %v6405
    %v6422 = vcombine.low %v6412, %v6419
    %v6423 = vcombine.high %v6412, %v6419
    %v6425 = vunpack.c.l.s4 1966171168
    %v6426 = vunpack.c.0.s8 %v6425
    %v6427 = vlaneseq
    %v6428 = vshrl.u32 %v6427, 7
    %v6429 = vsub.s32 %v6426, %v6428
    %v6430 = vrot.slane %v6420, %v6429
    %v6432 = vunpack.c.l.s4 1966171168
    %v6433 = vunpack.c.0.s8 %v6432
    %v6434 = vlaneseq
    %v6435 = vshrl.u32 %v6434, 7
    %v6436 = vsub.s32 %v6433, %v6435
    %v6437 = vrot.slane %v6421, %v6436
    %v6439 = vunpack.c.l.s4 1966171168
    %v6440 = vunpack.c.0.s8 %v6439
    %v6441 = vlaneseq
    %v6442 = vshrl.u32 %v6441, 7
    %v6443 = vsub.s32 %v6440, %v6442
    %v6444 = vrot.slane %v6422, %v6443
    %v6446 = vunpack.c.l.s4 1966171168
    %v6447 = vunpack.c.0.s8 %v6446
    %v6448 = vlaneseq
    %v6449 = vshrl.u32 %v6448, 7
    %v6450 = vsub.s32 %v6447, %v6449
    %v6451 = vrot.slane %v6423, %v6450
    %v6452 = vcombine.low %v6430, %v6444
    %v6453 = vcombine.low %v6437, %v6451
    %v6454 = vcombine.low %v6283, %v6285
    %v6455 = vcombine.low %v6287, %v6289
    %v6456 = vcombine.low %v6291, %v6293
    %v6457 = vcombine.low %v6295, %v6297
    %v6459 = vunpack.c.l.s4 1966171168
    %v6460 = vunpack.c.0.s8 %v6459
    %v6461 = vlaneseq
    %v6462 = vshrl.u32 %v6461, 7
    %v6463 = vsub.s32 %v6460, %v6462
    %v6464 = vrot.slane %v6454, %v6463
    %v6466 = vunpack.c.l.s4 1966171168
    %v6467 = vunpack.c.0.s8 %v6466
    %v6468 = vlaneseq
    %v6469 = vshrl.u32 %v6468, 7
    %v6470 = vsub.s32 %v6467, %v6469
    %v6471 = vrot.slane %v6455, %v6470
    %v6473 = vunpack.c.l.s4 1966171168
    %v6474 = vunpack.c.0.s8 %v6473
    %v6475 = vlaneseq
    %v6476 = vshrl.u32 %v6475, 7
    %v6477 = vsub.s32 %v6474, %v6476
    %v6478 = vrot.slane %v6456, %v6477
    %v6480 = vunpack.c.l.s4 1966171168
    %v6481 = vunpack.c.0.s8 %v6480
    %v6482 = vlaneseq
    %v6483 = vshrl.u32 %v6482, 7
    %v6484 = vsub.s32 %v6481, %v6483
    %v6485 = vrot.slane %v6457, %v6484
    %v6486 = vcombine.low %v6464, %v6471
    %v6487 = vcombine.high %v6464, %v6471
    %v6488 = vcombine.low %v6478, %v6485
    %v6489 = vcombine.high %v6478, %v6485
    %v6491 = vunpack.c.l.s4 1966171168
    %v6492 = vunpack.c.0.s8 %v6491
    %v6493 = vlaneseq
    %v6494 = vshrl.u32 %v6493, 7
    %v6495 = vsub.s32 %v6492, %v6494
    %v6496 = vrot.slane %v6486, %v6495
    %v6498 = vunpack.c.l.s4 1966171168
    %v6499 = vunpack.c.0.s8 %v6498
    %v6500 = vlaneseq
    %v6501 = vshrl.u32 %v6500, 7
    %v6502 = vsub.s32 %v6499, %v6501
    %v6503 = vrot.slane %v6487, %v6502
    %v6505 = vunpack.c.l.s4 1966171168
    %v6506 = vunpack.c.0.s8 %v6505
    %v6507 = vlaneseq
    %v6508 = vshrl.u32 %v6507, 7
    %v6509 = vsub.s32 %v6506, %v6508
    %v6510 = vrot.slane %v6488, %v6509
    %v6512 = vunpack.c.l.s4 1966171168
    %v6513 = vunpack.c.0.s8 %v6512
    %v6514 = vlaneseq
    %v6515 = vshrl.u32 %v6514, 7
    %v6516 = vsub.s32 %v6513, %v6515
    %v6517 = vrot.slane %v6489, %v6516
    %v6518 = vcombine.low %v6496, %v6510
    %v6519 = vcombine.low %v6503, %v6517
    %v6523 = vsel %vm425, %v6387, 0
    %v6525 = vsel %vm425, %v6453, 0
    %v6527 = vsel %vm425, %v6519, 0
    %6529 = vmatprep.subr.mxu0 %v153
    %6530 = vmatpush1.msra.mxu0 %v152
    %6531 = vmatprep.subr.mxu0 %v149
    %6532 = vmatpush1.msra.mxu0 %v148
    %6533 = vmatprep.subr.mxu0 %v145
    %6534 = vmatpush1.msra.mxu0 %v144
    %6535 = vmatprep.subr.mxu0 %v141
    %6536 = vmatpush1.msra.mxu0 %v140
    %6537 = vmatprep.subr.mxu0 %v137
    %6538 = vmatpush1.msra.mxu0 %v136
    %6539 = vmatprep.subr.mxu0 %v133
    %6540 = vmatpush1.msra.mxu0 %v132
    %6541 = vmatprep.subr.mxu0 %v129
    %6542 = vmatpush1.msra.mxu0 %v128
    %6543 = vmatprep.subr.mxu0 %v125
    %6544 = vmatpush1.msra.mxu0 %v124
    %6545 = vmatprep.subr.mxu0 %v121
    %6546 = vmatpush1.msra.mxu0 %v120
    %6547 = vmatprep.subr.mxu0 %v117
    %6548 = vmatpush1.msra.mxu0 %v116
    %6549 = vmatprep.subr.mxu0 %v113
    %6550 = vmatpush1.msra.mxu0 %v112
    %6551 = vmatprep.subr.mxu0 %v109
    %6552 = vmatpush1.msra.mxu0 %v108
    %6553 = vmatprep.subr.mxu0 %v105
    %6554 = vmatpush1.msra.mxu0 %v104
    %6555 = vmatprep.subr.mxu0 %v101
    %6556 = vmatpush1.msra.mxu0 %v100
    %6557 = vmatprep.subr.mxu0 %v97
    %6558 = vmatpush1.msra.mxu0 %v96
    %6559 = vmatprep.subr.mxu0 %v93
    %6560 = vmatpush1.msra.mxu0 %v92
    %6561 = vmatprep.subr.mxu0 0.0
    %6562 = vmatpush2.msra.mxu0 0.0
    %6563 = vmatprep.subr.mxu0 0.0
    %6564 = vmatpush2.msra.mxu0 0.0
    %6565 = vmatprep.subr.mxu0 0.0
    %6566 = vmatpush2.msra.mxu0 0.0
    %6567 = vmatprep.subr.mxu0 0.0
    %6568 = vmatpush2.msra.mxu0 0.0
    %6569 = vmatprep.subr.mxu0 0.0
    %6570 = vmatpush2.msra.mxu0 0.0
    %6571 = vmatprep.subr.mxu0 %v197
    %6572 = vmatpush2.msra.mxu0 %v196
    %6573 = vmatprep.subr.mxu0 %v193
    %6574 = vmatpush2.msra.mxu0 %v192
    %6575 = vmatprep.subr.mxu0 %v189
    %6576 = vmatpush2.msra.mxu0 %v188
    %6577 = vmatprep.subr.mxu0 %v185
    %6578 = vmatpush2.msra.mxu0 %v184
    %6579 = vmatprep.subr.mxu0 %v181
    %6580 = vmatpush2.msra.mxu0 %v180
    %6581 = vmatprep.subr.mxu0 %v177
    %6582 = vmatpush2.msra.mxu0 %v176
    %6583 = vmatprep.subr.mxu0 %v173
    %6584 = vmatpush2.msra.mxu0 %v172
    %6585 = vmatprep.subr.mxu0 %v169
    %6586 = vmatpush2.msra.mxu0 %v168
    %6587 = vmatprep.subr.mxu0 %v165
    %6588 = vmatpush2.msra.mxu0 %v164
    %6589 = vmatprep.subr.mxu0 %v161
    %6590 = vmatpush2.msra.mxu0 %v160
    %6591 = vmatprep.subr.mxu0 %v157
    %6592 = vmatpush2.msra.mxu0 %v156
    %6593 = vmatprep.mubr.f32.mxu0 %v6523
    %6594 = vmatmul.mubr.f32.gmra.mxu0 %v6386
    %v6595 = vpop.f32.mrf.mxu0
    %v6596 = vadd.f32 %v28, %v6595
    %v6597 = vpop.f32.mrf.mxu0
    %v6598 = vadd.f32 %v32, %v6597
    %6599 = vmatprep.mubr.f32.mxu0 %v6525
    %6600 = vmatmul.mubr.f32.gmra.mxu0 %v6452
    %v6601 = vpop.f32.mrf.mxu0
    %v6602 = vadd.f32 %v28, %v6601
    %v6603 = vpop.f32.mrf.mxu0
    %v6604 = vadd.f32 %v32, %v6603
    %6605 = vmatprep.mubr.f32.mxu0 %v6527
    %6606 = vmatmul.mubr.f32.gmra.mxu0 %v6518
    %v6607 = vpop.f32.mrf.mxu0
    %v6608 = vadd.f32 %v28, %v6607
    %v6609 = vpop.f32.mrf.mxu0
    %v6610 = vadd.f32 %v32, %v6609
    %6611 = vdwg.mxu0
    %6612 = vmatprep.subr.mxu0 %v155
    %6613 = vmatpush1.msra.mxu0 %v154
    %6614 = vmatprep.subr.mxu0 %v151
    %6615 = vmatpush1.msra.mxu0 %v150
    %6616 = vmatprep.subr.mxu0 %v147
    %6617 = vmatpush1.msra.mxu0 %v146
    %6618 = vmatprep.subr.mxu0 %v143
    %6619 = vmatpush1.msra.mxu0 %v142
    %6620 = vmatprep.subr.mxu0 %v139
    %6621 = vmatpush1.msra.mxu0 %v138
    %6622 = vmatprep.subr.mxu0 %v135
    %6623 = vmatpush1.msra.mxu0 %v134
    %6624 = vmatprep.subr.mxu0 %v131
    %6625 = vmatpush1.msra.mxu0 %v130
    %6626 = vmatprep.subr.mxu0 %v127
    %6627 = vmatpush1.msra.mxu0 %v126
    %6628 = vmatprep.subr.mxu0 %v123
    %6629 = vmatpush1.msra.mxu0 %v122
    %6630 = vmatprep.subr.mxu0 %v119
    %6631 = vmatpush1.msra.mxu0 %v118
    %6632 = vmatprep.subr.mxu0 %v115
    %6633 = vmatpush1.msra.mxu0 %v114
    %6634 = vmatprep.subr.mxu0 %v111
    %6635 = vmatpush1.msra.mxu0 %v110
    %6636 = vmatprep.subr.mxu0 %v107
    %6637 = vmatpush1.msra.mxu0 %v106
    %6638 = vmatprep.subr.mxu0 %v103
    %6639 = vmatpush1.msra.mxu0 %v102
    %6640 = vmatprep.subr.mxu0 %v99
    %6641 = vmatpush1.msra.mxu0 %v98
    %6642 = vmatprep.subr.mxu0 %v95
    %6643 = vmatpush1.msra.mxu0 %v94
    %6644 = vmatprep.subr.mxu0 0.0
    %6645 = vmatpush2.msra.mxu0 0.0
    %6646 = vmatprep.subr.mxu0 0.0
    %6647 = vmatpush2.msra.mxu0 0.0
    %6648 = vmatprep.subr.mxu0 0.0
    %6649 = vmatpush2.msra.mxu0 0.0
    %6650 = vmatprep.subr.mxu0 0.0
    %6651 = vmatpush2.msra.mxu0 0.0
    %6652 = vmatprep.subr.mxu0 0.0
    %6653 = vmatpush2.msra.mxu0 0.0
    %6654 = vmatprep.subr.mxu0 %v199
    %6655 = vmatpush2.msra.mxu0 %v198
    %6656 = vmatprep.subr.mxu0 %v195
    %6657 = vmatpush2.msra.mxu0 %v194
    %6658 = vmatprep.subr.mxu0 %v191
    %6659 = vmatpush2.msra.mxu0 %v190
    %6660 = vmatprep.subr.mxu0 %v187
    %6661 = vmatpush2.msra.mxu0 %v186
    %6662 = vmatprep.subr.mxu0 %v183
    %6663 = vmatpush2.msra.mxu0 %v182
    %6664 = vmatprep.subr.mxu0 %v179
    %6665 = vmatpush2.msra.mxu0 %v178
    %6666 = vmatprep.subr.mxu0 %v175
    %6667 = vmatpush2.msra.mxu0 %v174
    %6668 = vmatprep.subr.mxu0 %v171
    %6669 = vmatpush2.msra.mxu0 %v170
    %6670 = vmatprep.subr.mxu0 %v167
    %6671 = vmatpush2.msra.mxu0 %v166
    %6672 = vmatprep.subr.mxu0 %v163
    %6673 = vmatpush2.msra.mxu0 %v162
    %6674 = vmatprep.subr.mxu0 %v159
    %6675 = vmatpush2.msra.mxu0 %v158
    %6676 = vmatprep.mubr.f32.mxu0 %v6523
    %6677 = vmatmul.mubr.f32.gmra.mxu0 %v6386
    %v6678 = vpop.f32.mrf.mxu0
    %v6679 = vadd.f32 %v36, %v6678
    %v6680 = vpop.f32.mrf.mxu0
    %v6681 = vadd.f32 %v40, %v6680
    %6682 = vmatprep.mubr.f32.mxu0 %v6525
    %6683 = vmatmul.mubr.f32.gmra.mxu0 %v6452
    %v6684 = vpop.f32.mrf.mxu0
    %v6685 = vadd.f32 %v36, %v6684
    %v6686 = vpop.f32.mrf.mxu0
    %v6687 = vadd.f32 %v40, %v6686
    %6688 = vmatprep.mubr.f32.mxu0 %v6527
    %6689 = vmatmul.mubr.f32.gmra.mxu0 %v6518
    %v6690 = vpop.f32.mrf.mxu0
    %v6691 = vadd.f32 %v36, %v6690
    %v6692 = vpop.f32.mrf.mxu0
    %v6693 = vadd.f32 %v40, %v6692
    %6694 = vdwg.mxu0
    %v6695 = vmax.f32 %v6596, 0.0
    %v6696 = vmax.f32 %v6598, 0.0
    %v6697 = vmax.f32 %v6679, 0.0
    %v6698 = vmax.f32 %v6681, 0.0
    %v6699 = vmax.f32 %v6602, 0.0
    %v6700 = vmax.f32 %v6604, 0.0
    %v6701 = vmax.f32 %v6685, 0.0
    %v6702 = vmax.f32 %v6687, 0.0
    %v6703 = vmax.f32 %v6608, 0.0
    %v6704 = vmax.f32 %v6610, 0.0
    %v6705 = vmax.f32 %v6691, 0.0
    %v6706 = vmax.f32 %v6693, 0.0
    %v6707 = vadd.f32 %v6238, %v6695
    %v6708 = vadd.f32 %v6239, %v6696
    %v6709 = vadd.f32 %v6240, %v6697
    %v6710 = vadd.f32 %v6241, %v6698
    %v6711 = vadd.f32 %v6242, %v6699
    %v6712 = vadd.f32 %v6243, %v6700
    %v6713 = vadd.f32 %v6244, %v6701
    %v6714 = vadd.f32 %v6245, %v6702
    %v6715 = vadd.f32 %v6246, %v6703
    %v6716 = vadd.f32 %v6247, %v6704
    %v6717 = vadd.f32 %v6248, %v6705
    %v6718 = vadd.f32 %v6249, %v6706
    %s6719 = scalar_lea.vmem %s0, 22
    %v6720 = vld [vmem:[%s6719] ss:$8 sm:$0x3]
    %s6721 = scalar_lea.vmem %s0, 54
    %v6722 = vld [vmem:[%s6721] ss:$8 sm:$0x3]
    %s6723 = scalar_lea.vmem %s0, 86
    %v6724 = vld [vmem:[%s6723] ss:$8 sm:$0x3]
    %s6725 = scalar_lea.vmem %s0, 118
    %v6726 = vld [vmem:[%s6725] ss:$8 sm:$0x3]
    %s6727 = scalar_lea.vmem %s0, 150
    %v6728 = vld [vmem:[%s6727] ss:$8 sm:$0x3]
    %s6729 = scalar_lea.vmem %s0, 182
    %v6730 = vld [vmem:[%s6729] ss:$8 sm:$0x3]
    %s6731 = scalar_lea.vmem %s0, 214
    %v6732 = vld [vmem:[%s6731] ss:$8 sm:$0x3]
    %s6733 = scalar_lea.vmem %s0, 246
    %v6734 = vld [vmem:[%s6733] ss:$8 sm:$0x3]
    %s6735 = scalar_lea.vmem %s0, 278
    %v6736 = vld [vmem:[%s6735] ss:$8 sm:$0x3]
    %s6737 = scalar_lea.vmem %s0, 310
    %v6738 = vld [vmem:[%s6737] ss:$8 sm:$0x3]
    %s6739 = scalar_lea.vmem %s0, 342
    %v6740 = vld [vmem:[%s6739] ss:$8 sm:$0x3]
    %s6741 = scalar_lea.vmem %s0, 374
    %v6742 = vld [vmem:[%s6741] ss:$8 sm:$0x3]
    %s6743 = scalar_lea.vmem %s0, 406
    %v6744 = vld [vmem:[%s6743] ss:$8 sm:$0x3]
    %s6745 = scalar_lea.vmem %s0, 438
    %v6746 = vld [vmem:[%s6745] ss:$8 sm:$0x3]
    %s6747 = scalar_lea.vmem %s0, 470
    %v6748 = vld [vmem:[%s6747] ss:$8 sm:$0x3]
    %s6749 = scalar_lea.vmem %s0, 502
    %v6750 = vld [vmem:[%s6749] ss:$8 sm:$0x3]
    %s6751 = scalar_lea.vmem %s0, 534
    %v6752 = vld [vmem:[%s6751] ss:$8 sm:$0x3]
    %s6753 = scalar_lea.vmem %s0, 566
    %v6754 = vld [vmem:[%s6753] ss:$8 sm:$0x3]
    %s6755 = scalar_lea.vmem %s0, 598
    %v6756 = vld [vmem:[%s6755] ss:$8 sm:$0x3]
    %s6757 = scalar_lea.vmem %s0, 630
    %v6758 = vld [vmem:[%s6757] ss:$8 sm:$0x3]
    %s6759 = scalar_lea.vmem %s0, 662
    %v6760 = vld [vmem:[%s6759] ss:$8 sm:$0x3]
    %s6761 = scalar_lea.vmem %s0, 694
    %v6762 = vld [vmem:[%s6761] ss:$8 sm:$0x3]
    %s6763 = scalar_lea.vmem %s0, 726
    %v6764 = vld [vmem:[%s6763] ss:$8 sm:$0x3]
    %s6765 = scalar_lea.vmem %s0, 758
    %v6766 = vld [vmem:[%s6765] ss:$8 sm:$0x3]
    %v6791 = vcombine.low %v6720, %v6722
    %v6792 = vcombine.low %v6724, %v6726
    %v6793 = vcombine.low %v6728, %v6730
    %v6794 = vcombine.low %v6732, %v6734
    %v6796 = vunpack.c.l.s4 1966171168
    %v6797 = vunpack.c.0.s8 %v6796
    %v6798 = vlaneseq
    %v6799 = vshrl.u32 %v6798, 7
    %v6800 = vsub.s32 %v6797, %v6799
    %v6801 = vrot.slane %v6791, %v6800
    %v6803 = vunpack.c.l.s4 1966171168
    %v6804 = vunpack.c.0.s8 %v6803
    %v6805 = vlaneseq
    %v6806 = vshrl.u32 %v6805, 7
    %v6807 = vsub.s32 %v6804, %v6806
    %v6808 = vrot.slane %v6792, %v6807
    %v6810 = vunpack.c.l.s4 1966171168
    %v6811 = vunpack.c.0.s8 %v6810
    %v6812 = vlaneseq
    %v6813 = vshrl.u32 %v6812, 7
    %v6814 = vsub.s32 %v6811, %v6813
    %v6815 = vrot.slane %v6793, %v6814
    %v6817 = vunpack.c.l.s4 1966171168
    %v6818 = vunpack.c.0.s8 %v6817
    %v6819 = vlaneseq
    %v6820 = vshrl.u32 %v6819, 7
    %v6821 = vsub.s32 %v6818, %v6820
    %v6822 = vrot.slane %v6794, %v6821
    %v6823 = vcombine.low %v6801, %v6808
    %v6824 = vcombine.high %v6801, %v6808
    %v6825 = vcombine.low %v6815, %v6822
    %v6826 = vcombine.high %v6815, %v6822
    %v6828 = vunpack.c.l.s4 1966171168
    %v6829 = vunpack.c.0.s8 %v6828
    %v6830 = vlaneseq
    %v6831 = vshrl.u32 %v6830, 7
    %v6832 = vsub.s32 %v6829, %v6831
    %v6833 = vrot.slane %v6823, %v6832
    %v6835 = vunpack.c.l.s4 1966171168
    %v6836 = vunpack.c.0.s8 %v6835
    %v6837 = vlaneseq
    %v6838 = vshrl.u32 %v6837, 7
    %v6839 = vsub.s32 %v6836, %v6838
    %v6840 = vrot.slane %v6824, %v6839
    %v6842 = vunpack.c.l.s4 1966171168
    %v6843 = vunpack.c.0.s8 %v6842
    %v6844 = vlaneseq
    %v6845 = vshrl.u32 %v6844, 7
    %v6846 = vsub.s32 %v6843, %v6845
    %v6847 = vrot.slane %v6825, %v6846
    %v6849 = vunpack.c.l.s4 1966171168
    %v6850 = vunpack.c.0.s8 %v6849
    %v6851 = vlaneseq
    %v6852 = vshrl.u32 %v6851, 7
    %v6853 = vsub.s32 %v6850, %v6852
    %v6854 = vrot.slane %v6826, %v6853
    %v6855 = vcombine.low %v6833, %v6847
    %v6856 = vcombine.low %v6840, %v6854
    %v6857 = vcombine.low %v6736, %v6738
    %v6858 = vcombine.low %v6740, %v6742
    %v6859 = vcombine.low %v6744, %v6746
    %v6860 = vcombine.low %v6748, %v6750
    %v6862 = vunpack.c.l.s4 1966171168
    %v6863 = vunpack.c.0.s8 %v6862
    %v6864 = vlaneseq
    %v6865 = vshrl.u32 %v6864, 7
    %v6866 = vsub.s32 %v6863, %v6865
    %v6867 = vrot.slane %v6857, %v6866
    %v6869 = vunpack.c.l.s4 1966171168
    %v6870 = vunpack.c.0.s8 %v6869
    %v6871 = vlaneseq
    %v6872 = vshrl.u32 %v6871, 7
    %v6873 = vsub.s32 %v6870, %v6872
    %v6874 = vrot.slane %v6858, %v6873
    %v6876 = vunpack.c.l.s4 1966171168
    %v6877 = vunpack.c.0.s8 %v6876
    %v6878 = vlaneseq
    %v6879 = vshrl.u32 %v6878, 7
    %v6880 = vsub.s32 %v6877, %v6879
    %v6881 = vrot.slane %v6859, %v6880
    %v6883 = vunpack.c.l.s4 1966171168
    %v6884 = vunpack.c.0.s8 %v6883
    %v6885 = vlaneseq
    %v6886 = vshrl.u32 %v6885, 7
    %v6887 = vsub.s32 %v6884, %v6886
    %v6888 = vrot.slane %v6860, %v6887
    %v6889 = vcombine.low %v6867, %v6874
    %v6890 = vcombine.high %v6867, %v6874
    %v6891 = vcombine.low %v6881, %v6888
    %v6892 = vcombine.high %v6881, %v6888
    %v6894 = vunpack.c.l.s4 1966171168
    %v6895 = vunpack.c.0.s8 %v6894
    %v6896 = vlaneseq
    %v6897 = vshrl.u32 %v6896, 7
    %v6898 = vsub.s32 %v6895, %v6897
    %v6899 = vrot.slane %v6889, %v6898
    %v6901 = vunpack.c.l.s4 1966171168
    %v6902 = vunpack.c.0.s8 %v6901
    %v6903 = vlaneseq
    %v6904 = vshrl.u32 %v6903, 7
    %v6905 = vsub.s32 %v6902, %v6904
    %v6906 = vrot.slane %v6890, %v6905
    %v6908 = vunpack.c.l.s4 1966171168
    %v6909 = vunpack.c.0.s8 %v6908
    %v6910 = vlaneseq
    %v6911 = vshrl.u32 %v6910, 7
    %v6912 = vsub.s32 %v6909, %v6911
    %v6913 = vrot.slane %v6891, %v6912
    %v6915 = vunpack.c.l.s4 1966171168
    %v6916 = vunpack.c.0.s8 %v6915
    %v6917 = vlaneseq
    %v6918 = vshrl.u32 %v6917, 7
    %v6919 = vsub.s32 %v6916, %v6918
    %v6920 = vrot.slane %v6892, %v6919
    %v6921 = vcombine.low %v6899, %v6913
    %v6922 = vcombine.low %v6906, %v6920
    %v6923 = vcombine.low %v6752, %v6754
    %v6924 = vcombine.low %v6756, %v6758
    %v6925 = vcombine.low %v6760, %v6762
    %v6926 = vcombine.low %v6764, %v6766
    %v6928 = vunpack.c.l.s4 1966171168
    %v6929 = vunpack.c.0.s8 %v6928
    %v6930 = vlaneseq
    %v6931 = vshrl.u32 %v6930, 7
    %v6932 = vsub.s32 %v6929, %v6931
    %v6933 = vrot.slane %v6923, %v6932
    %v6935 = vunpack.c.l.s4 1966171168
    %v6936 = vunpack.c.0.s8 %v6935
    %v6937 = vlaneseq
    %v6938 = vshrl.u32 %v6937, 7
    %v6939 = vsub.s32 %v6936, %v6938
    %v6940 = vrot.slane %v6924, %v6939
    %v6942 = vunpack.c.l.s4 1966171168
    %v6943 = vunpack.c.0.s8 %v6942
    %v6944 = vlaneseq
    %v6945 = vshrl.u32 %v6944, 7
    %v6946 = vsub.s32 %v6943, %v6945
    %v6947 = vrot.slane %v6925, %v6946
    %v6949 = vunpack.c.l.s4 1966171168
    %v6950 = vunpack.c.0.s8 %v6949
    %v6951 = vlaneseq
    %v6952 = vshrl.u32 %v6951, 7
    %v6953 = vsub.s32 %v6950, %v6952
    %v6954 = vrot.slane %v6926, %v6953
    %v6955 = vcombine.low %v6933, %v6940
    %v6956 = vcombine.high %v6933, %v6940
    %v6957 = vcombine.low %v6947, %v6954
    %v6958 = vcombine.high %v6947, %v6954
    %v6960 = vunpack.c.l.s4 1966171168
    %v6961 = vunpack.c.0.s8 %v6960
    %v6962 = vlaneseq
    %v6963 = vshrl.u32 %v6962, 7
    %v6964 = vsub.s32 %v6961, %v6963
    %v6965 = vrot.slane %v6955, %v6964
    %v6967 = vunpack.c.l.s4 1966171168
    %v6968 = vunpack.c.0.s8 %v6967
    %v6969 = vlaneseq
    %v6970 = vshrl.u32 %v6969, 7
    %v6971 = vsub.s32 %v6968, %v6970
    %v6972 = vrot.slane %v6956, %v6971
    %v6974 = vunpack.c.l.s4 1966171168
    %v6975 = vunpack.c.0.s8 %v6974
    %v6976 = vlaneseq
    %v6977 = vshrl.u32 %v6976, 7
    %v6978 = vsub.s32 %v6975, %v6977
    %v6979 = vrot.slane %v6957, %v6978
    %v6981 = vunpack.c.l.s4 1966171168
    %v6982 = vunpack.c.0.s8 %v6981
    %v6983 = vlaneseq
    %v6984 = vshrl.u32 %v6983, 7
    %v6985 = vsub.s32 %v6982, %v6984
    %v6986 = vrot.slane %v6958, %v6985
    %v6987 = vcombine.low %v6965, %v6979
    %v6988 = vcombine.low %v6972, %v6986
    %v6992 = vsel %vm425, %v6856, 0
    %v6994 = vsel %vm425, %v6922, 0
    %v6996 = vsel %vm425, %v6988, 0
    %6998 = vmatprep.subr.mxu0 %v153
    %6999 = vmatpush1.msra.mxu0 %v152
    %7000 = vmatprep.subr.mxu0 %v149
    %7001 = vmatpush1.msra.mxu0 %v148
    %7002 = vmatprep.subr.mxu0 %v145
    %7003 = vmatpush1.msra.mxu0 %v144
    %7004 = vmatprep.subr.mxu0 %v141
    %7005 = vmatpush1.msra.mxu0 %v140
    %7006 = vmatprep.subr.mxu0 %v137
    %7007 = vmatpush1.msra.mxu0 %v136
    %7008 = vmatprep.subr.mxu0 %v133
    %7009 = vmatpush1.msra.mxu0 %v132
    %7010 = vmatprep.subr.mxu0 %v129
    %7011 = vmatpush1.msra.mxu0 %v128
    %7012 = vmatprep.subr.mxu0 %v125
    %7013 = vmatpush1.msra.mxu0 %v124
    %7014 = vmatprep.subr.mxu0 %v121
    %7015 = vmatpush1.msra.mxu0 %v120
    %7016 = vmatprep.subr.mxu0 %v117
    %7017 = vmatpush1.msra.mxu0 %v116
    %7018 = vmatprep.subr.mxu0 %v113
    %7019 = vmatpush1.msra.mxu0 %v112
    %7020 = vmatprep.subr.mxu0 %v109
    %7021 = vmatpush1.msra.mxu0 %v108
    %7022 = vmatprep.subr.mxu0 %v105
    %7023 = vmatpush1.msra.mxu0 %v104
    %7024 = vmatprep.subr.mxu0 %v101
    %7025 = vmatpush1.msra.mxu0 %v100
    %7026 = vmatprep.subr.mxu0 %v97
    %7027 = vmatpush1.msra.mxu0 %v96
    %7028 = vmatprep.subr.mxu0 %v93
    %7029 = vmatpush1.msra.mxu0 %v92
    %7030 = vmatprep.subr.mxu0 0.0
    %7031 = vmatpush2.msra.mxu0 0.0
    %7032 = vmatprep.subr.mxu0 0.0
    %7033 = vmatpush2.msra.mxu0 0.0
    %7034 = vmatprep.subr.mxu0 0.0
    %7035 = vmatpush2.msra.mxu0 0.0
    %7036 = vmatprep.subr.mxu0 0.0
    %7037 = vmatpush2.msra.mxu0 0.0
    %7038 = vmatprep.subr.mxu0 0.0
    %7039 = vmatpush2.msra.mxu0 0.0
    %7040 = vmatprep.subr.mxu0 %v197
    %7041 = vmatpush2.msra.mxu0 %v196
    %7042 = vmatprep.subr.mxu0 %v193
    %7043 = vmatpush2.msra.mxu0 %v192
    %7044 = vmatprep.subr.mxu0 %v189
    %7045 = vmatpush2.msra.mxu0 %v188
    %7046 = vmatprep.subr.mxu0 %v185
    %7047 = vmatpush2.msra.mxu0 %v184
    %7048 = vmatprep.subr.mxu0 %v181
    %7049 = vmatpush2.msra.mxu0 %v180
    %7050 = vmatprep.subr.mxu0 %v177
    %7051 = vmatpush2.msra.mxu0 %v176
    %7052 = vmatprep.subr.mxu0 %v173
    %7053 = vmatpush2.msra.mxu0 %v172
    %7054 = vmatprep.subr.mxu0 %v169
    %7055 = vmatpush2.msra.mxu0 %v168
    %7056 = vmatprep.subr.mxu0 %v165
    %7057 = vmatpush2.msra.mxu0 %v164
    %7058 = vmatprep.subr.mxu0 %v161
    %7059 = vmatpush2.msra.mxu0 %v160
    %7060 = vmatprep.subr.mxu0 %v157
    %7061 = vmatpush2.msra.mxu0 %v156
    %7062 = vmatprep.mubr.f32.mxu0 %v6992
    %7063 = vmatmul.mubr.f32.gmra.mxu0 %v6855
    %v7064 = vpop.f32.mrf.mxu0
    %v7065 = vadd.f32 %v28, %v7064
    %v7066 = vpop.f32.mrf.mxu0
    %v7067 = vadd.f32 %v32, %v7066
    %7068 = vmatprep.mubr.f32.mxu0 %v6994
    %7069 = vmatmul.mubr.f32.gmra.mxu0 %v6921
    %v7070 = vpop.f32.mrf.mxu0
    %v7071 = vadd.f32 %v28, %v7070
    %v7072 = vpop.f32.mrf.mxu0
    %v7073 = vadd.f32 %v32, %v7072
    %7074 = vmatprep.mubr.f32.mxu0 %v6996
    %7075 = vmatmul.mubr.f32.gmra.mxu0 %v6987
    %v7076 = vpop.f32.mrf.mxu0
    %v7077 = vadd.f32 %v28, %v7076
    %v7078 = vpop.f32.mrf.mxu0
    %v7079 = vadd.f32 %v32, %v7078
    %7080 = vdwg.mxu0
    %7081 = vmatprep.subr.mxu0 %v155
    %7082 = vmatpush1.msra.mxu0 %v154
    %7083 = vmatprep.subr.mxu0 %v151
    %7084 = vmatpush1.msra.mxu0 %v150
    %7085 = vmatprep.subr.mxu0 %v147
    %7086 = vmatpush1.msra.mxu0 %v146
    %7087 = vmatprep.subr.mxu0 %v143
    %7088 = vmatpush1.msra.mxu0 %v142
    %7089 = vmatprep.subr.mxu0 %v139
    %7090 = vmatpush1.msra.mxu0 %v138
    %7091 = vmatprep.subr.mxu0 %v135
    %7092 = vmatpush1.msra.mxu0 %v134
    %7093 = vmatprep.subr.mxu0 %v131
    %7094 = vmatpush1.msra.mxu0 %v130
    %7095 = vmatprep.subr.mxu0 %v127
    %7096 = vmatpush1.msra.mxu0 %v126
    %7097 = vmatprep.subr.mxu0 %v123
    %7098 = vmatpush1.msra.mxu0 %v122
    %7099 = vmatprep.subr.mxu0 %v119
    %7100 = vmatpush1.msra.mxu0 %v118
    %7101 = vmatprep.subr.mxu0 %v115
    %7102 = vmatpush1.msra.mxu0 %v114
    %7103 = vmatprep.subr.mxu0 %v111
    %7104 = vmatpush1.msra.mxu0 %v110
    %7105 = vmatprep.subr.mxu0 %v107
    %7106 = vmatpush1.msra.mxu0 %v106
    %7107 = vmatprep.subr.mxu0 %v103
    %7108 = vmatpush1.msra.mxu0 %v102
    %7109 = vmatprep.subr.mxu0 %v99
    %7110 = vmatpush1.msra.mxu0 %v98
    %7111 = vmatprep.subr.mxu0 %v95
    %7112 = vmatpush1.msra.mxu0 %v94
    %7113 = vmatprep.subr.mxu0 0.0
    %7114 = vmatpush2.msra.mxu0 0.0
    %7115 = vmatprep.subr.mxu0 0.0
    %7116 = vmatpush2.msra.mxu0 0.0
    %7117 = vmatprep.subr.mxu0 0.0
    %7118 = vmatpush2.msra.mxu0 0.0
    %7119 = vmatprep.subr.mxu0 0.0
    %7120 = vmatpush2.msra.mxu0 0.0
    %7121 = vmatprep.subr.mxu0 0.0
    %7122 = vmatpush2.msra.mxu0 0.0
    %7123 = vmatprep.subr.mxu0 %v199
    %7124 = vmatpush2.msra.mxu0 %v198
    %7125 = vmatprep.subr.mxu0 %v195
    %7126 = vmatpush2.msra.mxu0 %v194
    %7127 = vmatprep.subr.mxu0 %v191
    %7128 = vmatpush2.msra.mxu0 %v190
    %7129 = vmatprep.subr.mxu0 %v187
    %7130 = vmatpush2.msra.mxu0 %v186
    %7131 = vmatprep.subr.mxu0 %v183
    %7132 = vmatpush2.msra.mxu0 %v182
    %7133 = vmatprep.subr.mxu0 %v179
    %7134 = vmatpush2.msra.mxu0 %v178
    %7135 = vmatprep.subr.mxu0 %v175
    %7136 = vmatpush2.msra.mxu0 %v174
    %7137 = vmatprep.subr.mxu0 %v171
    %7138 = vmatpush2.msra.mxu0 %v170
    %7139 = vmatprep.subr.mxu0 %v167
    %7140 = vmatpush2.msra.mxu0 %v166
    %7141 = vmatprep.subr.mxu0 %v163
    %7142 = vmatpush2.msra.mxu0 %v162
    %7143 = vmatprep.subr.mxu0 %v159
    %7144 = vmatpush2.msra.mxu0 %v158
    %7145 = vmatprep.mubr.f32.mxu0 %v6992
    %7146 = vmatmul.mubr.f32.gmra.mxu0 %v6855
    %v7147 = vpop.f32.mrf.mxu0
    %v7148 = vadd.f32 %v36, %v7147
    %v7149 = vpop.f32.mrf.mxu0
    %v7150 = vadd.f32 %v40, %v7149
    %7151 = vmatprep.mubr.f32.mxu0 %v6994
    %7152 = vmatmul.mubr.f32.gmra.mxu0 %v6921
    %v7153 = vpop.f32.mrf.mxu0
    %v7154 = vadd.f32 %v36, %v7153
    %v7155 = vpop.f32.mrf.mxu0
    %v7156 = vadd.f32 %v40, %v7155
    %7157 = vmatprep.mubr.f32.mxu0 %v6996
    %7158 = vmatmul.mubr.f32.gmra.mxu0 %v6987
    %v7159 = vpop.f32.mrf.mxu0
    %v7160 = vadd.f32 %v36, %v7159
    %v7161 = vpop.f32.mrf.mxu0
    %v7162 = vadd.f32 %v40, %v7161
    %7163 = vdwg.mxu0
    %v7164 = vmax.f32 %v7065, 0.0
    %v7165 = vmax.f32 %v7067, 0.0
    %v7166 = vmax.f32 %v7148, 0.0
    %v7167 = vmax.f32 %v7150, 0.0
    %v7168 = vmax.f32 %v7071, 0.0
    %v7169 = vmax.f32 %v7073, 0.0
    %v7170 = vmax.f32 %v7154, 0.0
    %v7171 = vmax.f32 %v7156, 0.0
    %v7172 = vmax.f32 %v7077, 0.0
    %v7173 = vmax.f32 %v7079, 0.0
    %v7174 = vmax.f32 %v7160, 0.0
    %v7175 = vmax.f32 %v7162, 0.0
    %v7176 = vadd.f32 %v6707, %v7164
    %v7177 = vadd.f32 %v6708, %v7165
    %v7178 = vadd.f32 %v6709, %v7166
    %v7179 = vadd.f32 %v6710, %v7167
    %v7180 = vadd.f32 %v6711, %v7168
    %v7181 = vadd.f32 %v6712, %v7169
    %v7182 = vadd.f32 %v6713, %v7170
    %v7183 = vadd.f32 %v6714, %v7171
    %v7184 = vadd.f32 %v6715, %v7172
    %v7185 = vadd.f32 %v6716, %v7173
    %v7186 = vadd.f32 %v6717, %v7174
    %v7187 = vadd.f32 %v6718, %v7175
    %s7188 = scalar_lea.vmem %s0, 23
    %v7189 = vld [vmem:[%s7188] ss:$8 sm:$0x3]
    %s7190 = scalar_lea.vmem %s0, 55
    %v7191 = vld [vmem:[%s7190] ss:$8 sm:$0x3]
    %s7192 = scalar_lea.vmem %s0, 87
    %v7193 = vld [vmem:[%s7192] ss:$8 sm:$0x3]
    %s7194 = scalar_lea.vmem %s0, 119
    %v7195 = vld [vmem:[%s7194] ss:$8 sm:$0x3]
    %s7196 = scalar_lea.vmem %s0, 151
    %v7197 = vld [vmem:[%s7196] ss:$8 sm:$0x3]
    %s7198 = scalar_lea.vmem %s0, 183
    %v7199 = vld [vmem:[%s7198] ss:$8 sm:$0x3]
    %s7200 = scalar_lea.vmem %s0, 215
    %v7201 = vld [vmem:[%s7200] ss:$8 sm:$0x3]
    %s7202 = scalar_lea.vmem %s0, 247
    %v7203 = vld [vmem:[%s7202] ss:$8 sm:$0x3]
    %s7204 = scalar_lea.vmem %s0, 279
    %v7205 = vld [vmem:[%s7204] ss:$8 sm:$0x3]
    %s7206 = scalar_lea.vmem %s0, 311
    %v7207 = vld [vmem:[%s7206] ss:$8 sm:$0x3]
    %s7208 = scalar_lea.vmem %s0, 343
    %v7209 = vld [vmem:[%s7208] ss:$8 sm:$0x3]
    %s7210 = scalar_lea.vmem %s0, 375
    %v7211 = vld [vmem:[%s7210] ss:$8 sm:$0x3]
    %s7212 = scalar_lea.vmem %s0, 407
    %v7213 = vld [vmem:[%s7212] ss:$8 sm:$0x3]
    %s7214 = scalar_lea.vmem %s0, 439
    %v7215 = vld [vmem:[%s7214] ss:$8 sm:$0x3]
    %s7216 = scalar_lea.vmem %s0, 471
    %v7217 = vld [vmem:[%s7216] ss:$8 sm:$0x3]
    %s7218 = scalar_lea.vmem %s0, 503
    %v7219 = vld [vmem:[%s7218] ss:$8 sm:$0x3]
    %s7220 = scalar_lea.vmem %s0, 535
    %v7221 = vld [vmem:[%s7220] ss:$8 sm:$0x3]
    %s7222 = scalar_lea.vmem %s0, 567
    %v7223 = vld [vmem:[%s7222] ss:$8 sm:$0x3]
    %s7224 = scalar_lea.vmem %s0, 599
    %v7225 = vld [vmem:[%s7224] ss:$8 sm:$0x3]
    %s7226 = scalar_lea.vmem %s0, 631
    %v7227 = vld [vmem:[%s7226] ss:$8 sm:$0x3]
    %s7228 = scalar_lea.vmem %s0, 663
    %v7229 = vld [vmem:[%s7228] ss:$8 sm:$0x3]
    %s7230 = scalar_lea.vmem %s0, 695
    %v7231 = vld [vmem:[%s7230] ss:$8 sm:$0x3]
    %s7232 = scalar_lea.vmem %s0, 727
    %v7233 = vld [vmem:[%s7232] ss:$8 sm:$0x3]
    %s7234 = scalar_lea.vmem %s0, 759
    %v7235 = vld [vmem:[%s7234] ss:$8 sm:$0x3]
    %v7260 = vcombine.low %v7189, %v7191
    %v7261 = vcombine.low %v7193, %v7195
    %v7262 = vcombine.low %v7197, %v7199
    %v7263 = vcombine.low %v7201, %v7203
    %v7265 = vunpack.c.l.s4 1966171168
    %v7266 = vunpack.c.0.s8 %v7265
    %v7267 = vlaneseq
    %v7268 = vshrl.u32 %v7267, 7
    %v7269 = vsub.s32 %v7266, %v7268
    %v7270 = vrot.slane %v7260, %v7269
    %v7272 = vunpack.c.l.s4 1966171168
    %v7273 = vunpack.c.0.s8 %v7272
    %v7274 = vlaneseq
    %v7275 = vshrl.u32 %v7274, 7
    %v7276 = vsub.s32 %v7273, %v7275
    %v7277 = vrot.slane %v7261, %v7276
    %v7279 = vunpack.c.l.s4 1966171168
    %v7280 = vunpack.c.0.s8 %v7279
    %v7281 = vlaneseq
    %v7282 = vshrl.u32 %v7281, 7
    %v7283 = vsub.s32 %v7280, %v7282
    %v7284 = vrot.slane %v7262, %v7283
    %v7286 = vunpack.c.l.s4 1966171168
    %v7287 = vunpack.c.0.s8 %v7286
    %v7288 = vlaneseq
    %v7289 = vshrl.u32 %v7288, 7
    %v7290 = vsub.s32 %v7287, %v7289
    %v7291 = vrot.slane %v7263, %v7290
    %v7292 = vcombine.low %v7270, %v7277
    %v7293 = vcombine.high %v7270, %v7277
    %v7294 = vcombine.low %v7284, %v7291
    %v7295 = vcombine.high %v7284, %v7291
    %v7297 = vunpack.c.l.s4 1966171168
    %v7298 = vunpack.c.0.s8 %v7297
    %v7299 = vlaneseq
    %v7300 = vshrl.u32 %v7299, 7
    %v7301 = vsub.s32 %v7298, %v7300
    %v7302 = vrot.slane %v7292, %v7301
    %v7304 = vunpack.c.l.s4 1966171168
    %v7305 = vunpack.c.0.s8 %v7304
    %v7306 = vlaneseq
    %v7307 = vshrl.u32 %v7306, 7
    %v7308 = vsub.s32 %v7305, %v7307
    %v7309 = vrot.slane %v7293, %v7308
    %v7311 = vunpack.c.l.s4 1966171168
    %v7312 = vunpack.c.0.s8 %v7311
    %v7313 = vlaneseq
    %v7314 = vshrl.u32 %v7313, 7
    %v7315 = vsub.s32 %v7312, %v7314
    %v7316 = vrot.slane %v7294, %v7315
    %v7318 = vunpack.c.l.s4 1966171168
    %v7319 = vunpack.c.0.s8 %v7318
    %v7320 = vlaneseq
    %v7321 = vshrl.u32 %v7320, 7
    %v7322 = vsub.s32 %v7319, %v7321
    %v7323 = vrot.slane %v7295, %v7322
    %v7324 = vcombine.low %v7302, %v7316
    %v7325 = vcombine.low %v7309, %v7323
    %v7326 = vcombine.low %v7205, %v7207
    %v7327 = vcombine.low %v7209, %v7211
    %v7328 = vcombine.low %v7213, %v7215
    %v7329 = vcombine.low %v7217, %v7219
    %v7331 = vunpack.c.l.s4 1966171168
    %v7332 = vunpack.c.0.s8 %v7331
    %v7333 = vlaneseq
    %v7334 = vshrl.u32 %v7333, 7
    %v7335 = vsub.s32 %v7332, %v7334
    %v7336 = vrot.slane %v7326, %v7335
    %v7338 = vunpack.c.l.s4 1966171168
    %v7339 = vunpack.c.0.s8 %v7338
    %v7340 = vlaneseq
    %v7341 = vshrl.u32 %v7340, 7
    %v7342 = vsub.s32 %v7339, %v7341
    %v7343 = vrot.slane %v7327, %v7342
    %v7345 = vunpack.c.l.s4 1966171168
    %v7346 = vunpack.c.0.s8 %v7345
    %v7347 = vlaneseq
    %v7348 = vshrl.u32 %v7347, 7
    %v7349 = vsub.s32 %v7346, %v7348
    %v7350 = vrot.slane %v7328, %v7349
    %v7352 = vunpack.c.l.s4 1966171168
    %v7353 = vunpack.c.0.s8 %v7352
    %v7354 = vlaneseq
    %v7355 = vshrl.u32 %v7354, 7
    %v7356 = vsub.s32 %v7353, %v7355
    %v7357 = vrot.slane %v7329, %v7356
    %v7358 = vcombine.low %v7336, %v7343
    %v7359 = vcombine.high %v7336, %v7343
    %v7360 = vcombine.low %v7350, %v7357
    %v7361 = vcombine.high %v7350, %v7357
    %v7363 = vunpack.c.l.s4 1966171168
    %v7364 = vunpack.c.0.s8 %v7363
    %v7365 = vlaneseq
    %v7366 = vshrl.u32 %v7365, 7
    %v7367 = vsub.s32 %v7364, %v7366
    %v7368 = vrot.slane %v7358, %v7367
    %v7370 = vunpack.c.l.s4 1966171168
    %v7371 = vunpack.c.0.s8 %v7370
    %v7372 = vlaneseq
    %v7373 = vshrl.u32 %v7372, 7
    %v7374 = vsub.s32 %v7371, %v7373
    %v7375 = vrot.slane %v7359, %v7374
    %v7377 = vunpack.c.l.s4 1966171168
    %v7378 = vunpack.c.0.s8 %v7377
    %v7379 = vlaneseq
    %v7380 = vshrl.u32 %v7379, 7
    %v7381 = vsub.s32 %v7378, %v7380
    %v7382 = vrot.slane %v7360, %v7381
    %v7384 = vunpack.c.l.s4 1966171168
    %v7385 = vunpack.c.0.s8 %v7384
    %v7386 = vlaneseq
    %v7387 = vshrl.u32 %v7386, 7
    %v7388 = vsub.s32 %v7385, %v7387
    %v7389 = vrot.slane %v7361, %v7388
    %v7390 = vcombine.low %v7368, %v7382
    %v7391 = vcombine.low %v7375, %v7389
    %v7392 = vcombine.low %v7221, %v7223
    %v7393 = vcombine.low %v7225, %v7227
    %v7394 = vcombine.low %v7229, %v7231
    %v7395 = vcombine.low %v7233, %v7235
    %v7397 = vunpack.c.l.s4 1966171168
    %v7398 = vunpack.c.0.s8 %v7397
    %v7399 = vlaneseq
    %v7400 = vshrl.u32 %v7399, 7
    %v7401 = vsub.s32 %v7398, %v7400
    %v7402 = vrot.slane %v7392, %v7401
    %v7404 = vunpack.c.l.s4 1966171168
    %v7405 = vunpack.c.0.s8 %v7404
    %v7406 = vlaneseq
    %v7407 = vshrl.u32 %v7406, 7
    %v7408 = vsub.s32 %v7405, %v7407
    %v7409 = vrot.slane %v7393, %v7408
    %v7411 = vunpack.c.l.s4 1966171168
    %v7412 = vunpack.c.0.s8 %v7411
    %v7413 = vlaneseq
    %v7414 = vshrl.u32 %v7413, 7
    %v7415 = vsub.s32 %v7412, %v7414
    %v7416 = vrot.slane %v7394, %v7415
    %v7418 = vunpack.c.l.s4 1966171168
    %v7419 = vunpack.c.0.s8 %v7418
    %v7420 = vlaneseq
    %v7421 = vshrl.u32 %v7420, 7
    %v7422 = vsub.s32 %v7419, %v7421
    %v7423 = vrot.slane %v7395, %v7422
    %v7424 = vcombine.low %v7402, %v7409
    %v7425 = vcombine.high %v7402, %v7409
    %v7426 = vcombine.low %v7416, %v7423
    %v7427 = vcombine.high %v7416, %v7423
    %v7429 = vunpack.c.l.s4 1966171168
    %v7430 = vunpack.c.0.s8 %v7429
    %v7431 = vlaneseq
    %v7432 = vshrl.u32 %v7431, 7
    %v7433 = vsub.s32 %v7430, %v7432
    %v7434 = vrot.slane %v7424, %v7433
    %v7436 = vunpack.c.l.s4 1966171168
    %v7437 = vunpack.c.0.s8 %v7436
    %v7438 = vlaneseq
    %v7439 = vshrl.u32 %v7438, 7
    %v7440 = vsub.s32 %v7437, %v7439
    %v7441 = vrot.slane %v7425, %v7440
    %v7443 = vunpack.c.l.s4 1966171168
    %v7444 = vunpack.c.0.s8 %v7443
    %v7445 = vlaneseq
    %v7446 = vshrl.u32 %v7445, 7
    %v7447 = vsub.s32 %v7444, %v7446
    %v7448 = vrot.slane %v7426, %v7447
    %v7450 = vunpack.c.l.s4 1966171168
    %v7451 = vunpack.c.0.s8 %v7450
    %v7452 = vlaneseq
    %v7453 = vshrl.u32 %v7452, 7
    %v7454 = vsub.s32 %v7451, %v7453
    %v7455 = vrot.slane %v7427, %v7454
    %v7456 = vcombine.low %v7434, %v7448
    %v7457 = vcombine.low %v7441, %v7455
    %v7461 = vsel %vm425, %v7325, 0
    %v7463 = vsel %vm425, %v7391, 0
    %v7465 = vsel %vm425, %v7457, 0
    %7467 = vmatprep.subr.mxu0 %v153
    %7468 = vmatpush1.msra.mxu0 %v152
    %7469 = vmatprep.subr.mxu0 %v149
    %7470 = vmatpush1.msra.mxu0 %v148
    %7471 = vmatprep.subr.mxu0 %v145
    %7472 = vmatpush1.msra.mxu0 %v144
    %7473 = vmatprep.subr.mxu0 %v141
    %7474 = vmatpush1.msra.mxu0 %v140
    %7475 = vmatprep.subr.mxu0 %v137
    %7476 = vmatpush1.msra.mxu0 %v136
    %7477 = vmatprep.subr.mxu0 %v133
    %7478 = vmatpush1.msra.mxu0 %v132
    %7479 = vmatprep.subr.mxu0 %v129
    %7480 = vmatpush1.msra.mxu0 %v128
    %7481 = vmatprep.subr.mxu0 %v125
    %7482 = vmatpush1.msra.mxu0 %v124
    %7483 = vmatprep.subr.mxu0 %v121
    %7484 = vmatpush1.msra.mxu0 %v120
    %7485 = vmatprep.subr.mxu0 %v117
    %7486 = vmatpush1.msra.mxu0 %v116
    %7487 = vmatprep.subr.mxu0 %v113
    %7488 = vmatpush1.msra.mxu0 %v112
    %7489 = vmatprep.subr.mxu0 %v109
    %7490 = vmatpush1.msra.mxu0 %v108
    %7491 = vmatprep.subr.mxu0 %v105
    %7492 = vmatpush1.msra.mxu0 %v104
    %7493 = vmatprep.subr.mxu0 %v101
    %7494 = vmatpush1.msra.mxu0 %v100
    %7495 = vmatprep.subr.mxu0 %v97
    %7496 = vmatpush1.msra.mxu0 %v96
    %7497 = vmatprep.subr.mxu0 %v93
    %7498 = vmatpush1.msra.mxu0 %v92
    %7499 = vmatprep.subr.mxu0 0.0
    %7500 = vmatpush2.msra.mxu0 0.0
    %7501 = vmatprep.subr.mxu0 0.0
    %7502 = vmatpush2.msra.mxu0 0.0
    %7503 = vmatprep.subr.mxu0 0.0
    %7504 = vmatpush2.msra.mxu0 0.0
    %7505 = vmatprep.subr.mxu0 0.0
    %7506 = vmatpush2.msra.mxu0 0.0
    %7507 = vmatprep.subr.mxu0 0.0
    %7508 = vmatpush2.msra.mxu0 0.0
    %7509 = vmatprep.subr.mxu0 %v197
    %7510 = vmatpush2.msra.mxu0 %v196
    %7511 = vmatprep.subr.mxu0 %v193
    %7512 = vmatpush2.msra.mxu0 %v192
    %7513 = vmatprep.subr.mxu0 %v189
    %7514 = vmatpush2.msra.mxu0 %v188
    %7515 = vmatprep.subr.mxu0 %v185
    %7516 = vmatpush2.msra.mxu0 %v184
    %7517 = vmatprep.subr.mxu0 %v181
    %7518 = vmatpush2.msra.mxu0 %v180
    %7519 = vmatprep.subr.mxu0 %v177
    %7520 = vmatpush2.msra.mxu0 %v176
    %7521 = vmatprep.subr.mxu0 %v173
    %7522 = vmatpush2.msra.mxu0 %v172
    %7523 = vmatprep.subr.mxu0 %v169
    %7524 = vmatpush2.msra.mxu0 %v168
    %7525 = vmatprep.subr.mxu0 %v165
    %7526 = vmatpush2.msra.mxu0 %v164
    %7527 = vmatprep.subr.mxu0 %v161
    %7528 = vmatpush2.msra.mxu0 %v160
    %7529 = vmatprep.subr.mxu0 %v157
    %7530 = vmatpush2.msra.mxu0 %v156
    %7531 = vmatprep.mubr.f32.mxu0 %v7461
    %7532 = vmatmul.mubr.f32.gmra.mxu0 %v7324
    %v7533 = vpop.f32.mrf.mxu0
    %v7534 = vadd.f32 %v28, %v7533
    %v7535 = vpop.f32.mrf.mxu0
    %v7536 = vadd.f32 %v32, %v7535
    %7537 = vmatprep.mubr.f32.mxu0 %v7463
    %7538 = vmatmul.mubr.f32.gmra.mxu0 %v7390
    %v7539 = vpop.f32.mrf.mxu0
    %v7540 = vadd.f32 %v28, %v7539
    %v7541 = vpop.f32.mrf.mxu0
    %v7542 = vadd.f32 %v32, %v7541
    %7543 = vmatprep.mubr.f32.mxu0 %v7465
    %7544 = vmatmul.mubr.f32.gmra.mxu0 %v7456
    %v7545 = vpop.f32.mrf.mxu0
    %v7546 = vadd.f32 %v28, %v7545
    %v7547 = vpop.f32.mrf.mxu0
    %v7548 = vadd.f32 %v32, %v7547
    %7549 = vdwg.mxu0
    %7550 = vmatprep.subr.mxu0 %v155
    %7551 = vmatpush1.msra.mxu0 %v154
    %7552 = vmatprep.subr.mxu0 %v151
    %7553 = vmatpush1.msra.mxu0 %v150
    %7554 = vmatprep.subr.mxu0 %v147
    %7555 = vmatpush1.msra.mxu0 %v146
    %7556 = vmatprep.subr.mxu0 %v143
    %7557 = vmatpush1.msra.mxu0 %v142
    %7558 = vmatprep.subr.mxu0 %v139
    %7559 = vmatpush1.msra.mxu0 %v138
    %7560 = vmatprep.subr.mxu0 %v135
    %7561 = vmatpush1.msra.mxu0 %v134
    %7562 = vmatprep.subr.mxu0 %v131
    %7563 = vmatpush1.msra.mxu0 %v130
    %7564 = vmatprep.subr.mxu0 %v127
    %7565 = vmatpush1.msra.mxu0 %v126
    %7566 = vmatprep.subr.mxu0 %v123
    %7567 = vmatpush1.msra.mxu0 %v122
    %7568 = vmatprep.subr.mxu0 %v119
    %7569 = vmatpush1.msra.mxu0 %v118
    %7570 = vmatprep.subr.mxu0 %v115
    %7571 = vmatpush1.msra.mxu0 %v114
    %7572 = vmatprep.subr.mxu0 %v111
    %7573 = vmatpush1.msra.mxu0 %v110
    %7574 = vmatprep.subr.mxu0 %v107
    %7575 = vmatpush1.msra.mxu0 %v106
    %7576 = vmatprep.subr.mxu0 %v103
    %7577 = vmatpush1.msra.mxu0 %v102
    %7578 = vmatprep.subr.mxu0 %v99
    %7579 = vmatpush1.msra.mxu0 %v98
    %7580 = vmatprep.subr.mxu0 %v95
    %7581 = vmatpush1.msra.mxu0 %v94
    %7582 = vmatprep.subr.mxu0 0.0
    %7583 = vmatpush2.msra.mxu0 0.0
    %7584 = vmatprep.subr.mxu0 0.0
    %7585 = vmatpush2.msra.mxu0 0.0
    %7586 = vmatprep.subr.mxu0 0.0
    %7587 = vmatpush2.msra.mxu0 0.0
    %7588 = vmatprep.subr.mxu0 0.0
    %7589 = vmatpush2.msra.mxu0 0.0
    %7590 = vmatprep.subr.mxu0 0.0
    %7591 = vmatpush2.msra.mxu0 0.0
    %7592 = vmatprep.subr.mxu0 %v199
    %7593 = vmatpush2.msra.mxu0 %v198
    %7594 = vmatprep.subr.mxu0 %v195
    %7595 = vmatpush2.msra.mxu0 %v194
    %7596 = vmatprep.subr.mxu0 %v191
    %7597 = vmatpush2.msra.mxu0 %v190
    %7598 = vmatprep.subr.mxu0 %v187
    %7599 = vmatpush2.msra.mxu0 %v186
    %7600 = vmatprep.subr.mxu0 %v183
    %7601 = vmatpush2.msra.mxu0 %v182
    %7602 = vmatprep.subr.mxu0 %v179
    %7603 = vmatpush2.msra.mxu0 %v178
    %7604 = vmatprep.subr.mxu0 %v175
    %7605 = vmatpush2.msra.mxu0 %v174
    %7606 = vmatprep.subr.mxu0 %v171
    %7607 = vmatpush2.msra.mxu0 %v170
    %7608 = vmatprep.subr.mxu0 %v167
    %7609 = vmatpush2.msra.mxu0 %v166
    %7610 = vmatprep.subr.mxu0 %v163
    %7611 = vmatpush2.msra.mxu0 %v162
    %7612 = vmatprep.subr.mxu0 %v159
    %7613 = vmatpush2.msra.mxu0 %v158
    %7614 = vmatprep.mubr.f32.mxu0 %v7461
    %7615 = vmatmul.mubr.f32.gmra.mxu0 %v7324
    %v7616 = vpop.f32.mrf.mxu0
    %v7617 = vadd.f32 %v36, %v7616
    %v7618 = vpop.f32.mrf.mxu0
    %v7619 = vadd.f32 %v40, %v7618
    %7620 = vmatprep.mubr.f32.mxu0 %v7463
    %7621 = vmatmul.mubr.f32.gmra.mxu0 %v7390
    %v7622 = vpop.f32.mrf.mxu0
    %v7623 = vadd.f32 %v36, %v7622
    %v7624 = vpop.f32.mrf.mxu0
    %v7625 = vadd.f32 %v40, %v7624
    %7626 = vmatprep.mubr.f32.mxu0 %v7465
    %7627 = vmatmul.mubr.f32.gmra.mxu0 %v7456
    %v7628 = vpop.f32.mrf.mxu0
    %v7629 = vadd.f32 %v36, %v7628
    %v7630 = vpop.f32.mrf.mxu0
    %v7631 = vadd.f32 %v40, %v7630
    %7632 = vdwg.mxu0
    %v7633 = vmax.f32 %v7534, 0.0
    %v7634 = vmax.f32 %v7536, 0.0
    %v7635 = vmax.f32 %v7617, 0.0
    %v7636 = vmax.f32 %v7619, 0.0
    %v7637 = vmax.f32 %v7540, 0.0
    %v7638 = vmax.f32 %v7542, 0.0
    %v7639 = vmax.f32 %v7623, 0.0
    %v7640 = vmax.f32 %v7625, 0.0
    %v7641 = vmax.f32 %v7546, 0.0
    %v7642 = vmax.f32 %v7548, 0.0
    %v7643 = vmax.f32 %v7629, 0.0
    %v7644 = vmax.f32 %v7631, 0.0
    %v7645 = vadd.f32 %v7176, %v7633
    %v7646 = vadd.f32 %v7177, %v7634
    %v7647 = vadd.f32 %v7178, %v7635
    %v7648 = vadd.f32 %v7179, %v7636
    %v7649 = vadd.f32 %v7180, %v7637
    %v7650 = vadd.f32 %v7181, %v7638
    %v7651 = vadd.f32 %v7182, %v7639
    %v7652 = vadd.f32 %v7183, %v7640
    %v7653 = vadd.f32 %v7184, %v7641
    %v7654 = vadd.f32 %v7185, %v7642
    %v7655 = vadd.f32 %v7186, %v7643
    %v7656 = vadd.f32 %v7187, %v7644
    %v7657 = vadd.f32 %v7645, 0.0
    %v7658 = vadd.f32 %v7649, 0.0
    %v7659 = vadd.f32 %v7653, 0.0
    %7663 = vrot.lane.b32.xlu0 %v7645, 96
    %v7664 = vpop.permute.xlu0 %7663
    %7665 = vrot.lane.b32.xlu0 %v7649, 96
    %v7666 = vpop.permute.xlu0 %7665
    %7667 = vrot.lane.b32.xlu0 %v7653, 96
    %v7668 = vpop.permute.xlu0 %7667
    %v7672 = vadd.f32 %v7657, %v7664
    %v7673 = vadd.f32 %v7658, %v7666
    %v7674 = vadd.f32 %v7659, %v7668
    %7675 = vrot.lane.b32.xlu0 %v7645, 64
    %v7676 = vpop.permute.xlu0 %7675
    %7677 = vrot.lane.b32.xlu0 %v7649, 64
    %v7678 = vpop.permute.xlu0 %7677
    %7679 = vrot.lane.b32.xlu0 %v7653, 64
    %v7680 = vpop.permute.xlu0 %7679
    %v7684 = vadd.f32 %v7672, %v7676
    %v7685 = vadd.f32 %v7673, %v7678
    %v7686 = vadd.f32 %v7674, %v7680
    %7687 = vrot.lane.b32.xlu0 %v7645, 32
    %v7688 = vpop.permute.xlu0 %7687
    %7689 = vrot.lane.b32.xlu0 %v7649, 32
    %v7690 = vpop.permute.xlu0 %7689
    %7691 = vrot.lane.b32.xlu0 %v7653, 32
    %v7692 = vpop.permute.xlu0 %7691
    %v7696 = vadd.f32 %v7684, %v7688
    %v7697 = vadd.f32 %v7685, %v7690
    %v7698 = vadd.f32 %v7686, %v7692
    %v7699 = vadd.f32 %v7696, %v7646
    %v7700 = vadd.f32 %v7697, %v7650
    %v7701 = vadd.f32 %v7698, %v7654
    %7705 = vrot.lane.b32.xlu0 %v7646, 96
    %v7706 = vpop.permute.xlu0 %7705
    %7707 = vrot.lane.b32.xlu0 %v7650, 96
    %v7708 = vpop.permute.xlu0 %7707
    %7709 = vrot.lane.b32.xlu0 %v7654, 96
    %v7710 = vpop.permute.xlu0 %7709
    %v7714 = vadd.f32 %v7699, %v7706
    %v7715 = vadd.f32 %v7700, %v7708
    %v7716 = vadd.f32 %v7701, %v7710
    %7717 = vrot.lane.b32.xlu0 %v7646, 64
    %v7718 = vpop.permute.xlu0 %7717
    %7719 = vrot.lane.b32.xlu0 %v7650, 64
    %v7720 = vpop.permute.xlu0 %7719
    %7721 = vrot.lane.b32.xlu0 %v7654, 64
    %v7722 = vpop.permute.xlu0 %7721
    %v7726 = vadd.f32 %v7714, %v7718
    %v7727 = vadd.f32 %v7715, %v7720
    %v7728 = vadd.f32 %v7716, %v7722
    %7729 = vrot.lane.b32.xlu0 %v7646, 32
    %v7730 = vpop.permute.xlu0 %7729
    %7731 = vrot.lane.b32.xlu0 %v7650, 32
    %v7732 = vpop.permute.xlu0 %7731
    %7733 = vrot.lane.b32.xlu0 %v7654, 32
    %v7734 = vpop.permute.xlu0 %7733
    %v7738 = vadd.f32 %v7726, %v7730
    %v7739 = vadd.f32 %v7727, %v7732
    %v7740 = vadd.f32 %v7728, %v7734
    %v7741 = vadd.f32 %v7738, %v7647
    %v7742 = vadd.f32 %v7739, %v7651
    %v7743 = vadd.f32 %v7740, %v7655
    %7747 = vrot.lane.b32.xlu0 %v7647, 96
    %v7748 = vpop.permute.xlu0 %7747
    %7749 = vrot.lane.b32.xlu0 %v7651, 96
    %v7750 = vpop.permute.xlu0 %7749
    %7751 = vrot.lane.b32.xlu0 %v7655, 96
    %v7752 = vpop.permute.xlu0 %7751
    %v7756 = vadd.f32 %v7741, %v7748
    %v7757 = vadd.f32 %v7742, %v7750
    %v7758 = vadd.f32 %v7743, %v7752
    %7759 = vrot.lane.b32.xlu0 %v7647, 64
    %v7760 = vpop.permute.xlu0 %7759
    %7761 = vrot.lane.b32.xlu0 %v7651, 64
    %v7762 = vpop.permute.xlu0 %7761
    %7763 = vrot.lane.b32.xlu0 %v7655, 64
    %v7764 = vpop.permute.xlu0 %7763
    %v7768 = vadd.f32 %v7756, %v7760
    %v7769 = vadd.f32 %v7757, %v7762
    %v7770 = vadd.f32 %v7758, %v7764
    %7771 = vrot.lane.b32.xlu0 %v7647, 32
    %v7772 = vpop.permute.xlu0 %7771
    %7773 = vrot.lane.b32.xlu0 %v7651, 32
    %v7774 = vpop.permute.xlu0 %7773
    %7775 = vrot.lane.b32.xlu0 %v7655, 32
    %v7776 = vpop.permute.xlu0 %7775
    %v7780 = vadd.f32 %v7768, %v7772
    %v7781 = vadd.f32 %v7769, %v7774
    %v7782 = vadd.f32 %v7770, %v7776
    %v7783 = vadd.f32 %v7780, %v7648
    %v7784 = vadd.f32 %v7781, %v7652
    %v7785 = vadd.f32 %v7782, %v7656
    %7789 = vrot.lane.b32.xlu0 %v7648, 96
    %v7790 = vpop.permute.xlu0 %7789
    %7791 = vrot.lane.b32.xlu0 %v7652, 96
    %v7792 = vpop.permute.xlu0 %7791
    %7793 = vrot.lane.b32.xlu0 %v7656, 96
    %v7794 = vpop.permute.xlu0 %7793
    %v7798 = vadd.f32 %v7783, %v7790
    %v7799 = vadd.f32 %v7784, %v7792
    %v7800 = vadd.f32 %v7785, %v7794
    %7801 = vrot.lane.b32.xlu0 %v7648, 64
    %v7802 = vpop.permute.xlu0 %7801
    %7803 = vrot.lane.b32.xlu0 %v7652, 64
    %v7804 = vpop.permute.xlu0 %7803
    %7805 = vrot.lane.b32.xlu0 %v7656, 64
    %v7806 = vpop.permute.xlu0 %7805
    %v7810 = vadd.f32 %v7798, %v7802
    %v7811 = vadd.f32 %v7799, %v7804
    %v7812 = vadd.f32 %v7800, %v7806
    %7813 = vrot.lane.b32.xlu0 %v7648, 32
    %v7814 = vpop.permute.xlu0 %7813
    %7815 = vrot.lane.b32.xlu0 %v7652, 32
    %v7816 = vpop.permute.xlu0 %7815
    %7817 = vrot.lane.b32.xlu0 %v7656, 32
    %v7818 = vpop.permute.xlu0 %7817
    %v7822 = vadd.f32 %v7810, %v7814
    %v7823 = vadd.f32 %v7811, %v7816
    %v7824 = vadd.f32 %v7812, %v7818
    %v7825 = vmul.f32 %v7822, 0.00390625
    %v7826 = vmul.f32 %v7823, 0.00390625
    %v7827 = vmul.f32 %v7824, 0.00390625
    %vm7828 = vcmask 261120
    %7829 = vst.msk [vmem:[#allocation2] sm:$0xff] %vm7828, %v7825
    %7830 = vst.msk [vmem:[#allocation2 + $0x8] sm:$0xff] %vm7828, %v7826
    %7831 = vst.msk [vmem:[#allocation2 + $0x10] sm:$0xff] %vm7828, %v7827
    %v7832 = vld [vmem:[%s3] sm:$0xff]
    %v7833 = vld [vmem:[%s3 + $0x8] sm:$0xff]
    %v7834 = vld [vmem:[%s3 + $0x10] sm:$0xff]
    %v7835 = vld [vmem:[%s3 + $0x18] sm:$0xff]
    %v7836 = vld [vmem:[%s4] sm:$0x1]
    %v7838 = vlaneseq
    %v7839 = vshrl.u32 %v7838, 7
    %v7840 = vsub.s32 0, %v7839
    %v7841 = vrot.slane %v7836, %v7840
    %v7844 = vsel %vm7828, %v7825, 0
    %v7847 = vsel %vm7828, %v7826, 0
    %v7850 = vsel %vm7828, %v7827, 0
    %7852 = vmatprep.subr.mxu0 0.0
    %7853 = vmatpush1.msra.mxu0 0.0
    %7854 = vmatprep.subr.mxu0 0.0
    %7855 = vmatpush1.msra.mxu0 0.0
    %7856 = vmatprep.subr.mxu0 0.0
    %7857 = vmatpush1.msra.mxu0 0.0
    %7858 = vmatprep.subr.mxu0 0.0
    %7859 = vmatpush1.msra.mxu0 0.0
    %7860 = vmatprep.subr.mxu0 0.0
    %7861 = vmatpush1.msra.mxu0 0.0
    %7862 = vmatprep.subr.mxu0 0.0
    %7863 = vmatpush1.msra.mxu0 0.0
    %7864 = vmatprep.subr.mxu0 0.0
    %7865 = vmatpush1.msra.mxu0 0.0
    %7866 = vmatprep.subr.mxu0 0.0
    %7867 = vmatpush1.msra.mxu0 0.0
    %7868 = vmatprep.subr.mxu0 0.0
    %7869 = vmatpush1.msra.mxu0 0.0
    %7870 = vmatprep.subr.mxu0 0.0
    %7871 = vmatpush1.msra.mxu0 0.0
    %7872 = vmatprep.subr.mxu0 0.0
    %7873 = vmatpush1.msra.mxu0 0.0
    %7874 = vmatprep.subr.mxu0 0.0
    %7875 = vmatpush1.msra.mxu0 0.0
    %7876 = vmatprep.subr.mxu0 0.0
    %7877 = vmatpush1.msra.mxu0 %v7835
    %7878 = vmatprep.subr.mxu0 0.0
    %7879 = vmatpush1.msra.mxu0 %v7834
    %7880 = vmatprep.subr.mxu0 0.0
    %7881 = vmatpush1.msra.mxu0 %v7833
    %7882 = vmatprep.subr.mxu0 0.0
    %7883 = vmatpush1.msra.mxu0 %v7832
    %7884 = vmatprep.subr.mxu0 0.0
    %7885 = vmatpush2.msra.mxu0 0.0
    %7886 = vmatprep.subr.mxu0 0.0
    %7887 = vmatpush2.msra.mxu0 0.0
    %7888 = vmatprep.subr.mxu0 0.0
    %7889 = vmatpush2.msra.mxu0 0.0
    %7890 = vmatprep.subr.mxu0 0.0
    %7891 = vmatpush2.msra.mxu0 0.0
    %7892 = vmatprep.subr.mxu0 0.0
    %7893 = vmatpush2.msra.mxu0 0.0
    %7894 = vmatprep.subr.mxu0 0.0
    %7895 = vmatpush2.msra.mxu0 0.0
    %7896 = vmatprep.subr.mxu0 0.0
    %7897 = vmatpush2.msra.mxu0 0.0
    %7898 = vmatprep.subr.mxu0 0.0
    %7899 = vmatpush2.msra.mxu0 0.0
    %7900 = vmatprep.subr.mxu0 0.0
    %7901 = vmatpush2.msra.mxu0 0.0
    %7902 = vmatprep.subr.mxu0 0.0
    %7903 = vmatpush2.msra.mxu0 0.0
    %7904 = vmatprep.subr.mxu0 0.0
    %7905 = vmatpush2.msra.mxu0 0.0
    %7906 = vmatprep.subr.mxu0 0.0
    %7907 = vmatpush2.msra.mxu0 0.0
    %7908 = vmatprep.subr.mxu0 0.0
    %7909 = vmatpush2.msra.mxu0 0.0
    %7910 = vmatprep.subr.mxu0 0.0
    %7911 = vmatpush2.msra.mxu0 0.0
    %7912 = vmatprep.subr.mxu0 0.0
    %7913 = vmatpush2.msra.mxu0 0.0
    %7914 = vmatprep.subr.mxu0 0.0
    %7915 = vmatpush2.msra.mxu0 0.0
    %7916 = vmatprep.mubr.f32.mxu0 0.0
    %7917 = vmatmul.mubr.f32.gmra.mxu0 %v7844
    %v7918 = vpop.f32.mrf.mxu0
    %v7919 = vadd.f32 %v7841, %v7918
    %v7920 = vpop.f32.mrf.mxu0
    %7921 = vmatprep.mubr.f32.mxu0 0.0
    %7922 = vmatmul.mubr.f32.gmra.mxu0 %v7847
    %v7923 = vpop.f32.mrf.mxu0
    %v7924 = vadd.f32 %v7841, %v7923
    %v7925 = vpop.f32.mrf.mxu0
    %7926 = vmatprep.mubr.f32.mxu0 0.0
    %7927 = vmatmul.mubr.f32.gmra.mxu0 %v7850
    %v7928 = vpop.f32.mrf.mxu0
    %v7929 = vadd.f32 %v7841, %v7928
    %v7930 = vpop.f32.mrf.mxu0
    %7931 = vdwg.mxu0
    %7932 = vst [vmem:[%s6] sm:$0xff] %v7919
    %7933 = vst [vmem:[%s6 + $0x8] sm:$0xff] %v7924
    %7934 = vst [vmem:[%s6 + $0x10] sm:$0xff] %v7929
    // Predicated region
    $region22: #{cbn_net_forward.1} parent=1 // pred_check
      _
    $region23: #{cbn_net_forward.1} parent=1 // pred_check_branch
      %7936 = sbr.rel (0) target = $region25
    $region24: #{cbn_net_forward.1} parent=1 // pred_region
      %s7938 = ssub.s32 384, 384
      %7939 = vsyncadd [#allocation3], %s7938
      %s7940 = sshll.u32 [#allocation2], 4
      %s7941 = int_to_ptr.vmem [resolvable:$true] %s7940
      %7946 = dma.vmem_to_hbm [thread:$0]  %s7941, 384, %s5, [#allocation3], 128, 128, 8
    $region25: #{cbn_net_forward.1} parent=1 // pred_fallthru
      _
    // Predicated region
    $region26: #{cbn_net_forward.1} parent=1 // pred_check
      _
    $region27: #{cbn_net_forward.1} parent=1 // pred_check_branch
      %7948 = sbr.rel (0) target = $region29
    $region28: #{cbn_net_forward.1} parent=1 // pred_region
      _
    $region29: #{cbn_net_forward.1} parent=1 // pred_fallthru
      _
    // Predicated region
    $region30: #{cbn_net_forward.1} parent=1 // pred_check
      _
    $region31: #{cbn_net_forward.1} parent=1 // pred_check_branch
      %7950 = sbr.rel (0) target = $region33
    $region32: #{cbn_net_forward.1} parent=1 // pred_region
      %7951 = dma.done [#allocation3], 384
    $region33: #{cbn_net_forward.1} parent=1 // pred_fallthru
      _
    // Predicated region
    $region34: #{cbn_net_forward.1} parent=1 // pred_check
      _
    $region35: #{cbn_net_forward.1} parent=1 // pred_check_branch
      %7953 = sbr.rel (0) target = $region37
    $region36: #{cbn_net_forward.1} parent=1 // pred_region
      _
    $region37: #{cbn_net_forward.1} parent=1 // pred_fallthru
      _
    %7954 = vsyncpa [#allocation3], 1

</llo_original>
